<compile_context>
chip_gen: v6e
topology: v6e:2x2x1
jax: 0.10.0
libtpu: 0.0.40
codegen_flags: <defaults>
</compile_context>

<pallas_src>
import functools
import math
from functools import partial

import numpy as np
import jax
import jax.numpy as jnp
from jax import lax
from jax.experimental import pallas as pl
from jax.experimental.pallas import tpu as pltpu

PITCH = 16  # lanes per padded row in the working layout (needs W + 2 <= 16)


# ------------------------------ Pallas kernel -------------------------------

def _down_kernel(x_ref, sel_ref, w_ref, o_ref, pad_ref, *, C, H, W, NB):
    """NB batch elements of MaxPool2d(2) -> double_conv -> double_conv.

    Layouts (channels on sublanes, flattened spatial map on the lane axis):
      x_ref   : (NB, C, 4*H*W)  NCHW pixels, flat index = h2*(2W) + w2
      sel_ref : (4*H*W, 4*NL)   0/1 corner-gather matrix (host constant)
      w_ref   : (4, C, 9*C+1)   per-conv im2col weights, last column = bias
      o_ref   : (NB, C, NL)     pitch-16 output layout, lane = 16*h + w
      pad_ref : (C, 32*H)       zero-padded feature map, row pitch = 16 lanes
    """
    NL = PITCH * H
    f32 = jnp.float32

    # Junk-column mask (w >= W); one iota + compare per grid step.
    lane = jax.lax.broadcasted_iota(jnp.int32, (C, NL), 1)
    valid = (lane & (PITCH - 1)) < W

    # Zero the halo once per grid step (interior writes below are masked so
    # the halo is never corrupted afterwards).  Intentionally NOT guarded by
    # pl.when(program_id == 0): under the megacore-parallel split a core may
    # never execute step 0.
    pad_ref[...] = jnp.zeros_like(pad_ref)

    def conv(rep, k):
        """3x3 'same' conv (+ bias): 9 accumulated (C,C)@(C,NL) MXU matmuls."""
        # Masked interior write keeps the zero halo intact (the w==15 lane of
        # each row wraps onto the next row's left-halo column).
        pad_ref[:, PITCH + 1:PITCH + 1 + NL] = jnp.where(valid, rep, 0.0)
        acc = jnp.zeros((C, NL), f32)
        for dy in range(3):
            for dx in range(3):
                t = dy * 3 + dx
                off = dy * PITCH + dx
                acc = acc + jnp.dot(w_ref[k, :, t * C:(t + 1) * C],
                                    pad_ref[:, off:off + NL],
                                    preferred_element_type=f32)
        return acc + w_ref[k, :, 9 * C:9 * C + 1]        # bias (C, 1) broadcast

    def double_conv(rep, k):                   # x + conv2(relu(conv1(x)))
        h1 = jnp.maximum(conv(rep, k), 0.0)
        return rep + conv(h1, k + 1)

    for b in range(NB):                        # static unroll (NB is tiny)
        xf = x_ref[b]                                          # (C, 4*H*W)
        # MaxPool2d(2): one MXU gather of the four 2x2 corners into
        # lane-aligned maps, then 3 elementwise maxes on full, aligned vregs.
        corners = jnp.dot(xf, sel_ref[...], preferred_element_type=f32)
        pooled = jnp.maximum(
            jnp.maximum(corners[:, 0 * NL:1 * NL], corners[:, 1 * NL:2 * NL]),
            jnp.maximum(corners[:, 2 * NL:3 * NL], corners[:, 3 * NL:4 * NL]))
        out = double_conv(double_conv(pooled, 0), 2)           # (C, NL)
        o_ref[b] = out.astype(o_ref.dtype)     # full-lane, unmasked store


# --------------------------- host-built constants ----------------------------

@functools.lru_cache(maxsize=None)
def _pool_selector_np(H, W):
    """(4*H*W, 4*NL) 0/1 matrix gathering the 4 corners of each 2x2 window."""
    W2, NL = 2 * W, PITCH * H
    sel = np.zeros((4 * H * W, 4 * NL), np.float32)
    for h in range(H):
        for w in range(W):
            for dy in range(2):
                for dx in range(2):
                    f = (2 * h + dy) * W2 + (2 * w + dx)
                    sel[f, (dy * 2 + dx) * NL + PITCH * h + w] = 1.0
    return sel


def _batch_per_step(N):
    """Batch elements processed per grid step (device-aware)."""
    try:
        kind = jax.devices()[0].device_kind.lower()
    except Exception:
        kind = ""
    if "v7" in kind or "tpu7" in kind or "7x" in kind:
        return 1   # 2 TCs per chip: grid=(N,) "parallel" -> one element per TC
    return N       # single-TC (v5e/v6e): fold the whole batch into one step


# --------------------------------- wrapper ----------------------------------

def down_forward(x_nchw, w_packed, *, batch_per_step=None):
    """x_nchw: (N, C, 2H, 2W) float32;  w_packed: (4, C, 9*C+1) float32."""
    N, C, H2, W2 = x_nchw.shape
    assert H2 % 2 == 0 and W2 % 2 == 0
    H, W = H2 // 2, W2 // 2
    assert (W & (W - 1)) == 0 and W + 2 <= PITCH and H >= 4, \
        "kernel assumes pitch-16 rows"
    NL = PITCH * H

    nb = batch_per_step if batch_per_step is not None else _batch_per_step(N)
    nb = max(1, min(int(nb), N))
    assert N % nb == 0

    # Reshape-only glue (NCHW is row-major): no transpose, no strided slices.
    x_flat = x_nchw.reshape(N, C, H2 * W2).astype(jnp.float32)
    pool_sel = jnp.asarray(_pool_selector_np(H, W))      # compile-time constant

    kernel = partial(_down_kernel, C=C, H=H, W=W, NB=nb)
    out_flat = pl.pallas_call(
        kernel,
        out_shape=jax.ShapeDtypeStruct((N, C, NL), jnp.float32),
        grid=(N // nb,),
        in_specs=[
            pl.BlockSpec((nb, C, H2 * W2), lambda n: (n, 0, 0)),
            pl.BlockSpec((4 * H * W, 4 * NL), lambda n: (0, 0)),    # constant
            pl.BlockSpec((4, C, 9 * C + 1), lambda n: (0, 0, 0)),   # constant
        ],
        out_specs=pl.BlockSpec((nb, C, NL), lambda n: (n, 0, 0)),
        scratch_shapes=[pltpu.VMEM((C, 2 * PITCH * H), jnp.float32)],
        compiler_params=pltpu.CompilerParams(
            dimension_semantics=("parallel",)),
    )(x_flat, pool_sel, w_packed)

    # Pitch-16 working layout -> NCHW: one cheap slice strips the pad columns.
    return out_flat.reshape(N, C, H, PITCH)[:, :, :, :W]


# -------------------------- parameters & reference --------------------------

def init_params(key, C):
    """Deterministic params matching nn.Conv2d(C, C, 3, padding=1) shapes."""
    ks = jax.random.split(key, 8)
    bound = 1.0 / math.sqrt(C * 9)               # PyTorch default init bound
    torch_params = []
    for i in range(4):                           # 4 convs (2 per double_conv)
        w = jax.random.uniform(ks[2 * i], (C, C, 3, 3), jnp.float32,
                               -bound, bound)    # OIHW
        b = jax.random.uniform(ks[2 * i + 1], (C,), jnp.float32, -bound, bound)
        torch_params += [w, b]
    return tuple(torch_params)


def pack_params(torch_params, C):
    """OIHW weights + biases  ->  one (4, C, 9*C+1) weight array (bias last)."""
    mats = []
    for i in range(4):
        w, b = torch_params[2 * i], torch_params[2 * i + 1]
        wm = jnp.transpose(w, (0, 2, 3, 1)).reshape(C, 9 * C)  # [o,(3dy+dx)*C+i]
        mats.append(jnp.concatenate([wm, b[:, None]], axis=1))
    return jnp.stack(mats, axis=0)


def _conv_ref(x_nchw, w_oihw, b):
    y = lax.conv_general_dilated(
        x_nchw, w_oihw, window_strides=(1, 1), padding="SAME",
        dimension_numbers=("NCHW", "OIHW", "NCHW"))
    return y + b[None, :, None, None]


def down_ref(x_nchw, torch_params):
    x = lax.reduce_window(x_nchw, -jnp.inf, lax.max,
                          (1, 1, 2, 2), (1, 1, 2, 2), "VALID")
    for i in range(2):
        wa, ba, wb, bb = torch_params[4 * i:4 * i + 4]
        h = jnp.maximum(_conv_ref(x, wa, ba), 0.0)
        x = x + _conv_ref(h, wb, bb)
    return x


# ----------------------------------- main ------------------------------------

if __name__ == "__main__":
    key = jax.random.PRNGKey(0)
    kx, kp = jax.random.split(key)

    N, C, H2, W2 = 2, 4, 16, 16          # down(4, 4): residual needs in_ch == out_ch
    x = jax.random.normal(kx, (N, C, H2, W2), jnp.float32)
    torch_params = init_params(kp, C)
    w_packed = pack_params(torch_params, C)

    out = jax.block_until_ready(down_forward(x, w_packed))
    assert out.shape == (N, C, H2 // 2, W2 // 2)

    ref = down_ref(x, torch_params)
    err = float(jnp.max(jnp.abs(out - ref)))
    assert err < 1e-4, f"max abs err {err}"
    print("KERNEL_OK")
</pallas_src>

<mosaic_0001>
module attributes {stable_mosaic.version = 11 : i64} {
  func.func @_down_kernel(%arg0: i32, %arg1: memref<2x4x256xf32, #tpu.memory_space<vmem>>, %arg2: memref<256x512xf32, #tpu.memory_space<vmem>>, %arg3: memref<4x4x37xf32, #tpu.memory_space<vmem>>, %arg4: memref<2x4x128xf32, #tpu.memory_space<vmem>>, %arg5: memref<4x256xf32, #tpu.memory_space<vmem>>) attributes {dimension_semantics = [#tpu.dimension_semantics<parallel>], iteration_bounds = array<i64: 1>, scalar_prefetch = 0 : i64, scratch_operands = 1 : i64, tpu.core_type = #tpu.core_type<tc>, window_params = [{transform_indices = @transform_0, window_bounds = array<i64: 2, 4, 256>}, {pipeline_mode = #tpu.pipeline_mode<synchronous>, transform_indices = @transform_1, window_bounds = array<i64: 256, 512>}, {pipeline_mode = #tpu.pipeline_mode<synchronous>, transform_indices = @transform_2, window_bounds = array<i64: 4, 4, 37>}, {transform_indices = @transform_3, window_bounds = array<i64: 2, 4, 128>}]} {
    %0 = tpu.iota {dimensions = array<i32: 1>} : vector<4x128xi32>
    %c15_i32 = arith.constant 15 : i32
    %1 = vector.broadcast %c15_i32 : i32 to vector<4x128xi32>
    %2 = arith.andi %0, %1 : vector<4x128xi32>
    %c8_i32 = arith.constant 8 : i32
    %3 = vector.broadcast %c8_i32 : i32 to vector<4x128xi32>
    %4 = arith.cmpi slt, %2, %3 : vector<4x128xi32>
    %cst = arith.constant 0.000000e+00 : f32
    %5 = vector.broadcast %cst : f32 to vector<4x256xf32>
    %c0 = arith.constant 0 : index
    %c0_0 = arith.constant 0 : index
    %6 = vector.load %arg5[%c0, %c0_0] : memref<4x256xf32, #tpu.memory_space<vmem>>, vector<4x256xf32>
    tpu.vector_store %arg5[%c0, %c0_0], %5 {strides = array<i32>} : memref<4x256xf32, #tpu.memory_space<vmem>>, vector<4x256xf32>,
    %c0_1 = arith.constant 0 : index
    %c0_2 = arith.constant 0 : index
    %c0_3 = arith.constant 0 : index
    %7 = vector.load %arg1[%c0_1, %c0_2, %c0_3] : memref<2x4x256xf32, #tpu.memory_space<vmem>>, vector<1x4x256xf32>
    %8 = vector.shape_cast %7 : vector<1x4x256xf32> to vector<4x256xf32>
    %c0_4 = arith.constant 0 : index
    %c0_5 = arith.constant 0 : index
    %9 = vector.load %arg2[%c0_4, %c0_5] : memref<256x512xf32, #tpu.memory_space<vmem>>, vector<256x512xf32>
    %cst_6 = arith.constant dense<0.000000e+00> : vector<4x512xf32>
    %10 = tpu.matmul %8, %9, %cst_6 {dimension_numbers = #tpu.dot_dimension_numbers<[1], [0], [0], [1], [0, 0, 1, 1], [], []>} : vector<4x256xf32>, vector<256x512xf32>, vector<4x512xf32> -> vector<4x512xf32>
    %11 = vector.extract_strided_slice %10 {offsets = [0, 0], sizes = [4, 128], strides = [1, 1]} : vector<4x512xf32> to vector<4x128xf32>
    %12 = vector.extract_strided_slice %10 {offsets = [0, 128], sizes = [4, 128], strides = [1, 1]} : vector<4x512xf32> to vector<4x128xf32>
    %13 = arith.maximumf %11, %12 : vector<4x128xf32>
    %14 = vector.extract_strided_slice %10 {offsets = [0, 256], sizes = [4, 128], strides = [1, 1]} : vector<4x512xf32> to vector<4x128xf32>
    %15 = vector.extract_strided_slice %10 {offsets = [0, 384], sizes = [4, 128], strides = [1, 1]} : vector<4x512xf32> to vector<4x128xf32>
    %16 = arith.maximumf %14, %15 : vector<4x128xf32>
    %17 = arith.maximumf %13, %16 : vector<4x128xf32>
    %cst_7 = arith.constant 0.000000e+00 : f32
    %18 = vector.broadcast %cst_7 : f32 to vector<4x128xf32>
    %19 = arith.select %4, %17, %18 : vector<4x128xi1>, vector<4x128xf32>
    %c0_8 = arith.constant 0 : index
    %c17 = arith.constant 17 : index
    %20 = vector.load %arg5[%c0_8, %c17] : memref<4x256xf32, #tpu.memory_space<vmem>>, vector<4x128xf32>
    tpu.vector_store %arg5[%c0_8, %c17], %19 {strides = array<i32>} : memref<4x256xf32, #tpu.memory_space<vmem>>, vector<4x128xf32>,
    %cst_9 = arith.constant 0.000000e+00 : f32
    %21 = vector.broadcast %cst_9 : f32 to vector<4x128xf32>
    %c0_10 = arith.constant 0 : index
    %c0_11 = arith.constant 0 : index
    %c0_12 = arith.constant 0 : index
    %22 = vector.load %arg3[%c0_10, %c0_11, %c0_12] : memref<4x4x37xf32, #tpu.memory_space<vmem>>, vector<1x4x4xf32>
    %23 = vector.shape_cast %22 : vector<1x4x4xf32> to vector<4x4xf32>
    %c0_13 = arith.constant 0 : index
    %c0_14 = arith.constant 0 : index
    %24 = vector.load %arg5[%c0_13, %c0_14] : memref<4x256xf32, #tpu.memory_space<vmem>>, vector<4x128xf32>
    %cst_15 = arith.constant dense<0.000000e+00> : vector<4x128xf32>
    %25 = tpu.matmul %23, %24, %cst_15 {dimension_numbers = #tpu.dot_dimension_numbers<[1], [0], [0], [1], [0, 0, 1, 1], [], []>} : vector<4x4xf32>, vector<4x128xf32>, vector<4x128xf32> -> vector<4x128xf32>
    %26 = arith.addf %21, %25 : vector<4x128xf32>
    %c0_16 = arith.constant 0 : index
    %c0_17 = arith.constant 0 : index
    %c4 = arith.constant 4 : index
    %27 = vector.load %arg3[%c0_16, %c0_17, %c4] : memref<4x4x37xf32, #tpu.memory_space<vmem>>, vector<1x4x4xf32>
    %28 = vector.shape_cast %27 : vector<1x4x4xf32> to vector<4x4xf32>
    %c0_18 = arith.constant 0 : index
    %c1 = arith.constant 1 : index
    %29 = vector.load %arg5[%c0_18, %c1] : memref<4x256xf32, #tpu.memory_space<vmem>>, vector<4x128xf32>
    %cst_19 = arith.constant dense<0.000000e+00> : vector<4x128xf32>
    %30 = tpu.matmul %28, %29, %cst_19 {dimension_numbers = #tpu.dot_dimension_numbers<[1], [0], [0], [1], [0, 0, 1, 1], [], []>} : vector<4x4xf32>, vector<4x128xf32>, vector<4x128xf32> -> vector<4x128xf32>
    %31 = arith.addf %26, %30 : vector<4x128xf32>
    %c0_20 = arith.constant 0 : index
    %c0_21 = arith.constant 0 : index
    %c8 = arith.constant 8 : index
    %32 = vector.load %arg3[%c0_20, %c0_21, %c8] : memref<4x4x37xf32, #tpu.memory_space<vmem>>, vector<1x4x4xf32>
    %33 = vector.shape_cast %32 : vector<1x4x4xf32> to vector<4x4xf32>
    %c0_22 = arith.constant 0 : index
    %c2 = arith.constant 2 : index
    %34 = vector.load %arg5[%c0_22, %c2] : memref<4x256xf32, #tpu.memory_space<vmem>>, vector<4x128xf32>
    %cst_23 = arith.constant dense<0.000000e+00> : vector<4x128xf32>
    %35 = tpu.matmul %33, %34, %cst_23 {dimension_numbers = #tpu.dot_dimension_numbers<[1], [0], [0], [1], [0, 0, 1, 1], [], []>} : vector<4x4xf32>, vector<4x128xf32>, vector<4x128xf32> -> vector<4x128xf32>
    %36 = arith.addf %31, %35 : vector<4x128xf32>
    %c0_24 = arith.constant 0 : index
    %c0_25 = arith.constant 0 : index
    %c12 = arith.constant 12 : index
    %37 = vector.load %arg3[%c0_24, %c0_25, %c12] : memref<4x4x37xf32, #tpu.memory_space<vmem>>, vector<1x4x4xf32>
    %38 = vector.shape_cast %37 : vector<1x4x4xf32> to vector<4x4xf32>
    %c0_26 = arith.constant 0 : index
    %c16 = arith.constant 16 : index
    %39 = vector.load %arg5[%c0_26, %c16] : memref<4x256xf32, #tpu.memory_space<vmem>>, vector<4x128xf32>
    %cst_27 = arith.constant dense<0.000000e+00> : vector<4x128xf32>
    %40 = tpu.matmul %38, %39, %cst_27 {dimension_numbers = #tpu.dot_dimension_numbers<[1], [0], [0], [1], [0, 0, 1, 1], [], []>} : vector<4x4xf32>, vector<4x128xf32>, vector<4x128xf32> -> vector<4x128xf32>
    %41 = arith.addf %36, %40 : vector<4x128xf32>
    %c0_28 = arith.constant 0 : index
    %c0_29 = arith.constant 0 : index
    %c16_30 = arith.constant 16 : index
    %42 = vector.load %arg3[%c0_28, %c0_29, %c16_30] : memref<4x4x37xf32, #tpu.memory_space<vmem>>, vector<1x4x4xf32>
    %43 = vector.shape_cast %42 : vector<1x4x4xf32> to vector<4x4xf32>
    %c0_31 = arith.constant 0 : index
    %c17_32 = arith.constant 17 : index
    %44 = vector.load %arg5[%c0_31, %c17_32] : memref<4x256xf32, #tpu.memory_space<vmem>>, vector<4x128xf32>
    %cst_33 = arith.constant dense<0.000000e+00> : vector<4x128xf32>
    %45 = tpu.matmul %43, %44, %cst_33 {dimension_numbers = #tpu.dot_dimension_numbers<[1], [0], [0], [1], [0, 0, 1, 1], [], []>} : vector<4x4xf32>, vector<4x128xf32>, vector<4x128xf32> -> vector<4x128xf32>
    %46 = arith.addf %41, %45 : vector<4x128xf32>
    %c0_34 = arith.constant 0 : index
    %c0_35 = arith.constant 0 : index
    %c20 = arith.constant 20 : index
    %47 = vector.load %arg3[%c0_34, %c0_35, %c20] : memref<4x4x37xf32, #tpu.memory_space<vmem>>, vector<1x4x4xf32>
    %48 = vector.shape_cast %47 : vector<1x4x4xf32> to vector<4x4xf32>
    %c0_36 = arith.constant 0 : index
    %c18 = arith.constant 18 : index
    %49 = vector.load %arg5[%c0_36, %c18] : memref<4x256xf32, #tpu.memory_space<vmem>>, vector<4x128xf32>
    %cst_37 = arith.constant dense<0.000000e+00> : vector<4x128xf32>
    %50 = tpu.matmul %48, %49, %cst_37 {dimension_numbers = #tpu.dot_dimension_numbers<[1], [0], [0], [1], [0, 0, 1, 1], [], []>} : vector<4x4xf32>, vector<4x128xf32>, vector<4x128xf32> -> vector<4x128xf32>
    %51 = arith.addf %46, %50 : vector<4x128xf32>
    %c0_38 = arith.constant 0 : index
    %c0_39 = arith.constant 0 : index
    %c24 = arith.constant 24 : index
    %52 = vector.load %arg3[%c0_38, %c0_39, %c24] : memref<4x4x37xf32, #tpu.memory_space<vmem>>, vector<1x4x4xf32>
    %53 = vector.shape_cast %52 : vector<1x4x4xf32> to vector<4x4xf32>
    %c0_40 = arith.constant 0 : index
    %c32 = arith.constant 32 : index
    %54 = vector.load %arg5[%c0_40, %c32] : memref<4x256xf32, #tpu.memory_space<vmem>>, vector<4x128xf32>
    %cst_41 = arith.constant dense<0.000000e+00> : vector<4x128xf32>
    %55 = tpu.matmul %53, %54, %cst_41 {dimension_numbers = #tpu.dot_dimension_numbers<[1], [0], [0], [1], [0, 0, 1, 1], [], []>} : vector<4x4xf32>, vector<4x128xf32>, vector<4x128xf32> -> vector<4x128xf32>
    %56 = arith.addf %51, %55 : vector<4x128xf32>
    %c0_42 = arith.constant 0 : index
    %c0_43 = arith.constant 0 : index
    %c28 = arith.constant 28 : index
    %57 = vector.load %arg3[%c0_42, %c0_43, %c28] : memref<4x4x37xf32, #tpu.memory_space<vmem>>, vector<1x4x4xf32>
    %58 = vector.shape_cast %57 : vector<1x4x4xf32> to vector<4x4xf32>
    %c0_44 = arith.constant 0 : index
    %c33 = arith.constant 33 : index
    %59 = vector.load %arg5[%c0_44, %c33] : memref<4x256xf32, #tpu.memory_space<vmem>>, vector<4x128xf32>
    %cst_45 = arith.constant dense<0.000000e+00> : vector<4x128xf32>
    %60 = tpu.matmul %58, %59, %cst_45 {dimension_numbers = #tpu.dot_dimension_numbers<[1], [0], [0], [1], [0, 0, 1, 1], [], []>} : vector<4x4xf32>, vector<4x128xf32>, vector<4x128xf32> -> vector<4x128xf32>
    %61 = arith.addf %56, %60 : vector<4x128xf32>
    %c0_46 = arith.constant 0 : index
    %c0_47 = arith.constant 0 : index
    %c32_48 = arith.constant 32 : index
    %62 = vector.load %arg3[%c0_46, %c0_47, %c32_48] : memref<4x4x37xf32, #tpu.memory_space<vmem>>, vector<1x4x4xf32>
    %63 = vector.shape_cast %62 : vector<1x4x4xf32> to vector<4x4xf32>
    %c0_49 = arith.constant 0 : index
    %c34 = arith.constant 34 : index
    %64 = vector.load %arg5[%c0_49, %c34] : memref<4x256xf32, #tpu.memory_space<vmem>>, vector<4x128xf32>
    %cst_50 = arith.constant dense<0.000000e+00> : vector<4x128xf32>
    %65 = tpu.matmul %63, %64, %cst_50 {dimension_numbers = #tpu.dot_dimension_numbers<[1], [0], [0], [1], [0, 0, 1, 1], [], []>} : vector<4x4xf32>, vector<4x128xf32>, vector<4x128xf32> -> vector<4x128xf32>
    %66 = arith.addf %61, %65 : vector<4x128xf32>
    %c0_51 = arith.constant 0 : index
    %c0_52 = arith.constant 0 : index
    %c36 = arith.constant 36 : index
    %67 = vector.load %arg3[%c0_51, %c0_52, %c36] : memref<4x4x37xf32, #tpu.memory_space<vmem>>, vector<1x4x1xf32>
    %68 = vector.shape_cast %67 : vector<1x4x1xf32> to vector<4x1xf32>
    %69 = vector.broadcast %68 : vector<4x1xf32> to vector<4x128xf32>
    %70 = arith.addf %66, %69 : vector<4x128xf32>
    %cst_53 = arith.constant 0.000000e+00 : f32
    %71 = vector.broadcast %cst_53 : f32 to vector<4x128xf32>
    %72 = arith.maximumf %70, %71 : vector<4x128xf32>
    %cst_54 = arith.constant 0.000000e+00 : f32
    %73 = vector.broadcast %cst_54 : f32 to vector<4x128xf32>
    %74 = arith.select %4, %72, %73 : vector<4x128xi1>, vector<4x128xf32>
    %c0_55 = arith.constant 0 : index
    %c17_56 = arith.constant 17 : index
    %75 = vector.load %arg5[%c0_55, %c17_56] : memref<4x256xf32, #tpu.memory_space<vmem>>, vector<4x128xf32>
    tpu.vector_store %arg5[%c0_55, %c17_56], %74 {strides = array<i32>} : memref<4x256xf32, #tpu.memory_space<vmem>>, vector<4x128xf32>,
    %cst_57 = arith.constant 0.000000e+00 : f32
    %76 = vector.broadcast %cst_57 : f32 to vector<4x128xf32>
    %c1_58 = arith.constant 1 : index
    %c0_59 = arith.constant 0 : index
    %c0_60 = arith.constant 0 : index
    %77 = vector.load %arg3[%c1_58, %c0_59, %c0_60] : memref<4x4x37xf32, #tpu.memory_space<vmem>>, vector<1x4x4xf32>
    %78 = vector.shape_cast %77 : vector<1x4x4xf32> to vector<4x4xf32>
    %c0_61 = arith.constant 0 : index
    %c0_62 = arith.constant 0 : index
    %79 = vector.load %arg5[%c0_61, %c0_62] : memref<4x256xf32, #tpu.memory_space<vmem>>, vector<4x128xf32>
    %cst_63 = arith.constant dense<0.000000e+00> : vector<4x128xf32>
    %80 = tpu.matmul %78, %79, %cst_63 {dimension_numbers = #tpu.dot_dimension_numbers<[1], [0], [0], [1], [0, 0, 1, 1], [], []>} : vector<4x4xf32>, vector<4x128xf32>, vector<4x128xf32> -> vector<4x128xf32>
    %81 = arith.addf %76, %80 : vector<4x128xf32>
    %c1_64 = arith.constant 1 : index
    %c0_65 = arith.constant 0 : index
    %c4_66 = arith.constant 4 : index
    %82 = vector.load %arg3[%c1_64, %c0_65, %c4_66] : memref<4x4x37xf32, #tpu.memory_space<vmem>>, vector<1x4x4xf32>
    %83 = vector.shape_cast %82 : vector<1x4x4xf32> to vector<4x4xf32>
    %c0_67 = arith.constant 0 : index
    %c1_68 = arith.constant 1 : index
    %84 = vector.load %arg5[%c0_67, %c1_68] : memref<4x256xf32, #tpu.memory_space<vmem>>, vector<4x128xf32>
    %cst_69 = arith.constant dense<0.000000e+00> : vector<4x128xf32>
    %85 = tpu.matmul %83, %84, %cst_69 {dimension_numbers = #tpu.dot_dimension_numbers<[1], [0], [0], [1], [0, 0, 1, 1], [], []>} : vector<4x4xf32>, vector<4x128xf32>, vector<4x128xf32> -> vector<4x128xf32>
    %86 = arith.addf %81, %85 : vector<4x128xf32>
    %c1_70 = arith.constant 1 : index
    %c0_71 = arith.constant 0 : index
    %c8_72 = arith.constant 8 : index
    %87 = vector.load %arg3[%c1_70, %c0_71, %c8_72] : memref<4x4x37xf32, #tpu.memory_space<vmem>>, vector<1x4x4xf32>
    %88 = vector.shape_cast %87 : vector<1x4x4xf32> to vector<4x4xf32>
    %c0_73 = arith.constant 0 : index
    %c2_74 = arith.constant 2 : index
    %89 = vector.load %arg5[%c0_73, %c2_74] : memref<4x256xf32, #tpu.memory_space<vmem>>, vector<4x128xf32>
    %cst_75 = arith.constant dense<0.000000e+00> : vector<4x128xf32>
    %90 = tpu.matmul %88, %89, %cst_75 {dimension_numbers = #tpu.dot_dimension_numbers<[1], [0], [0], [1], [0, 0, 1, 1], [], []>} : vector<4x4xf32>, vector<4x128xf32>, vector<4x128xf32> -> vector<4x128xf32>
    %91 = arith.addf %86, %90 : vector<4x128xf32>
    %c1_76 = arith.constant 1 : index
    %c0_77 = arith.constant 0 : index
    %c12_78 = arith.constant 12 : index
    %92 = vector.load %arg3[%c1_76, %c0_77, %c12_78] : memref<4x4x37xf32, #tpu.memory_space<vmem>>, vector<1x4x4xf32>
    %93 = vector.shape_cast %92 : vector<1x4x4xf32> to vector<4x4xf32>
    %c0_79 = arith.constant 0 : index
    %c16_80 = arith.constant 16 : index
    %94 = vector.load %arg5[%c0_79, %c16_80] : memref<4x256xf32, #tpu.memory_space<vmem>>, vector<4x128xf32>
    %cst_81 = arith.constant dense<0.000000e+00> : vector<4x128xf32>
    %95 = tpu.matmul %93, %94, %cst_81 {dimension_numbers = #tpu.dot_dimension_numbers<[1], [0], [0], [1], [0, 0, 1, 1], [], []>} : vector<4x4xf32>, vector<4x128xf32>, vector<4x128xf32> -> vector<4x128xf32>
    %96 = arith.addf %91, %95 : vector<4x128xf32>
    %c1_82 = arith.constant 1 : index
    %c0_83 = arith.constant 0 : index
    %c16_84 = arith.constant 16 : index
    %97 = vector.load %arg3[%c1_82, %c0_83, %c16_84] : memref<4x4x37xf32, #tpu.memory_space<vmem>>, vector<1x4x4xf32>
    %98 = vector.shape_cast %97 : vector<1x4x4xf32> to vector<4x4xf32>
    %c0_85 = arith.constant 0 : index
    %c17_86 = arith.constant 17 : index
    %99 = vector.load %arg5[%c0_85, %c17_86] : memref<4x256xf32, #tpu.memory_space<vmem>>, vector<4x128xf32>
    %cst_87 = arith.constant dense<0.000000e+00> : vector<4x128xf32>
    %100 = tpu.matmul %98, %99, %cst_87 {dimension_numbers = #tpu.dot_dimension_numbers<[1], [0], [0], [1], [0, 0, 1, 1], [], []>} : vector<4x4xf32>, vector<4x128xf32>, vector<4x128xf32> -> vector<4x128xf32>
    %101 = arith.addf %96, %100 : vector<4x128xf32>
    %c1_88 = arith.constant 1 : index
    %c0_89 = arith.constant 0 : index
    %c20_90 = arith.constant 20 : index
    %102 = vector.load %arg3[%c1_88, %c0_89, %c20_90] : memref<4x4x37xf32, #tpu.memory_space<vmem>>, vector<1x4x4xf32>
    %103 = vector.shape_cast %102 : vector<1x4x4xf32> to vector<4x4xf32>
    %c0_91 = arith.constant 0 : index
    %c18_92 = arith.constant 18 : index
    %104 = vector.load %arg5[%c0_91, %c18_92] : memref<4x256xf32, #tpu.memory_space<vmem>>, vector<4x128xf32>
    %cst_93 = arith.constant dense<0.000000e+00> : vector<4x128xf32>
    %105 = tpu.matmul %103, %104, %cst_93 {dimension_numbers = #tpu.dot_dimension_numbers<[1], [0], [0], [1], [0, 0, 1, 1], [], []>} : vector<4x4xf32>, vector<4x128xf32>, vector<4x128xf32> -> vector<4x128xf32>
    %106 = arith.addf %101, %105 : vector<4x128xf32>
    %c1_94 = arith.constant 1 : index
    %c0_95 = arith.constant 0 : index
    %c24_96 = arith.constant 24 : index
    %107 = vector.load %arg3[%c1_94, %c0_95, %c24_96] : memref<4x4x37xf32, #tpu.memory_space<vmem>>, vector<1x4x4xf32>
    %108 = vector.shape_cast %107 : vector<1x4x4xf32> to vector<4x4xf32>
    %c0_97 = arith.constant 0 : index
    %c32_98 = arith.constant 32 : index
    %109 = vector.load %arg5[%c0_97, %c32_98] : memref<4x256xf32, #tpu.memory_space<vmem>>, vector<4x128xf32>
    %cst_99 = arith.constant dense<0.000000e+00> : vector<4x128xf32>
    %110 = tpu.matmul %108, %109, %cst_99 {dimension_numbers = #tpu.dot_dimension_numbers<[1], [0], [0], [1], [0, 0, 1, 1], [], []>} : vector<4x4xf32>, vector<4x128xf32>, vector<4x128xf32> -> vector<4x128xf32>
    %111 = arith.addf %106, %110 : vector<4x128xf32>
    %c1_100 = arith.constant 1 : index
    %c0_101 = arith.constant 0 : index
    %c28_102 = arith.constant 28 : index
    %112 = vector.load %arg3[%c1_100, %c0_101, %c28_102] : memref<4x4x37xf32, #tpu.memory_space<vmem>>, vector<1x4x4xf32>
    %113 = vector.shape_cast %112 : vector<1x4x4xf32> to vector<4x4xf32>
    %c0_103 = arith.constant 0 : index
    %c33_104 = arith.constant 33 : index
    %114 = vector.load %arg5[%c0_103, %c33_104] : memref<4x256xf32, #tpu.memory_space<vmem>>, vector<4x128xf32>
    %cst_105 = arith.constant dense<0.000000e+00> : vector<4x128xf32>
    %115 = tpu.matmul %113, %114, %cst_105 {dimension_numbers = #tpu.dot_dimension_numbers<[1], [0], [0], [1], [0, 0, 1, 1], [], []>} : vector<4x4xf32>, vector<4x128xf32>, vector<4x128xf32> -> vector<4x128xf32>
    %116 = arith.addf %111, %115 : vector<4x128xf32>
    %c1_106 = arith.constant 1 : index
    %c0_107 = arith.constant 0 : index
    %c32_108 = arith.constant 32 : index
    %117 = vector.load %arg3[%c1_106, %c0_107, %c32_108] : memref<4x4x37xf32, #tpu.memory_space<vmem>>, vector<1x4x4xf32>
    %118 = vector.shape_cast %117 : vector<1x4x4xf32> to vector<4x4xf32>
    %c0_109 = arith.constant 0 : index
    %c34_110 = arith.constant 34 : index
    %119 = vector.load %arg5[%c0_109, %c34_110] : memref<4x256xf32, #tpu.memory_space<vmem>>, vector<4x128xf32>
    %cst_111 = arith.constant dense<0.000000e+00> : vector<4x128xf32>
    %120 = tpu.matmul %118, %119, %cst_111 {dimension_numbers = #tpu.dot_dimension_numbers<[1], [0], [0], [1], [0, 0, 1, 1], [], []>} : vector<4x4xf32>, vector<4x128xf32>, vector<4x128xf32> -> vector<4x128xf32>
    %121 = arith.addf %116, %120 : vector<4x128xf32>
    %c1_112 = arith.constant 1 : index
    %c0_113 = arith.constant 0 : index
    %c36_114 = arith.constant 36 : index
    %122 = vector.load %arg3[%c1_112, %c0_113, %c36_114] : memref<4x4x37xf32, #tpu.memory_space<vmem>>, vector<1x4x1xf32>
    %123 = vector.shape_cast %122 : vector<1x4x1xf32> to vector<4x1xf32>
    %124 = vector.broadcast %123 : vector<4x1xf32> to vector<4x128xf32>
    %125 = arith.addf %121, %124 : vector<4x128xf32>
    %126 = arith.addf %17, %125 : vector<4x128xf32>
    %cst_115 = arith.constant 0.000000e+00 : f32
    %127 = vector.broadcast %cst_115 : f32 to vector<4x128xf32>
    %128 = arith.select %4, %126, %127 : vector<4x128xi1>, vector<4x128xf32>
    %c0_116 = arith.constant 0 : index
    %c17_117 = arith.constant 17 : index
    %129 = vector.load %arg5[%c0_116, %c17_117] : memref<4x256xf32, #tpu.memory_space<vmem>>, vector<4x128xf32>
    tpu.vector_store %arg5[%c0_116, %c17_117], %128 {strides = array<i32>} : memref<4x256xf32, #tpu.memory_space<vmem>>, vector<4x128xf32>,
    %cst_118 = arith.constant 0.000000e+00 : f32
    %130 = vector.broadcast %cst_118 : f32 to vector<4x128xf32>
    %c2_119 = arith.constant 2 : index
    %c0_120 = arith.constant 0 : index
    %c0_121 = arith.constant 0 : index
    %131 = vector.load %arg3[%c2_119, %c0_120, %c0_121] : memref<4x4x37xf32, #tpu.memory_space<vmem>>, vector<1x4x4xf32>
    %132 = vector.shape_cast %131 : vector<1x4x4xf32> to vector<4x4xf32>
    %c0_122 = arith.constant 0 : index
    %c0_123 = arith.constant 0 : index
    %133 = vector.load %arg5[%c0_122, %c0_123] : memref<4x256xf32, #tpu.memory_space<vmem>>, vector<4x128xf32>
    %cst_124 = arith.constant dense<0.000000e+00> : vector<4x128xf32>
    %134 = tpu.matmul %132, %133, %cst_124 {dimension_numbers = #tpu.dot_dimension_numbers<[1], [0], [0], [1], [0, 0, 1, 1], [], []>} : vector<4x4xf32>, vector<4x128xf32>, vector<4x128xf32> -> vector<4x128xf32>
    %135 = arith.addf %130, %134 : vector<4x128xf32>
    %c2_125 = arith.constant 2 : index
    %c0_126 = arith.constant 0 : index
    %c4_127 = arith.constant 4 : index
    %136 = vector.load %arg3[%c2_125, %c0_126, %c4_127] : memref<4x4x37xf32, #tpu.memory_space<vmem>>, vector<1x4x4xf32>
    %137 = vector.shape_cast %136 : vector<1x4x4xf32> to vector<4x4xf32>
    %c0_128 = arith.constant 0 : index
    %c1_129 = arith.constant 1 : index
    %138 = vector.load %arg5[%c0_128, %c1_129] : memref<4x256xf32, #tpu.memory_space<vmem>>, vector<4x128xf32>
    %cst_130 = arith.constant dense<0.000000e+00> : vector<4x128xf32>
    %139 = tpu.matmul %137, %138, %cst_130 {dimension_numbers = #tpu.dot_dimension_numbers<[1], [0], [0], [1], [0, 0, 1, 1], [], []>} : vector<4x4xf32>, vector<4x128xf32>, vector<4x128xf32> -> vector<4x128xf32>
    %140 = arith.addf %135, %139 : vector<4x128xf32>
    %c2_131 = arith.constant 2 : index
    %c0_132 = arith.constant 0 : index
    %c8_133 = arith.constant 8 : index
    %141 = vector.load %arg3[%c2_131, %c0_132, %c8_133] : memref<4x4x37xf32, #tpu.memory_space<vmem>>, vector<1x4x4xf32>
    %142 = vector.shape_cast %141 : vector<1x4x4xf32> to vector<4x4xf32>
    %c0_134 = arith.constant 0 : index
    %c2_135 = arith.constant 2 : index
    %143 = vector.load %arg5[%c0_134, %c2_135] : memref<4x256xf32, #tpu.memory_space<vmem>>, vector<4x128xf32>
    %cst_136 = arith.constant dense<0.000000e+00> : vector<4x128xf32>
    %144 = tpu.matmul %142, %143, %cst_136 {dimension_numbers = #tpu.dot_dimension_numbers<[1], [0], [0], [1], [0, 0, 1, 1], [], []>} : vector<4x4xf32>, vector<4x128xf32>, vector<4x128xf32> -> vector<4x128xf32>
    %145 = arith.addf %140, %144 : vector<4x128xf32>
    %c2_137 = arith.constant 2 : index
    %c0_138 = arith.constant 0 : index
    %c12_139 = arith.constant 12 : index
    %146 = vector.load %arg3[%c2_137, %c0_138, %c12_139] : memref<4x4x37xf32, #tpu.memory_space<vmem>>, vector<1x4x4xf32>
    %147 = vector.shape_cast %146 : vector<1x4x4xf32> to vector<4x4xf32>
    %c0_140 = arith.constant 0 : index
    %c16_141 = arith.constant 16 : index
    %148 = vector.load %arg5[%c0_140, %c16_141] : memref<4x256xf32, #tpu.memory_space<vmem>>, vector<4x128xf32>
    %cst_142 = arith.constant dense<0.000000e+00> : vector<4x128xf32>
    %149 = tpu.matmul %147, %148, %cst_142 {dimension_numbers = #tpu.dot_dimension_numbers<[1], [0], [0], [1], [0, 0, 1, 1], [], []>} : vector<4x4xf32>, vector<4x128xf32>, vector<4x128xf32> -> vector<4x128xf32>
    %150 = arith.addf %145, %149 : vector<4x128xf32>
    %c2_143 = arith.constant 2 : index
    %c0_144 = arith.constant 0 : index
    %c16_145 = arith.constant 16 : index
    %151 = vector.load %arg3[%c2_143, %c0_144, %c16_145] : memref<4x4x37xf32, #tpu.memory_space<vmem>>, vector<1x4x4xf32>
    %152 = vector.shape_cast %151 : vector<1x4x4xf32> to vector<4x4xf32>
    %c0_146 = arith.constant 0 : index
    %c17_147 = arith.constant 17 : index
    %153 = vector.load %arg5[%c0_146, %c17_147] : memref<4x256xf32, #tpu.memory_space<vmem>>, vector<4x128xf32>
    %cst_148 = arith.constant dense<0.000000e+00> : vector<4x128xf32>
    %154 = tpu.matmul %152, %153, %cst_148 {dimension_numbers = #tpu.dot_dimension_numbers<[1], [0], [0], [1], [0, 0, 1, 1], [], []>} : vector<4x4xf32>, vector<4x128xf32>, vector<4x128xf32> -> vector<4x128xf32>
    %155 = arith.addf %150, %154 : vector<4x128xf32>
    %c2_149 = arith.constant 2 : index
    %c0_150 = arith.constant 0 : index
    %c20_151 = arith.constant 20 : index
    %156 = vector.load %arg3[%c2_149, %c0_150, %c20_151] : memref<4x4x37xf32, #tpu.memory_space<vmem>>, vector<1x4x4xf32>
    %157 = vector.shape_cast %156 : vector<1x4x4xf32> to vector<4x4xf32>
    %c0_152 = arith.constant 0 : index
    %c18_153 = arith.constant 18 : index
    %158 = vector.load %arg5[%c0_152, %c18_153] : memref<4x256xf32, #tpu.memory_space<vmem>>, vector<4x128xf32>
    %cst_154 = arith.constant dense<0.000000e+00> : vector<4x128xf32>
    %159 = tpu.matmul %157, %158, %cst_154 {dimension_numbers = #tpu.dot_dimension_numbers<[1], [0], [0], [1], [0, 0, 1, 1], [], []>} : vector<4x4xf32>, vector<4x128xf32>, vector<4x128xf32> -> vector<4x128xf32>
    %160 = arith.addf %155, %159 : vector<4x128xf32>
    %c2_155 = arith.constant 2 : index
    %c0_156 = arith.constant 0 : index
    %c24_157 = arith.constant 24 : index
    %161 = vector.load %arg3[%c2_155, %c0_156, %c24_157] : memref<4x4x37xf32, #tpu.memory_space<vmem>>, vector<1x4x4xf32>
    %162 = vector.shape_cast %161 : vector<1x4x4xf32> to vector<4x4xf32>
    %c0_158 = arith.constant 0 : index
    %c32_159 = arith.constant 32 : index
    %163 = vector.load %arg5[%c0_158, %c32_159] : memref<4x256xf32, #tpu.memory_space<vmem>>, vector<4x128xf32>
    %cst_160 = arith.constant dense<0.000000e+00> : vector<4x128xf32>
    %164 = tpu.matmul %162, %163, %cst_160 {dimension_numbers = #tpu.dot_dimension_numbers<[1], [0], [0], [1], [0, 0, 1, 1], [], []>} : vector<4x4xf32>, vector<4x128xf32>, vector<4x128xf32> -> vector<4x128xf32>
    %165 = arith.addf %160, %164 : vector<4x128xf32>
    %c2_161 = arith.constant 2 : index
    %c0_162 = arith.constant 0 : index
    %c28_163 = arith.constant 28 : index
    %166 = vector.load %arg3[%c2_161, %c0_162, %c28_163] : memref<4x4x37xf32, #tpu.memory_space<vmem>>, vector<1x4x4xf32>
    %167 = vector.shape_cast %166 : vector<1x4x4xf32> to vector<4x4xf32>
    %c0_164 = arith.constant 0 : index
    %c33_165 = arith.constant 33 : index
    %168 = vector.load %arg5[%c0_164, %c33_165] : memref<4x256xf32, #tpu.memory_space<vmem>>, vector<4x128xf32>
    %cst_166 = arith.constant dense<0.000000e+00> : vector<4x128xf32>
    %169 = tpu.matmul %167, %168, %cst_166 {dimension_numbers = #tpu.dot_dimension_numbers<[1], [0], [0], [1], [0, 0, 1, 1], [], []>} : vector<4x4xf32>, vector<4x128xf32>, vector<4x128xf32> -> vector<4x128xf32>
    %170 = arith.addf %165, %169 : vector<4x128xf32>
    %c2_167 = arith.constant 2 : index
    %c0_168 = arith.constant 0 : index
    %c32_169 = arith.constant 32 : index
    %171 = vector.load %arg3[%c2_167, %c0_168, %c32_169] : memref<4x4x37xf32, #tpu.memory_space<vmem>>, vector<1x4x4xf32>
    %172 = vector.shape_cast %171 : vector<1x4x4xf32> to vector<4x4xf32>
    %c0_170 = arith.constant 0 : index
    %c34_171 = arith.constant 34 : index
    %173 = vector.load %arg5[%c0_170, %c34_171] : memref<4x256xf32, #tpu.memory_space<vmem>>, vector<4x128xf32>
    %cst_172 = arith.constant dense<0.000000e+00> : vector<4x128xf32>
    %174 = tpu.matmul %172, %173, %cst_172 {dimension_numbers = #tpu.dot_dimension_numbers<[1], [0], [0], [1], [0, 0, 1, 1], [], []>} : vector<4x4xf32>, vector<4x128xf32>, vector<4x128xf32> -> vector<4x128xf32>
    %175 = arith.addf %170, %174 : vector<4x128xf32>
    %c2_173 = arith.constant 2 : index
    %c0_174 = arith.constant 0 : index
    %c36_175 = arith.constant 36 : index
    %176 = vector.load %arg3[%c2_173, %c0_174, %c36_175] : memref<4x4x37xf32, #tpu.memory_space<vmem>>, vector<1x4x1xf32>
    %177 = vector.shape_cast %176 : vector<1x4x1xf32> to vector<4x1xf32>
    %178 = vector.broadcast %177 : vector<4x1xf32> to vector<4x128xf32>
    %179 = arith.addf %175, %178 : vector<4x128xf32>
    %cst_176 = arith.constant 0.000000e+00 : f32
    %180 = vector.broadcast %cst_176 : f32 to vector<4x128xf32>
    %181 = arith.maximumf %179, %180 : vector<4x128xf32>
    %cst_177 = arith.constant 0.000000e+00 : f32
    %182 = vector.broadcast %cst_177 : f32 to vector<4x128xf32>
    %183 = arith.select %4, %181, %182 : vector<4x128xi1>, vector<4x128xf32>
    %c0_178 = arith.constant 0 : index
    %c17_179 = arith.constant 17 : index
    %184 = vector.load %arg5[%c0_178, %c17_179] : memref<4x256xf32, #tpu.memory_space<vmem>>, vector<4x128xf32>
    tpu.vector_store %arg5[%c0_178, %c17_179], %183 {strides = array<i32>} : memref<4x256xf32, #tpu.memory_space<vmem>>, vector<4x128xf32>,
    %cst_180 = arith.constant 0.000000e+00 : f32
    %185 = vector.broadcast %cst_180 : f32 to vector<4x128xf32>
    %c3 = arith.constant 3 : index
    %c0_181 = arith.constant 0 : index
    %c0_182 = arith.constant 0 : index
    %186 = vector.load %arg3[%c3, %c0_181, %c0_182] : memref<4x4x37xf32, #tpu.memory_space<vmem>>, vector<1x4x4xf32>
    %187 = vector.shape_cast %186 : vector<1x4x4xf32> to vector<4x4xf32>
    %c0_183 = arith.constant 0 : index
    %c0_184 = arith.constant 0 : index
    %188 = vector.load %arg5[%c0_183, %c0_184] : memref<4x256xf32, #tpu.memory_space<vmem>>, vector<4x128xf32>
    %cst_185 = arith.constant dense<0.000000e+00> : vector<4x128xf32>
    %189 = tpu.matmul %187, %188, %cst_185 {dimension_numbers = #tpu.dot_dimension_numbers<[1], [0], [0], [1], [0, 0, 1, 1], [], []>} : vector<4x4xf32>, vector<4x128xf32>, vector<4x128xf32> -> vector<4x128xf32>
    %190 = arith.addf %185, %189 : vector<4x128xf32>
    %c3_186 = arith.constant 3 : index
    %c0_187 = arith.constant 0 : index
    %c4_188 = arith.constant 4 : index
    %191 = vector.load %arg3[%c3_186, %c0_187, %c4_188] : memref<4x4x37xf32, #tpu.memory_space<vmem>>, vector<1x4x4xf32>
    %192 = vector.shape_cast %191 : vector<1x4x4xf32> to vector<4x4xf32>
    %c0_189 = arith.constant 0 : index
    %c1_190 = arith.constant 1 : index
    %193 = vector.load %arg5[%c0_189, %c1_190] : memref<4x256xf32, #tpu.memory_space<vmem>>, vector<4x128xf32>
    %cst_191 = arith.constant dense<0.000000e+00> : vector<4x128xf32>
    %194 = tpu.matmul %192, %193, %cst_191 {dimension_numbers = #tpu.dot_dimension_numbers<[1], [0], [0], [1], [0, 0, 1, 1], [], []>} : vector<4x4xf32>, vector<4x128xf32>, vector<4x128xf32> -> vector<4x128xf32>
    %195 = arith.addf %190, %194 : vector<4x128xf32>
    %c3_192 = arith.constant 3 : index
    %c0_193 = arith.constant 0 : index
    %c8_194 = arith.constant 8 : index
    %196 = vector.load %arg3[%c3_192, %c0_193, %c8_194] : memref<4x4x37xf32, #tpu.memory_space<vmem>>, vector<1x4x4xf32>
    %197 = vector.shape_cast %196 : vector<1x4x4xf32> to vector<4x4xf32>
    %c0_195 = arith.constant 0 : index
    %c2_196 = arith.constant 2 : index
    %198 = vector.load %arg5[%c0_195, %c2_196] : memref<4x256xf32, #tpu.memory_space<vmem>>, vector<4x128xf32>
    %cst_197 = arith.constant dense<0.000000e+00> : vector<4x128xf32>
    %199 = tpu.matmul %197, %198, %cst_197 {dimension_numbers = #tpu.dot_dimension_numbers<[1], [0], [0], [1], [0, 0, 1, 1], [], []>} : vector<4x4xf32>, vector<4x128xf32>, vector<4x128xf32> -> vector<4x128xf32>
    %200 = arith.addf %195, %199 : vector<4x128xf32>
    %c3_198 = arith.constant 3 : index
    %c0_199 = arith.constant 0 : index
    %c12_200 = arith.constant 12 : index
    %201 = vector.load %arg3[%c3_198, %c0_199, %c12_200] : memref<4x4x37xf32, #tpu.memory_space<vmem>>, vector<1x4x4xf32>
    %202 = vector.shape_cast %201 : vector<1x4x4xf32> to vector<4x4xf32>
    %c0_201 = arith.constant 0 : index
    %c16_202 = arith.constant 16 : index
    %203 = vector.load %arg5[%c0_201, %c16_202] : memref<4x256xf32, #tpu.memory_space<vmem>>, vector<4x128xf32>
    %cst_203 = arith.constant dense<0.000000e+00> : vector<4x128xf32>
    %204 = tpu.matmul %202, %203, %cst_203 {dimension_numbers = #tpu.dot_dimension_numbers<[1], [0], [0], [1], [0, 0, 1, 1], [], []>} : vector<4x4xf32>, vector<4x128xf32>, vector<4x128xf32> -> vector<4x128xf32>
    %205 = arith.addf %200, %204 : vector<4x128xf32>
    %c3_204 = arith.constant 3 : index
    %c0_205 = arith.constant 0 : index
    %c16_206 = arith.constant 16 : index
    %206 = vector.load %arg3[%c3_204, %c0_205, %c16_206] : memref<4x4x37xf32, #tpu.memory_space<vmem>>, vector<1x4x4xf32>
    %207 = vector.shape_cast %206 : vector<1x4x4xf32> to vector<4x4xf32>
    %c0_207 = arith.constant 0 : index
    %c17_208 = arith.constant 17 : index
    %208 = vector.load %arg5[%c0_207, %c17_208] : memref<4x256xf32, #tpu.memory_space<vmem>>, vector<4x128xf32>
    %cst_209 = arith.constant dense<0.000000e+00> : vector<4x128xf32>
    %209 = tpu.matmul %207, %208, %cst_209 {dimension_numbers = #tpu.dot_dimension_numbers<[1], [0], [0], [1], [0, 0, 1, 1], [], []>} : vector<4x4xf32>, vector<4x128xf32>, vector<4x128xf32> -> vector<4x128xf32>
    %210 = arith.addf %205, %209 : vector<4x128xf32>
    %c3_210 = arith.constant 3 : index
    %c0_211 = arith.constant 0 : index
    %c20_212 = arith.constant 20 : index
    %211 = vector.load %arg3[%c3_210, %c0_211, %c20_212] : memref<4x4x37xf32, #tpu.memory_space<vmem>>, vector<1x4x4xf32>
    %212 = vector.shape_cast %211 : vector<1x4x4xf32> to vector<4x4xf32>
    %c0_213 = arith.constant 0 : index
    %c18_214 = arith.constant 18 : index
    %213 = vector.load %arg5[%c0_213, %c18_214] : memref<4x256xf32, #tpu.memory_space<vmem>>, vector<4x128xf32>
    %cst_215 = arith.constant dense<0.000000e+00> : vector<4x128xf32>
    %214 = tpu.matmul %212, %213, %cst_215 {dimension_numbers = #tpu.dot_dimension_numbers<[1], [0], [0], [1], [0, 0, 1, 1], [], []>} : vector<4x4xf32>, vector<4x128xf32>, vector<4x128xf32> -> vector<4x128xf32>
    %215 = arith.addf %210, %214 : vector<4x128xf32>
    %c3_216 = arith.constant 3 : index
    %c0_217 = arith.constant 0 : index
    %c24_218 = arith.constant 24 : index
    %216 = vector.load %arg3[%c3_216, %c0_217, %c24_218] : memref<4x4x37xf32, #tpu.memory_space<vmem>>, vector<1x4x4xf32>
    %217 = vector.shape_cast %216 : vector<1x4x4xf32> to vector<4x4xf32>
    %c0_219 = arith.constant 0 : index
    %c32_220 = arith.constant 32 : index
    %218 = vector.load %arg5[%c0_219, %c32_220] : memref<4x256xf32, #tpu.memory_space<vmem>>, vector<4x128xf32>
    %cst_221 = arith.constant dense<0.000000e+00> : vector<4x128xf32>
    %219 = tpu.matmul %217, %218, %cst_221 {dimension_numbers = #tpu.dot_dimension_numbers<[1], [0], [0], [1], [0, 0, 1, 1], [], []>} : vector<4x4xf32>, vector<4x128xf32>, vector<4x128xf32> -> vector<4x128xf32>
    %220 = arith.addf %215, %219 : vector<4x128xf32>
    %c3_222 = arith.constant 3 : index
    %c0_223 = arith.constant 0 : index
    %c28_224 = arith.constant 28 : index
    %221 = vector.load %arg3[%c3_222, %c0_223, %c28_224] : memref<4x4x37xf32, #tpu.memory_space<vmem>>, vector<1x4x4xf32>
    %222 = vector.shape_cast %221 : vector<1x4x4xf32> to vector<4x4xf32>
    %c0_225 = arith.constant 0 : index
    %c33_226 = arith.constant 33 : index
    %223 = vector.load %arg5[%c0_225, %c33_226] : memref<4x256xf32, #tpu.memory_space<vmem>>, vector<4x128xf32>
    %cst_227 = arith.constant dense<0.000000e+00> : vector<4x128xf32>
    %224 = tpu.matmul %222, %223, %cst_227 {dimension_numbers = #tpu.dot_dimension_numbers<[1], [0], [0], [1], [0, 0, 1, 1], [], []>} : vector<4x4xf32>, vector<4x128xf32>, vector<4x128xf32> -> vector<4x128xf32>
    %225 = arith.addf %220, %224 : vector<4x128xf32>
    %c3_228 = arith.constant 3 : index
    %c0_229 = arith.constant 0 : index
    %c32_230 = arith.constant 32 : index
    %226 = vector.load %arg3[%c3_228, %c0_229, %c32_230] : memref<4x4x37xf32, #tpu.memory_space<vmem>>, vector<1x4x4xf32>
    %227 = vector.shape_cast %226 : vector<1x4x4xf32> to vector<4x4xf32>
    %c0_231 = arith.constant 0 : index
    %c34_232 = arith.constant 34 : index
    %228 = vector.load %arg5[%c0_231, %c34_232] : memref<4x256xf32, #tpu.memory_space<vmem>>, vector<4x128xf32>
    %cst_233 = arith.constant dense<0.000000e+00> : vector<4x128xf32>
    %229 = tpu.matmul %227, %228, %cst_233 {dimension_numbers = #tpu.dot_dimension_numbers<[1], [0], [0], [1], [0, 0, 1, 1], [], []>} : vector<4x4xf32>, vector<4x128xf32>, vector<4x128xf32> -> vector<4x128xf32>
    %230 = arith.addf %225, %229 : vector<4x128xf32>
    %c3_234 = arith.constant 3 : index
    %c0_235 = arith.constant 0 : index
    %c36_236 = arith.constant 36 : index
    %231 = vector.load %arg3[%c3_234, %c0_235, %c36_236] : memref<4x4x37xf32, #tpu.memory_space<vmem>>, vector<1x4x1xf32>
    %232 = vector.shape_cast %231 : vector<1x4x1xf32> to vector<4x1xf32>
    %233 = vector.broadcast %232 : vector<4x1xf32> to vector<4x128xf32>
    %234 = arith.addf %230, %233 : vector<4x128xf32>
    %235 = arith.addf %126, %234 : vector<4x128xf32>
    %c0_237 = arith.constant 0 : index
    %c0_238 = arith.constant 0 : index
    %c0_239 = arith.constant 0 : index
    %236 = vector.load %arg4[%c0_237, %c0_238, %c0_239] : memref<2x4x128xf32, #tpu.memory_space<vmem>>, vector<1x4x128xf32>
    %237 = vector.shape_cast %236 : vector<1x4x128xf32> to vector<4x128xf32>
    %238 = vector.shape_cast %235 : vector<4x128xf32> to vector<1x4x128xf32>
    tpu.vector_store %arg4[%c0_237, %c0_238, %c0_239], %238 {strides = array<i32>} : memref<2x4x128xf32, #tpu.memory_space<vmem>>, vector<1x4x128xf32>,
    %c1_240 = arith.constant 1 : index
    %c0_241 = arith.constant 0 : index
    %c0_242 = arith.constant 0 : index
    %239 = vector.load %arg1[%c1_240, %c0_241, %c0_242] : memref<2x4x256xf32, #tpu.memory_space<vmem>>, vector<1x4x256xf32>
    %240 = vector.shape_cast %239 : vector<1x4x256xf32> to vector<4x256xf32>
    %c0_243 = arith.constant 0 : index
    %c0_244 = arith.constant 0 : index
    %241 = vector.load %arg2[%c0_243, %c0_244] : memref<256x512xf32, #tpu.memory_space<vmem>>, vector<256x512xf32>
    %cst_245 = arith.constant dense<0.000000e+00> : vector<4x512xf32>
    %242 = tpu.matmul %240, %241, %cst_245 {dimension_numbers = #tpu.dot_dimension_numbers<[1], [0], [0], [1], [0, 0, 1, 1], [], []>} : vector<4x256xf32>, vector<256x512xf32>, vector<4x512xf32> -> vector<4x512xf32>
    %243 = vector.extract_strided_slice %242 {offsets = [0, 0], sizes = [4, 128], strides = [1, 1]} : vector<4x512xf32> to vector<4x128xf32>
    %244 = vector.extract_strided_slice %242 {offsets = [0, 128], sizes = [4, 128], strides = [1, 1]} : vector<4x512xf32> to vector<4x128xf32>
    %245 = arith.maximumf %243, %244 : vector<4x128xf32>
    %246 = vector.extract_strided_slice %242 {offsets = [0, 256], sizes = [4, 128], strides = [1, 1]} : vector<4x512xf32> to vector<4x128xf32>
    %247 = vector.extract_strided_slice %242 {offsets = [0, 384], sizes = [4, 128], strides = [1, 1]} : vector<4x512xf32> to vector<4x128xf32>
    %248 = arith.maximumf %246, %247 : vector<4x128xf32>
    %249 = arith.maximumf %245, %248 : vector<4x128xf32>
    %cst_246 = arith.constant 0.000000e+00 : f32
    %250 = vector.broadcast %cst_246 : f32 to vector<4x128xf32>
    %251 = arith.select %4, %249, %250 : vector<4x128xi1>, vector<4x128xf32>
    %c0_247 = arith.constant 0 : index
    %c17_248 = arith.constant 17 : index
    %252 = vector.load %arg5[%c0_247, %c17_248] : memref<4x256xf32, #tpu.memory_space<vmem>>, vector<4x128xf32>
    tpu.vector_store %arg5[%c0_247, %c17_248], %251 {strides = array<i32>} : memref<4x256xf32, #tpu.memory_space<vmem>>, vector<4x128xf32>,
    %cst_249 = arith.constant 0.000000e+00 : f32
    %253 = vector.broadcast %cst_249 : f32 to vector<4x128xf32>
    %c0_250 = arith.constant 0 : index
    %c0_251 = arith.constant 0 : index
    %c0_252 = arith.constant 0 : index
    %254 = vector.load %arg3[%c0_250, %c0_251, %c0_252] : memref<4x4x37xf32, #tpu.memory_space<vmem>>, vector<1x4x4xf32>
    %255 = vector.shape_cast %254 : vector<1x4x4xf32> to vector<4x4xf32>
    %c0_253 = arith.constant 0 : index
    %c0_254 = arith.constant 0 : index
    %256 = vector.load %arg5[%c0_253, %c0_254] : memref<4x256xf32, #tpu.memory_space<vmem>>, vector<4x128xf32>
    %cst_255 = arith.constant dense<0.000000e+00> : vector<4x128xf32>
    %257 = tpu.matmul %255, %256, %cst_255 {dimension_numbers = #tpu.dot_dimension_numbers<[1], [0], [0], [1], [0, 0, 1, 1], [], []>} : vector<4x4xf32>, vector<4x128xf32>, vector<4x128xf32> -> vector<4x128xf32>
    %258 = arith.addf %253, %257 : vector<4x128xf32>
    %c0_256 = arith.constant 0 : index
    %c0_257 = arith.constant 0 : index
    %c4_258 = arith.constant 4 : index
    %259 = vector.load %arg3[%c0_256, %c0_257, %c4_258] : memref<4x4x37xf32, #tpu.memory_space<vmem>>, vector<1x4x4xf32>
    %260 = vector.shape_cast %259 : vector<1x4x4xf32> to vector<4x4xf32>
    %c0_259 = arith.constant 0 : index
    %c1_260 = arith.constant 1 : index
    %261 = vector.load %arg5[%c0_259, %c1_260] : memref<4x256xf32, #tpu.memory_space<vmem>>, vector<4x128xf32>
    %cst_261 = arith.constant dense<0.000000e+00> : vector<4x128xf32>
    %262 = tpu.matmul %260, %261, %cst_261 {dimension_numbers = #tpu.dot_dimension_numbers<[1], [0], [0], [1], [0, 0, 1, 1], [], []>} : vector<4x4xf32>, vector<4x128xf32>, vector<4x128xf32> -> vector<4x128xf32>
    %263 = arith.addf %258, %262 : vector<4x128xf32>
    %c0_262 = arith.constant 0 : index
    %c0_263 = arith.constant 0 : index
    %c8_264 = arith.constant 8 : index
    %264 = vector.load %arg3[%c0_262, %c0_263, %c8_264] : memref<4x4x37xf32, #tpu.memory_space<vmem>>, vector<1x4x4xf32>
    %265 = vector.shape_cast %264 : vector<1x4x4xf32> to vector<4x4xf32>
    %c0_265 = arith.constant 0 : index
    %c2_266 = arith.constant 2 : index
    %266 = vector.load %arg5[%c0_265, %c2_266] : memref<4x256xf32, #tpu.memory_space<vmem>>, vector<4x128xf32>
    %cst_267 = arith.constant dense<0.000000e+00> : vector<4x128xf32>
    %267 = tpu.matmul %265, %266, %cst_267 {dimension_numbers = #tpu.dot_dimension_numbers<[1], [0], [0], [1], [0, 0, 1, 1], [], []>} : vector<4x4xf32>, vector<4x128xf32>, vector<4x128xf32> -> vector<4x128xf32>
    %268 = arith.addf %263, %267 : vector<4x128xf32>
    %c0_268 = arith.constant 0 : index
    %c0_269 = arith.constant 0 : index
    %c12_270 = arith.constant 12 : index
    %269 = vector.load %arg3[%c0_268, %c0_269, %c12_270] : memref<4x4x37xf32, #tpu.memory_space<vmem>>, vector<1x4x4xf32>
    %270 = vector.shape_cast %269 : vector<1x4x4xf32> to vector<4x4xf32>
    %c0_271 = arith.constant 0 : index
    %c16_272 = arith.constant 16 : index
    %271 = vector.load %arg5[%c0_271, %c16_272] : memref<4x256xf32, #tpu.memory_space<vmem>>, vector<4x128xf32>
    %cst_273 = arith.constant dense<0.000000e+00> : vector<4x128xf32>
    %272 = tpu.matmul %270, %271, %cst_273 {dimension_numbers = #tpu.dot_dimension_numbers<[1], [0], [0], [1], [0, 0, 1, 1], [], []>} : vector<4x4xf32>, vector<4x128xf32>, vector<4x128xf32> -> vector<4x128xf32>
    %273 = arith.addf %268, %272 : vector<4x128xf32>
    %c0_274 = arith.constant 0 : index
    %c0_275 = arith.constant 0 : index
    %c16_276 = arith.constant 16 : index
    %274 = vector.load %arg3[%c0_274, %c0_275, %c16_276] : memref<4x4x37xf32, #tpu.memory_space<vmem>>, vector<1x4x4xf32>
    %275 = vector.shape_cast %274 : vector<1x4x4xf32> to vector<4x4xf32>
    %c0_277 = arith.constant 0 : index
    %c17_278 = arith.constant 17 : index
    %276 = vector.load %arg5[%c0_277, %c17_278] : memref<4x256xf32, #tpu.memory_space<vmem>>, vector<4x128xf32>
    %cst_279 = arith.constant dense<0.000000e+00> : vector<4x128xf32>
    %277 = tpu.matmul %275, %276, %cst_279 {dimension_numbers = #tpu.dot_dimension_numbers<[1], [0], [0], [1], [0, 0, 1, 1], [], []>} : vector<4x4xf32>, vector<4x128xf32>, vector<4x128xf32> -> vector<4x128xf32>
    %278 = arith.addf %273, %277 : vector<4x128xf32>
    %c0_280 = arith.constant 0 : index
    %c0_281 = arith.constant 0 : index
    %c20_282 = arith.constant 20 : index
    %279 = vector.load %arg3[%c0_280, %c0_281, %c20_282] : memref<4x4x37xf32, #tpu.memory_space<vmem>>, vector<1x4x4xf32>
    %280 = vector.shape_cast %279 : vector<1x4x4xf32> to vector<4x4xf32>
    %c0_283 = arith.constant 0 : index
    %c18_284 = arith.constant 18 : index
    %281 = vector.load %arg5[%c0_283, %c18_284] : memref<4x256xf32, #tpu.memory_space<vmem>>, vector<4x128xf32>
    %cst_285 = arith.constant dense<0.000000e+00> : vector<4x128xf32>
    %282 = tpu.matmul %280, %281, %cst_285 {dimension_numbers = #tpu.dot_dimension_numbers<[1], [0], [0], [1], [0, 0, 1, 1], [], []>} : vector<4x4xf32>, vector<4x128xf32>, vector<4x128xf32> -> vector<4x128xf32>
    %283 = arith.addf %278, %282 : vector<4x128xf32>
    %c0_286 = arith.constant 0 : index
    %c0_287 = arith.constant 0 : index
    %c24_288 = arith.constant 24 : index
    %284 = vector.load %arg3[%c0_286, %c0_287, %c24_288] : memref<4x4x37xf32, #tpu.memory_space<vmem>>, vector<1x4x4xf32>
    %285 = vector.shape_cast %284 : vector<1x4x4xf32> to vector<4x4xf32>
    %c0_289 = arith.constant 0 : index
    %c32_290 = arith.constant 32 : index
    %286 = vector.load %arg5[%c0_289, %c32_290] : memref<4x256xf32, #tpu.memory_space<vmem>>, vector<4x128xf32>
    %cst_291 = arith.constant dense<0.000000e+00> : vector<4x128xf32>
    %287 = tpu.matmul %285, %286, %cst_291 {dimension_numbers = #tpu.dot_dimension_numbers<[1], [0], [0], [1], [0, 0, 1, 1], [], []>} : vector<4x4xf32>, vector<4x128xf32>, vector<4x128xf32> -> vector<4x128xf32>
    %288 = arith.addf %283, %287 : vector<4x128xf32>
    %c0_292 = arith.constant 0 : index
    %c0_293 = arith.constant 0 : index
    %c28_294 = arith.constant 28 : index
    %289 = vector.load %arg3[%c0_292, %c0_293, %c28_294] : memref<4x4x37xf32, #tpu.memory_space<vmem>>, vector<1x4x4xf32>
    %290 = vector.shape_cast %289 : vector<1x4x4xf32> to vector<4x4xf32>
    %c0_295 = arith.constant 0 : index
    %c33_296 = arith.constant 33 : index
    %291 = vector.load %arg5[%c0_295, %c33_296] : memref<4x256xf32, #tpu.memory_space<vmem>>, vector<4x128xf32>
    %cst_297 = arith.constant dense<0.000000e+00> : vector<4x128xf32>
    %292 = tpu.matmul %290, %291, %cst_297 {dimension_numbers = #tpu.dot_dimension_numbers<[1], [0], [0], [1], [0, 0, 1, 1], [], []>} : vector<4x4xf32>, vector<4x128xf32>, vector<4x128xf32> -> vector<4x128xf32>
    %293 = arith.addf %288, %292 : vector<4x128xf32>
    %c0_298 = arith.constant 0 : index
    %c0_299 = arith.constant 0 : index
    %c32_300 = arith.constant 32 : index
    %294 = vector.load %arg3[%c0_298, %c0_299, %c32_300] : memref<4x4x37xf32, #tpu.memory_space<vmem>>, vector<1x4x4xf32>
    %295 = vector.shape_cast %294 : vector<1x4x4xf32> to vector<4x4xf32>
    %c0_301 = arith.constant 0 : index
    %c34_302 = arith.constant 34 : index
    %296 = vector.load %arg5[%c0_301, %c34_302] : memref<4x256xf32, #tpu.memory_space<vmem>>, vector<4x128xf32>
    %cst_303 = arith.constant dense<0.000000e+00> : vector<4x128xf32>
    %297 = tpu.matmul %295, %296, %cst_303 {dimension_numbers = #tpu.dot_dimension_numbers<[1], [0], [0], [1], [0, 0, 1, 1], [], []>} : vector<4x4xf32>, vector<4x128xf32>, vector<4x128xf32> -> vector<4x128xf32>
    %298 = arith.addf %293, %297 : vector<4x128xf32>
    %c0_304 = arith.constant 0 : index
    %c0_305 = arith.constant 0 : index
    %c36_306 = arith.constant 36 : index
    %299 = vector.load %arg3[%c0_304, %c0_305, %c36_306] : memref<4x4x37xf32, #tpu.memory_space<vmem>>, vector<1x4x1xf32>
    %300 = vector.shape_cast %299 : vector<1x4x1xf32> to vector<4x1xf32>
    %301 = vector.broadcast %300 : vector<4x1xf32> to vector<4x128xf32>
    %302 = arith.addf %298, %301 : vector<4x128xf32>
    %cst_307 = arith.constant 0.000000e+00 : f32
    %303 = vector.broadcast %cst_307 : f32 to vector<4x128xf32>
    %304 = arith.maximumf %302, %303 : vector<4x128xf32>
    %cst_308 = arith.constant 0.000000e+00 : f32
    %305 = vector.broadcast %cst_308 : f32 to vector<4x128xf32>
    %306 = arith.select %4, %304, %305 : vector<4x128xi1>, vector<4x128xf32>
    %c0_309 = arith.constant 0 : index
    %c17_310 = arith.constant 17 : index
    %307 = vector.load %arg5[%c0_309, %c17_310] : memref<4x256xf32, #tpu.memory_space<vmem>>, vector<4x128xf32>
    tpu.vector_store %arg5[%c0_309, %c17_310], %306 {strides = array<i32>} : memref<4x256xf32, #tpu.memory_space<vmem>>, vector<4x128xf32>,
    %cst_311 = arith.constant 0.000000e+00 : f32
    %308 = vector.broadcast %cst_311 : f32 to vector<4x128xf32>
    %c1_312 = arith.constant 1 : index
    %c0_313 = arith.constant 0 : index
    %c0_314 = arith.constant 0 : index
    %309 = vector.load %arg3[%c1_312, %c0_313, %c0_314] : memref<4x4x37xf32, #tpu.memory_space<vmem>>, vector<1x4x4xf32>
    %310 = vector.shape_cast %309 : vector<1x4x4xf32> to vector<4x4xf32>
    %c0_315 = arith.constant 0 : index
    %c0_316 = arith.constant 0 : index
    %311 = vector.load %arg5[%c0_315, %c0_316] : memref<4x256xf32, #tpu.memory_space<vmem>>, vector<4x128xf32>
    %cst_317 = arith.constant dense<0.000000e+00> : vector<4x128xf32>
    %312 = tpu.matmul %310, %311, %cst_317 {dimension_numbers = #tpu.dot_dimension_numbers<[1], [0], [0], [1], [0, 0, 1, 1], [], []>} : vector<4x4xf32>, vector<4x128xf32>, vector<4x128xf32> -> vector<4x128xf32>
    %313 = arith.addf %308, %312 : vector<4x128xf32>
    %c1_318 = arith.constant 1 : index
    %c0_319 = arith.constant 0 : index
    %c4_320 = arith.constant 4 : index
    %314 = vector.load %arg3[%c1_318, %c0_319, %c4_320] : memref<4x4x37xf32, #tpu.memory_space<vmem>>, vector<1x4x4xf32>
    %315 = vector.shape_cast %314 : vector<1x4x4xf32> to vector<4x4xf32>
    %c0_321 = arith.constant 0 : index
    %c1_322 = arith.constant 1 : index
    %316 = vector.load %arg5[%c0_321, %c1_322] : memref<4x256xf32, #tpu.memory_space<vmem>>, vector<4x128xf32>
    %cst_323 = arith.constant dense<0.000000e+00> : vector<4x128xf32>
    %317 = tpu.matmul %315, %316, %cst_323 {dimension_numbers = #tpu.dot_dimension_numbers<[1], [0], [0], [1], [0, 0, 1, 1], [], []>} : vector<4x4xf32>, vector<4x128xf32>, vector<4x128xf32> -> vector<4x128xf32>
    %318 = arith.addf %313, %317 : vector<4x128xf32>
    %c1_324 = arith.constant 1 : index
    %c0_325 = arith.constant 0 : index
    %c8_326 = arith.constant 8 : index
    %319 = vector.load %arg3[%c1_324, %c0_325, %c8_326] : memref<4x4x37xf32, #tpu.memory_space<vmem>>, vector<1x4x4xf32>
    %320 = vector.shape_cast %319 : vector<1x4x4xf32> to vector<4x4xf32>
    %c0_327 = arith.constant 0 : index
    %c2_328 = arith.constant 2 : index
    %321 = vector.load %arg5[%c0_327, %c2_328] : memref<4x256xf32, #tpu.memory_space<vmem>>, vector<4x128xf32>
    %cst_329 = arith.constant dense<0.000000e+00> : vector<4x128xf32>
    %322 = tpu.matmul %320, %321, %cst_329 {dimension_numbers = #tpu.dot_dimension_numbers<[1], [0], [0], [1], [0, 0, 1, 1], [], []>} : vector<4x4xf32>, vector<4x128xf32>, vector<4x128xf32> -> vector<4x128xf32>
    %323 = arith.addf %318, %322 : vector<4x128xf32>
    %c1_330 = arith.constant 1 : index
    %c0_331 = arith.constant 0 : index
    %c12_332 = arith.constant 12 : index
    %324 = vector.load %arg3[%c1_330, %c0_331, %c12_332] : memref<4x4x37xf32, #tpu.memory_space<vmem>>, vector<1x4x4xf32>
    %325 = vector.shape_cast %324 : vector<1x4x4xf32> to vector<4x4xf32>
    %c0_333 = arith.constant 0 : index
    %c16_334 = arith.constant 16 : index
    %326 = vector.load %arg5[%c0_333, %c16_334] : memref<4x256xf32, #tpu.memory_space<vmem>>, vector<4x128xf32>
    %cst_335 = arith.constant dense<0.000000e+00> : vector<4x128xf32>
    %327 = tpu.matmul %325, %326, %cst_335 {dimension_numbers = #tpu.dot_dimension_numbers<[1], [0], [0], [1], [0, 0, 1, 1], [], []>} : vector<4x4xf32>, vector<4x128xf32>, vector<4x128xf32> -> vector<4x128xf32>
    %328 = arith.addf %323, %327 : vector<4x128xf32>
    %c1_336 = arith.constant 1 : index
    %c0_337 = arith.constant 0 : index
    %c16_338 = arith.constant 16 : index
    %329 = vector.load %arg3[%c1_336, %c0_337, %c16_338] : memref<4x4x37xf32, #tpu.memory_space<vmem>>, vector<1x4x4xf32>
    %330 = vector.shape_cast %329 : vector<1x4x4xf32> to vector<4x4xf32>
    %c0_339 = arith.constant 0 : index
    %c17_340 = arith.constant 17 : index
    %331 = vector.load %arg5[%c0_339, %c17_340] : memref<4x256xf32, #tpu.memory_space<vmem>>, vector<4x128xf32>
    %cst_341 = arith.constant dense<0.000000e+00> : vector<4x128xf32>
    %332 = tpu.matmul %330, %331, %cst_341 {dimension_numbers = #tpu.dot_dimension_numbers<[1], [0], [0], [1], [0, 0, 1, 1], [], []>} : vector<4x4xf32>, vector<4x128xf32>, vector<4x128xf32> -> vector<4x128xf32>
    %333 = arith.addf %328, %332 : vector<4x128xf32>
    %c1_342 = arith.constant 1 : index
    %c0_343 = arith.constant 0 : index
    %c20_344 = arith.constant 20 : index
    %334 = vector.load %arg3[%c1_342, %c0_343, %c20_344] : memref<4x4x37xf32, #tpu.memory_space<vmem>>, vector<1x4x4xf32>
    %335 = vector.shape_cast %334 : vector<1x4x4xf32> to vector<4x4xf32>
    %c0_345 = arith.constant 0 : index
    %c18_346 = arith.constant 18 : index
    %336 = vector.load %arg5[%c0_345, %c18_346] : memref<4x256xf32, #tpu.memory_space<vmem>>, vector<4x128xf32>
    %cst_347 = arith.constant dense<0.000000e+00> : vector<4x128xf32>
    %337 = tpu.matmul %335, %336, %cst_347 {dimension_numbers = #tpu.dot_dimension_numbers<[1], [0], [0], [1], [0, 0, 1, 1], [], []>} : vector<4x4xf32>, vector<4x128xf32>, vector<4x128xf32> -> vector<4x128xf32>
    %338 = arith.addf %333, %337 : vector<4x128xf32>
    %c1_348 = arith.constant 1 : index
    %c0_349 = arith.constant 0 : index
    %c24_350 = arith.constant 24 : index
    %339 = vector.load %arg3[%c1_348, %c0_349, %c24_350] : memref<4x4x37xf32, #tpu.memory_space<vmem>>, vector<1x4x4xf32>
    %340 = vector.shape_cast %339 : vector<1x4x4xf32> to vector<4x4xf32>
    %c0_351 = arith.constant 0 : index
    %c32_352 = arith.constant 32 : index
    %341 = vector.load %arg5[%c0_351, %c32_352] : memref<4x256xf32, #tpu.memory_space<vmem>>, vector<4x128xf32>
    %cst_353 = arith.constant dense<0.000000e+00> : vector<4x128xf32>
    %342 = tpu.matmul %340, %341, %cst_353 {dimension_numbers = #tpu.dot_dimension_numbers<[1], [0], [0], [1], [0, 0, 1, 1], [], []>} : vector<4x4xf32>, vector<4x128xf32>, vector<4x128xf32> -> vector<4x128xf32>
    %343 = arith.addf %338, %342 : vector<4x128xf32>
    %c1_354 = arith.constant 1 : index
    %c0_355 = arith.constant 0 : index
    %c28_356 = arith.constant 28 : index
    %344 = vector.load %arg3[%c1_354, %c0_355, %c28_356] : memref<4x4x37xf32, #tpu.memory_space<vmem>>, vector<1x4x4xf32>
    %345 = vector.shape_cast %344 : vector<1x4x4xf32> to vector<4x4xf32>
    %c0_357 = arith.constant 0 : index
    %c33_358 = arith.constant 33 : index
    %346 = vector.load %arg5[%c0_357, %c33_358] : memref<4x256xf32, #tpu.memory_space<vmem>>, vector<4x128xf32>
    %cst_359 = arith.constant dense<0.000000e+00> : vector<4x128xf32>
    %347 = tpu.matmul %345, %346, %cst_359 {dimension_numbers = #tpu.dot_dimension_numbers<[1], [0], [0], [1], [0, 0, 1, 1], [], []>} : vector<4x4xf32>, vector<4x128xf32>, vector<4x128xf32> -> vector<4x128xf32>
    %348 = arith.addf %343, %347 : vector<4x128xf32>
    %c1_360 = arith.constant 1 : index
    %c0_361 = arith.constant 0 : index
    %c32_362 = arith.constant 32 : index
    %349 = vector.load %arg3[%c1_360, %c0_361, %c32_362] : memref<4x4x37xf32, #tpu.memory_space<vmem>>, vector<1x4x4xf32>
    %350 = vector.shape_cast %349 : vector<1x4x4xf32> to vector<4x4xf32>
    %c0_363 = arith.constant 0 : index
    %c34_364 = arith.constant 34 : index
    %351 = vector.load %arg5[%c0_363, %c34_364] : memref<4x256xf32, #tpu.memory_space<vmem>>, vector<4x128xf32>
    %cst_365 = arith.constant dense<0.000000e+00> : vector<4x128xf32>
    %352 = tpu.matmul %350, %351, %cst_365 {dimension_numbers = #tpu.dot_dimension_numbers<[1], [0], [0], [1], [0, 0, 1, 1], [], []>} : vector<4x4xf32>, vector<4x128xf32>, vector<4x128xf32> -> vector<4x128xf32>
    %353 = arith.addf %348, %352 : vector<4x128xf32>
    %c1_366 = arith.constant 1 : index
    %c0_367 = arith.constant 0 : index
    %c36_368 = arith.constant 36 : index
    %354 = vector.load %arg3[%c1_366, %c0_367, %c36_368] : memref<4x4x37xf32, #tpu.memory_space<vmem>>, vector<1x4x1xf32>
    %355 = vector.shape_cast %354 : vector<1x4x1xf32> to vector<4x1xf32>
    %356 = vector.broadcast %355 : vector<4x1xf32> to vector<4x128xf32>
    %357 = arith.addf %353, %356 : vector<4x128xf32>
    %358 = arith.addf %249, %357 : vector<4x128xf32>
    %cst_369 = arith.constant 0.000000e+00 : f32
    %359 = vector.broadcast %cst_369 : f32 to vector<4x128xf32>
    %360 = arith.select %4, %358, %359 : vector<4x128xi1>, vector<4x128xf32>
    %c0_370 = arith.constant 0 : index
    %c17_371 = arith.constant 17 : index
    %361 = vector.load %arg5[%c0_370, %c17_371] : memref<4x256xf32, #tpu.memory_space<vmem>>, vector<4x128xf32>
    tpu.vector_store %arg5[%c0_370, %c17_371], %360 {strides = array<i32>} : memref<4x256xf32, #tpu.memory_space<vmem>>, vector<4x128xf32>,
    %cst_372 = arith.constant 0.000000e+00 : f32
    %362 = vector.broadcast %cst_372 : f32 to vector<4x128xf32>
    %c2_373 = arith.constant 2 : index
    %c0_374 = arith.constant 0 : index
    %c0_375 = arith.constant 0 : index
    %363 = vector.load %arg3[%c2_373, %c0_374, %c0_375] : memref<4x4x37xf32, #tpu.memory_space<vmem>>, vector<1x4x4xf32>
    %364 = vector.shape_cast %363 : vector<1x4x4xf32> to vector<4x4xf32>
    %c0_376 = arith.constant 0 : index
    %c0_377 = arith.constant 0 : index
    %365 = vector.load %arg5[%c0_376, %c0_377] : memref<4x256xf32, #tpu.memory_space<vmem>>, vector<4x128xf32>
    %cst_378 = arith.constant dense<0.000000e+00> : vector<4x128xf32>
    %366 = tpu.matmul %364, %365, %cst_378 {dimension_numbers = #tpu.dot_dimension_numbers<[1], [0], [0], [1], [0, 0, 1, 1], [], []>} : vector<4x4xf32>, vector<4x128xf32>, vector<4x128xf32> -> vector<4x128xf32>
    %367 = arith.addf %362, %366 : vector<4x128xf32>
    %c2_379 = arith.constant 2 : index
    %c0_380 = arith.constant 0 : index
    %c4_381 = arith.constant 4 : index
    %368 = vector.load %arg3[%c2_379, %c0_380, %c4_381] : memref<4x4x37xf32, #tpu.memory_space<vmem>>, vector<1x4x4xf32>
    %369 = vector.shape_cast %368 : vector<1x4x4xf32> to vector<4x4xf32>
    %c0_382 = arith.constant 0 : index
    %c1_383 = arith.constant 1 : index
    %370 = vector.load %arg5[%c0_382, %c1_383] : memref<4x256xf32, #tpu.memory_space<vmem>>, vector<4x128xf32>
    %cst_384 = arith.constant dense<0.000000e+00> : vector<4x128xf32>
    %371 = tpu.matmul %369, %370, %cst_384 {dimension_numbers = #tpu.dot_dimension_numbers<[1], [0], [0], [1], [0, 0, 1, 1], [], []>} : vector<4x4xf32>, vector<4x128xf32>, vector<4x128xf32> -> vector<4x128xf32>
    %372 = arith.addf %367, %371 : vector<4x128xf32>
    %c2_385 = arith.constant 2 : index
    %c0_386 = arith.constant 0 : index
    %c8_387 = arith.constant 8 : index
    %373 = vector.load %arg3[%c2_385, %c0_386, %c8_387] : memref<4x4x37xf32, #tpu.memory_space<vmem>>, vector<1x4x4xf32>
    %374 = vector.shape_cast %373 : vector<1x4x4xf32> to vector<4x4xf32>
    %c0_388 = arith.constant 0 : index
    %c2_389 = arith.constant 2 : index
    %375 = vector.load %arg5[%c0_388, %c2_389] : memref<4x256xf32, #tpu.memory_space<vmem>>, vector<4x128xf32>
    %cst_390 = arith.constant dense<0.000000e+00> : vector<4x128xf32>
    %376 = tpu.matmul %374, %375, %cst_390 {dimension_numbers = #tpu.dot_dimension_numbers<[1], [0], [0], [1], [0, 0, 1, 1], [], []>} : vector<4x4xf32>, vector<4x128xf32>, vector<4x128xf32> -> vector<4x128xf32>
    %377 = arith.addf %372, %376 : vector<4x128xf32>
    %c2_391 = arith.constant 2 : index
    %c0_392 = arith.constant 0 : index
    %c12_393 = arith.constant 12 : index
    %378 = vector.load %arg3[%c2_391, %c0_392, %c12_393] : memref<4x4x37xf32, #tpu.memory_space<vmem>>, vector<1x4x4xf32>
    %379 = vector.shape_cast %378 : vector<1x4x4xf32> to vector<4x4xf32>
    %c0_394 = arith.constant 0 : index
    %c16_395 = arith.constant 16 : index
    %380 = vector.load %arg5[%c0_394, %c16_395] : memref<4x256xf32, #tpu.memory_space<vmem>>, vector<4x128xf32>
    %cst_396 = arith.constant dense<0.000000e+00> : vector<4x128xf32>
    %381 = tpu.matmul %379, %380, %cst_396 {dimension_numbers = #tpu.dot_dimension_numbers<[1], [0], [0], [1], [0, 0, 1, 1], [], []>} : vector<4x4xf32>, vector<4x128xf32>, vector<4x128xf32> -> vector<4x128xf32>
    %382 = arith.addf %377, %381 : vector<4x128xf32>
    %c2_397 = arith.constant 2 : index
    %c0_398 = arith.constant 0 : index
    %c16_399 = arith.constant 16 : index
    %383 = vector.load %arg3[%c2_397, %c0_398, %c16_399] : memref<4x4x37xf32, #tpu.memory_space<vmem>>, vector<1x4x4xf32>
    %384 = vector.shape_cast %383 : vector<1x4x4xf32> to vector<4x4xf32>
    %c0_400 = arith.constant 0 : index
    %c17_401 = arith.constant 17 : index
    %385 = vector.load %arg5[%c0_400, %c17_401] : memref<4x256xf32, #tpu.memory_space<vmem>>, vector<4x128xf32>
    %cst_402 = arith.constant dense<0.000000e+00> : vector<4x128xf32>
    %386 = tpu.matmul %384, %385, %cst_402 {dimension_numbers = #tpu.dot_dimension_numbers<[1], [0], [0], [1], [0, 0, 1, 1], [], []>} : vector<4x4xf32>, vector<4x128xf32>, vector<4x128xf32> -> vector<4x128xf32>
    %387 = arith.addf %382, %386 : vector<4x128xf32>
    %c2_403 = arith.constant 2 : index
    %c0_404 = arith.constant 0 : index
    %c20_405 = arith.constant 20 : index
    %388 = vector.load %arg3[%c2_403, %c0_404, %c20_405] : memref<4x4x37xf32, #tpu.memory_space<vmem>>, vector<1x4x4xf32>
    %389 = vector.shape_cast %388 : vector<1x4x4xf32> to vector<4x4xf32>
    %c0_406 = arith.constant 0 : index
    %c18_407 = arith.constant 18 : index
    %390 = vector.load %arg5[%c0_406, %c18_407] : memref<4x256xf32, #tpu.memory_space<vmem>>, vector<4x128xf32>
    %cst_408 = arith.constant dense<0.000000e+00> : vector<4x128xf32>
    %391 = tpu.matmul %389, %390, %cst_408 {dimension_numbers = #tpu.dot_dimension_numbers<[1], [0], [0], [1], [0, 0, 1, 1], [], []>} : vector<4x4xf32>, vector<4x128xf32>, vector<4x128xf32> -> vector<4x128xf32>
    %392 = arith.addf %387, %391 : vector<4x128xf32>
    %c2_409 = arith.constant 2 : index
    %c0_410 = arith.constant 0 : index
    %c24_411 = arith.constant 24 : index
    %393 = vector.load %arg3[%c2_409, %c0_410, %c24_411] : memref<4x4x37xf32, #tpu.memory_space<vmem>>, vector<1x4x4xf32>
    %394 = vector.shape_cast %393 : vector<1x4x4xf32> to vector<4x4xf32>
    %c0_412 = arith.constant 0 : index
    %c32_413 = arith.constant 32 : index
    %395 = vector.load %arg5[%c0_412, %c32_413] : memref<4x256xf32, #tpu.memory_space<vmem>>, vector<4x128xf32>
    %cst_414 = arith.constant dense<0.000000e+00> : vector<4x128xf32>
    %396 = tpu.matmul %394, %395, %cst_414 {dimension_numbers = #tpu.dot_dimension_numbers<[1], [0], [0], [1], [0, 0, 1, 1], [], []>} : vector<4x4xf32>, vector<4x128xf32>, vector<4x128xf32> -> vector<4x128xf32>
    %397 = arith.addf %392, %396 : vector<4x128xf32>
    %c2_415 = arith.constant 2 : index
    %c0_416 = arith.constant 0 : index
    %c28_417 = arith.constant 28 : index
    %398 = vector.load %arg3[%c2_415, %c0_416, %c28_417] : memref<4x4x37xf32, #tpu.memory_space<vmem>>, vector<1x4x4xf32>
    %399 = vector.shape_cast %398 : vector<1x4x4xf32> to vector<4x4xf32>
    %c0_418 = arith.constant 0 : index
    %c33_419 = arith.constant 33 : index
    %400 = vector.load %arg5[%c0_418, %c33_419] : memref<4x256xf32, #tpu.memory_space<vmem>>, vector<4x128xf32>
    %cst_420 = arith.constant dense<0.000000e+00> : vector<4x128xf32>
    %401 = tpu.matmul %399, %400, %cst_420 {dimension_numbers = #tpu.dot_dimension_numbers<[1], [0], [0], [1], [0, 0, 1, 1], [], []>} : vector<4x4xf32>, vector<4x128xf32>, vector<4x128xf32> -> vector<4x128xf32>
    %402 = arith.addf %397, %401 : vector<4x128xf32>
    %c2_421 = arith.constant 2 : index
    %c0_422 = arith.constant 0 : index
    %c32_423 = arith.constant 32 : index
    %403 = vector.load %arg3[%c2_421, %c0_422, %c32_423] : memref<4x4x37xf32, #tpu.memory_space<vmem>>, vector<1x4x4xf32>
    %404 = vector.shape_cast %403 : vector<1x4x4xf32> to vector<4x4xf32>
    %c0_424 = arith.constant 0 : index
    %c34_425 = arith.constant 34 : index
    %405 = vector.load %arg5[%c0_424, %c34_425] : memref<4x256xf32, #tpu.memory_space<vmem>>, vector<4x128xf32>
    %cst_426 = arith.constant dense<0.000000e+00> : vector<4x128xf32>
    %406 = tpu.matmul %404, %405, %cst_426 {dimension_numbers = #tpu.dot_dimension_numbers<[1], [0], [0], [1], [0, 0, 1, 1], [], []>} : vector<4x4xf32>, vector<4x128xf32>, vector<4x128xf32> -> vector<4x128xf32>
    %407 = arith.addf %402, %406 : vector<4x128xf32>
    %c2_427 = arith.constant 2 : index
    %c0_428 = arith.constant 0 : index
    %c36_429 = arith.constant 36 : index
    %408 = vector.load %arg3[%c2_427, %c0_428, %c36_429] : memref<4x4x37xf32, #tpu.memory_space<vmem>>, vector<1x4x1xf32>
    %409 = vector.shape_cast %408 : vector<1x4x1xf32> to vector<4x1xf32>
    %410 = vector.broadcast %409 : vector<4x1xf32> to vector<4x128xf32>
    %411 = arith.addf %407, %410 : vector<4x128xf32>
    %cst_430 = arith.constant 0.000000e+00 : f32
    %412 = vector.broadcast %cst_430 : f32 to vector<4x128xf32>
    %413 = arith.maximumf %411, %412 : vector<4x128xf32>
    %cst_431 = arith.constant 0.000000e+00 : f32
    %414 = vector.broadcast %cst_431 : f32 to vector<4x128xf32>
    %415 = arith.select %4, %413, %414 : vector<4x128xi1>, vector<4x128xf32>
    %c0_432 = arith.constant 0 : index
    %c17_433 = arith.constant 17 : index
    %416 = vector.load %arg5[%c0_432, %c17_433] : memref<4x256xf32, #tpu.memory_space<vmem>>, vector<4x128xf32>
    tpu.vector_store %arg5[%c0_432, %c17_433], %415 {strides = array<i32>} : memref<4x256xf32, #tpu.memory_space<vmem>>, vector<4x128xf32>,
    %cst_434 = arith.constant 0.000000e+00 : f32
    %417 = vector.broadcast %cst_434 : f32 to vector<4x128xf32>
    %c3_435 = arith.constant 3 : index
    %c0_436 = arith.constant 0 : index
    %c0_437 = arith.constant 0 : index
    %418 = vector.load %arg3[%c3_435, %c0_436, %c0_437] : memref<4x4x37xf32, #tpu.memory_space<vmem>>, vector<1x4x4xf32>
    %419 = vector.shape_cast %418 : vector<1x4x4xf32> to vector<4x4xf32>
    %c0_438 = arith.constant 0 : index
    %c0_439 = arith.constant 0 : index
    %420 = vector.load %arg5[%c0_438, %c0_439] : memref<4x256xf32, #tpu.memory_space<vmem>>, vector<4x128xf32>
    %cst_440 = arith.constant dense<0.000000e+00> : vector<4x128xf32>
    %421 = tpu.matmul %419, %420, %cst_440 {dimension_numbers = #tpu.dot_dimension_numbers<[1], [0], [0], [1], [0, 0, 1, 1], [], []>} : vector<4x4xf32>, vector<4x128xf32>, vector<4x128xf32> -> vector<4x128xf32>
    %422 = arith.addf %417, %421 : vector<4x128xf32>
    %c3_441 = arith.constant 3 : index
    %c0_442 = arith.constant 0 : index
    %c4_443 = arith.constant 4 : index
    %423 = vector.load %arg3[%c3_441, %c0_442, %c4_443] : memref<4x4x37xf32, #tpu.memory_space<vmem>>, vector<1x4x4xf32>
    %424 = vector.shape_cast %423 : vector<1x4x4xf32> to vector<4x4xf32>
    %c0_444 = arith.constant 0 : index
    %c1_445 = arith.constant 1 : index
    %425 = vector.load %arg5[%c0_444, %c1_445] : memref<4x256xf32, #tpu.memory_space<vmem>>, vector<4x128xf32>
    %cst_446 = arith.constant dense<0.000000e+00> : vector<4x128xf32>
    %426 = tpu.matmul %424, %425, %cst_446 {dimension_numbers = #tpu.dot_dimension_numbers<[1], [0], [0], [1], [0, 0, 1, 1], [], []>} : vector<4x4xf32>, vector<4x128xf32>, vector<4x128xf32> -> vector<4x128xf32>
    %427 = arith.addf %422, %426 : vector<4x128xf32>
    %c3_447 = arith.constant 3 : index
    %c0_448 = arith.constant 0 : index
    %c8_449 = arith.constant 8 : index
    %428 = vector.load %arg3[%c3_447, %c0_448, %c8_449] : memref<4x4x37xf32, #tpu.memory_space<vmem>>, vector<1x4x4xf32>
    %429 = vector.shape_cast %428 : vector<1x4x4xf32> to vector<4x4xf32>
    %c0_450 = arith.constant 0 : index
    %c2_451 = arith.constant 2 : index
    %430 = vector.load %arg5[%c0_450, %c2_451] : memref<4x256xf32, #tpu.memory_space<vmem>>, vector<4x128xf32>
    %cst_452 = arith.constant dense<0.000000e+00> : vector<4x128xf32>
    %431 = tpu.matmul %429, %430, %cst_452 {dimension_numbers = #tpu.dot_dimension_numbers<[1], [0], [0], [1], [0, 0, 1, 1], [], []>} : vector<4x4xf32>, vector<4x128xf32>, vector<4x128xf32> -> vector<4x128xf32>
    %432 = arith.addf %427, %431 : vector<4x128xf32>
    %c3_453 = arith.constant 3 : index
    %c0_454 = arith.constant 0 : index
    %c12_455 = arith.constant 12 : index
    %433 = vector.load %arg3[%c3_453, %c0_454, %c12_455] : memref<4x4x37xf32, #tpu.memory_space<vmem>>, vector<1x4x4xf32>
    %434 = vector.shape_cast %433 : vector<1x4x4xf32> to vector<4x4xf32>
    %c0_456 = arith.constant 0 : index
    %c16_457 = arith.constant 16 : index
    %435 = vector.load %arg5[%c0_456, %c16_457] : memref<4x256xf32, #tpu.memory_space<vmem>>, vector<4x128xf32>
    %cst_458 = arith.constant dense<0.000000e+00> : vector<4x128xf32>
    %436 = tpu.matmul %434, %435, %cst_458 {dimension_numbers = #tpu.dot_dimension_numbers<[1], [0], [0], [1], [0, 0, 1, 1], [], []>} : vector<4x4xf32>, vector<4x128xf32>, vector<4x128xf32> -> vector<4x128xf32>
    %437 = arith.addf %432, %436 : vector<4x128xf32>
    %c3_459 = arith.constant 3 : index
    %c0_460 = arith.constant 0 : index
    %c16_461 = arith.constant 16 : index
    %438 = vector.load %arg3[%c3_459, %c0_460, %c16_461] : memref<4x4x37xf32, #tpu.memory_space<vmem>>, vector<1x4x4xf32>
    %439 = vector.shape_cast %438 : vector<1x4x4xf32> to vector<4x4xf32>
    %c0_462 = arith.constant 0 : index
    %c17_463 = arith.constant 17 : index
    %440 = vector.load %arg5[%c0_462, %c17_463] : memref<4x256xf32, #tpu.memory_space<vmem>>, vector<4x128xf32>
    %cst_464 = arith.constant dense<0.000000e+00> : vector<4x128xf32>
    %441 = tpu.matmul %439, %440, %cst_464 {dimension_numbers = #tpu.dot_dimension_numbers<[1], [0], [0], [1], [0, 0, 1, 1], [], []>} : vector<4x4xf32>, vector<4x128xf32>, vector<4x128xf32> -> vector<4x128xf32>
    %442 = arith.addf %437, %441 : vector<4x128xf32>
    %c3_465 = arith.constant 3 : index
    %c0_466 = arith.constant 0 : index
    %c20_467 = arith.constant 20 : index
    %443 = vector.load %arg3[%c3_465, %c0_466, %c20_467] : memref<4x4x37xf32, #tpu.memory_space<vmem>>, vector<1x4x4xf32>
    %444 = vector.shape_cast %443 : vector<1x4x4xf32> to vector<4x4xf32>
    %c0_468 = arith.constant 0 : index
    %c18_469 = arith.constant 18 : index
    %445 = vector.load %arg5[%c0_468, %c18_469] : memref<4x256xf32, #tpu.memory_space<vmem>>, vector<4x128xf32>
    %cst_470 = arith.constant dense<0.000000e+00> : vector<4x128xf32>
    %446 = tpu.matmul %444, %445, %cst_470 {dimension_numbers = #tpu.dot_dimension_numbers<[1], [0], [0], [1], [0, 0, 1, 1], [], []>} : vector<4x4xf32>, vector<4x128xf32>, vector<4x128xf32> -> vector<4x128xf32>
    %447 = arith.addf %442, %446 : vector<4x128xf32>
    %c3_471 = arith.constant 3 : index
    %c0_472 = arith.constant 0 : index
    %c24_473 = arith.constant 24 : index
    %448 = vector.load %arg3[%c3_471, %c0_472, %c24_473] : memref<4x4x37xf32, #tpu.memory_space<vmem>>, vector<1x4x4xf32>
    %449 = vector.shape_cast %448 : vector<1x4x4xf32> to vector<4x4xf32>
    %c0_474 = arith.constant 0 : index
    %c32_475 = arith.constant 32 : index
    %450 = vector.load %arg5[%c0_474, %c32_475] : memref<4x256xf32, #tpu.memory_space<vmem>>, vector<4x128xf32>
    %cst_476 = arith.constant dense<0.000000e+00> : vector<4x128xf32>
    %451 = tpu.matmul %449, %450, %cst_476 {dimension_numbers = #tpu.dot_dimension_numbers<[1], [0], [0], [1], [0, 0, 1, 1], [], []>} : vector<4x4xf32>, vector<4x128xf32>, vector<4x128xf32> -> vector<4x128xf32>
    %452 = arith.addf %447, %451 : vector<4x128xf32>
    %c3_477 = arith.constant 3 : index
    %c0_478 = arith.constant 0 : index
    %c28_479 = arith.constant 28 : index
    %453 = vector.load %arg3[%c3_477, %c0_478, %c28_479] : memref<4x4x37xf32, #tpu.memory_space<vmem>>, vector<1x4x4xf32>
    %454 = vector.shape_cast %453 : vector<1x4x4xf32> to vector<4x4xf32>
    %c0_480 = arith.constant 0 : index
    %c33_481 = arith.constant 33 : index
    %455 = vector.load %arg5[%c0_480, %c33_481] : memref<4x256xf32, #tpu.memory_space<vmem>>, vector<4x128xf32>
    %cst_482 = arith.constant dense<0.000000e+00> : vector<4x128xf32>
    %456 = tpu.matmul %454, %455, %cst_482 {dimension_numbers = #tpu.dot_dimension_numbers<[1], [0], [0], [1], [0, 0, 1, 1], [], []>} : vector<4x4xf32>, vector<4x128xf32>, vector<4x128xf32> -> vector<4x128xf32>
    %457 = arith.addf %452, %456 : vector<4x128xf32>
    %c3_483 = arith.constant 3 : index
    %c0_484 = arith.constant 0 : index
    %c32_485 = arith.constant 32 : index
    %458 = vector.load %arg3[%c3_483, %c0_484, %c32_485] : memref<4x4x37xf32, #tpu.memory_space<vmem>>, vector<1x4x4xf32>
    %459 = vector.shape_cast %458 : vector<1x4x4xf32> to vector<4x4xf32>
    %c0_486 = arith.constant 0 : index
    %c34_487 = arith.constant 34 : index
    %460 = vector.load %arg5[%c0_486, %c34_487] : memref<4x256xf32, #tpu.memory_space<vmem>>, vector<4x128xf32>
    %cst_488 = arith.constant dense<0.000000e+00> : vector<4x128xf32>
    %461 = tpu.matmul %459, %460, %cst_488 {dimension_numbers = #tpu.dot_dimension_numbers<[1], [0], [0], [1], [0, 0, 1, 1], [], []>} : vector<4x4xf32>, vector<4x128xf32>, vector<4x128xf32> -> vector<4x128xf32>
    %462 = arith.addf %457, %461 : vector<4x128xf32>
    %c3_489 = arith.constant 3 : index
    %c0_490 = arith.constant 0 : index
    %c36_491 = arith.constant 36 : index
    %463 = vector.load %arg3[%c3_489, %c0_490, %c36_491] : memref<4x4x37xf32, #tpu.memory_space<vmem>>, vector<1x4x1xf32>
    %464 = vector.shape_cast %463 : vector<1x4x1xf32> to vector<4x1xf32>
    %465 = vector.broadcast %464 : vector<4x1xf32> to vector<4x128xf32>
    %466 = arith.addf %462, %465 : vector<4x128xf32>
    %467 = arith.addf %358, %466 : vector<4x128xf32>
    %c1_492 = arith.constant 1 : index
    %c0_493 = arith.constant 0 : index
    %c0_494 = arith.constant 0 : index
    %468 = vector.load %arg4[%c1_492, %c0_493, %c0_494] : memref<2x4x128xf32, #tpu.memory_space<vmem>>, vector<1x4x128xf32>
    %469 = vector.shape_cast %468 : vector<1x4x128xf32> to vector<4x128xf32>
    %470 = vector.shape_cast %467 : vector<4x128xf32> to vector<1x4x128xf32>
    tpu.vector_store %arg4[%c1_492, %c0_493, %c0_494], %470 {strides = array<i32>} : memref<2x4x128xf32, #tpu.memory_space<vmem>>, vector<1x4x128xf32>,
    return
  }
  func.func @transform_0(%arg0: i32) -> (i32, i32, i32) {
    %c0_i32 = arith.constant 0 : i32
    %c0_i32_0 = arith.constant 0 : i32
    %c0_i32_1 = arith.constant 0 : i32
    return %arg0, %c0_i32, %c0_i32_0 : i32, i32, i32
  }
  func.func @transform_1(%arg0: i32) -> (i32, i32) {
    %c0_i32 = arith.constant 0 : i32
    %c0_i32_0 = arith.constant 0 : i32
    %c0_i32_1 = arith.constant 0 : i32
    return %c0_i32, %c0_i32_0 : i32, i32
  }
  func.func @transform_2(%arg0: i32) -> (i32, i32, i32) {
    %c0_i32 = arith.constant 0 : i32
    %c0_i32_0 = arith.constant 0 : i32
    %c0_i32_1 = arith.constant 0 : i32
    %c0_i32_2 = arith.constant 0 : i32
    return %c0_i32, %c0_i32_0, %c0_i32_1 : i32, i32, i32
  }
  func.func @transform_3(%arg0: i32) -> (i32, i32, i32) {
    %c0_i32 = arith.constant 0 : i32
    %c0_i32_0 = arith.constant 0 : i32
    %c0_i32_1 = arith.constant 0 : i32
    return %arg0, %c0_i32, %c0_i32_0 : i32, i32, i32
  }
}

</mosaic_0001>

<llo_original>
// kernel: tpu_custom_call.1
$region0: #{tpu_custom_call.1}
  #allocation0 [shape = 'u32[]', space=smem, size = 0x4, offset = 0x4, fixed_abs, tag = 'smem constant byte address 0x4 - core index']
  #allocation1 [shape = 'u32[144,128]{1,0:T(1,128)}', space=vmem, size = 0x12000, scoped, tag = 'internal scratch']
  #allocation2 [shape = 'f32[4,256]{1,0:T(4,128)}', space=vmem, size = 0x1000, scoped, tag = 'scratch operand']
  %s0 = inlined_call_operand.hbm [shape: f32[2,4,256], index: 0, kind: input, shape index: {}]
  %s1 = inlined_call_operand.hbm [shape: f32[256,512], index: 1, kind: input, shape index: {}]
  %s2 = inlined_call_operand.hbm [shape: f32[4,4,37], index: 2, kind: input, shape index: {}]
  %s3 = inlined_call_operand.hbm [shape: f32[2,4,128], index: 3, kind: output, shape index: {}]
  %s4 = sld [smem:[#allocation0]]
  $region34: #{tpu_custom_call.1} parent=0
    _
  %s6 = ssub.s32 1, %s4
  %s7 = scalar_select 0, %s6, %s4
  $region1: #{tpu_custom_call.1} parent=0
    #allocation3 [shape = 'u8[8192]{0}', space=vmem, size = 0x2000, scoped, tag = 'input window, operand 0, single buffered']
    #allocation4 [shape = 's32[1]{0}', space=sflag, size = 0x4, scoped, tag = 'scoped memory for tpu_custom_call.1']
    #allocation5 [shape = 's32[1]{0}', space=sflag, size = 0x4, scoped, tag = 'scoped memory for tpu_custom_call.1']
    #allocation6 [shape = 'u8[524288]{0}', space=vmem, size = 0x80000, scoped, tag = 'input window, operand 1, single buffered']
    #allocation7 [shape = 's32[1]{0}', space=sflag, size = 0x4, scoped, tag = 'scoped memory for tpu_custom_call.1']
    #allocation8 [shape = 'u8[8192]{0}', space=vmem, size = 0x2000, scoped, tag = 'input window, operand 2, single buffered']
    #allocation9 [shape = 'u8[4096]{0}', space=vmem, size = 0x1000, scoped, tag = 'output window, operand 0, single buffered']
    %8 = vsyncpa [#allocation4], 0
    %9 = vsyncpa [#allocation7], 0
    %10 = vsyncpa [#allocation5], 0
    // Predicated region
    $region2: #{tpu_custom_call.1} parent=1 // pred_check
      _
    $region3: #{tpu_custom_call.1} parent=1 // pred_check_branch
      %12 = sbr.rel (0) target = $region5
    $region4: #{tpu_custom_call.1} parent=1 // pred_region
      %s14 = ssub.s32 256, 256
      %15 = vsyncadd [#allocation4], %s14
      %s16 = sshll.u32 [#allocation3], 4
      %s17 = int_to_ptr.vmem [resolvable:$true] %s16
      %22 = dma.hbm_to_vmem [thread:$0]  %s0, 256, %s17, [#allocation4], 128, 128, 8
    $region5: #{tpu_custom_call.1} parent=1 // pred_fallthru
      _
    // Predicated region
    $region6: #{tpu_custom_call.1} parent=1 // pred_check
      _
    $region7: #{tpu_custom_call.1} parent=1 // pred_check_branch
      %24 = sbr.rel (0) target = $region9
    $region8: #{tpu_custom_call.1} parent=1 // pred_region
      %s26 = ssub.s32 16384, 16384
      %27 = vsyncadd [#allocation7], %s26
      %s28 = sshll.u32 [#allocation6], 4
      %s29 = int_to_ptr.vmem [resolvable:$true] %s28
      %34 = dma.hbm_to_vmem [thread:$0]  %s1, 16384, %s29, [#allocation7], 512, 512, 32
    $region9: #{tpu_custom_call.1} parent=1 // pred_fallthru
      _
    // Predicated region
    $region10: #{tpu_custom_call.1} parent=1 // pred_check
      _
    $region11: #{tpu_custom_call.1} parent=1 // pred_check_branch
      %36 = sbr.rel (0) target = $region13
    $region12: #{tpu_custom_call.1} parent=1 // pred_region
      %s38 = ssub.s32 256, 256
      %39 = vsyncadd [#allocation7], %s38
      %s40 = sshll.u32 [#allocation8], 4
      %s41 = int_to_ptr.vmem [resolvable:$true] %s40
      %46 = dma.hbm_to_vmem [thread:$0]  %s2, 256, %s41, [#allocation7], 64, 64, 4
    $region13: #{tpu_custom_call.1} parent=1 // pred_fallthru
      _
    // Predicated region
    $region14: #{tpu_custom_call.1} parent=1 // pred_check
      _
    $region15: #{tpu_custom_call.1} parent=1 // pred_check_branch
      %48 = sbr.rel (0) target = $region17
    $region16: #{tpu_custom_call.1} parent=1 // pred_region
      %49 = dma.done [#allocation4], 256
    $region17: #{tpu_custom_call.1} parent=1 // pred_fallthru
      _
    // Predicated region
    $region18: #{tpu_custom_call.1} parent=1 // pred_check
      _
    $region19: #{tpu_custom_call.1} parent=1 // pred_check_branch
      %51 = sbr.rel (0) target = $region21
    $region20: #{tpu_custom_call.1} parent=1 // pred_region
      %52 = dma.done [#allocation7], 16384
    $region21: #{tpu_custom_call.1} parent=1 // pred_fallthru
      _
    // Predicated region
    $region22: #{tpu_custom_call.1} parent=1 // pred_check
      _
    $region23: #{tpu_custom_call.1} parent=1 // pred_check_branch
      %54 = sbr.rel (0) target = $region25
    $region24: #{tpu_custom_call.1} parent=1 // pred_region
      %55 = dma.done [#allocation7], 256
    $region25: #{tpu_custom_call.1} parent=1 // pred_fallthru
      _
    %v56 = vlaneseq
    %v57 = vand.u32 %v56, 127
    %v58 = vand.u32 %v57, 15
    %vm59 = vcmp.lt.s32.totalorder %v58, 8
    %60 = vst [vmem:[#allocation2] sm:$0xff] 0.0
    %v61 = vld [vmem:[#allocation3] sm:$0xff]
    %v62 = vld [vmem:[#allocation6] sm:$0xff]
    %v63 = vld [vmem:[#allocation6 + $0x8] sm:$0xff]
    %v64 = vld [vmem:[#allocation6 + $0x10] sm:$0xff]
    %v65 = vld [vmem:[#allocation6 + $0x18] sm:$0xff]
    %v66 = vld [vmem:[#allocation6 + $0x20] sm:$0xff]
    %v67 = vld [vmem:[#allocation6 + $0x28] sm:$0xff]
    %v68 = vld [vmem:[#allocation6 + $0x30] sm:$0xff]
    %v69 = vld [vmem:[#allocation6 + $0x38] sm:$0xff]
    %v70 = vld [vmem:[#allocation6 + $0x40] sm:$0xff]
    %v71 = vld [vmem:[#allocation6 + $0x48] sm:$0xff]
    %v72 = vld [vmem:[#allocation6 + $0x50] sm:$0xff]
    %v73 = vld [vmem:[#allocation6 + $0x58] sm:$0xff]
    %v74 = vld [vmem:[#allocation6 + $0x60] sm:$0xff]
    %v75 = vld [vmem:[#allocation6 + $0x68] sm:$0xff]
    %v76 = vld [vmem:[#allocation6 + $0x70] sm:$0xff]
    %v77 = vld [vmem:[#allocation6 + $0x78] sm:$0xff]
    %v78 = vld [vmem:[#allocation6 + $0x80] sm:$0xff]
    %v79 = vld [vmem:[#allocation6 + $0x88] sm:$0xff]
    %v80 = vld [vmem:[#allocation6 + $0x90] sm:$0xff]
    %v81 = vld [vmem:[#allocation6 + $0x98] sm:$0xff]
    %v82 = vld [vmem:[#allocation6 + $0xa0] sm:$0xff]
    %v83 = vld [vmem:[#allocation6 + $0xa8] sm:$0xff]
    %v84 = vld [vmem:[#allocation6 + $0xb0] sm:$0xff]
    %v85 = vld [vmem:[#allocation6 + $0xb8] sm:$0xff]
    %v86 = vld [vmem:[#allocation6 + $0xc0] sm:$0xff]
    %v87 = vld [vmem:[#allocation6 + $0xc8] sm:$0xff]
    %v88 = vld [vmem:[#allocation6 + $0xd0] sm:$0xff]
    %v89 = vld [vmem:[#allocation6 + $0xd8] sm:$0xff]
    %v90 = vld [vmem:[#allocation6 + $0xe0] sm:$0xff]
    %v91 = vld [vmem:[#allocation6 + $0xe8] sm:$0xff]
    %v92 = vld [vmem:[#allocation6 + $0xf0] sm:$0xff]
    %v93 = vld [vmem:[#allocation6 + $0xf8] sm:$0xff]
    %v94 = vld [vmem:[#allocation6 + $0x100] sm:$0xff]
    %v95 = vld [vmem:[#allocation6 + $0x108] sm:$0xff]
    %v96 = vld [vmem:[#allocation6 + $0x110] sm:$0xff]
    %v97 = vld [vmem:[#allocation6 + $0x118] sm:$0xff]
    %v98 = vld [vmem:[#allocation6 + $0x120] sm:$0xff]
    %v99 = vld [vmem:[#allocation6 + $0x128] sm:$0xff]
    %v100 = vld [vmem:[#allocation6 + $0x130] sm:$0xff]
    %v101 = vld [vmem:[#allocation6 + $0x138] sm:$0xff]
    %v102 = vld [vmem:[#allocation6 + $0x140] sm:$0xff]
    %v103 = vld [vmem:[#allocation6 + $0x148] sm:$0xff]
    %v104 = vld [vmem:[#allocation6 + $0x150] sm:$0xff]
    %v105 = vld [vmem:[#allocation6 + $0x158] sm:$0xff]
    %v106 = vld [vmem:[#allocation6 + $0x160] sm:$0xff]
    %v107 = vld [vmem:[#allocation6 + $0x168] sm:$0xff]
    %v108 = vld [vmem:[#allocation6 + $0x170] sm:$0xff]
    %v109 = vld [vmem:[#allocation6 + $0x178] sm:$0xff]
    %v110 = vld [vmem:[#allocation6 + $0x180] sm:$0xff]
    %v111 = vld [vmem:[#allocation6 + $0x188] sm:$0xff]
    %v112 = vld [vmem:[#allocation6 + $0x190] sm:$0xff]
    %v113 = vld [vmem:[#allocation6 + $0x198] sm:$0xff]
    %v114 = vld [vmem:[#allocation6 + $0x1a0] sm:$0xff]
    %v115 = vld [vmem:[#allocation6 + $0x1a8] sm:$0xff]
    %v116 = vld [vmem:[#allocation6 + $0x1b0] sm:$0xff]
    %v117 = vld [vmem:[#allocation6 + $0x1b8] sm:$0xff]
    %v118 = vld [vmem:[#allocation6 + $0x1c0] sm:$0xff]
    %v119 = vld [vmem:[#allocation6 + $0x1c8] sm:$0xff]
    %v120 = vld [vmem:[#allocation6 + $0x1d0] sm:$0xff]
    %v121 = vld [vmem:[#allocation6 + $0x1d8] sm:$0xff]
    %v122 = vld [vmem:[#allocation6 + $0x1e0] sm:$0xff]
    %v123 = vld [vmem:[#allocation6 + $0x1e8] sm:$0xff]
    %v124 = vld [vmem:[#allocation6 + $0x1f0] sm:$0xff]
    %v125 = vld [vmem:[#allocation6 + $0x1f8] sm:$0xff]
    %v126 = vld [vmem:[#allocation6 + $0x200] sm:$0xff]
    %v127 = vld [vmem:[#allocation6 + $0x208] sm:$0xff]
    %v128 = vld [vmem:[#allocation6 + $0x210] sm:$0xff]
    %v129 = vld [vmem:[#allocation6 + $0x218] sm:$0xff]
    %v130 = vld [vmem:[#allocation6 + $0x220] sm:$0xff]
    %v131 = vld [vmem:[#allocation6 + $0x228] sm:$0xff]
    %v132 = vld [vmem:[#allocation6 + $0x230] sm:$0xff]
    %v133 = vld [vmem:[#allocation6 + $0x238] sm:$0xff]
    %v134 = vld [vmem:[#allocation6 + $0x240] sm:$0xff]
    %v135 = vld [vmem:[#allocation6 + $0x248] sm:$0xff]
    %v136 = vld [vmem:[#allocation6 + $0x250] sm:$0xff]
    %v137 = vld [vmem:[#allocation6 + $0x258] sm:$0xff]
    %v138 = vld [vmem:[#allocation6 + $0x260] sm:$0xff]
    %v139 = vld [vmem:[#allocation6 + $0x268] sm:$0xff]
    %v140 = vld [vmem:[#allocation6 + $0x270] sm:$0xff]
    %v141 = vld [vmem:[#allocation6 + $0x278] sm:$0xff]
    %v142 = vld [vmem:[#allocation6 + $0x280] sm:$0xff]
    %v143 = vld [vmem:[#allocation6 + $0x288] sm:$0xff]
    %v144 = vld [vmem:[#allocation6 + $0x290] sm:$0xff]
    %v145 = vld [vmem:[#allocation6 + $0x298] sm:$0xff]
    %v146 = vld [vmem:[#allocation6 + $0x2a0] sm:$0xff]
    %v147 = vld [vmem:[#allocation6 + $0x2a8] sm:$0xff]
    %v148 = vld [vmem:[#allocation6 + $0x2b0] sm:$0xff]
    %v149 = vld [vmem:[#allocation6 + $0x2b8] sm:$0xff]
    %v150 = vld [vmem:[#allocation6 + $0x2c0] sm:$0xff]
    %v151 = vld [vmem:[#allocation6 + $0x2c8] sm:$0xff]
    %v152 = vld [vmem:[#allocation6 + $0x2d0] sm:$0xff]
    %v153 = vld [vmem:[#allocation6 + $0x2d8] sm:$0xff]
    %v154 = vld [vmem:[#allocation6 + $0x2e0] sm:$0xff]
    %v155 = vld [vmem:[#allocation6 + $0x2e8] sm:$0xff]
    %v156 = vld [vmem:[#allocation6 + $0x2f0] sm:$0xff]
    %v157 = vld [vmem:[#allocation6 + $0x2f8] sm:$0xff]
    %v158 = vld [vmem:[#allocation6 + $0x300] sm:$0xff]
    %v159 = vld [vmem:[#allocation6 + $0x308] sm:$0xff]
    %v160 = vld [vmem:[#allocation6 + $0x310] sm:$0xff]
    %v161 = vld [vmem:[#allocation6 + $0x318] sm:$0xff]
    %v162 = vld [vmem:[#allocation6 + $0x320] sm:$0xff]
    %v163 = vld [vmem:[#allocation6 + $0x328] sm:$0xff]
    %v164 = vld [vmem:[#allocation6 + $0x330] sm:$0xff]
    %v165 = vld [vmem:[#allocation6 + $0x338] sm:$0xff]
    %v166 = vld [vmem:[#allocation6 + $0x340] sm:$0xff]
    %v167 = vld [vmem:[#allocation6 + $0x348] sm:$0xff]
    %v168 = vld [vmem:[#allocation6 + $0x350] sm:$0xff]
    %v169 = vld [vmem:[#allocation6 + $0x358] sm:$0xff]
    %v170 = vld [vmem:[#allocation6 + $0x360] sm:$0xff]
    %v171 = vld [vmem:[#allocation6 + $0x368] sm:$0xff]
    %v172 = vld [vmem:[#allocation6 + $0x370] sm:$0xff]
    %v173 = vld [vmem:[#allocation6 + $0x378] sm:$0xff]
    %v174 = vld [vmem:[#allocation6 + $0x380] sm:$0xff]
    %v175 = vld [vmem:[#allocation6 + $0x388] sm:$0xff]
    %v176 = vld [vmem:[#allocation6 + $0x390] sm:$0xff]
    %v177 = vld [vmem:[#allocation6 + $0x398] sm:$0xff]
    %v178 = vld [vmem:[#allocation6 + $0x3a0] sm:$0xff]
    %v179 = vld [vmem:[#allocation6 + $0x3a8] sm:$0xff]
    %v180 = vld [vmem:[#allocation6 + $0x3b0] sm:$0xff]
    %v181 = vld [vmem:[#allocation6 + $0x3b8] sm:$0xff]
    %v182 = vld [vmem:[#allocation6 + $0x3c0] sm:$0xff]
    %v183 = vld [vmem:[#allocation6 + $0x3c8] sm:$0xff]
    %v184 = vld [vmem:[#allocation6 + $0x3d0] sm:$0xff]
    %v185 = vld [vmem:[#allocation6 + $0x3d8] sm:$0xff]
    %v186 = vld [vmem:[#allocation6 + $0x3e0] sm:$0xff]
    %v187 = vld [vmem:[#allocation6 + $0x3e8] sm:$0xff]
    %v188 = vld [vmem:[#allocation6 + $0x3f0] sm:$0xff]
    %v189 = vld [vmem:[#allocation6 + $0x3f8] sm:$0xff]
    %v191 = vcombine.high %v61, %v61
    %193 = vmatprep.subr.mxu0 %v123
    %194 = vmatpush1.msra.mxu0 %v122
    %195 = vmatprep.subr.mxu0 %v119
    %196 = vmatpush1.msra.mxu0 %v118
    %197 = vmatprep.subr.mxu0 %v115
    %198 = vmatpush1.msra.mxu0 %v114
    %199 = vmatprep.subr.mxu0 %v111
    %200 = vmatpush1.msra.mxu0 %v110
    %201 = vmatprep.subr.mxu0 %v107
    %202 = vmatpush1.msra.mxu0 %v106
    %203 = vmatprep.subr.mxu0 %v103
    %204 = vmatpush1.msra.mxu0 %v102
    %205 = vmatprep.subr.mxu0 %v99
    %206 = vmatpush1.msra.mxu0 %v98
    %207 = vmatprep.subr.mxu0 %v95
    %208 = vmatpush1.msra.mxu0 %v94
    %209 = vmatprep.subr.mxu0 %v91
    %210 = vmatpush1.msra.mxu0 %v90
    %211 = vmatprep.subr.mxu0 %v87
    %212 = vmatpush1.msra.mxu0 %v86
    %213 = vmatprep.subr.mxu0 %v83
    %214 = vmatpush1.msra.mxu0 %v82
    %215 = vmatprep.subr.mxu0 %v79
    %216 = vmatpush1.msra.mxu0 %v78
    %217 = vmatprep.subr.mxu0 %v75
    %218 = vmatpush1.msra.mxu0 %v74
    %219 = vmatprep.subr.mxu0 %v71
    %220 = vmatpush1.msra.mxu0 %v70
    %221 = vmatprep.subr.mxu0 %v67
    %222 = vmatpush1.msra.mxu0 %v66
    %223 = vmatprep.subr.mxu0 %v63
    %224 = vmatpush1.msra.mxu0 %v62
    %225 = vmatprep.subr.mxu0 %v187
    %226 = vmatpush2.msra.mxu0 %v186
    %227 = vmatprep.subr.mxu0 %v183
    %228 = vmatpush2.msra.mxu0 %v182
    %229 = vmatprep.subr.mxu0 %v179
    %230 = vmatpush2.msra.mxu0 %v178
    %231 = vmatprep.subr.mxu0 %v175
    %232 = vmatpush2.msra.mxu0 %v174
    %233 = vmatprep.subr.mxu0 %v171
    %234 = vmatpush2.msra.mxu0 %v170
    %235 = vmatprep.subr.mxu0 %v167
    %236 = vmatpush2.msra.mxu0 %v166
    %237 = vmatprep.subr.mxu0 %v163
    %238 = vmatpush2.msra.mxu0 %v162
    %239 = vmatprep.subr.mxu0 %v159
    %240 = vmatpush2.msra.mxu0 %v158
    %241 = vmatprep.subr.mxu0 %v155
    %242 = vmatpush2.msra.mxu0 %v154
    %243 = vmatprep.subr.mxu0 %v151
    %244 = vmatpush2.msra.mxu0 %v150
    %245 = vmatprep.subr.mxu0 %v147
    %246 = vmatpush2.msra.mxu0 %v146
    %247 = vmatprep.subr.mxu0 %v143
    %248 = vmatpush2.msra.mxu0 %v142
    %249 = vmatprep.subr.mxu0 %v139
    %250 = vmatpush2.msra.mxu0 %v138
    %251 = vmatprep.subr.mxu0 %v135
    %252 = vmatpush2.msra.mxu0 %v134
    %253 = vmatprep.subr.mxu0 %v131
    %254 = vmatpush2.msra.mxu0 %v130
    %255 = vmatprep.subr.mxu0 %v127
    %256 = vmatpush2.msra.mxu0 %v126
    %257 = vmatprep.mubr.f32.mxu0 %v191
    %258 = vmatmul.mubr.f32.gmra.mxu0 %v61
    %v259 = vpop.f32.mrf.mxu0
    %v260 = vadd.f32 0.0, %v259
    %v261 = vpop.f32.mrf.mxu0
    %v262 = vadd.f32 0.0, %v261
    %263 = vdwg.mxu0
    %264 = vmatprep.subr.mxu0 %v125
    %265 = vmatpush1.msra.mxu0 %v124
    %266 = vmatprep.subr.mxu0 %v121
    %267 = vmatpush1.msra.mxu0 %v120
    %268 = vmatprep.subr.mxu0 %v117
    %269 = vmatpush1.msra.mxu0 %v116
    %270 = vmatprep.subr.mxu0 %v113
    %271 = vmatpush1.msra.mxu0 %v112
    %272 = vmatprep.subr.mxu0 %v109
    %273 = vmatpush1.msra.mxu0 %v108
    %274 = vmatprep.subr.mxu0 %v105
    %275 = vmatpush1.msra.mxu0 %v104
    %276 = vmatprep.subr.mxu0 %v101
    %277 = vmatpush1.msra.mxu0 %v100
    %278 = vmatprep.subr.mxu0 %v97
    %279 = vmatpush1.msra.mxu0 %v96
    %280 = vmatprep.subr.mxu0 %v93
    %281 = vmatpush1.msra.mxu0 %v92
    %282 = vmatprep.subr.mxu0 %v89
    %283 = vmatpush1.msra.mxu0 %v88
    %284 = vmatprep.subr.mxu0 %v85
    %285 = vmatpush1.msra.mxu0 %v84
    %286 = vmatprep.subr.mxu0 %v81
    %287 = vmatpush1.msra.mxu0 %v80
    %288 = vmatprep.subr.mxu0 %v77
    %289 = vmatpush1.msra.mxu0 %v76
    %290 = vmatprep.subr.mxu0 %v73
    %291 = vmatpush1.msra.mxu0 %v72
    %292 = vmatprep.subr.mxu0 %v69
    %293 = vmatpush1.msra.mxu0 %v68
    %294 = vmatprep.subr.mxu0 %v65
    %295 = vmatpush1.msra.mxu0 %v64
    %296 = vmatprep.subr.mxu0 %v189
    %297 = vmatpush2.msra.mxu0 %v188
    %298 = vmatprep.subr.mxu0 %v185
    %299 = vmatpush2.msra.mxu0 %v184
    %300 = vmatprep.subr.mxu0 %v181
    %301 = vmatpush2.msra.mxu0 %v180
    %302 = vmatprep.subr.mxu0 %v177
    %303 = vmatpush2.msra.mxu0 %v176
    %304 = vmatprep.subr.mxu0 %v173
    %305 = vmatpush2.msra.mxu0 %v172
    %306 = vmatprep.subr.mxu0 %v169
    %307 = vmatpush2.msra.mxu0 %v168
    %308 = vmatprep.subr.mxu0 %v165
    %309 = vmatpush2.msra.mxu0 %v164
    %310 = vmatprep.subr.mxu0 %v161
    %311 = vmatpush2.msra.mxu0 %v160
    %312 = vmatprep.subr.mxu0 %v157
    %313 = vmatpush2.msra.mxu0 %v156
    %314 = vmatprep.subr.mxu0 %v153
    %315 = vmatpush2.msra.mxu0 %v152
    %316 = vmatprep.subr.mxu0 %v149
    %317 = vmatpush2.msra.mxu0 %v148
    %318 = vmatprep.subr.mxu0 %v145
    %319 = vmatpush2.msra.mxu0 %v144
    %320 = vmatprep.subr.mxu0 %v141
    %321 = vmatpush2.msra.mxu0 %v140
    %322 = vmatprep.subr.mxu0 %v137
    %323 = vmatpush2.msra.mxu0 %v136
    %324 = vmatprep.subr.mxu0 %v133
    %325 = vmatpush2.msra.mxu0 %v132
    %326 = vmatprep.subr.mxu0 %v129
    %327 = vmatpush2.msra.mxu0 %v128
    %328 = vmatprep.mubr.f32.mxu0 %v191
    %329 = vmatmul.mubr.f32.gmra.mxu0 %v61
    %v330 = vpop.f32.mrf.mxu0
    %v331 = vadd.f32 0.0, %v330
    %v332 = vpop.f32.mrf.mxu0
    %v333 = vadd.f32 0.0, %v332
    %334 = vdwg.mxu0
    %v335 = vmax.f32 %v260, %v262
    %v336 = vmax.f32 %v331, %v333
    %v337 = vmax.f32 %v335, %v336
    %v338 = vsel %vm59, %v337, 0.0
    %340 = vrot.lane.b32.xlu0 %v338, 17
    %v341 = vpop.permute.xlu0 %340
    %v342 = vrot.slane %v341, 4
    %vm343 = vcmask 138240
    %v344 = vsel %vm343, %v342, %v341
    %vm346 = vcmask 1043592
    %vm347 = vcmask 138244
    %vm348 = vmor %vm347, %vm346
    %349 = vst.msk [vmem:[#allocation2] sm:$0xff] %vm348, %v344
    %v350 = vld [vmem:[#allocation8] sm:$0xf]
    %v351 = vld [vmem:[#allocation2] sm:$0xf]
    %v352 = vld [vmem:[#allocation2] sm:$0xff]
    %354 = vrot.lane.b32.xlu0 %v350, 124
    %v355 = vpop.permute.xlu0 %354
    %v357 = vcombine.high %v352, %v352
    %358 = vrot.lane.b32.xlu0 %v352, 127
    %v359 = vpop.permute.xlu0 %358
    %360 = vrot.lane.b32.xlu0 %v357, 127
    %v361 = vpop.permute.xlu0 %360
    %vm362 = vcmask 1039360
    %v363 = vsel %vm362, %v359, %v361
    %vm364 = vcmask 31744
    %v365 = vsel %vm364, %v355, 0
    %vm367 = vcmask 1043456
    %v368 = vsel %vm367, %v363, 0
    %370 = vmatprep.subr.mxu0 0.0
    %371 = vmatpush1.msra.mxu0 0.0
    %372 = vmatprep.subr.mxu0 0.0
    %373 = vmatpush1.msra.mxu0 0.0
    %374 = vmatprep.subr.mxu0 0.0
    %375 = vmatpush1.msra.mxu0 0.0
    %376 = vmatprep.subr.mxu0 0.0
    %377 = vmatpush1.msra.mxu0 0.0
    %378 = vmatprep.subr.mxu0 0.0
    %379 = vmatpush1.msra.mxu0 0.0
    %380 = vmatprep.subr.mxu0 0.0
    %381 = vmatpush1.msra.mxu0 0.0
    %382 = vmatprep.subr.mxu0 0.0
    %383 = vmatpush1.msra.mxu0 0.0
    %384 = vmatprep.subr.mxu0 0.0
    %385 = vmatpush1.msra.mxu0 0.0
    %386 = vmatprep.subr.mxu0 0.0
    %387 = vmatpush1.msra.mxu0 0.0
    %388 = vmatprep.subr.mxu0 0.0
    %389 = vmatpush1.msra.mxu0 0.0
    %390 = vmatprep.subr.mxu0 0.0
    %391 = vmatpush1.msra.mxu0 0.0
    %392 = vmatprep.subr.mxu0 0.0
    %393 = vmatpush1.msra.mxu0 0.0
    %394 = vmatprep.subr.mxu0 0.0
    %395 = vmatpush1.msra.mxu0 0.0
    %396 = vmatprep.subr.mxu0 0.0
    %397 = vmatpush1.msra.mxu0 0.0
    %398 = vmatprep.subr.mxu0 0.0
    %399 = vmatpush1.msra.mxu0 0.0
    %400 = vmatprep.subr.mxu0 0.0
    %401 = vmatpush1.msra.mxu0 %v368
    %402 = vmatprep.subr.mxu0 0.0
    %403 = vmatpush2.msra.mxu0 0.0
    %404 = vmatprep.subr.mxu0 0.0
    %405 = vmatpush2.msra.mxu0 0.0
    %406 = vmatprep.subr.mxu0 0.0
    %407 = vmatpush2.msra.mxu0 0.0
    %408 = vmatprep.subr.mxu0 0.0
    %409 = vmatpush2.msra.mxu0 0.0
    %410 = vmatprep.subr.mxu0 0.0
    %411 = vmatpush2.msra.mxu0 0.0
    %412 = vmatprep.subr.mxu0 0.0
    %413 = vmatpush2.msra.mxu0 0.0
    %414 = vmatprep.subr.mxu0 0.0
    %415 = vmatpush2.msra.mxu0 0.0
    %416 = vmatprep.subr.mxu0 0.0
    %417 = vmatpush2.msra.mxu0 0.0
    %418 = vmatprep.subr.mxu0 0.0
    %419 = vmatpush2.msra.mxu0 0.0
    %420 = vmatprep.subr.mxu0 0.0
    %421 = vmatpush2.msra.mxu0 0.0
    %422 = vmatprep.subr.mxu0 0.0
    %423 = vmatpush2.msra.mxu0 0.0
    %424 = vmatprep.subr.mxu0 0.0
    %425 = vmatpush2.msra.mxu0 0.0
    %426 = vmatprep.subr.mxu0 0.0
    %427 = vmatpush2.msra.mxu0 0.0
    %428 = vmatprep.subr.mxu0 0.0
    %429 = vmatpush2.msra.mxu0 0.0
    %430 = vmatprep.subr.mxu0 0.0
    %431 = vmatpush2.msra.mxu0 0.0
    %432 = vmatprep.subr.mxu0 0.0
    %433 = vmatpush2.msra.mxu0 0.0
    %434 = vmatprep.mubr.f32.mxu0 0.0
    %435 = vmatmul.mubr.f32.gmra.mxu0 %v365
    %v436 = vpop.f32.mrf.mxu0
    %v437 = vadd.f32 0.0, %v436
    %v438 = vpop.f32.mrf.mxu0
    %439 = vdwg.mxu0
    %v440 = vsel %vm364, %v350, 0
    %v443 = vsel %vm367, %v351, 0
    %445 = vmatprep.subr.mxu0 0.0
    %446 = vmatpush1.msra.mxu0 0.0
    %447 = vmatprep.subr.mxu0 0.0
    %448 = vmatpush1.msra.mxu0 0.0
    %449 = vmatprep.subr.mxu0 0.0
    %450 = vmatpush1.msra.mxu0 0.0
    %451 = vmatprep.subr.mxu0 0.0
    %452 = vmatpush1.msra.mxu0 0.0
    %453 = vmatprep.subr.mxu0 0.0
    %454 = vmatpush1.msra.mxu0 0.0
    %455 = vmatprep.subr.mxu0 0.0
    %456 = vmatpush1.msra.mxu0 0.0
    %457 = vmatprep.subr.mxu0 0.0
    %458 = vmatpush1.msra.mxu0 0.0
    %459 = vmatprep.subr.mxu0 0.0
    %460 = vmatpush1.msra.mxu0 0.0
    %461 = vmatprep.subr.mxu0 0.0
    %462 = vmatpush1.msra.mxu0 0.0
    %463 = vmatprep.subr.mxu0 0.0
    %464 = vmatpush1.msra.mxu0 0.0
    %465 = vmatprep.subr.mxu0 0.0
    %466 = vmatpush1.msra.mxu0 0.0
    %467 = vmatprep.subr.mxu0 0.0
    %468 = vmatpush1.msra.mxu0 0.0
    %469 = vmatprep.subr.mxu0 0.0
    %470 = vmatpush1.msra.mxu0 0.0
    %471 = vmatprep.subr.mxu0 0.0
    %472 = vmatpush1.msra.mxu0 0.0
    %473 = vmatprep.subr.mxu0 0.0
    %474 = vmatpush1.msra.mxu0 0.0
    %475 = vmatprep.subr.mxu0 0.0
    %476 = vmatpush1.msra.mxu0 %v443
    %477 = vmatprep.subr.mxu0 0.0
    %478 = vmatpush2.msra.mxu0 0.0
    %479 = vmatprep.subr.mxu0 0.0
    %480 = vmatpush2.msra.mxu0 0.0
    %481 = vmatprep.subr.mxu0 0.0
    %482 = vmatpush2.msra.mxu0 0.0
    %483 = vmatprep.subr.mxu0 0.0
    %484 = vmatpush2.msra.mxu0 0.0
    %485 = vmatprep.subr.mxu0 0.0
    %486 = vmatpush2.msra.mxu0 0.0
    %487 = vmatprep.subr.mxu0 0.0
    %488 = vmatpush2.msra.mxu0 0.0
    %489 = vmatprep.subr.mxu0 0.0
    %490 = vmatpush2.msra.mxu0 0.0
    %491 = vmatprep.subr.mxu0 0.0
    %492 = vmatpush2.msra.mxu0 0.0
    %493 = vmatprep.subr.mxu0 0.0
    %494 = vmatpush2.msra.mxu0 0.0
    %495 = vmatprep.subr.mxu0 0.0
    %496 = vmatpush2.msra.mxu0 0.0
    %497 = vmatprep.subr.mxu0 0.0
    %498 = vmatpush2.msra.mxu0 0.0
    %499 = vmatprep.subr.mxu0 0.0
    %500 = vmatpush2.msra.mxu0 0.0
    %501 = vmatprep.subr.mxu0 0.0
    %502 = vmatpush2.msra.mxu0 0.0
    %503 = vmatprep.subr.mxu0 0.0
    %504 = vmatpush2.msra.mxu0 0.0
    %505 = vmatprep.subr.mxu0 0.0
    %506 = vmatpush2.msra.mxu0 0.0
    %507 = vmatprep.subr.mxu0 0.0
    %508 = vmatpush2.msra.mxu0 0.0
    %509 = vmatprep.mubr.f32.mxu0 0.0
    %510 = vmatmul.mubr.f32.gmra.mxu0 %v440
    %v511 = vpop.f32.mrf.mxu0
    %v512 = vadd.f32 %v437, %v511
    %v513 = vpop.f32.mrf.mxu0
    %514 = vdwg.mxu0
    %v515 = vld [vmem:[#allocation8] sm:$0xf]
    %v516 = vld [vmem:[#allocation2] sm:$0xff]
    %518 = vrot.lane.b32.xlu0 %v515, 120
    %v519 = vpop.permute.xlu0 %518
    %v521 = vcombine.high %v516, %v516
    %522 = vrot.lane.b32.xlu0 %v516, 126
    %v523 = vpop.permute.xlu0 %522
    %524 = vrot.lane.b32.xlu0 %v521, 126
    %v525 = vpop.permute.xlu0 %524
    %vm526 = vcmask 1031168
    %v527 = vsel %vm526, %v523, %v525
    %v528 = vsel %vm364, %v519, 0
    %v530 = vsel %vm367, %v527, 0
    %532 = vmatprep.subr.mxu0 0.0
    %533 = vmatpush1.msra.mxu0 0.0
    %534 = vmatprep.subr.mxu0 0.0
    %535 = vmatpush1.msra.mxu0 0.0
    %536 = vmatprep.subr.mxu0 0.0
    %537 = vmatpush1.msra.mxu0 0.0
    %538 = vmatprep.subr.mxu0 0.0
    %539 = vmatpush1.msra.mxu0 0.0
    %540 = vmatprep.subr.mxu0 0.0
    %541 = vmatpush1.msra.mxu0 0.0
    %542 = vmatprep.subr.mxu0 0.0
    %543 = vmatpush1.msra.mxu0 0.0
    %544 = vmatprep.subr.mxu0 0.0
    %545 = vmatpush1.msra.mxu0 0.0
    %546 = vmatprep.subr.mxu0 0.0
    %547 = vmatpush1.msra.mxu0 0.0
    %548 = vmatprep.subr.mxu0 0.0
    %549 = vmatpush1.msra.mxu0 0.0
    %550 = vmatprep.subr.mxu0 0.0
    %551 = vmatpush1.msra.mxu0 0.0
    %552 = vmatprep.subr.mxu0 0.0
    %553 = vmatpush1.msra.mxu0 0.0
    %554 = vmatprep.subr.mxu0 0.0
    %555 = vmatpush1.msra.mxu0 0.0
    %556 = vmatprep.subr.mxu0 0.0
    %557 = vmatpush1.msra.mxu0 0.0
    %558 = vmatprep.subr.mxu0 0.0
    %559 = vmatpush1.msra.mxu0 0.0
    %560 = vmatprep.subr.mxu0 0.0
    %561 = vmatpush1.msra.mxu0 0.0
    %562 = vmatprep.subr.mxu0 0.0
    %563 = vmatpush1.msra.mxu0 %v530
    %564 = vmatprep.subr.mxu0 0.0
    %565 = vmatpush2.msra.mxu0 0.0
    %566 = vmatprep.subr.mxu0 0.0
    %567 = vmatpush2.msra.mxu0 0.0
    %568 = vmatprep.subr.mxu0 0.0
    %569 = vmatpush2.msra.mxu0 0.0
    %570 = vmatprep.subr.mxu0 0.0
    %571 = vmatpush2.msra.mxu0 0.0
    %572 = vmatprep.subr.mxu0 0.0
    %573 = vmatpush2.msra.mxu0 0.0
    %574 = vmatprep.subr.mxu0 0.0
    %575 = vmatpush2.msra.mxu0 0.0
    %576 = vmatprep.subr.mxu0 0.0
    %577 = vmatpush2.msra.mxu0 0.0
    %578 = vmatprep.subr.mxu0 0.0
    %579 = vmatpush2.msra.mxu0 0.0
    %580 = vmatprep.subr.mxu0 0.0
    %581 = vmatpush2.msra.mxu0 0.0
    %582 = vmatprep.subr.mxu0 0.0
    %583 = vmatpush2.msra.mxu0 0.0
    %584 = vmatprep.subr.mxu0 0.0
    %585 = vmatpush2.msra.mxu0 0.0
    %586 = vmatprep.subr.mxu0 0.0
    %587 = vmatpush2.msra.mxu0 0.0
    %588 = vmatprep.subr.mxu0 0.0
    %589 = vmatpush2.msra.mxu0 0.0
    %590 = vmatprep.subr.mxu0 0.0
    %591 = vmatpush2.msra.mxu0 0.0
    %592 = vmatprep.subr.mxu0 0.0
    %593 = vmatpush2.msra.mxu0 0.0
    %594 = vmatprep.subr.mxu0 0.0
    %595 = vmatpush2.msra.mxu0 0.0
    %596 = vmatprep.mubr.f32.mxu0 0.0
    %597 = vmatmul.mubr.f32.gmra.mxu0 %v528
    %v598 = vpop.f32.mrf.mxu0
    %v599 = vadd.f32 0.0, %v598
    %v600 = vpop.f32.mrf.mxu0
    %601 = vdwg.mxu0
    %v602 = vadd.f32 %v512, %v599
    %v603 = vld [vmem:[#allocation8] sm:$0xf]
    %v604 = vld [vmem:[#allocation2] sm:$0xff]
    %606 = vrot.lane.b32.xlu0 %v603, 116
    %v607 = vpop.permute.xlu0 %606
    %v609 = vcombine.high %v604, %v604
    %610 = vrot.lane.b32.xlu0 %v604, 112
    %v611 = vpop.permute.xlu0 %610
    %612 = vrot.lane.b32.xlu0 %v609, 112
    %v613 = vpop.permute.xlu0 %612
    %vm614 = vcmask 916480
    %v615 = vsel %vm614, %v611, %v613
    %v616 = vsel %vm364, %v607, 0
    %v618 = vsel %vm367, %v615, 0
    %620 = vmatprep.subr.mxu0 0.0
    %621 = vmatpush1.msra.mxu0 0.0
    %622 = vmatprep.subr.mxu0 0.0
    %623 = vmatpush1.msra.mxu0 0.0
    %624 = vmatprep.subr.mxu0 0.0
    %625 = vmatpush1.msra.mxu0 0.0
    %626 = vmatprep.subr.mxu0 0.0
    %627 = vmatpush1.msra.mxu0 0.0
    %628 = vmatprep.subr.mxu0 0.0
    %629 = vmatpush1.msra.mxu0 0.0
    %630 = vmatprep.subr.mxu0 0.0
    %631 = vmatpush1.msra.mxu0 0.0
    %632 = vmatprep.subr.mxu0 0.0
    %633 = vmatpush1.msra.mxu0 0.0
    %634 = vmatprep.subr.mxu0 0.0
    %635 = vmatpush1.msra.mxu0 0.0
    %636 = vmatprep.subr.mxu0 0.0
    %637 = vmatpush1.msra.mxu0 0.0
    %638 = vmatprep.subr.mxu0 0.0
    %639 = vmatpush1.msra.mxu0 0.0
    %640 = vmatprep.subr.mxu0 0.0
    %641 = vmatpush1.msra.mxu0 0.0
    %642 = vmatprep.subr.mxu0 0.0
    %643 = vmatpush1.msra.mxu0 0.0
    %644 = vmatprep.subr.mxu0 0.0
    %645 = vmatpush1.msra.mxu0 0.0
    %646 = vmatprep.subr.mxu0 0.0
    %647 = vmatpush1.msra.mxu0 0.0
    %648 = vmatprep.subr.mxu0 0.0
    %649 = vmatpush1.msra.mxu0 0.0
    %650 = vmatprep.subr.mxu0 0.0
    %651 = vmatpush1.msra.mxu0 %v618
    %652 = vmatprep.subr.mxu0 0.0
    %653 = vmatpush2.msra.mxu0 0.0
    %654 = vmatprep.subr.mxu0 0.0
    %655 = vmatpush2.msra.mxu0 0.0
    %656 = vmatprep.subr.mxu0 0.0
    %657 = vmatpush2.msra.mxu0 0.0
    %658 = vmatprep.subr.mxu0 0.0
    %659 = vmatpush2.msra.mxu0 0.0
    %660 = vmatprep.subr.mxu0 0.0
    %661 = vmatpush2.msra.mxu0 0.0
    %662 = vmatprep.subr.mxu0 0.0
    %663 = vmatpush2.msra.mxu0 0.0
    %664 = vmatprep.subr.mxu0 0.0
    %665 = vmatpush2.msra.mxu0 0.0
    %666 = vmatprep.subr.mxu0 0.0
    %667 = vmatpush2.msra.mxu0 0.0
    %668 = vmatprep.subr.mxu0 0.0
    %669 = vmatpush2.msra.mxu0 0.0
    %670 = vmatprep.subr.mxu0 0.0
    %671 = vmatpush2.msra.mxu0 0.0
    %672 = vmatprep.subr.mxu0 0.0
    %673 = vmatpush2.msra.mxu0 0.0
    %674 = vmatprep.subr.mxu0 0.0
    %675 = vmatpush2.msra.mxu0 0.0
    %676 = vmatprep.subr.mxu0 0.0
    %677 = vmatpush2.msra.mxu0 0.0
    %678 = vmatprep.subr.mxu0 0.0
    %679 = vmatpush2.msra.mxu0 0.0
    %680 = vmatprep.subr.mxu0 0.0
    %681 = vmatpush2.msra.mxu0 0.0
    %682 = vmatprep.subr.mxu0 0.0
    %683 = vmatpush2.msra.mxu0 0.0
    %684 = vmatprep.mubr.f32.mxu0 0.0
    %685 = vmatmul.mubr.f32.gmra.mxu0 %v616
    %v686 = vpop.f32.mrf.mxu0
    %v687 = vadd.f32 0.0, %v686
    %v688 = vpop.f32.mrf.mxu0
    %689 = vdwg.mxu0
    %v690 = vadd.f32 %v602, %v687
    %v691 = vld [vmem:[#allocation8] sm:$0xf]
    %v692 = vld [vmem:[#allocation2] sm:$0xff]
    %694 = vrot.lane.b32.xlu0 %v691, 112
    %v695 = vpop.permute.xlu0 %694
    %v697 = vcombine.high %v692, %v692
    %698 = vrot.lane.b32.xlu0 %v692, 111
    %v699 = vpop.permute.xlu0 %698
    %700 = vrot.lane.b32.xlu0 %v697, 111
    %v701 = vpop.permute.xlu0 %700
    %vm702 = vcmask 908288
    %v703 = vsel %vm702, %v699, %v701
    %v704 = vsel %vm364, %v695, 0
    %v706 = vsel %vm367, %v703, 0
    %708 = vmatprep.subr.mxu0 0.0
    %709 = vmatpush1.msra.mxu0 0.0
    %710 = vmatprep.subr.mxu0 0.0
    %711 = vmatpush1.msra.mxu0 0.0
    %712 = vmatprep.subr.mxu0 0.0
    %713 = vmatpush1.msra.mxu0 0.0
    %714 = vmatprep.subr.mxu0 0.0
    %715 = vmatpush1.msra.mxu0 0.0
    %716 = vmatprep.subr.mxu0 0.0
    %717 = vmatpush1.msra.mxu0 0.0
    %718 = vmatprep.subr.mxu0 0.0
    %719 = vmatpush1.msra.mxu0 0.0
    %720 = vmatprep.subr.mxu0 0.0
    %721 = vmatpush1.msra.mxu0 0.0
    %722 = vmatprep.subr.mxu0 0.0
    %723 = vmatpush1.msra.mxu0 0.0
    %724 = vmatprep.subr.mxu0 0.0
    %725 = vmatpush1.msra.mxu0 0.0
    %726 = vmatprep.subr.mxu0 0.0
    %727 = vmatpush1.msra.mxu0 0.0
    %728 = vmatprep.subr.mxu0 0.0
    %729 = vmatpush1.msra.mxu0 0.0
    %730 = vmatprep.subr.mxu0 0.0
    %731 = vmatpush1.msra.mxu0 0.0
    %732 = vmatprep.subr.mxu0 0.0
    %733 = vmatpush1.msra.mxu0 0.0
    %734 = vmatprep.subr.mxu0 0.0
    %735 = vmatpush1.msra.mxu0 0.0
    %736 = vmatprep.subr.mxu0 0.0
    %737 = vmatpush1.msra.mxu0 0.0
    %738 = vmatprep.subr.mxu0 0.0
    %739 = vmatpush1.msra.mxu0 %v706
    %740 = vmatprep.subr.mxu0 0.0
    %741 = vmatpush2.msra.mxu0 0.0
    %742 = vmatprep.subr.mxu0 0.0
    %743 = vmatpush2.msra.mxu0 0.0
    %744 = vmatprep.subr.mxu0 0.0
    %745 = vmatpush2.msra.mxu0 0.0
    %746 = vmatprep.subr.mxu0 0.0
    %747 = vmatpush2.msra.mxu0 0.0
    %748 = vmatprep.subr.mxu0 0.0
    %749 = vmatpush2.msra.mxu0 0.0
    %750 = vmatprep.subr.mxu0 0.0
    %751 = vmatpush2.msra.mxu0 0.0
    %752 = vmatprep.subr.mxu0 0.0
    %753 = vmatpush2.msra.mxu0 0.0
    %754 = vmatprep.subr.mxu0 0.0
    %755 = vmatpush2.msra.mxu0 0.0
    %756 = vmatprep.subr.mxu0 0.0
    %757 = vmatpush2.msra.mxu0 0.0
    %758 = vmatprep.subr.mxu0 0.0
    %759 = vmatpush2.msra.mxu0 0.0
    %760 = vmatprep.subr.mxu0 0.0
    %761 = vmatpush2.msra.mxu0 0.0
    %762 = vmatprep.subr.mxu0 0.0
    %763 = vmatpush2.msra.mxu0 0.0
    %764 = vmatprep.subr.mxu0 0.0
    %765 = vmatpush2.msra.mxu0 0.0
    %766 = vmatprep.subr.mxu0 0.0
    %767 = vmatpush2.msra.mxu0 0.0
    %768 = vmatprep.subr.mxu0 0.0
    %769 = vmatpush2.msra.mxu0 0.0
    %770 = vmatprep.subr.mxu0 0.0
    %771 = vmatpush2.msra.mxu0 0.0
    %772 = vmatprep.mubr.f32.mxu0 0.0
    %773 = vmatmul.mubr.f32.gmra.mxu0 %v704
    %v774 = vpop.f32.mrf.mxu0
    %v775 = vadd.f32 0.0, %v774
    %v776 = vpop.f32.mrf.mxu0
    %777 = vdwg.mxu0
    %v778 = vadd.f32 %v690, %v775
    %v779 = vld [vmem:[#allocation8] sm:$0xf]
    %v780 = vld [vmem:[#allocation2] sm:$0xff]
    %782 = vrot.lane.b32.xlu0 %v779, 108
    %v783 = vpop.permute.xlu0 %782
    %v785 = vcombine.high %v780, %v780
    %786 = vrot.lane.b32.xlu0 %v780, 110
    %v787 = vpop.permute.xlu0 %786
    %788 = vrot.lane.b32.xlu0 %v785, 110
    %v789 = vpop.permute.xlu0 %788
    %vm790 = vcmask 900096
    %v791 = vsel %vm790, %v787, %v789
    %v792 = vsel %vm364, %v783, 0
    %v794 = vsel %vm367, %v791, 0
    %796 = vmatprep.subr.mxu0 0.0
    %797 = vmatpush1.msra.mxu0 0.0
    %798 = vmatprep.subr.mxu0 0.0
    %799 = vmatpush1.msra.mxu0 0.0
    %800 = vmatprep.subr.mxu0 0.0
    %801 = vmatpush1.msra.mxu0 0.0
    %802 = vmatprep.subr.mxu0 0.0
    %803 = vmatpush1.msra.mxu0 0.0
    %804 = vmatprep.subr.mxu0 0.0
    %805 = vmatpush1.msra.mxu0 0.0
    %806 = vmatprep.subr.mxu0 0.0
    %807 = vmatpush1.msra.mxu0 0.0
    %808 = vmatprep.subr.mxu0 0.0
    %809 = vmatpush1.msra.mxu0 0.0
    %810 = vmatprep.subr.mxu0 0.0
    %811 = vmatpush1.msra.mxu0 0.0
    %812 = vmatprep.subr.mxu0 0.0
    %813 = vmatpush1.msra.mxu0 0.0
    %814 = vmatprep.subr.mxu0 0.0
    %815 = vmatpush1.msra.mxu0 0.0
    %816 = vmatprep.subr.mxu0 0.0
    %817 = vmatpush1.msra.mxu0 0.0
    %818 = vmatprep.subr.mxu0 0.0
    %819 = vmatpush1.msra.mxu0 0.0
    %820 = vmatprep.subr.mxu0 0.0
    %821 = vmatpush1.msra.mxu0 0.0
    %822 = vmatprep.subr.mxu0 0.0
    %823 = vmatpush1.msra.mxu0 0.0
    %824 = vmatprep.subr.mxu0 0.0
    %825 = vmatpush1.msra.mxu0 0.0
    %826 = vmatprep.subr.mxu0 0.0
    %827 = vmatpush1.msra.mxu0 %v794
    %828 = vmatprep.subr.mxu0 0.0
    %829 = vmatpush2.msra.mxu0 0.0
    %830 = vmatprep.subr.mxu0 0.0
    %831 = vmatpush2.msra.mxu0 0.0
    %832 = vmatprep.subr.mxu0 0.0
    %833 = vmatpush2.msra.mxu0 0.0
    %834 = vmatprep.subr.mxu0 0.0
    %835 = vmatpush2.msra.mxu0 0.0
    %836 = vmatprep.subr.mxu0 0.0
    %837 = vmatpush2.msra.mxu0 0.0
    %838 = vmatprep.subr.mxu0 0.0
    %839 = vmatpush2.msra.mxu0 0.0
    %840 = vmatprep.subr.mxu0 0.0
    %841 = vmatpush2.msra.mxu0 0.0
    %842 = vmatprep.subr.mxu0 0.0
    %843 = vmatpush2.msra.mxu0 0.0
    %844 = vmatprep.subr.mxu0 0.0
    %845 = vmatpush2.msra.mxu0 0.0
    %846 = vmatprep.subr.mxu0 0.0
    %847 = vmatpush2.msra.mxu0 0.0
    %848 = vmatprep.subr.mxu0 0.0
    %849 = vmatpush2.msra.mxu0 0.0
    %850 = vmatprep.subr.mxu0 0.0
    %851 = vmatpush2.msra.mxu0 0.0
    %852 = vmatprep.subr.mxu0 0.0
    %853 = vmatpush2.msra.mxu0 0.0
    %854 = vmatprep.subr.mxu0 0.0
    %855 = vmatpush2.msra.mxu0 0.0
    %856 = vmatprep.subr.mxu0 0.0
    %857 = vmatpush2.msra.mxu0 0.0
    %858 = vmatprep.subr.mxu0 0.0
    %859 = vmatpush2.msra.mxu0 0.0
    %860 = vmatprep.mubr.f32.mxu0 0.0
    %861 = vmatmul.mubr.f32.gmra.mxu0 %v792
    %v862 = vpop.f32.mrf.mxu0
    %v863 = vadd.f32 0.0, %v862
    %v864 = vpop.f32.mrf.mxu0
    %865 = vdwg.mxu0
    %v866 = vadd.f32 %v778, %v863
    %v867 = vld [vmem:[#allocation8] sm:$0xf]
    %v868 = vld [vmem:[#allocation2] sm:$0xff]
    %870 = vrot.lane.b32.xlu0 %v867, 104
    %v871 = vpop.permute.xlu0 %870
    %v873 = vcombine.high %v868, %v868
    %874 = vrot.lane.b32.xlu0 %v868, 96
    %v875 = vpop.permute.xlu0 %874
    %876 = vrot.lane.b32.xlu0 %v873, 96
    %v877 = vpop.permute.xlu0 %876
    %vm878 = vcmask 785408
    %v879 = vsel %vm878, %v875, %v877
    %v880 = vsel %vm364, %v871, 0
    %v882 = vsel %vm367, %v879, 0
    %884 = vmatprep.subr.mxu0 0.0
    %885 = vmatpush1.msra.mxu0 0.0
    %886 = vmatprep.subr.mxu0 0.0
    %887 = vmatpush1.msra.mxu0 0.0
    %888 = vmatprep.subr.mxu0 0.0
    %889 = vmatpush1.msra.mxu0 0.0
    %890 = vmatprep.subr.mxu0 0.0
    %891 = vmatpush1.msra.mxu0 0.0
    %892 = vmatprep.subr.mxu0 0.0
    %893 = vmatpush1.msra.mxu0 0.0
    %894 = vmatprep.subr.mxu0 0.0
    %895 = vmatpush1.msra.mxu0 0.0
    %896 = vmatprep.subr.mxu0 0.0
    %897 = vmatpush1.msra.mxu0 0.0
    %898 = vmatprep.subr.mxu0 0.0
    %899 = vmatpush1.msra.mxu0 0.0
    %900 = vmatprep.subr.mxu0 0.0
    %901 = vmatpush1.msra.mxu0 0.0
    %902 = vmatprep.subr.mxu0 0.0
    %903 = vmatpush1.msra.mxu0 0.0
    %904 = vmatprep.subr.mxu0 0.0
    %905 = vmatpush1.msra.mxu0 0.0
    %906 = vmatprep.subr.mxu0 0.0
    %907 = vmatpush1.msra.mxu0 0.0
    %908 = vmatprep.subr.mxu0 0.0
    %909 = vmatpush1.msra.mxu0 0.0
    %910 = vmatprep.subr.mxu0 0.0
    %911 = vmatpush1.msra.mxu0 0.0
    %912 = vmatprep.subr.mxu0 0.0
    %913 = vmatpush1.msra.mxu0 0.0
    %914 = vmatprep.subr.mxu0 0.0
    %915 = vmatpush1.msra.mxu0 %v882
    %916 = vmatprep.subr.mxu0 0.0
    %917 = vmatpush2.msra.mxu0 0.0
    %918 = vmatprep.subr.mxu0 0.0
    %919 = vmatpush2.msra.mxu0 0.0
    %920 = vmatprep.subr.mxu0 0.0
    %921 = vmatpush2.msra.mxu0 0.0
    %922 = vmatprep.subr.mxu0 0.0
    %923 = vmatpush2.msra.mxu0 0.0
    %924 = vmatprep.subr.mxu0 0.0
    %925 = vmatpush2.msra.mxu0 0.0
    %926 = vmatprep.subr.mxu0 0.0
    %927 = vmatpush2.msra.mxu0 0.0
    %928 = vmatprep.subr.mxu0 0.0
    %929 = vmatpush2.msra.mxu0 0.0
    %930 = vmatprep.subr.mxu0 0.0
    %931 = vmatpush2.msra.mxu0 0.0
    %932 = vmatprep.subr.mxu0 0.0
    %933 = vmatpush2.msra.mxu0 0.0
    %934 = vmatprep.subr.mxu0 0.0
    %935 = vmatpush2.msra.mxu0 0.0
    %936 = vmatprep.subr.mxu0 0.0
    %937 = vmatpush2.msra.mxu0 0.0
    %938 = vmatprep.subr.mxu0 0.0
    %939 = vmatpush2.msra.mxu0 0.0
    %940 = vmatprep.subr.mxu0 0.0
    %941 = vmatpush2.msra.mxu0 0.0
    %942 = vmatprep.subr.mxu0 0.0
    %943 = vmatpush2.msra.mxu0 0.0
    %944 = vmatprep.subr.mxu0 0.0
    %945 = vmatpush2.msra.mxu0 0.0
    %946 = vmatprep.subr.mxu0 0.0
    %947 = vmatpush2.msra.mxu0 0.0
    %948 = vmatprep.mubr.f32.mxu0 0.0
    %949 = vmatmul.mubr.f32.gmra.mxu0 %v880
    %v950 = vpop.f32.mrf.mxu0
    %v951 = vadd.f32 0.0, %v950
    %v952 = vpop.f32.mrf.mxu0
    %953 = vdwg.mxu0
    %v954 = vadd.f32 %v866, %v951
    %v955 = vld [vmem:[#allocation8] sm:$0xf]
    %v956 = vld [vmem:[#allocation2] sm:$0xff]
    %958 = vrot.lane.b32.xlu0 %v955, 100
    %v959 = vpop.permute.xlu0 %958
    %v961 = vcombine.high %v956, %v956
    %962 = vrot.lane.b32.xlu0 %v956, 95
    %v963 = vpop.permute.xlu0 %962
    %964 = vrot.lane.b32.xlu0 %v961, 95
    %v965 = vpop.permute.xlu0 %964
    %vm966 = vcmask 777216
    %v967 = vsel %vm966, %v963, %v965
    %v968 = vsel %vm364, %v959, 0
    %v970 = vsel %vm367, %v967, 0
    %972 = vmatprep.subr.mxu0 0.0
    %973 = vmatpush1.msra.mxu0 0.0
    %974 = vmatprep.subr.mxu0 0.0
    %975 = vmatpush1.msra.mxu0 0.0
    %976 = vmatprep.subr.mxu0 0.0
    %977 = vmatpush1.msra.mxu0 0.0
    %978 = vmatprep.subr.mxu0 0.0
    %979 = vmatpush1.msra.mxu0 0.0
    %980 = vmatprep.subr.mxu0 0.0
    %981 = vmatpush1.msra.mxu0 0.0
    %982 = vmatprep.subr.mxu0 0.0
    %983 = vmatpush1.msra.mxu0 0.0
    %984 = vmatprep.subr.mxu0 0.0
    %985 = vmatpush1.msra.mxu0 0.0
    %986 = vmatprep.subr.mxu0 0.0
    %987 = vmatpush1.msra.mxu0 0.0
    %988 = vmatprep.subr.mxu0 0.0
    %989 = vmatpush1.msra.mxu0 0.0
    %990 = vmatprep.subr.mxu0 0.0
    %991 = vmatpush1.msra.mxu0 0.0
    %992 = vmatprep.subr.mxu0 0.0
    %993 = vmatpush1.msra.mxu0 0.0
    %994 = vmatprep.subr.mxu0 0.0
    %995 = vmatpush1.msra.mxu0 0.0
    %996 = vmatprep.subr.mxu0 0.0
    %997 = vmatpush1.msra.mxu0 0.0
    %998 = vmatprep.subr.mxu0 0.0
    %999 = vmatpush1.msra.mxu0 0.0
    %1000 = vmatprep.subr.mxu0 0.0
    %1001 = vmatpush1.msra.mxu0 0.0
    %1002 = vmatprep.subr.mxu0 0.0
    %1003 = vmatpush1.msra.mxu0 %v970
    %1004 = vmatprep.subr.mxu0 0.0
    %1005 = vmatpush2.msra.mxu0 0.0
    %1006 = vmatprep.subr.mxu0 0.0
    %1007 = vmatpush2.msra.mxu0 0.0
    %1008 = vmatprep.subr.mxu0 0.0
    %1009 = vmatpush2.msra.mxu0 0.0
    %1010 = vmatprep.subr.mxu0 0.0
    %1011 = vmatpush2.msra.mxu0 0.0
    %1012 = vmatprep.subr.mxu0 0.0
    %1013 = vmatpush2.msra.mxu0 0.0
    %1014 = vmatprep.subr.mxu0 0.0
    %1015 = vmatpush2.msra.mxu0 0.0
    %1016 = vmatprep.subr.mxu0 0.0
    %1017 = vmatpush2.msra.mxu0 0.0
    %1018 = vmatprep.subr.mxu0 0.0
    %1019 = vmatpush2.msra.mxu0 0.0
    %1020 = vmatprep.subr.mxu0 0.0
    %1021 = vmatpush2.msra.mxu0 0.0
    %1022 = vmatprep.subr.mxu0 0.0
    %1023 = vmatpush2.msra.mxu0 0.0
    %1024 = vmatprep.subr.mxu0 0.0
    %1025 = vmatpush2.msra.mxu0 0.0
    %1026 = vmatprep.subr.mxu0 0.0
    %1027 = vmatpush2.msra.mxu0 0.0
    %1028 = vmatprep.subr.mxu0 0.0
    %1029 = vmatpush2.msra.mxu0 0.0
    %1030 = vmatprep.subr.mxu0 0.0
    %1031 = vmatpush2.msra.mxu0 0.0
    %1032 = vmatprep.subr.mxu0 0.0
    %1033 = vmatpush2.msra.mxu0 0.0
    %1034 = vmatprep.subr.mxu0 0.0
    %1035 = vmatpush2.msra.mxu0 0.0
    %1036 = vmatprep.mubr.f32.mxu0 0.0
    %1037 = vmatmul.mubr.f32.gmra.mxu0 %v968
    %v1038 = vpop.f32.mrf.mxu0
    %v1039 = vadd.f32 0.0, %v1038
    %v1040 = vpop.f32.mrf.mxu0
    %1041 = vdwg.mxu0
    %v1042 = vadd.f32 %v954, %v1039
    %v1043 = vld [vmem:[#allocation8] sm:$0xf]
    %v1044 = vld [vmem:[#allocation2] sm:$0xff]
    %1046 = vrot.lane.b32.xlu0 %v1043, 96
    %v1047 = vpop.permute.xlu0 %1046
    %v1049 = vcombine.high %v1044, %v1044
    %1050 = vrot.lane.b32.xlu0 %v1044, 94
    %v1051 = vpop.permute.xlu0 %1050
    %1052 = vrot.lane.b32.xlu0 %v1049, 94
    %v1053 = vpop.permute.xlu0 %1052
    %vm1054 = vcmask 769024
    %v1055 = vsel %vm1054, %v1051, %v1053
    %v1056 = vsel %vm364, %v1047, 0
    %v1058 = vsel %vm367, %v1055, 0
    %1060 = vmatprep.subr.mxu0 0.0
    %1061 = vmatpush1.msra.mxu0 0.0
    %1062 = vmatprep.subr.mxu0 0.0
    %1063 = vmatpush1.msra.mxu0 0.0
    %1064 = vmatprep.subr.mxu0 0.0
    %1065 = vmatpush1.msra.mxu0 0.0
    %1066 = vmatprep.subr.mxu0 0.0
    %1067 = vmatpush1.msra.mxu0 0.0
    %1068 = vmatprep.subr.mxu0 0.0
    %1069 = vmatpush1.msra.mxu0 0.0
    %1070 = vmatprep.subr.mxu0 0.0
    %1071 = vmatpush1.msra.mxu0 0.0
    %1072 = vmatprep.subr.mxu0 0.0
    %1073 = vmatpush1.msra.mxu0 0.0
    %1074 = vmatprep.subr.mxu0 0.0
    %1075 = vmatpush1.msra.mxu0 0.0
    %1076 = vmatprep.subr.mxu0 0.0
    %1077 = vmatpush1.msra.mxu0 0.0
    %1078 = vmatprep.subr.mxu0 0.0
    %1079 = vmatpush1.msra.mxu0 0.0
    %1080 = vmatprep.subr.mxu0 0.0
    %1081 = vmatpush1.msra.mxu0 0.0
    %1082 = vmatprep.subr.mxu0 0.0
    %1083 = vmatpush1.msra.mxu0 0.0
    %1084 = vmatprep.subr.mxu0 0.0
    %1085 = vmatpush1.msra.mxu0 0.0
    %1086 = vmatprep.subr.mxu0 0.0
    %1087 = vmatpush1.msra.mxu0 0.0
    %1088 = vmatprep.subr.mxu0 0.0
    %1089 = vmatpush1.msra.mxu0 0.0
    %1090 = vmatprep.subr.mxu0 0.0
    %1091 = vmatpush1.msra.mxu0 %v1058
    %1092 = vmatprep.subr.mxu0 0.0
    %1093 = vmatpush2.msra.mxu0 0.0
    %1094 = vmatprep.subr.mxu0 0.0
    %1095 = vmatpush2.msra.mxu0 0.0
    %1096 = vmatprep.subr.mxu0 0.0
    %1097 = vmatpush2.msra.mxu0 0.0
    %1098 = vmatprep.subr.mxu0 0.0
    %1099 = vmatpush2.msra.mxu0 0.0
    %1100 = vmatprep.subr.mxu0 0.0
    %1101 = vmatpush2.msra.mxu0 0.0
    %1102 = vmatprep.subr.mxu0 0.0
    %1103 = vmatpush2.msra.mxu0 0.0
    %1104 = vmatprep.subr.mxu0 0.0
    %1105 = vmatpush2.msra.mxu0 0.0
    %1106 = vmatprep.subr.mxu0 0.0
    %1107 = vmatpush2.msra.mxu0 0.0
    %1108 = vmatprep.subr.mxu0 0.0
    %1109 = vmatpush2.msra.mxu0 0.0
    %1110 = vmatprep.subr.mxu0 0.0
    %1111 = vmatpush2.msra.mxu0 0.0
    %1112 = vmatprep.subr.mxu0 0.0
    %1113 = vmatpush2.msra.mxu0 0.0
    %1114 = vmatprep.subr.mxu0 0.0
    %1115 = vmatpush2.msra.mxu0 0.0
    %1116 = vmatprep.subr.mxu0 0.0
    %1117 = vmatpush2.msra.mxu0 0.0
    %1118 = vmatprep.subr.mxu0 0.0
    %1119 = vmatpush2.msra.mxu0 0.0
    %1120 = vmatprep.subr.mxu0 0.0
    %1121 = vmatpush2.msra.mxu0 0.0
    %1122 = vmatprep.subr.mxu0 0.0
    %1123 = vmatpush2.msra.mxu0 0.0
    %1124 = vmatprep.mubr.f32.mxu0 0.0
    %1125 = vmatmul.mubr.f32.gmra.mxu0 %v1056
    %v1126 = vpop.f32.mrf.mxu0
    %v1127 = vadd.f32 0.0, %v1126
    %v1128 = vpop.f32.mrf.mxu0
    %1129 = vdwg.mxu0
    %v1130 = vadd.f32 %v1042, %v1127
    %v1131 = vld [vmem:[#allocation8] sm:$0xf]
    %1133 = vset.pattern.permute.xlu0 36
    %1134 = vperm.xlu0 %1133, %v1131
    %v1135 = vpop.permute.xlu0 %1134
    %v1137 = vadd.f32 %v1130, %v1135
    %v1138 = vmax.f32 %v1137, 0.0
    %v1139 = vsel %vm59, %v1138, 0.0
    %1141 = vrot.lane.b32.xlu0 %v1139, 17
    %v1142 = vpop.permute.xlu0 %1141
    %v1143 = vrot.slane %v1142, 4
    %v1144 = vsel %vm343, %v1143, %v1142
    %1146 = vst.msk [vmem:[#allocation2] sm:$0xff] %vm348, %v1144
    %s1147 = scalar_lea.vmem [#allocation8], 4
    %v1148 = vld [vmem:[%s1147] sm:$0xf]
    %v1149 = vld [vmem:[#allocation2] sm:$0xf]
    %v1150 = vld [vmem:[#allocation2] sm:$0xff]
    %1152 = vrot.lane.b32.xlu0 %v1148, 124
    %v1153 = vpop.permute.xlu0 %1152
    %v1155 = vcombine.high %v1150, %v1150
    %1156 = vrot.lane.b32.xlu0 %v1150, 127
    %v1157 = vpop.permute.xlu0 %1156
    %1158 = vrot.lane.b32.xlu0 %v1155, 127
    %v1159 = vpop.permute.xlu0 %1158
    %v1160 = vsel %vm362, %v1157, %v1159
    %v1161 = vsel %vm364, %v1153, 0
    %v1163 = vsel %vm367, %v1160, 0
    %1165 = vmatprep.subr.mxu0 0.0
    %1166 = vmatpush1.msra.mxu0 0.0
    %1167 = vmatprep.subr.mxu0 0.0
    %1168 = vmatpush1.msra.mxu0 0.0
    %1169 = vmatprep.subr.mxu0 0.0
    %1170 = vmatpush1.msra.mxu0 0.0
    %1171 = vmatprep.subr.mxu0 0.0
    %1172 = vmatpush1.msra.mxu0 0.0
    %1173 = vmatprep.subr.mxu0 0.0
    %1174 = vmatpush1.msra.mxu0 0.0
    %1175 = vmatprep.subr.mxu0 0.0
    %1176 = vmatpush1.msra.mxu0 0.0
    %1177 = vmatprep.subr.mxu0 0.0
    %1178 = vmatpush1.msra.mxu0 0.0
    %1179 = vmatprep.subr.mxu0 0.0
    %1180 = vmatpush1.msra.mxu0 0.0
    %1181 = vmatprep.subr.mxu0 0.0
    %1182 = vmatpush1.msra.mxu0 0.0
    %1183 = vmatprep.subr.mxu0 0.0
    %1184 = vmatpush1.msra.mxu0 0.0
    %1185 = vmatprep.subr.mxu0 0.0
    %1186 = vmatpush1.msra.mxu0 0.0
    %1187 = vmatprep.subr.mxu0 0.0
    %1188 = vmatpush1.msra.mxu0 0.0
    %1189 = vmatprep.subr.mxu0 0.0
    %1190 = vmatpush1.msra.mxu0 0.0
    %1191 = vmatprep.subr.mxu0 0.0
    %1192 = vmatpush1.msra.mxu0 0.0
    %1193 = vmatprep.subr.mxu0 0.0
    %1194 = vmatpush1.msra.mxu0 0.0
    %1195 = vmatprep.subr.mxu0 0.0
    %1196 = vmatpush1.msra.mxu0 %v1163
    %1197 = vmatprep.subr.mxu0 0.0
    %1198 = vmatpush2.msra.mxu0 0.0
    %1199 = vmatprep.subr.mxu0 0.0
    %1200 = vmatpush2.msra.mxu0 0.0
    %1201 = vmatprep.subr.mxu0 0.0
    %1202 = vmatpush2.msra.mxu0 0.0
    %1203 = vmatprep.subr.mxu0 0.0
    %1204 = vmatpush2.msra.mxu0 0.0
    %1205 = vmatprep.subr.mxu0 0.0
    %1206 = vmatpush2.msra.mxu0 0.0
    %1207 = vmatprep.subr.mxu0 0.0
    %1208 = vmatpush2.msra.mxu0 0.0
    %1209 = vmatprep.subr.mxu0 0.0
    %1210 = vmatpush2.msra.mxu0 0.0
    %1211 = vmatprep.subr.mxu0 0.0
    %1212 = vmatpush2.msra.mxu0 0.0
    %1213 = vmatprep.subr.mxu0 0.0
    %1214 = vmatpush2.msra.mxu0 0.0
    %1215 = vmatprep.subr.mxu0 0.0
    %1216 = vmatpush2.msra.mxu0 0.0
    %1217 = vmatprep.subr.mxu0 0.0
    %1218 = vmatpush2.msra.mxu0 0.0
    %1219 = vmatprep.subr.mxu0 0.0
    %1220 = vmatpush2.msra.mxu0 0.0
    %1221 = vmatprep.subr.mxu0 0.0
    %1222 = vmatpush2.msra.mxu0 0.0
    %1223 = vmatprep.subr.mxu0 0.0
    %1224 = vmatpush2.msra.mxu0 0.0
    %1225 = vmatprep.subr.mxu0 0.0
    %1226 = vmatpush2.msra.mxu0 0.0
    %1227 = vmatprep.subr.mxu0 0.0
    %1228 = vmatpush2.msra.mxu0 0.0
    %1229 = vmatprep.mubr.f32.mxu0 0.0
    %1230 = vmatmul.mubr.f32.gmra.mxu0 %v1161
    %v1231 = vpop.f32.mrf.mxu0
    %v1232 = vadd.f32 0.0, %v1231
    %v1233 = vpop.f32.mrf.mxu0
    %1234 = vdwg.mxu0
    %v1235 = vsel %vm364, %v1148, 0
    %v1238 = vsel %vm367, %v1149, 0
    %1240 = vmatprep.subr.mxu0 0.0
    %1241 = vmatpush1.msra.mxu0 0.0
    %1242 = vmatprep.subr.mxu0 0.0
    %1243 = vmatpush1.msra.mxu0 0.0
    %1244 = vmatprep.subr.mxu0 0.0
    %1245 = vmatpush1.msra.mxu0 0.0
    %1246 = vmatprep.subr.mxu0 0.0
    %1247 = vmatpush1.msra.mxu0 0.0
    %1248 = vmatprep.subr.mxu0 0.0
    %1249 = vmatpush1.msra.mxu0 0.0
    %1250 = vmatprep.subr.mxu0 0.0
    %1251 = vmatpush1.msra.mxu0 0.0
    %1252 = vmatprep.subr.mxu0 0.0
    %1253 = vmatpush1.msra.mxu0 0.0
    %1254 = vmatprep.subr.mxu0 0.0
    %1255 = vmatpush1.msra.mxu0 0.0
    %1256 = vmatprep.subr.mxu0 0.0
    %1257 = vmatpush1.msra.mxu0 0.0
    %1258 = vmatprep.subr.mxu0 0.0
    %1259 = vmatpush1.msra.mxu0 0.0
    %1260 = vmatprep.subr.mxu0 0.0
    %1261 = vmatpush1.msra.mxu0 0.0
    %1262 = vmatprep.subr.mxu0 0.0
    %1263 = vmatpush1.msra.mxu0 0.0
    %1264 = vmatprep.subr.mxu0 0.0
    %1265 = vmatpush1.msra.mxu0 0.0
    %1266 = vmatprep.subr.mxu0 0.0
    %1267 = vmatpush1.msra.mxu0 0.0
    %1268 = vmatprep.subr.mxu0 0.0
    %1269 = vmatpush1.msra.mxu0 0.0
    %1270 = vmatprep.subr.mxu0 0.0
    %1271 = vmatpush1.msra.mxu0 %v1238
    %1272 = vmatprep.subr.mxu0 0.0
    %1273 = vmatpush2.msra.mxu0 0.0
    %1274 = vmatprep.subr.mxu0 0.0
    %1275 = vmatpush2.msra.mxu0 0.0
    %1276 = vmatprep.subr.mxu0 0.0
    %1277 = vmatpush2.msra.mxu0 0.0
    %1278 = vmatprep.subr.mxu0 0.0
    %1279 = vmatpush2.msra.mxu0 0.0
    %1280 = vmatprep.subr.mxu0 0.0
    %1281 = vmatpush2.msra.mxu0 0.0
    %1282 = vmatprep.subr.mxu0 0.0
    %1283 = vmatpush2.msra.mxu0 0.0
    %1284 = vmatprep.subr.mxu0 0.0
    %1285 = vmatpush2.msra.mxu0 0.0
    %1286 = vmatprep.subr.mxu0 0.0
    %1287 = vmatpush2.msra.mxu0 0.0
    %1288 = vmatprep.subr.mxu0 0.0
    %1289 = vmatpush2.msra.mxu0 0.0
    %1290 = vmatprep.subr.mxu0 0.0
    %1291 = vmatpush2.msra.mxu0 0.0
    %1292 = vmatprep.subr.mxu0 0.0
    %1293 = vmatpush2.msra.mxu0 0.0
    %1294 = vmatprep.subr.mxu0 0.0
    %1295 = vmatpush2.msra.mxu0 0.0
    %1296 = vmatprep.subr.mxu0 0.0
    %1297 = vmatpush2.msra.mxu0 0.0
    %1298 = vmatprep.subr.mxu0 0.0
    %1299 = vmatpush2.msra.mxu0 0.0
    %1300 = vmatprep.subr.mxu0 0.0
    %1301 = vmatpush2.msra.mxu0 0.0
    %1302 = vmatprep.subr.mxu0 0.0
    %1303 = vmatpush2.msra.mxu0 0.0
    %1304 = vmatprep.mubr.f32.mxu0 0.0
    %1305 = vmatmul.mubr.f32.gmra.mxu0 %v1235
    %v1306 = vpop.f32.mrf.mxu0
    %v1307 = vadd.f32 %v1232, %v1306
    %v1308 = vpop.f32.mrf.mxu0
    %1309 = vdwg.mxu0
    %v1310 = vld [vmem:[%s1147] sm:$0xf]
    %v1311 = vld [vmem:[#allocation2] sm:$0xff]
    %1313 = vrot.lane.b32.xlu0 %v1310, 120
    %v1314 = vpop.permute.xlu0 %1313
    %v1316 = vcombine.high %v1311, %v1311
    %1317 = vrot.lane.b32.xlu0 %v1311, 126
    %v1318 = vpop.permute.xlu0 %1317
    %1319 = vrot.lane.b32.xlu0 %v1316, 126
    %v1320 = vpop.permute.xlu0 %1319
    %v1321 = vsel %vm526, %v1318, %v1320
    %v1322 = vsel %vm364, %v1314, 0
    %v1324 = vsel %vm367, %v1321, 0
    %1326 = vmatprep.subr.mxu0 0.0
    %1327 = vmatpush1.msra.mxu0 0.0
    %1328 = vmatprep.subr.mxu0 0.0
    %1329 = vmatpush1.msra.mxu0 0.0
    %1330 = vmatprep.subr.mxu0 0.0
    %1331 = vmatpush1.msra.mxu0 0.0
    %1332 = vmatprep.subr.mxu0 0.0
    %1333 = vmatpush1.msra.mxu0 0.0
    %1334 = vmatprep.subr.mxu0 0.0
    %1335 = vmatpush1.msra.mxu0 0.0
    %1336 = vmatprep.subr.mxu0 0.0
    %1337 = vmatpush1.msra.mxu0 0.0
    %1338 = vmatprep.subr.mxu0 0.0
    %1339 = vmatpush1.msra.mxu0 0.0
    %1340 = vmatprep.subr.mxu0 0.0
    %1341 = vmatpush1.msra.mxu0 0.0
    %1342 = vmatprep.subr.mxu0 0.0
    %1343 = vmatpush1.msra.mxu0 0.0
    %1344 = vmatprep.subr.mxu0 0.0
    %1345 = vmatpush1.msra.mxu0 0.0
    %1346 = vmatprep.subr.mxu0 0.0
    %1347 = vmatpush1.msra.mxu0 0.0
    %1348 = vmatprep.subr.mxu0 0.0
    %1349 = vmatpush1.msra.mxu0 0.0
    %1350 = vmatprep.subr.mxu0 0.0
    %1351 = vmatpush1.msra.mxu0 0.0
    %1352 = vmatprep.subr.mxu0 0.0
    %1353 = vmatpush1.msra.mxu0 0.0
    %1354 = vmatprep.subr.mxu0 0.0
    %1355 = vmatpush1.msra.mxu0 0.0
    %1356 = vmatprep.subr.mxu0 0.0
    %1357 = vmatpush1.msra.mxu0 %v1324
    %1358 = vmatprep.subr.mxu0 0.0
    %1359 = vmatpush2.msra.mxu0 0.0
    %1360 = vmatprep.subr.mxu0 0.0
    %1361 = vmatpush2.msra.mxu0 0.0
    %1362 = vmatprep.subr.mxu0 0.0
    %1363 = vmatpush2.msra.mxu0 0.0
    %1364 = vmatprep.subr.mxu0 0.0
    %1365 = vmatpush2.msra.mxu0 0.0
    %1366 = vmatprep.subr.mxu0 0.0
    %1367 = vmatpush2.msra.mxu0 0.0
    %1368 = vmatprep.subr.mxu0 0.0
    %1369 = vmatpush2.msra.mxu0 0.0
    %1370 = vmatprep.subr.mxu0 0.0
    %1371 = vmatpush2.msra.mxu0 0.0
    %1372 = vmatprep.subr.mxu0 0.0
    %1373 = vmatpush2.msra.mxu0 0.0
    %1374 = vmatprep.subr.mxu0 0.0
    %1375 = vmatpush2.msra.mxu0 0.0
    %1376 = vmatprep.subr.mxu0 0.0
    %1377 = vmatpush2.msra.mxu0 0.0
    %1378 = vmatprep.subr.mxu0 0.0
    %1379 = vmatpush2.msra.mxu0 0.0
    %1380 = vmatprep.subr.mxu0 0.0
    %1381 = vmatpush2.msra.mxu0 0.0
    %1382 = vmatprep.subr.mxu0 0.0
    %1383 = vmatpush2.msra.mxu0 0.0
    %1384 = vmatprep.subr.mxu0 0.0
    %1385 = vmatpush2.msra.mxu0 0.0
    %1386 = vmatprep.subr.mxu0 0.0
    %1387 = vmatpush2.msra.mxu0 0.0
    %1388 = vmatprep.subr.mxu0 0.0
    %1389 = vmatpush2.msra.mxu0 0.0
    %1390 = vmatprep.mubr.f32.mxu0 0.0
    %1391 = vmatmul.mubr.f32.gmra.mxu0 %v1322
    %v1392 = vpop.f32.mrf.mxu0
    %v1393 = vadd.f32 0.0, %v1392
    %v1394 = vpop.f32.mrf.mxu0
    %1395 = vdwg.mxu0
    %v1396 = vadd.f32 %v1307, %v1393
    %v1397 = vld [vmem:[%s1147] sm:$0xf]
    %v1398 = vld [vmem:[#allocation2] sm:$0xff]
    %1400 = vrot.lane.b32.xlu0 %v1397, 116
    %v1401 = vpop.permute.xlu0 %1400
    %v1403 = vcombine.high %v1398, %v1398
    %1404 = vrot.lane.b32.xlu0 %v1398, 112
    %v1405 = vpop.permute.xlu0 %1404
    %1406 = vrot.lane.b32.xlu0 %v1403, 112
    %v1407 = vpop.permute.xlu0 %1406
    %v1408 = vsel %vm614, %v1405, %v1407
    %v1409 = vsel %vm364, %v1401, 0
    %v1411 = vsel %vm367, %v1408, 0
    %1413 = vmatprep.subr.mxu0 0.0
    %1414 = vmatpush1.msra.mxu0 0.0
    %1415 = vmatprep.subr.mxu0 0.0
    %1416 = vmatpush1.msra.mxu0 0.0
    %1417 = vmatprep.subr.mxu0 0.0
    %1418 = vmatpush1.msra.mxu0 0.0
    %1419 = vmatprep.subr.mxu0 0.0
    %1420 = vmatpush1.msra.mxu0 0.0
    %1421 = vmatprep.subr.mxu0 0.0
    %1422 = vmatpush1.msra.mxu0 0.0
    %1423 = vmatprep.subr.mxu0 0.0
    %1424 = vmatpush1.msra.mxu0 0.0
    %1425 = vmatprep.subr.mxu0 0.0
    %1426 = vmatpush1.msra.mxu0 0.0
    %1427 = vmatprep.subr.mxu0 0.0
    %1428 = vmatpush1.msra.mxu0 0.0
    %1429 = vmatprep.subr.mxu0 0.0
    %1430 = vmatpush1.msra.mxu0 0.0
    %1431 = vmatprep.subr.mxu0 0.0
    %1432 = vmatpush1.msra.mxu0 0.0
    %1433 = vmatprep.subr.mxu0 0.0
    %1434 = vmatpush1.msra.mxu0 0.0
    %1435 = vmatprep.subr.mxu0 0.0
    %1436 = vmatpush1.msra.mxu0 0.0
    %1437 = vmatprep.subr.mxu0 0.0
    %1438 = vmatpush1.msra.mxu0 0.0
    %1439 = vmatprep.subr.mxu0 0.0
    %1440 = vmatpush1.msra.mxu0 0.0
    %1441 = vmatprep.subr.mxu0 0.0
    %1442 = vmatpush1.msra.mxu0 0.0
    %1443 = vmatprep.subr.mxu0 0.0
    %1444 = vmatpush1.msra.mxu0 %v1411
    %1445 = vmatprep.subr.mxu0 0.0
    %1446 = vmatpush2.msra.mxu0 0.0
    %1447 = vmatprep.subr.mxu0 0.0
    %1448 = vmatpush2.msra.mxu0 0.0
    %1449 = vmatprep.subr.mxu0 0.0
    %1450 = vmatpush2.msra.mxu0 0.0
    %1451 = vmatprep.subr.mxu0 0.0
    %1452 = vmatpush2.msra.mxu0 0.0
    %1453 = vmatprep.subr.mxu0 0.0
    %1454 = vmatpush2.msra.mxu0 0.0
    %1455 = vmatprep.subr.mxu0 0.0
    %1456 = vmatpush2.msra.mxu0 0.0
    %1457 = vmatprep.subr.mxu0 0.0
    %1458 = vmatpush2.msra.mxu0 0.0
    %1459 = vmatprep.subr.mxu0 0.0
    %1460 = vmatpush2.msra.mxu0 0.0
    %1461 = vmatprep.subr.mxu0 0.0
    %1462 = vmatpush2.msra.mxu0 0.0
    %1463 = vmatprep.subr.mxu0 0.0
    %1464 = vmatpush2.msra.mxu0 0.0
    %1465 = vmatprep.subr.mxu0 0.0
    %1466 = vmatpush2.msra.mxu0 0.0
    %1467 = vmatprep.subr.mxu0 0.0
    %1468 = vmatpush2.msra.mxu0 0.0
    %1469 = vmatprep.subr.mxu0 0.0
    %1470 = vmatpush2.msra.mxu0 0.0
    %1471 = vmatprep.subr.mxu0 0.0
    %1472 = vmatpush2.msra.mxu0 0.0
    %1473 = vmatprep.subr.mxu0 0.0
    %1474 = vmatpush2.msra.mxu0 0.0
    %1475 = vmatprep.subr.mxu0 0.0
    %1476 = vmatpush2.msra.mxu0 0.0
    %1477 = vmatprep.mubr.f32.mxu0 0.0
    %1478 = vmatmul.mubr.f32.gmra.mxu0 %v1409
    %v1479 = vpop.f32.mrf.mxu0
    %v1480 = vadd.f32 0.0, %v1479
    %v1481 = vpop.f32.mrf.mxu0
    %1482 = vdwg.mxu0
    %v1483 = vadd.f32 %v1396, %v1480
    %v1484 = vld [vmem:[%s1147] sm:$0xf]
    %v1485 = vld [vmem:[#allocation2] sm:$0xff]
    %1487 = vrot.lane.b32.xlu0 %v1484, 112
    %v1488 = vpop.permute.xlu0 %1487
    %v1490 = vcombine.high %v1485, %v1485
    %1491 = vrot.lane.b32.xlu0 %v1485, 111
    %v1492 = vpop.permute.xlu0 %1491
    %1493 = vrot.lane.b32.xlu0 %v1490, 111
    %v1494 = vpop.permute.xlu0 %1493
    %v1495 = vsel %vm702, %v1492, %v1494
    %v1496 = vsel %vm364, %v1488, 0
    %v1498 = vsel %vm367, %v1495, 0
    %1500 = vmatprep.subr.mxu0 0.0
    %1501 = vmatpush1.msra.mxu0 0.0
    %1502 = vmatprep.subr.mxu0 0.0
    %1503 = vmatpush1.msra.mxu0 0.0
    %1504 = vmatprep.subr.mxu0 0.0
    %1505 = vmatpush1.msra.mxu0 0.0
    %1506 = vmatprep.subr.mxu0 0.0
    %1507 = vmatpush1.msra.mxu0 0.0
    %1508 = vmatprep.subr.mxu0 0.0
    %1509 = vmatpush1.msra.mxu0 0.0
    %1510 = vmatprep.subr.mxu0 0.0
    %1511 = vmatpush1.msra.mxu0 0.0
    %1512 = vmatprep.subr.mxu0 0.0
    %1513 = vmatpush1.msra.mxu0 0.0
    %1514 = vmatprep.subr.mxu0 0.0
    %1515 = vmatpush1.msra.mxu0 0.0
    %1516 = vmatprep.subr.mxu0 0.0
    %1517 = vmatpush1.msra.mxu0 0.0
    %1518 = vmatprep.subr.mxu0 0.0
    %1519 = vmatpush1.msra.mxu0 0.0
    %1520 = vmatprep.subr.mxu0 0.0
    %1521 = vmatpush1.msra.mxu0 0.0
    %1522 = vmatprep.subr.mxu0 0.0
    %1523 = vmatpush1.msra.mxu0 0.0
    %1524 = vmatprep.subr.mxu0 0.0
    %1525 = vmatpush1.msra.mxu0 0.0
    %1526 = vmatprep.subr.mxu0 0.0
    %1527 = vmatpush1.msra.mxu0 0.0
    %1528 = vmatprep.subr.mxu0 0.0
    %1529 = vmatpush1.msra.mxu0 0.0
    %1530 = vmatprep.subr.mxu0 0.0
    %1531 = vmatpush1.msra.mxu0 %v1498
    %1532 = vmatprep.subr.mxu0 0.0
    %1533 = vmatpush2.msra.mxu0 0.0
    %1534 = vmatprep.subr.mxu0 0.0
    %1535 = vmatpush2.msra.mxu0 0.0
    %1536 = vmatprep.subr.mxu0 0.0
    %1537 = vmatpush2.msra.mxu0 0.0
    %1538 = vmatprep.subr.mxu0 0.0
    %1539 = vmatpush2.msra.mxu0 0.0
    %1540 = vmatprep.subr.mxu0 0.0
    %1541 = vmatpush2.msra.mxu0 0.0
    %1542 = vmatprep.subr.mxu0 0.0
    %1543 = vmatpush2.msra.mxu0 0.0
    %1544 = vmatprep.subr.mxu0 0.0
    %1545 = vmatpush2.msra.mxu0 0.0
    %1546 = vmatprep.subr.mxu0 0.0
    %1547 = vmatpush2.msra.mxu0 0.0
    %1548 = vmatprep.subr.mxu0 0.0
    %1549 = vmatpush2.msra.mxu0 0.0
    %1550 = vmatprep.subr.mxu0 0.0
    %1551 = vmatpush2.msra.mxu0 0.0
    %1552 = vmatprep.subr.mxu0 0.0
    %1553 = vmatpush2.msra.mxu0 0.0
    %1554 = vmatprep.subr.mxu0 0.0
    %1555 = vmatpush2.msra.mxu0 0.0
    %1556 = vmatprep.subr.mxu0 0.0
    %1557 = vmatpush2.msra.mxu0 0.0
    %1558 = vmatprep.subr.mxu0 0.0
    %1559 = vmatpush2.msra.mxu0 0.0
    %1560 = vmatprep.subr.mxu0 0.0
    %1561 = vmatpush2.msra.mxu0 0.0
    %1562 = vmatprep.subr.mxu0 0.0
    %1563 = vmatpush2.msra.mxu0 0.0
    %1564 = vmatprep.mubr.f32.mxu0 0.0
    %1565 = vmatmul.mubr.f32.gmra.mxu0 %v1496
    %v1566 = vpop.f32.mrf.mxu0
    %v1567 = vadd.f32 0.0, %v1566
    %v1568 = vpop.f32.mrf.mxu0
    %1569 = vdwg.mxu0
    %v1570 = vadd.f32 %v1483, %v1567
    %v1571 = vld [vmem:[%s1147] sm:$0xf]
    %v1572 = vld [vmem:[#allocation2] sm:$0xff]
    %1574 = vrot.lane.b32.xlu0 %v1571, 108
    %v1575 = vpop.permute.xlu0 %1574
    %v1577 = vcombine.high %v1572, %v1572
    %1578 = vrot.lane.b32.xlu0 %v1572, 110
    %v1579 = vpop.permute.xlu0 %1578
    %1580 = vrot.lane.b32.xlu0 %v1577, 110
    %v1581 = vpop.permute.xlu0 %1580
    %v1582 = vsel %vm790, %v1579, %v1581
    %v1583 = vsel %vm364, %v1575, 0
    %v1585 = vsel %vm367, %v1582, 0
    %1587 = vmatprep.subr.mxu0 0.0
    %1588 = vmatpush1.msra.mxu0 0.0
    %1589 = vmatprep.subr.mxu0 0.0
    %1590 = vmatpush1.msra.mxu0 0.0
    %1591 = vmatprep.subr.mxu0 0.0
    %1592 = vmatpush1.msra.mxu0 0.0
    %1593 = vmatprep.subr.mxu0 0.0
    %1594 = vmatpush1.msra.mxu0 0.0
    %1595 = vmatprep.subr.mxu0 0.0
    %1596 = vmatpush1.msra.mxu0 0.0
    %1597 = vmatprep.subr.mxu0 0.0
    %1598 = vmatpush1.msra.mxu0 0.0
    %1599 = vmatprep.subr.mxu0 0.0
    %1600 = vmatpush1.msra.mxu0 0.0
    %1601 = vmatprep.subr.mxu0 0.0
    %1602 = vmatpush1.msra.mxu0 0.0
    %1603 = vmatprep.subr.mxu0 0.0
    %1604 = vmatpush1.msra.mxu0 0.0
    %1605 = vmatprep.subr.mxu0 0.0
    %1606 = vmatpush1.msra.mxu0 0.0
    %1607 = vmatprep.subr.mxu0 0.0
    %1608 = vmatpush1.msra.mxu0 0.0
    %1609 = vmatprep.subr.mxu0 0.0
    %1610 = vmatpush1.msra.mxu0 0.0
    %1611 = vmatprep.subr.mxu0 0.0
    %1612 = vmatpush1.msra.mxu0 0.0
    %1613 = vmatprep.subr.mxu0 0.0
    %1614 = vmatpush1.msra.mxu0 0.0
    %1615 = vmatprep.subr.mxu0 0.0
    %1616 = vmatpush1.msra.mxu0 0.0
    %1617 = vmatprep.subr.mxu0 0.0
    %1618 = vmatpush1.msra.mxu0 %v1585
    %1619 = vmatprep.subr.mxu0 0.0
    %1620 = vmatpush2.msra.mxu0 0.0
    %1621 = vmatprep.subr.mxu0 0.0
    %1622 = vmatpush2.msra.mxu0 0.0
    %1623 = vmatprep.subr.mxu0 0.0
    %1624 = vmatpush2.msra.mxu0 0.0
    %1625 = vmatprep.subr.mxu0 0.0
    %1626 = vmatpush2.msra.mxu0 0.0
    %1627 = vmatprep.subr.mxu0 0.0
    %1628 = vmatpush2.msra.mxu0 0.0
    %1629 = vmatprep.subr.mxu0 0.0
    %1630 = vmatpush2.msra.mxu0 0.0
    %1631 = vmatprep.subr.mxu0 0.0
    %1632 = vmatpush2.msra.mxu0 0.0
    %1633 = vmatprep.subr.mxu0 0.0
    %1634 = vmatpush2.msra.mxu0 0.0
    %1635 = vmatprep.subr.mxu0 0.0
    %1636 = vmatpush2.msra.mxu0 0.0
    %1637 = vmatprep.subr.mxu0 0.0
    %1638 = vmatpush2.msra.mxu0 0.0
    %1639 = vmatprep.subr.mxu0 0.0
    %1640 = vmatpush2.msra.mxu0 0.0
    %1641 = vmatprep.subr.mxu0 0.0
    %1642 = vmatpush2.msra.mxu0 0.0
    %1643 = vmatprep.subr.mxu0 0.0
    %1644 = vmatpush2.msra.mxu0 0.0
    %1645 = vmatprep.subr.mxu0 0.0
    %1646 = vmatpush2.msra.mxu0 0.0
    %1647 = vmatprep.subr.mxu0 0.0
    %1648 = vmatpush2.msra.mxu0 0.0
    %1649 = vmatprep.subr.mxu0 0.0
    %1650 = vmatpush2.msra.mxu0 0.0
    %1651 = vmatprep.mubr.f32.mxu0 0.0
    %1652 = vmatmul.mubr.f32.gmra.mxu0 %v1583
    %v1653 = vpop.f32.mrf.mxu0
    %v1654 = vadd.f32 0.0, %v1653
    %v1655 = vpop.f32.mrf.mxu0
    %1656 = vdwg.mxu0
    %v1657 = vadd.f32 %v1570, %v1654
    %v1658 = vld [vmem:[%s1147] sm:$0xf]
    %v1659 = vld [vmem:[#allocation2] sm:$0xff]
    %1661 = vrot.lane.b32.xlu0 %v1658, 104
    %v1662 = vpop.permute.xlu0 %1661
    %v1664 = vcombine.high %v1659, %v1659
    %1665 = vrot.lane.b32.xlu0 %v1659, 96
    %v1666 = vpop.permute.xlu0 %1665
    %1667 = vrot.lane.b32.xlu0 %v1664, 96
    %v1668 = vpop.permute.xlu0 %1667
    %v1669 = vsel %vm878, %v1666, %v1668
    %v1670 = vsel %vm364, %v1662, 0
    %v1672 = vsel %vm367, %v1669, 0
    %1674 = vmatprep.subr.mxu0 0.0
    %1675 = vmatpush1.msra.mxu0 0.0
    %1676 = vmatprep.subr.mxu0 0.0
    %1677 = vmatpush1.msra.mxu0 0.0
    %1678 = vmatprep.subr.mxu0 0.0
    %1679 = vmatpush1.msra.mxu0 0.0
    %1680 = vmatprep.subr.mxu0 0.0
    %1681 = vmatpush1.msra.mxu0 0.0
    %1682 = vmatprep.subr.mxu0 0.0
    %1683 = vmatpush1.msra.mxu0 0.0
    %1684 = vmatprep.subr.mxu0 0.0
    %1685 = vmatpush1.msra.mxu0 0.0
    %1686 = vmatprep.subr.mxu0 0.0
    %1687 = vmatpush1.msra.mxu0 0.0
    %1688 = vmatprep.subr.mxu0 0.0
    %1689 = vmatpush1.msra.mxu0 0.0
    %1690 = vmatprep.subr.mxu0 0.0
    %1691 = vmatpush1.msra.mxu0 0.0
    %1692 = vmatprep.subr.mxu0 0.0
    %1693 = vmatpush1.msra.mxu0 0.0
    %1694 = vmatprep.subr.mxu0 0.0
    %1695 = vmatpush1.msra.mxu0 0.0
    %1696 = vmatprep.subr.mxu0 0.0
    %1697 = vmatpush1.msra.mxu0 0.0
    %1698 = vmatprep.subr.mxu0 0.0
    %1699 = vmatpush1.msra.mxu0 0.0
    %1700 = vmatprep.subr.mxu0 0.0
    %1701 = vmatpush1.msra.mxu0 0.0
    %1702 = vmatprep.subr.mxu0 0.0
    %1703 = vmatpush1.msra.mxu0 0.0
    %1704 = vmatprep.subr.mxu0 0.0
    %1705 = vmatpush1.msra.mxu0 %v1672
    %1706 = vmatprep.subr.mxu0 0.0
    %1707 = vmatpush2.msra.mxu0 0.0
    %1708 = vmatprep.subr.mxu0 0.0
    %1709 = vmatpush2.msra.mxu0 0.0
    %1710 = vmatprep.subr.mxu0 0.0
    %1711 = vmatpush2.msra.mxu0 0.0
    %1712 = vmatprep.subr.mxu0 0.0
    %1713 = vmatpush2.msra.mxu0 0.0
    %1714 = vmatprep.subr.mxu0 0.0
    %1715 = vmatpush2.msra.mxu0 0.0
    %1716 = vmatprep.subr.mxu0 0.0
    %1717 = vmatpush2.msra.mxu0 0.0
    %1718 = vmatprep.subr.mxu0 0.0
    %1719 = vmatpush2.msra.mxu0 0.0
    %1720 = vmatprep.subr.mxu0 0.0
    %1721 = vmatpush2.msra.mxu0 0.0
    %1722 = vmatprep.subr.mxu0 0.0
    %1723 = vmatpush2.msra.mxu0 0.0
    %1724 = vmatprep.subr.mxu0 0.0
    %1725 = vmatpush2.msra.mxu0 0.0
    %1726 = vmatprep.subr.mxu0 0.0
    %1727 = vmatpush2.msra.mxu0 0.0
    %1728 = vmatprep.subr.mxu0 0.0
    %1729 = vmatpush2.msra.mxu0 0.0
    %1730 = vmatprep.subr.mxu0 0.0
    %1731 = vmatpush2.msra.mxu0 0.0
    %1732 = vmatprep.subr.mxu0 0.0
    %1733 = vmatpush2.msra.mxu0 0.0
    %1734 = vmatprep.subr.mxu0 0.0
    %1735 = vmatpush2.msra.mxu0 0.0
    %1736 = vmatprep.subr.mxu0 0.0
    %1737 = vmatpush2.msra.mxu0 0.0
    %1738 = vmatprep.mubr.f32.mxu0 0.0
    %1739 = vmatmul.mubr.f32.gmra.mxu0 %v1670
    %v1740 = vpop.f32.mrf.mxu0
    %v1741 = vadd.f32 0.0, %v1740
    %v1742 = vpop.f32.mrf.mxu0
    %1743 = vdwg.mxu0
    %v1744 = vadd.f32 %v1657, %v1741
    %v1745 = vld [vmem:[%s1147] sm:$0xf]
    %v1746 = vld [vmem:[#allocation2] sm:$0xff]
    %1748 = vrot.lane.b32.xlu0 %v1745, 100
    %v1749 = vpop.permute.xlu0 %1748
    %v1751 = vcombine.high %v1746, %v1746
    %1752 = vrot.lane.b32.xlu0 %v1746, 95
    %v1753 = vpop.permute.xlu0 %1752
    %1754 = vrot.lane.b32.xlu0 %v1751, 95
    %v1755 = vpop.permute.xlu0 %1754
    %v1756 = vsel %vm966, %v1753, %v1755
    %v1757 = vsel %vm364, %v1749, 0
    %v1759 = vsel %vm367, %v1756, 0
    %1761 = vmatprep.subr.mxu0 0.0
    %1762 = vmatpush1.msra.mxu0 0.0
    %1763 = vmatprep.subr.mxu0 0.0
    %1764 = vmatpush1.msra.mxu0 0.0
    %1765 = vmatprep.subr.mxu0 0.0
    %1766 = vmatpush1.msra.mxu0 0.0
    %1767 = vmatprep.subr.mxu0 0.0
    %1768 = vmatpush1.msra.mxu0 0.0
    %1769 = vmatprep.subr.mxu0 0.0
    %1770 = vmatpush1.msra.mxu0 0.0
    %1771 = vmatprep.subr.mxu0 0.0
    %1772 = vmatpush1.msra.mxu0 0.0
    %1773 = vmatprep.subr.mxu0 0.0
    %1774 = vmatpush1.msra.mxu0 0.0
    %1775 = vmatprep.subr.mxu0 0.0
    %1776 = vmatpush1.msra.mxu0 0.0
    %1777 = vmatprep.subr.mxu0 0.0
    %1778 = vmatpush1.msra.mxu0 0.0
    %1779 = vmatprep.subr.mxu0 0.0
    %1780 = vmatpush1.msra.mxu0 0.0
    %1781 = vmatprep.subr.mxu0 0.0
    %1782 = vmatpush1.msra.mxu0 0.0
    %1783 = vmatprep.subr.mxu0 0.0
    %1784 = vmatpush1.msra.mxu0 0.0
    %1785 = vmatprep.subr.mxu0 0.0
    %1786 = vmatpush1.msra.mxu0 0.0
    %1787 = vmatprep.subr.mxu0 0.0
    %1788 = vmatpush1.msra.mxu0 0.0
    %1789 = vmatprep.subr.mxu0 0.0
    %1790 = vmatpush1.msra.mxu0 0.0
    %1791 = vmatprep.subr.mxu0 0.0
    %1792 = vmatpush1.msra.mxu0 %v1759
    %1793 = vmatprep.subr.mxu0 0.0
    %1794 = vmatpush2.msra.mxu0 0.0
    %1795 = vmatprep.subr.mxu0 0.0
    %1796 = vmatpush2.msra.mxu0 0.0
    %1797 = vmatprep.subr.mxu0 0.0
    %1798 = vmatpush2.msra.mxu0 0.0
    %1799 = vmatprep.subr.mxu0 0.0
    %1800 = vmatpush2.msra.mxu0 0.0
    %1801 = vmatprep.subr.mxu0 0.0
    %1802 = vmatpush2.msra.mxu0 0.0
    %1803 = vmatprep.subr.mxu0 0.0
    %1804 = vmatpush2.msra.mxu0 0.0
    %1805 = vmatprep.subr.mxu0 0.0
    %1806 = vmatpush2.msra.mxu0 0.0
    %1807 = vmatprep.subr.mxu0 0.0
    %1808 = vmatpush2.msra.mxu0 0.0
    %1809 = vmatprep.subr.mxu0 0.0
    %1810 = vmatpush2.msra.mxu0 0.0
    %1811 = vmatprep.subr.mxu0 0.0
    %1812 = vmatpush2.msra.mxu0 0.0
    %1813 = vmatprep.subr.mxu0 0.0
    %1814 = vmatpush2.msra.mxu0 0.0
    %1815 = vmatprep.subr.mxu0 0.0
    %1816 = vmatpush2.msra.mxu0 0.0
    %1817 = vmatprep.subr.mxu0 0.0
    %1818 = vmatpush2.msra.mxu0 0.0
    %1819 = vmatprep.subr.mxu0 0.0
    %1820 = vmatpush2.msra.mxu0 0.0
    %1821 = vmatprep.subr.mxu0 0.0
    %1822 = vmatpush2.msra.mxu0 0.0
    %1823 = vmatprep.subr.mxu0 0.0
    %1824 = vmatpush2.msra.mxu0 0.0
    %1825 = vmatprep.mubr.f32.mxu0 0.0
    %1826 = vmatmul.mubr.f32.gmra.mxu0 %v1757
    %v1827 = vpop.f32.mrf.mxu0
    %v1828 = vadd.f32 0.0, %v1827
    %v1829 = vpop.f32.mrf.mxu0
    %1830 = vdwg.mxu0
    %v1831 = vadd.f32 %v1744, %v1828
    %v1832 = vld [vmem:[%s1147] sm:$0xf]
    %v1833 = vld [vmem:[#allocation2] sm:$0xff]
    %1835 = vrot.lane.b32.xlu0 %v1832, 96
    %v1836 = vpop.permute.xlu0 %1835
    %v1838 = vcombine.high %v1833, %v1833
    %1839 = vrot.lane.b32.xlu0 %v1833, 94
    %v1840 = vpop.permute.xlu0 %1839
    %1841 = vrot.lane.b32.xlu0 %v1838, 94
    %v1842 = vpop.permute.xlu0 %1841
    %v1843 = vsel %vm1054, %v1840, %v1842
    %v1844 = vsel %vm364, %v1836, 0
    %v1846 = vsel %vm367, %v1843, 0
    %1848 = vmatprep.subr.mxu0 0.0
    %1849 = vmatpush1.msra.mxu0 0.0
    %1850 = vmatprep.subr.mxu0 0.0
    %1851 = vmatpush1.msra.mxu0 0.0
    %1852 = vmatprep.subr.mxu0 0.0
    %1853 = vmatpush1.msra.mxu0 0.0
    %1854 = vmatprep.subr.mxu0 0.0
    %1855 = vmatpush1.msra.mxu0 0.0
    %1856 = vmatprep.subr.mxu0 0.0
    %1857 = vmatpush1.msra.mxu0 0.0
    %1858 = vmatprep.subr.mxu0 0.0
    %1859 = vmatpush1.msra.mxu0 0.0
    %1860 = vmatprep.subr.mxu0 0.0
    %1861 = vmatpush1.msra.mxu0 0.0
    %1862 = vmatprep.subr.mxu0 0.0
    %1863 = vmatpush1.msra.mxu0 0.0
    %1864 = vmatprep.subr.mxu0 0.0
    %1865 = vmatpush1.msra.mxu0 0.0
    %1866 = vmatprep.subr.mxu0 0.0
    %1867 = vmatpush1.msra.mxu0 0.0
    %1868 = vmatprep.subr.mxu0 0.0
    %1869 = vmatpush1.msra.mxu0 0.0
    %1870 = vmatprep.subr.mxu0 0.0
    %1871 = vmatpush1.msra.mxu0 0.0
    %1872 = vmatprep.subr.mxu0 0.0
    %1873 = vmatpush1.msra.mxu0 0.0
    %1874 = vmatprep.subr.mxu0 0.0
    %1875 = vmatpush1.msra.mxu0 0.0
    %1876 = vmatprep.subr.mxu0 0.0
    %1877 = vmatpush1.msra.mxu0 0.0
    %1878 = vmatprep.subr.mxu0 0.0
    %1879 = vmatpush1.msra.mxu0 %v1846
    %1880 = vmatprep.subr.mxu0 0.0
    %1881 = vmatpush2.msra.mxu0 0.0
    %1882 = vmatprep.subr.mxu0 0.0
    %1883 = vmatpush2.msra.mxu0 0.0
    %1884 = vmatprep.subr.mxu0 0.0
    %1885 = vmatpush2.msra.mxu0 0.0
    %1886 = vmatprep.subr.mxu0 0.0
    %1887 = vmatpush2.msra.mxu0 0.0
    %1888 = vmatprep.subr.mxu0 0.0
    %1889 = vmatpush2.msra.mxu0 0.0
    %1890 = vmatprep.subr.mxu0 0.0
    %1891 = vmatpush2.msra.mxu0 0.0
    %1892 = vmatprep.subr.mxu0 0.0
    %1893 = vmatpush2.msra.mxu0 0.0
    %1894 = vmatprep.subr.mxu0 0.0
    %1895 = vmatpush2.msra.mxu0 0.0
    %1896 = vmatprep.subr.mxu0 0.0
    %1897 = vmatpush2.msra.mxu0 0.0
    %1898 = vmatprep.subr.mxu0 0.0
    %1899 = vmatpush2.msra.mxu0 0.0
    %1900 = vmatprep.subr.mxu0 0.0
    %1901 = vmatpush2.msra.mxu0 0.0
    %1902 = vmatprep.subr.mxu0 0.0
    %1903 = vmatpush2.msra.mxu0 0.0
    %1904 = vmatprep.subr.mxu0 0.0
    %1905 = vmatpush2.msra.mxu0 0.0
    %1906 = vmatprep.subr.mxu0 0.0
    %1907 = vmatpush2.msra.mxu0 0.0
    %1908 = vmatprep.subr.mxu0 0.0
    %1909 = vmatpush2.msra.mxu0 0.0
    %1910 = vmatprep.subr.mxu0 0.0
    %1911 = vmatpush2.msra.mxu0 0.0
    %1912 = vmatprep.mubr.f32.mxu0 0.0
    %1913 = vmatmul.mubr.f32.gmra.mxu0 %v1844
    %v1914 = vpop.f32.mrf.mxu0
    %v1915 = vadd.f32 0.0, %v1914
    %v1916 = vpop.f32.mrf.mxu0
    %1917 = vdwg.mxu0
    %v1918 = vadd.f32 %v1831, %v1915
    %v1919 = vld [vmem:[%s1147] sm:$0xf]
    %1921 = vset.pattern.permute.xlu0 36
    %1922 = vperm.xlu0 %1921, %v1919
    %v1923 = vpop.permute.xlu0 %1922
    %v1925 = vadd.f32 %v1918, %v1923
    %v1926 = vadd.f32 %v337, %v1925
    %v1927 = vsel %vm59, %v1926, 0.0
    %1929 = vrot.lane.b32.xlu0 %v1927, 17
    %v1930 = vpop.permute.xlu0 %1929
    %v1931 = vrot.slane %v1930, 4
    %v1932 = vsel %vm343, %v1931, %v1930
    %1934 = vst.msk [vmem:[#allocation2] sm:$0xff] %vm348, %v1932
    %s1935 = scalar_lea.vmem [#allocation8], 8
    %v1936 = vld [vmem:[%s1935] sm:$0xf]
    %v1937 = vld [vmem:[#allocation2] sm:$0xf]
    %v1938 = vld [vmem:[#allocation2] sm:$0xff]
    %1940 = vrot.lane.b32.xlu0 %v1936, 124
    %v1941 = vpop.permute.xlu0 %1940
    %v1943 = vcombine.high %v1938, %v1938
    %1944 = vrot.lane.b32.xlu0 %v1938, 127
    %v1945 = vpop.permute.xlu0 %1944
    %1946 = vrot.lane.b32.xlu0 %v1943, 127
    %v1947 = vpop.permute.xlu0 %1946
    %v1948 = vsel %vm362, %v1945, %v1947
    %v1949 = vsel %vm364, %v1941, 0
    %v1951 = vsel %vm367, %v1948, 0
    %1953 = vmatprep.subr.mxu0 0.0
    %1954 = vmatpush1.msra.mxu0 0.0
    %1955 = vmatprep.subr.mxu0 0.0
    %1956 = vmatpush1.msra.mxu0 0.0
    %1957 = vmatprep.subr.mxu0 0.0
    %1958 = vmatpush1.msra.mxu0 0.0
    %1959 = vmatprep.subr.mxu0 0.0
    %1960 = vmatpush1.msra.mxu0 0.0
    %1961 = vmatprep.subr.mxu0 0.0
    %1962 = vmatpush1.msra.mxu0 0.0
    %1963 = vmatprep.subr.mxu0 0.0
    %1964 = vmatpush1.msra.mxu0 0.0
    %1965 = vmatprep.subr.mxu0 0.0
    %1966 = vmatpush1.msra.mxu0 0.0
    %1967 = vmatprep.subr.mxu0 0.0
    %1968 = vmatpush1.msra.mxu0 0.0
    %1969 = vmatprep.subr.mxu0 0.0
    %1970 = vmatpush1.msra.mxu0 0.0
    %1971 = vmatprep.subr.mxu0 0.0
    %1972 = vmatpush1.msra.mxu0 0.0
    %1973 = vmatprep.subr.mxu0 0.0
    %1974 = vmatpush1.msra.mxu0 0.0
    %1975 = vmatprep.subr.mxu0 0.0
    %1976 = vmatpush1.msra.mxu0 0.0
    %1977 = vmatprep.subr.mxu0 0.0
    %1978 = vmatpush1.msra.mxu0 0.0
    %1979 = vmatprep.subr.mxu0 0.0
    %1980 = vmatpush1.msra.mxu0 0.0
    %1981 = vmatprep.subr.mxu0 0.0
    %1982 = vmatpush1.msra.mxu0 0.0
    %1983 = vmatprep.subr.mxu0 0.0
    %1984 = vmatpush1.msra.mxu0 %v1951
    %1985 = vmatprep.subr.mxu0 0.0
    %1986 = vmatpush2.msra.mxu0 0.0
    %1987 = vmatprep.subr.mxu0 0.0
    %1988 = vmatpush2.msra.mxu0 0.0
    %1989 = vmatprep.subr.mxu0 0.0
    %1990 = vmatpush2.msra.mxu0 0.0
    %1991 = vmatprep.subr.mxu0 0.0
    %1992 = vmatpush2.msra.mxu0 0.0
    %1993 = vmatprep.subr.mxu0 0.0
    %1994 = vmatpush2.msra.mxu0 0.0
    %1995 = vmatprep.subr.mxu0 0.0
    %1996 = vmatpush2.msra.mxu0 0.0
    %1997 = vmatprep.subr.mxu0 0.0
    %1998 = vmatpush2.msra.mxu0 0.0
    %1999 = vmatprep.subr.mxu0 0.0
    %2000 = vmatpush2.msra.mxu0 0.0
    %2001 = vmatprep.subr.mxu0 0.0
    %2002 = vmatpush2.msra.mxu0 0.0
    %2003 = vmatprep.subr.mxu0 0.0
    %2004 = vmatpush2.msra.mxu0 0.0
    %2005 = vmatprep.subr.mxu0 0.0
    %2006 = vmatpush2.msra.mxu0 0.0
    %2007 = vmatprep.subr.mxu0 0.0
    %2008 = vmatpush2.msra.mxu0 0.0
    %2009 = vmatprep.subr.mxu0 0.0
    %2010 = vmatpush2.msra.mxu0 0.0
    %2011 = vmatprep.subr.mxu0 0.0
    %2012 = vmatpush2.msra.mxu0 0.0
    %2013 = vmatprep.subr.mxu0 0.0
    %2014 = vmatpush2.msra.mxu0 0.0
    %2015 = vmatprep.subr.mxu0 0.0
    %2016 = vmatpush2.msra.mxu0 0.0
    %2017 = vmatprep.mubr.f32.mxu0 0.0
    %2018 = vmatmul.mubr.f32.gmra.mxu0 %v1949
    %v2019 = vpop.f32.mrf.mxu0
    %v2020 = vadd.f32 0.0, %v2019
    %v2021 = vpop.f32.mrf.mxu0
    %2022 = vdwg.mxu0
    %v2023 = vsel %vm364, %v1936, 0
    %v2026 = vsel %vm367, %v1937, 0
    %2028 = vmatprep.subr.mxu0 0.0
    %2029 = vmatpush1.msra.mxu0 0.0
    %2030 = vmatprep.subr.mxu0 0.0
    %2031 = vmatpush1.msra.mxu0 0.0
    %2032 = vmatprep.subr.mxu0 0.0
    %2033 = vmatpush1.msra.mxu0 0.0
    %2034 = vmatprep.subr.mxu0 0.0
    %2035 = vmatpush1.msra.mxu0 0.0
    %2036 = vmatprep.subr.mxu0 0.0
    %2037 = vmatpush1.msra.mxu0 0.0
    %2038 = vmatprep.subr.mxu0 0.0
    %2039 = vmatpush1.msra.mxu0 0.0
    %2040 = vmatprep.subr.mxu0 0.0
    %2041 = vmatpush1.msra.mxu0 0.0
    %2042 = vmatprep.subr.mxu0 0.0
    %2043 = vmatpush1.msra.mxu0 0.0
    %2044 = vmatprep.subr.mxu0 0.0
    %2045 = vmatpush1.msra.mxu0 0.0
    %2046 = vmatprep.subr.mxu0 0.0
    %2047 = vmatpush1.msra.mxu0 0.0
    %2048 = vmatprep.subr.mxu0 0.0
    %2049 = vmatpush1.msra.mxu0 0.0
    %2050 = vmatprep.subr.mxu0 0.0
    %2051 = vmatpush1.msra.mxu0 0.0
    %2052 = vmatprep.subr.mxu0 0.0
    %2053 = vmatpush1.msra.mxu0 0.0
    %2054 = vmatprep.subr.mxu0 0.0
    %2055 = vmatpush1.msra.mxu0 0.0
    %2056 = vmatprep.subr.mxu0 0.0
    %2057 = vmatpush1.msra.mxu0 0.0
    %2058 = vmatprep.subr.mxu0 0.0
    %2059 = vmatpush1.msra.mxu0 %v2026
    %2060 = vmatprep.subr.mxu0 0.0
    %2061 = vmatpush2.msra.mxu0 0.0
    %2062 = vmatprep.subr.mxu0 0.0
    %2063 = vmatpush2.msra.mxu0 0.0
    %2064 = vmatprep.subr.mxu0 0.0
    %2065 = vmatpush2.msra.mxu0 0.0
    %2066 = vmatprep.subr.mxu0 0.0
    %2067 = vmatpush2.msra.mxu0 0.0
    %2068 = vmatprep.subr.mxu0 0.0
    %2069 = vmatpush2.msra.mxu0 0.0
    %2070 = vmatprep.subr.mxu0 0.0
    %2071 = vmatpush2.msra.mxu0 0.0
    %2072 = vmatprep.subr.mxu0 0.0
    %2073 = vmatpush2.msra.mxu0 0.0
    %2074 = vmatprep.subr.mxu0 0.0
    %2075 = vmatpush2.msra.mxu0 0.0
    %2076 = vmatprep.subr.mxu0 0.0
    %2077 = vmatpush2.msra.mxu0 0.0
    %2078 = vmatprep.subr.mxu0 0.0
    %2079 = vmatpush2.msra.mxu0 0.0
    %2080 = vmatprep.subr.mxu0 0.0
    %2081 = vmatpush2.msra.mxu0 0.0
    %2082 = vmatprep.subr.mxu0 0.0
    %2083 = vmatpush2.msra.mxu0 0.0
    %2084 = vmatprep.subr.mxu0 0.0
    %2085 = vmatpush2.msra.mxu0 0.0
    %2086 = vmatprep.subr.mxu0 0.0
    %2087 = vmatpush2.msra.mxu0 0.0
    %2088 = vmatprep.subr.mxu0 0.0
    %2089 = vmatpush2.msra.mxu0 0.0
    %2090 = vmatprep.subr.mxu0 0.0
    %2091 = vmatpush2.msra.mxu0 0.0
    %2092 = vmatprep.mubr.f32.mxu0 0.0
    %2093 = vmatmul.mubr.f32.gmra.mxu0 %v2023
    %v2094 = vpop.f32.mrf.mxu0
    %v2095 = vadd.f32 %v2020, %v2094
    %v2096 = vpop.f32.mrf.mxu0
    %2097 = vdwg.mxu0
    %v2098 = vld [vmem:[%s1935] sm:$0xf]
    %v2099 = vld [vmem:[#allocation2] sm:$0xff]
    %2101 = vrot.lane.b32.xlu0 %v2098, 120
    %v2102 = vpop.permute.xlu0 %2101
    %v2104 = vcombine.high %v2099, %v2099
    %2105 = vrot.lane.b32.xlu0 %v2099, 126
    %v2106 = vpop.permute.xlu0 %2105
    %2107 = vrot.lane.b32.xlu0 %v2104, 126
    %v2108 = vpop.permute.xlu0 %2107
    %v2109 = vsel %vm526, %v2106, %v2108
    %v2110 = vsel %vm364, %v2102, 0
    %v2112 = vsel %vm367, %v2109, 0
    %2114 = vmatprep.subr.mxu0 0.0
    %2115 = vmatpush1.msra.mxu0 0.0
    %2116 = vmatprep.subr.mxu0 0.0
    %2117 = vmatpush1.msra.mxu0 0.0
    %2118 = vmatprep.subr.mxu0 0.0
    %2119 = vmatpush1.msra.mxu0 0.0
    %2120 = vmatprep.subr.mxu0 0.0
    %2121 = vmatpush1.msra.mxu0 0.0
    %2122 = vmatprep.subr.mxu0 0.0
    %2123 = vmatpush1.msra.mxu0 0.0
    %2124 = vmatprep.subr.mxu0 0.0
    %2125 = vmatpush1.msra.mxu0 0.0
    %2126 = vmatprep.subr.mxu0 0.0
    %2127 = vmatpush1.msra.mxu0 0.0
    %2128 = vmatprep.subr.mxu0 0.0
    %2129 = vmatpush1.msra.mxu0 0.0
    %2130 = vmatprep.subr.mxu0 0.0
    %2131 = vmatpush1.msra.mxu0 0.0
    %2132 = vmatprep.subr.mxu0 0.0
    %2133 = vmatpush1.msra.mxu0 0.0
    %2134 = vmatprep.subr.mxu0 0.0
    %2135 = vmatpush1.msra.mxu0 0.0
    %2136 = vmatprep.subr.mxu0 0.0
    %2137 = vmatpush1.msra.mxu0 0.0
    %2138 = vmatprep.subr.mxu0 0.0
    %2139 = vmatpush1.msra.mxu0 0.0
    %2140 = vmatprep.subr.mxu0 0.0
    %2141 = vmatpush1.msra.mxu0 0.0
    %2142 = vmatprep.subr.mxu0 0.0
    %2143 = vmatpush1.msra.mxu0 0.0
    %2144 = vmatprep.subr.mxu0 0.0
    %2145 = vmatpush1.msra.mxu0 %v2112
    %2146 = vmatprep.subr.mxu0 0.0
    %2147 = vmatpush2.msra.mxu0 0.0
    %2148 = vmatprep.subr.mxu0 0.0
    %2149 = vmatpush2.msra.mxu0 0.0
    %2150 = vmatprep.subr.mxu0 0.0
    %2151 = vmatpush2.msra.mxu0 0.0
    %2152 = vmatprep.subr.mxu0 0.0
    %2153 = vmatpush2.msra.mxu0 0.0
    %2154 = vmatprep.subr.mxu0 0.0
    %2155 = vmatpush2.msra.mxu0 0.0
    %2156 = vmatprep.subr.mxu0 0.0
    %2157 = vmatpush2.msra.mxu0 0.0
    %2158 = vmatprep.subr.mxu0 0.0
    %2159 = vmatpush2.msra.mxu0 0.0
    %2160 = vmatprep.subr.mxu0 0.0
    %2161 = vmatpush2.msra.mxu0 0.0
    %2162 = vmatprep.subr.mxu0 0.0
    %2163 = vmatpush2.msra.mxu0 0.0
    %2164 = vmatprep.subr.mxu0 0.0
    %2165 = vmatpush2.msra.mxu0 0.0
    %2166 = vmatprep.subr.mxu0 0.0
    %2167 = vmatpush2.msra.mxu0 0.0
    %2168 = vmatprep.subr.mxu0 0.0
    %2169 = vmatpush2.msra.mxu0 0.0
    %2170 = vmatprep.subr.mxu0 0.0
    %2171 = vmatpush2.msra.mxu0 0.0
    %2172 = vmatprep.subr.mxu0 0.0
    %2173 = vmatpush2.msra.mxu0 0.0
    %2174 = vmatprep.subr.mxu0 0.0
    %2175 = vmatpush2.msra.mxu0 0.0
    %2176 = vmatprep.subr.mxu0 0.0
    %2177 = vmatpush2.msra.mxu0 0.0
    %2178 = vmatprep.mubr.f32.mxu0 0.0
    %2179 = vmatmul.mubr.f32.gmra.mxu0 %v2110
    %v2180 = vpop.f32.mrf.mxu0
    %v2181 = vadd.f32 0.0, %v2180
    %v2182 = vpop.f32.mrf.mxu0
    %2183 = vdwg.mxu0
    %v2184 = vadd.f32 %v2095, %v2181
    %v2185 = vld [vmem:[%s1935] sm:$0xf]
    %v2186 = vld [vmem:[#allocation2] sm:$0xff]
    %2188 = vrot.lane.b32.xlu0 %v2185, 116
    %v2189 = vpop.permute.xlu0 %2188
    %v2191 = vcombine.high %v2186, %v2186
    %2192 = vrot.lane.b32.xlu0 %v2186, 112
    %v2193 = vpop.permute.xlu0 %2192
    %2194 = vrot.lane.b32.xlu0 %v2191, 112
    %v2195 = vpop.permute.xlu0 %2194
    %v2196 = vsel %vm614, %v2193, %v2195
    %v2197 = vsel %vm364, %v2189, 0
    %v2199 = vsel %vm367, %v2196, 0
    %2201 = vmatprep.subr.mxu0 0.0
    %2202 = vmatpush1.msra.mxu0 0.0
    %2203 = vmatprep.subr.mxu0 0.0
    %2204 = vmatpush1.msra.mxu0 0.0
    %2205 = vmatprep.subr.mxu0 0.0
    %2206 = vmatpush1.msra.mxu0 0.0
    %2207 = vmatprep.subr.mxu0 0.0
    %2208 = vmatpush1.msra.mxu0 0.0
    %2209 = vmatprep.subr.mxu0 0.0
    %2210 = vmatpush1.msra.mxu0 0.0
    %2211 = vmatprep.subr.mxu0 0.0
    %2212 = vmatpush1.msra.mxu0 0.0
    %2213 = vmatprep.subr.mxu0 0.0
    %2214 = vmatpush1.msra.mxu0 0.0
    %2215 = vmatprep.subr.mxu0 0.0
    %2216 = vmatpush1.msra.mxu0 0.0
    %2217 = vmatprep.subr.mxu0 0.0
    %2218 = vmatpush1.msra.mxu0 0.0
    %2219 = vmatprep.subr.mxu0 0.0
    %2220 = vmatpush1.msra.mxu0 0.0
    %2221 = vmatprep.subr.mxu0 0.0
    %2222 = vmatpush1.msra.mxu0 0.0
    %2223 = vmatprep.subr.mxu0 0.0
    %2224 = vmatpush1.msra.mxu0 0.0
    %2225 = vmatprep.subr.mxu0 0.0
    %2226 = vmatpush1.msra.mxu0 0.0
    %2227 = vmatprep.subr.mxu0 0.0
    %2228 = vmatpush1.msra.mxu0 0.0
    %2229 = vmatprep.subr.mxu0 0.0
    %2230 = vmatpush1.msra.mxu0 0.0
    %2231 = vmatprep.subr.mxu0 0.0
    %2232 = vmatpush1.msra.mxu0 %v2199
    %2233 = vmatprep.subr.mxu0 0.0
    %2234 = vmatpush2.msra.mxu0 0.0
    %2235 = vmatprep.subr.mxu0 0.0
    %2236 = vmatpush2.msra.mxu0 0.0
    %2237 = vmatprep.subr.mxu0 0.0
    %2238 = vmatpush2.msra.mxu0 0.0
    %2239 = vmatprep.subr.mxu0 0.0
    %2240 = vmatpush2.msra.mxu0 0.0
    %2241 = vmatprep.subr.mxu0 0.0
    %2242 = vmatpush2.msra.mxu0 0.0
    %2243 = vmatprep.subr.mxu0 0.0
    %2244 = vmatpush2.msra.mxu0 0.0
    %2245 = vmatprep.subr.mxu0 0.0
    %2246 = vmatpush2.msra.mxu0 0.0
    %2247 = vmatprep.subr.mxu0 0.0
    %2248 = vmatpush2.msra.mxu0 0.0
    %2249 = vmatprep.subr.mxu0 0.0
    %2250 = vmatpush2.msra.mxu0 0.0
    %2251 = vmatprep.subr.mxu0 0.0
    %2252 = vmatpush2.msra.mxu0 0.0
    %2253 = vmatprep.subr.mxu0 0.0
    %2254 = vmatpush2.msra.mxu0 0.0
    %2255 = vmatprep.subr.mxu0 0.0
    %2256 = vmatpush2.msra.mxu0 0.0
    %2257 = vmatprep.subr.mxu0 0.0
    %2258 = vmatpush2.msra.mxu0 0.0
    %2259 = vmatprep.subr.mxu0 0.0
    %2260 = vmatpush2.msra.mxu0 0.0
    %2261 = vmatprep.subr.mxu0 0.0
    %2262 = vmatpush2.msra.mxu0 0.0
    %2263 = vmatprep.subr.mxu0 0.0
    %2264 = vmatpush2.msra.mxu0 0.0
    %2265 = vmatprep.mubr.f32.mxu0 0.0
    %2266 = vmatmul.mubr.f32.gmra.mxu0 %v2197
    %v2267 = vpop.f32.mrf.mxu0
    %v2268 = vadd.f32 0.0, %v2267
    %v2269 = vpop.f32.mrf.mxu0
    %2270 = vdwg.mxu0
    %v2271 = vadd.f32 %v2184, %v2268
    %v2272 = vld [vmem:[%s1935] sm:$0xf]
    %v2273 = vld [vmem:[#allocation2] sm:$0xff]
    %2275 = vrot.lane.b32.xlu0 %v2272, 112
    %v2276 = vpop.permute.xlu0 %2275
    %v2278 = vcombine.high %v2273, %v2273
    %2279 = vrot.lane.b32.xlu0 %v2273, 111
    %v2280 = vpop.permute.xlu0 %2279
    %2281 = vrot.lane.b32.xlu0 %v2278, 111
    %v2282 = vpop.permute.xlu0 %2281
    %v2283 = vsel %vm702, %v2280, %v2282
    %v2284 = vsel %vm364, %v2276, 0
    %v2286 = vsel %vm367, %v2283, 0
    %2288 = vmatprep.subr.mxu0 0.0
    %2289 = vmatpush1.msra.mxu0 0.0
    %2290 = vmatprep.subr.mxu0 0.0
    %2291 = vmatpush1.msra.mxu0 0.0
    %2292 = vmatprep.subr.mxu0 0.0
    %2293 = vmatpush1.msra.mxu0 0.0
    %2294 = vmatprep.subr.mxu0 0.0
    %2295 = vmatpush1.msra.mxu0 0.0
    %2296 = vmatprep.subr.mxu0 0.0
    %2297 = vmatpush1.msra.mxu0 0.0
    %2298 = vmatprep.subr.mxu0 0.0
    %2299 = vmatpush1.msra.mxu0 0.0
    %2300 = vmatprep.subr.mxu0 0.0
    %2301 = vmatpush1.msra.mxu0 0.0
    %2302 = vmatprep.subr.mxu0 0.0
    %2303 = vmatpush1.msra.mxu0 0.0
    %2304 = vmatprep.subr.mxu0 0.0
    %2305 = vmatpush1.msra.mxu0 0.0
    %2306 = vmatprep.subr.mxu0 0.0
    %2307 = vmatpush1.msra.mxu0 0.0
    %2308 = vmatprep.subr.mxu0 0.0
    %2309 = vmatpush1.msra.mxu0 0.0
    %2310 = vmatprep.subr.mxu0 0.0
    %2311 = vmatpush1.msra.mxu0 0.0
    %2312 = vmatprep.subr.mxu0 0.0
    %2313 = vmatpush1.msra.mxu0 0.0
    %2314 = vmatprep.subr.mxu0 0.0
    %2315 = vmatpush1.msra.mxu0 0.0
    %2316 = vmatprep.subr.mxu0 0.0
    %2317 = vmatpush1.msra.mxu0 0.0
    %2318 = vmatprep.subr.mxu0 0.0
    %2319 = vmatpush1.msra.mxu0 %v2286
    %2320 = vmatprep.subr.mxu0 0.0
    %2321 = vmatpush2.msra.mxu0 0.0
    %2322 = vmatprep.subr.mxu0 0.0
    %2323 = vmatpush2.msra.mxu0 0.0
    %2324 = vmatprep.subr.mxu0 0.0
    %2325 = vmatpush2.msra.mxu0 0.0
    %2326 = vmatprep.subr.mxu0 0.0
    %2327 = vmatpush2.msra.mxu0 0.0
    %2328 = vmatprep.subr.mxu0 0.0
    %2329 = vmatpush2.msra.mxu0 0.0
    %2330 = vmatprep.subr.mxu0 0.0
    %2331 = vmatpush2.msra.mxu0 0.0
    %2332 = vmatprep.subr.mxu0 0.0
    %2333 = vmatpush2.msra.mxu0 0.0
    %2334 = vmatprep.subr.mxu0 0.0
    %2335 = vmatpush2.msra.mxu0 0.0
    %2336 = vmatprep.subr.mxu0 0.0
    %2337 = vmatpush2.msra.mxu0 0.0
    %2338 = vmatprep.subr.mxu0 0.0
    %2339 = vmatpush2.msra.mxu0 0.0
    %2340 = vmatprep.subr.mxu0 0.0
    %2341 = vmatpush2.msra.mxu0 0.0
    %2342 = vmatprep.subr.mxu0 0.0
    %2343 = vmatpush2.msra.mxu0 0.0
    %2344 = vmatprep.subr.mxu0 0.0
    %2345 = vmatpush2.msra.mxu0 0.0
    %2346 = vmatprep.subr.mxu0 0.0
    %2347 = vmatpush2.msra.mxu0 0.0
    %2348 = vmatprep.subr.mxu0 0.0
    %2349 = vmatpush2.msra.mxu0 0.0
    %2350 = vmatprep.subr.mxu0 0.0
    %2351 = vmatpush2.msra.mxu0 0.0
    %2352 = vmatprep.mubr.f32.mxu0 0.0
    %2353 = vmatmul.mubr.f32.gmra.mxu0 %v2284
    %v2354 = vpop.f32.mrf.mxu0
    %v2355 = vadd.f32 0.0, %v2354
    %v2356 = vpop.f32.mrf.mxu0
    %2357 = vdwg.mxu0
    %v2358 = vadd.f32 %v2271, %v2355
    %v2359 = vld [vmem:[%s1935] sm:$0xf]
    %v2360 = vld [vmem:[#allocation2] sm:$0xff]
    %2362 = vrot.lane.b32.xlu0 %v2359, 108
    %v2363 = vpop.permute.xlu0 %2362
    %v2365 = vcombine.high %v2360, %v2360
    %2366 = vrot.lane.b32.xlu0 %v2360, 110
    %v2367 = vpop.permute.xlu0 %2366
    %2368 = vrot.lane.b32.xlu0 %v2365, 110
    %v2369 = vpop.permute.xlu0 %2368
    %v2370 = vsel %vm790, %v2367, %v2369
    %v2371 = vsel %vm364, %v2363, 0
    %v2373 = vsel %vm367, %v2370, 0
    %2375 = vmatprep.subr.mxu0 0.0
    %2376 = vmatpush1.msra.mxu0 0.0
    %2377 = vmatprep.subr.mxu0 0.0
    %2378 = vmatpush1.msra.mxu0 0.0
    %2379 = vmatprep.subr.mxu0 0.0
    %2380 = vmatpush1.msra.mxu0 0.0
    %2381 = vmatprep.subr.mxu0 0.0
    %2382 = vmatpush1.msra.mxu0 0.0
    %2383 = vmatprep.subr.mxu0 0.0
    %2384 = vmatpush1.msra.mxu0 0.0
    %2385 = vmatprep.subr.mxu0 0.0
    %2386 = vmatpush1.msra.mxu0 0.0
    %2387 = vmatprep.subr.mxu0 0.0
    %2388 = vmatpush1.msra.mxu0 0.0
    %2389 = vmatprep.subr.mxu0 0.0
    %2390 = vmatpush1.msra.mxu0 0.0
    %2391 = vmatprep.subr.mxu0 0.0
    %2392 = vmatpush1.msra.mxu0 0.0
    %2393 = vmatprep.subr.mxu0 0.0
    %2394 = vmatpush1.msra.mxu0 0.0
    %2395 = vmatprep.subr.mxu0 0.0
    %2396 = vmatpush1.msra.mxu0 0.0
    %2397 = vmatprep.subr.mxu0 0.0
    %2398 = vmatpush1.msra.mxu0 0.0
    %2399 = vmatprep.subr.mxu0 0.0
    %2400 = vmatpush1.msra.mxu0 0.0
    %2401 = vmatprep.subr.mxu0 0.0
    %2402 = vmatpush1.msra.mxu0 0.0
    %2403 = vmatprep.subr.mxu0 0.0
    %2404 = vmatpush1.msra.mxu0 0.0
    %2405 = vmatprep.subr.mxu0 0.0
    %2406 = vmatpush1.msra.mxu0 %v2373
    %2407 = vmatprep.subr.mxu0 0.0
    %2408 = vmatpush2.msra.mxu0 0.0
    %2409 = vmatprep.subr.mxu0 0.0
    %2410 = vmatpush2.msra.mxu0 0.0
    %2411 = vmatprep.subr.mxu0 0.0
    %2412 = vmatpush2.msra.mxu0 0.0
    %2413 = vmatprep.subr.mxu0 0.0
    %2414 = vmatpush2.msra.mxu0 0.0
    %2415 = vmatprep.subr.mxu0 0.0
    %2416 = vmatpush2.msra.mxu0 0.0
    %2417 = vmatprep.subr.mxu0 0.0
    %2418 = vmatpush2.msra.mxu0 0.0
    %2419 = vmatprep.subr.mxu0 0.0
    %2420 = vmatpush2.msra.mxu0 0.0
    %2421 = vmatprep.subr.mxu0 0.0
    %2422 = vmatpush2.msra.mxu0 0.0
    %2423 = vmatprep.subr.mxu0 0.0
    %2424 = vmatpush2.msra.mxu0 0.0
    %2425 = vmatprep.subr.mxu0 0.0
    %2426 = vmatpush2.msra.mxu0 0.0
    %2427 = vmatprep.subr.mxu0 0.0
    %2428 = vmatpush2.msra.mxu0 0.0
    %2429 = vmatprep.subr.mxu0 0.0
    %2430 = vmatpush2.msra.mxu0 0.0
    %2431 = vmatprep.subr.mxu0 0.0
    %2432 = vmatpush2.msra.mxu0 0.0
    %2433 = vmatprep.subr.mxu0 0.0
    %2434 = vmatpush2.msra.mxu0 0.0
    %2435 = vmatprep.subr.mxu0 0.0
    %2436 = vmatpush2.msra.mxu0 0.0
    %2437 = vmatprep.subr.mxu0 0.0
    %2438 = vmatpush2.msra.mxu0 0.0
    %2439 = vmatprep.mubr.f32.mxu0 0.0
    %2440 = vmatmul.mubr.f32.gmra.mxu0 %v2371
    %v2441 = vpop.f32.mrf.mxu0
    %v2442 = vadd.f32 0.0, %v2441
    %v2443 = vpop.f32.mrf.mxu0
    %2444 = vdwg.mxu0
    %v2445 = vadd.f32 %v2358, %v2442
    %v2446 = vld [vmem:[%s1935] sm:$0xf]
    %v2447 = vld [vmem:[#allocation2] sm:$0xff]
    %2449 = vrot.lane.b32.xlu0 %v2446, 104
    %v2450 = vpop.permute.xlu0 %2449
    %v2452 = vcombine.high %v2447, %v2447
    %2453 = vrot.lane.b32.xlu0 %v2447, 96
    %v2454 = vpop.permute.xlu0 %2453
    %2455 = vrot.lane.b32.xlu0 %v2452, 96
    %v2456 = vpop.permute.xlu0 %2455
    %v2457 = vsel %vm878, %v2454, %v2456
    %v2458 = vsel %vm364, %v2450, 0
    %v2460 = vsel %vm367, %v2457, 0
    %2462 = vmatprep.subr.mxu0 0.0
    %2463 = vmatpush1.msra.mxu0 0.0
    %2464 = vmatprep.subr.mxu0 0.0
    %2465 = vmatpush1.msra.mxu0 0.0
    %2466 = vmatprep.subr.mxu0 0.0
    %2467 = vmatpush1.msra.mxu0 0.0
    %2468 = vmatprep.subr.mxu0 0.0
    %2469 = vmatpush1.msra.mxu0 0.0
    %2470 = vmatprep.subr.mxu0 0.0
    %2471 = vmatpush1.msra.mxu0 0.0
    %2472 = vmatprep.subr.mxu0 0.0
    %2473 = vmatpush1.msra.mxu0 0.0
    %2474 = vmatprep.subr.mxu0 0.0
    %2475 = vmatpush1.msra.mxu0 0.0
    %2476 = vmatprep.subr.mxu0 0.0
    %2477 = vmatpush1.msra.mxu0 0.0
    %2478 = vmatprep.subr.mxu0 0.0
    %2479 = vmatpush1.msra.mxu0 0.0
    %2480 = vmatprep.subr.mxu0 0.0
    %2481 = vmatpush1.msra.mxu0 0.0
    %2482 = vmatprep.subr.mxu0 0.0
    %2483 = vmatpush1.msra.mxu0 0.0
    %2484 = vmatprep.subr.mxu0 0.0
    %2485 = vmatpush1.msra.mxu0 0.0
    %2486 = vmatprep.subr.mxu0 0.0
    %2487 = vmatpush1.msra.mxu0 0.0
    %2488 = vmatprep.subr.mxu0 0.0
    %2489 = vmatpush1.msra.mxu0 0.0
    %2490 = vmatprep.subr.mxu0 0.0
    %2491 = vmatpush1.msra.mxu0 0.0
    %2492 = vmatprep.subr.mxu0 0.0
    %2493 = vmatpush1.msra.mxu0 %v2460
    %2494 = vmatprep.subr.mxu0 0.0
    %2495 = vmatpush2.msra.mxu0 0.0
    %2496 = vmatprep.subr.mxu0 0.0
    %2497 = vmatpush2.msra.mxu0 0.0
    %2498 = vmatprep.subr.mxu0 0.0
    %2499 = vmatpush2.msra.mxu0 0.0
    %2500 = vmatprep.subr.mxu0 0.0
    %2501 = vmatpush2.msra.mxu0 0.0
    %2502 = vmatprep.subr.mxu0 0.0
    %2503 = vmatpush2.msra.mxu0 0.0
    %2504 = vmatprep.subr.mxu0 0.0
    %2505 = vmatpush2.msra.mxu0 0.0
    %2506 = vmatprep.subr.mxu0 0.0
    %2507 = vmatpush2.msra.mxu0 0.0
    %2508 = vmatprep.subr.mxu0 0.0
    %2509 = vmatpush2.msra.mxu0 0.0
    %2510 = vmatprep.subr.mxu0 0.0
    %2511 = vmatpush2.msra.mxu0 0.0
    %2512 = vmatprep.subr.mxu0 0.0
    %2513 = vmatpush2.msra.mxu0 0.0
    %2514 = vmatprep.subr.mxu0 0.0
    %2515 = vmatpush2.msra.mxu0 0.0
    %2516 = vmatprep.subr.mxu0 0.0
    %2517 = vmatpush2.msra.mxu0 0.0
    %2518 = vmatprep.subr.mxu0 0.0
    %2519 = vmatpush2.msra.mxu0 0.0
    %2520 = vmatprep.subr.mxu0 0.0
    %2521 = vmatpush2.msra.mxu0 0.0
    %2522 = vmatprep.subr.mxu0 0.0
    %2523 = vmatpush2.msra.mxu0 0.0
    %2524 = vmatprep.subr.mxu0 0.0
    %2525 = vmatpush2.msra.mxu0 0.0
    %2526 = vmatprep.mubr.f32.mxu0 0.0
    %2527 = vmatmul.mubr.f32.gmra.mxu0 %v2458
    %v2528 = vpop.f32.mrf.mxu0
    %v2529 = vadd.f32 0.0, %v2528
    %v2530 = vpop.f32.mrf.mxu0
    %2531 = vdwg.mxu0
    %v2532 = vadd.f32 %v2445, %v2529
    %v2533 = vld [vmem:[%s1935] sm:$0xf]
    %v2534 = vld [vmem:[#allocation2] sm:$0xff]
    %2536 = vrot.lane.b32.xlu0 %v2533, 100
    %v2537 = vpop.permute.xlu0 %2536
    %v2539 = vcombine.high %v2534, %v2534
    %2540 = vrot.lane.b32.xlu0 %v2534, 95
    %v2541 = vpop.permute.xlu0 %2540
    %2542 = vrot.lane.b32.xlu0 %v2539, 95
    %v2543 = vpop.permute.xlu0 %2542
    %v2544 = vsel %vm966, %v2541, %v2543
    %v2545 = vsel %vm364, %v2537, 0
    %v2547 = vsel %vm367, %v2544, 0
    %2549 = vmatprep.subr.mxu0 0.0
    %2550 = vmatpush1.msra.mxu0 0.0
    %2551 = vmatprep.subr.mxu0 0.0
    %2552 = vmatpush1.msra.mxu0 0.0
    %2553 = vmatprep.subr.mxu0 0.0
    %2554 = vmatpush1.msra.mxu0 0.0
    %2555 = vmatprep.subr.mxu0 0.0
    %2556 = vmatpush1.msra.mxu0 0.0
    %2557 = vmatprep.subr.mxu0 0.0
    %2558 = vmatpush1.msra.mxu0 0.0
    %2559 = vmatprep.subr.mxu0 0.0
    %2560 = vmatpush1.msra.mxu0 0.0
    %2561 = vmatprep.subr.mxu0 0.0
    %2562 = vmatpush1.msra.mxu0 0.0
    %2563 = vmatprep.subr.mxu0 0.0
    %2564 = vmatpush1.msra.mxu0 0.0
    %2565 = vmatprep.subr.mxu0 0.0
    %2566 = vmatpush1.msra.mxu0 0.0
    %2567 = vmatprep.subr.mxu0 0.0
    %2568 = vmatpush1.msra.mxu0 0.0
    %2569 = vmatprep.subr.mxu0 0.0
    %2570 = vmatpush1.msra.mxu0 0.0
    %2571 = vmatprep.subr.mxu0 0.0
    %2572 = vmatpush1.msra.mxu0 0.0
    %2573 = vmatprep.subr.mxu0 0.0
    %2574 = vmatpush1.msra.mxu0 0.0
    %2575 = vmatprep.subr.mxu0 0.0
    %2576 = vmatpush1.msra.mxu0 0.0
    %2577 = vmatprep.subr.mxu0 0.0
    %2578 = vmatpush1.msra.mxu0 0.0
    %2579 = vmatprep.subr.mxu0 0.0
    %2580 = vmatpush1.msra.mxu0 %v2547
    %2581 = vmatprep.subr.mxu0 0.0
    %2582 = vmatpush2.msra.mxu0 0.0
    %2583 = vmatprep.subr.mxu0 0.0
    %2584 = vmatpush2.msra.mxu0 0.0
    %2585 = vmatprep.subr.mxu0 0.0
    %2586 = vmatpush2.msra.mxu0 0.0
    %2587 = vmatprep.subr.mxu0 0.0
    %2588 = vmatpush2.msra.mxu0 0.0
    %2589 = vmatprep.subr.mxu0 0.0
    %2590 = vmatpush2.msra.mxu0 0.0
    %2591 = vmatprep.subr.mxu0 0.0
    %2592 = vmatpush2.msra.mxu0 0.0
    %2593 = vmatprep.subr.mxu0 0.0
    %2594 = vmatpush2.msra.mxu0 0.0
    %2595 = vmatprep.subr.mxu0 0.0
    %2596 = vmatpush2.msra.mxu0 0.0
    %2597 = vmatprep.subr.mxu0 0.0
    %2598 = vmatpush2.msra.mxu0 0.0
    %2599 = vmatprep.subr.mxu0 0.0
    %2600 = vmatpush2.msra.mxu0 0.0
    %2601 = vmatprep.subr.mxu0 0.0
    %2602 = vmatpush2.msra.mxu0 0.0
    %2603 = vmatprep.subr.mxu0 0.0
    %2604 = vmatpush2.msra.mxu0 0.0
    %2605 = vmatprep.subr.mxu0 0.0
    %2606 = vmatpush2.msra.mxu0 0.0
    %2607 = vmatprep.subr.mxu0 0.0
    %2608 = vmatpush2.msra.mxu0 0.0
    %2609 = vmatprep.subr.mxu0 0.0
    %2610 = vmatpush2.msra.mxu0 0.0
    %2611 = vmatprep.subr.mxu0 0.0
    %2612 = vmatpush2.msra.mxu0 0.0
    %2613 = vmatprep.mubr.f32.mxu0 0.0
    %2614 = vmatmul.mubr.f32.gmra.mxu0 %v2545
    %v2615 = vpop.f32.mrf.mxu0
    %v2616 = vadd.f32 0.0, %v2615
    %v2617 = vpop.f32.mrf.mxu0
    %2618 = vdwg.mxu0
    %v2619 = vadd.f32 %v2532, %v2616
    %v2620 = vld [vmem:[%s1935] sm:$0xf]
    %v2621 = vld [vmem:[#allocation2] sm:$0xff]
    %2623 = vrot.lane.b32.xlu0 %v2620, 96
    %v2624 = vpop.permute.xlu0 %2623
    %v2626 = vcombine.high %v2621, %v2621
    %2627 = vrot.lane.b32.xlu0 %v2621, 94
    %v2628 = vpop.permute.xlu0 %2627
    %2629 = vrot.lane.b32.xlu0 %v2626, 94
    %v2630 = vpop.permute.xlu0 %2629
    %v2631 = vsel %vm1054, %v2628, %v2630
    %v2632 = vsel %vm364, %v2624, 0
    %v2634 = vsel %vm367, %v2631, 0
    %2636 = vmatprep.subr.mxu0 0.0
    %2637 = vmatpush1.msra.mxu0 0.0
    %2638 = vmatprep.subr.mxu0 0.0
    %2639 = vmatpush1.msra.mxu0 0.0
    %2640 = vmatprep.subr.mxu0 0.0
    %2641 = vmatpush1.msra.mxu0 0.0
    %2642 = vmatprep.subr.mxu0 0.0
    %2643 = vmatpush1.msra.mxu0 0.0
    %2644 = vmatprep.subr.mxu0 0.0
    %2645 = vmatpush1.msra.mxu0 0.0
    %2646 = vmatprep.subr.mxu0 0.0
    %2647 = vmatpush1.msra.mxu0 0.0
    %2648 = vmatprep.subr.mxu0 0.0
    %2649 = vmatpush1.msra.mxu0 0.0
    %2650 = vmatprep.subr.mxu0 0.0
    %2651 = vmatpush1.msra.mxu0 0.0
    %2652 = vmatprep.subr.mxu0 0.0
    %2653 = vmatpush1.msra.mxu0 0.0
    %2654 = vmatprep.subr.mxu0 0.0
    %2655 = vmatpush1.msra.mxu0 0.0
    %2656 = vmatprep.subr.mxu0 0.0
    %2657 = vmatpush1.msra.mxu0 0.0
    %2658 = vmatprep.subr.mxu0 0.0
    %2659 = vmatpush1.msra.mxu0 0.0
    %2660 = vmatprep.subr.mxu0 0.0
    %2661 = vmatpush1.msra.mxu0 0.0
    %2662 = vmatprep.subr.mxu0 0.0
    %2663 = vmatpush1.msra.mxu0 0.0
    %2664 = vmatprep.subr.mxu0 0.0
    %2665 = vmatpush1.msra.mxu0 0.0
    %2666 = vmatprep.subr.mxu0 0.0
    %2667 = vmatpush1.msra.mxu0 %v2634
    %2668 = vmatprep.subr.mxu0 0.0
    %2669 = vmatpush2.msra.mxu0 0.0
    %2670 = vmatprep.subr.mxu0 0.0
    %2671 = vmatpush2.msra.mxu0 0.0
    %2672 = vmatprep.subr.mxu0 0.0
    %2673 = vmatpush2.msra.mxu0 0.0
    %2674 = vmatprep.subr.mxu0 0.0
    %2675 = vmatpush2.msra.mxu0 0.0
    %2676 = vmatprep.subr.mxu0 0.0
    %2677 = vmatpush2.msra.mxu0 0.0
    %2678 = vmatprep.subr.mxu0 0.0
    %2679 = vmatpush2.msra.mxu0 0.0
    %2680 = vmatprep.subr.mxu0 0.0
    %2681 = vmatpush2.msra.mxu0 0.0
    %2682 = vmatprep.subr.mxu0 0.0
    %2683 = vmatpush2.msra.mxu0 0.0
    %2684 = vmatprep.subr.mxu0 0.0
    %2685 = vmatpush2.msra.mxu0 0.0
    %2686 = vmatprep.subr.mxu0 0.0
    %2687 = vmatpush2.msra.mxu0 0.0
    %2688 = vmatprep.subr.mxu0 0.0
    %2689 = vmatpush2.msra.mxu0 0.0
    %2690 = vmatprep.subr.mxu0 0.0
    %2691 = vmatpush2.msra.mxu0 0.0
    %2692 = vmatprep.subr.mxu0 0.0
    %2693 = vmatpush2.msra.mxu0 0.0
    %2694 = vmatprep.subr.mxu0 0.0
    %2695 = vmatpush2.msra.mxu0 0.0
    %2696 = vmatprep.subr.mxu0 0.0
    %2697 = vmatpush2.msra.mxu0 0.0
    %2698 = vmatprep.subr.mxu0 0.0
    %2699 = vmatpush2.msra.mxu0 0.0
    %2700 = vmatprep.mubr.f32.mxu0 0.0
    %2701 = vmatmul.mubr.f32.gmra.mxu0 %v2632
    %v2702 = vpop.f32.mrf.mxu0
    %v2703 = vadd.f32 0.0, %v2702
    %v2704 = vpop.f32.mrf.mxu0
    %2705 = vdwg.mxu0
    %v2706 = vadd.f32 %v2619, %v2703
    %v2707 = vld [vmem:[%s1935] sm:$0xf]
    %2709 = vset.pattern.permute.xlu0 36
    %2710 = vperm.xlu0 %2709, %v2707
    %v2711 = vpop.permute.xlu0 %2710
    %v2713 = vadd.f32 %v2706, %v2711
    %v2714 = vmax.f32 %v2713, 0.0
    %v2715 = vsel %vm59, %v2714, 0.0
    %2717 = vrot.lane.b32.xlu0 %v2715, 17
    %v2718 = vpop.permute.xlu0 %2717
    %v2719 = vrot.slane %v2718, 4
    %v2720 = vsel %vm343, %v2719, %v2718
    %2722 = vst.msk [vmem:[#allocation2] sm:$0xff] %vm348, %v2720
    %s2723 = scalar_lea.vmem [#allocation8], 12
    %v2724 = vld [vmem:[%s2723] sm:$0xf]
    %v2725 = vld [vmem:[#allocation2] sm:$0xf]
    %v2726 = vld [vmem:[#allocation2] sm:$0xff]
    %2728 = vrot.lane.b32.xlu0 %v2724, 124
    %v2729 = vpop.permute.xlu0 %2728
    %v2731 = vcombine.high %v2726, %v2726
    %2732 = vrot.lane.b32.xlu0 %v2726, 127
    %v2733 = vpop.permute.xlu0 %2732
    %2734 = vrot.lane.b32.xlu0 %v2731, 127
    %v2735 = vpop.permute.xlu0 %2734
    %v2736 = vsel %vm362, %v2733, %v2735
    %v2737 = vsel %vm364, %v2729, 0
    %v2739 = vsel %vm367, %v2736, 0
    %2741 = vmatprep.subr.mxu0 0.0
    %2742 = vmatpush1.msra.mxu0 0.0
    %2743 = vmatprep.subr.mxu0 0.0
    %2744 = vmatpush1.msra.mxu0 0.0
    %2745 = vmatprep.subr.mxu0 0.0
    %2746 = vmatpush1.msra.mxu0 0.0
    %2747 = vmatprep.subr.mxu0 0.0
    %2748 = vmatpush1.msra.mxu0 0.0
    %2749 = vmatprep.subr.mxu0 0.0
    %2750 = vmatpush1.msra.mxu0 0.0
    %2751 = vmatprep.subr.mxu0 0.0
    %2752 = vmatpush1.msra.mxu0 0.0
    %2753 = vmatprep.subr.mxu0 0.0
    %2754 = vmatpush1.msra.mxu0 0.0
    %2755 = vmatprep.subr.mxu0 0.0
    %2756 = vmatpush1.msra.mxu0 0.0
    %2757 = vmatprep.subr.mxu0 0.0
    %2758 = vmatpush1.msra.mxu0 0.0
    %2759 = vmatprep.subr.mxu0 0.0
    %2760 = vmatpush1.msra.mxu0 0.0
    %2761 = vmatprep.subr.mxu0 0.0
    %2762 = vmatpush1.msra.mxu0 0.0
    %2763 = vmatprep.subr.mxu0 0.0
    %2764 = vmatpush1.msra.mxu0 0.0
    %2765 = vmatprep.subr.mxu0 0.0
    %2766 = vmatpush1.msra.mxu0 0.0
    %2767 = vmatprep.subr.mxu0 0.0
    %2768 = vmatpush1.msra.mxu0 0.0
    %2769 = vmatprep.subr.mxu0 0.0
    %2770 = vmatpush1.msra.mxu0 0.0
    %2771 = vmatprep.subr.mxu0 0.0
    %2772 = vmatpush1.msra.mxu0 %v2739
    %2773 = vmatprep.subr.mxu0 0.0
    %2774 = vmatpush2.msra.mxu0 0.0
    %2775 = vmatprep.subr.mxu0 0.0
    %2776 = vmatpush2.msra.mxu0 0.0
    %2777 = vmatprep.subr.mxu0 0.0
    %2778 = vmatpush2.msra.mxu0 0.0
    %2779 = vmatprep.subr.mxu0 0.0
    %2780 = vmatpush2.msra.mxu0 0.0
    %2781 = vmatprep.subr.mxu0 0.0
    %2782 = vmatpush2.msra.mxu0 0.0
    %2783 = vmatprep.subr.mxu0 0.0
    %2784 = vmatpush2.msra.mxu0 0.0
    %2785 = vmatprep.subr.mxu0 0.0
    %2786 = vmatpush2.msra.mxu0 0.0
    %2787 = vmatprep.subr.mxu0 0.0
    %2788 = vmatpush2.msra.mxu0 0.0
    %2789 = vmatprep.subr.mxu0 0.0
    %2790 = vmatpush2.msra.mxu0 0.0
    %2791 = vmatprep.subr.mxu0 0.0
    %2792 = vmatpush2.msra.mxu0 0.0
    %2793 = vmatprep.subr.mxu0 0.0
    %2794 = vmatpush2.msra.mxu0 0.0
    %2795 = vmatprep.subr.mxu0 0.0
    %2796 = vmatpush2.msra.mxu0 0.0
    %2797 = vmatprep.subr.mxu0 0.0
    %2798 = vmatpush2.msra.mxu0 0.0
    %2799 = vmatprep.subr.mxu0 0.0
    %2800 = vmatpush2.msra.mxu0 0.0
    %2801 = vmatprep.subr.mxu0 0.0
    %2802 = vmatpush2.msra.mxu0 0.0
    %2803 = vmatprep.subr.mxu0 0.0
    %2804 = vmatpush2.msra.mxu0 0.0
    %2805 = vmatprep.mubr.f32.mxu0 0.0
    %2806 = vmatmul.mubr.f32.gmra.mxu0 %v2737
    %v2807 = vpop.f32.mrf.mxu0
    %v2808 = vadd.f32 0.0, %v2807
    %v2809 = vpop.f32.mrf.mxu0
    %2810 = vdwg.mxu0
    %v2811 = vsel %vm364, %v2724, 0
    %v2814 = vsel %vm367, %v2725, 0
    %2816 = vmatprep.subr.mxu0 0.0
    %2817 = vmatpush1.msra.mxu0 0.0
    %2818 = vmatprep.subr.mxu0 0.0
    %2819 = vmatpush1.msra.mxu0 0.0
    %2820 = vmatprep.subr.mxu0 0.0
    %2821 = vmatpush1.msra.mxu0 0.0
    %2822 = vmatprep.subr.mxu0 0.0
    %2823 = vmatpush1.msra.mxu0 0.0
    %2824 = vmatprep.subr.mxu0 0.0
    %2825 = vmatpush1.msra.mxu0 0.0
    %2826 = vmatprep.subr.mxu0 0.0
    %2827 = vmatpush1.msra.mxu0 0.0
    %2828 = vmatprep.subr.mxu0 0.0
    %2829 = vmatpush1.msra.mxu0 0.0
    %2830 = vmatprep.subr.mxu0 0.0
    %2831 = vmatpush1.msra.mxu0 0.0
    %2832 = vmatprep.subr.mxu0 0.0
    %2833 = vmatpush1.msra.mxu0 0.0
    %2834 = vmatprep.subr.mxu0 0.0
    %2835 = vmatpush1.msra.mxu0 0.0
    %2836 = vmatprep.subr.mxu0 0.0
    %2837 = vmatpush1.msra.mxu0 0.0
    %2838 = vmatprep.subr.mxu0 0.0
    %2839 = vmatpush1.msra.mxu0 0.0
    %2840 = vmatprep.subr.mxu0 0.0
    %2841 = vmatpush1.msra.mxu0 0.0
    %2842 = vmatprep.subr.mxu0 0.0
    %2843 = vmatpush1.msra.mxu0 0.0
    %2844 = vmatprep.subr.mxu0 0.0
    %2845 = vmatpush1.msra.mxu0 0.0
    %2846 = vmatprep.subr.mxu0 0.0
    %2847 = vmatpush1.msra.mxu0 %v2814
    %2848 = vmatprep.subr.mxu0 0.0
    %2849 = vmatpush2.msra.mxu0 0.0
    %2850 = vmatprep.subr.mxu0 0.0
    %2851 = vmatpush2.msra.mxu0 0.0
    %2852 = vmatprep.subr.mxu0 0.0
    %2853 = vmatpush2.msra.mxu0 0.0
    %2854 = vmatprep.subr.mxu0 0.0
    %2855 = vmatpush2.msra.mxu0 0.0
    %2856 = vmatprep.subr.mxu0 0.0
    %2857 = vmatpush2.msra.mxu0 0.0
    %2858 = vmatprep.subr.mxu0 0.0
    %2859 = vmatpush2.msra.mxu0 0.0
    %2860 = vmatprep.subr.mxu0 0.0
    %2861 = vmatpush2.msra.mxu0 0.0
    %2862 = vmatprep.subr.mxu0 0.0
    %2863 = vmatpush2.msra.mxu0 0.0
    %2864 = vmatprep.subr.mxu0 0.0
    %2865 = vmatpush2.msra.mxu0 0.0
    %2866 = vmatprep.subr.mxu0 0.0
    %2867 = vmatpush2.msra.mxu0 0.0
    %2868 = vmatprep.subr.mxu0 0.0
    %2869 = vmatpush2.msra.mxu0 0.0
    %2870 = vmatprep.subr.mxu0 0.0
    %2871 = vmatpush2.msra.mxu0 0.0
    %2872 = vmatprep.subr.mxu0 0.0
    %2873 = vmatpush2.msra.mxu0 0.0
    %2874 = vmatprep.subr.mxu0 0.0
    %2875 = vmatpush2.msra.mxu0 0.0
    %2876 = vmatprep.subr.mxu0 0.0
    %2877 = vmatpush2.msra.mxu0 0.0
    %2878 = vmatprep.subr.mxu0 0.0
    %2879 = vmatpush2.msra.mxu0 0.0
    %2880 = vmatprep.mubr.f32.mxu0 0.0
    %2881 = vmatmul.mubr.f32.gmra.mxu0 %v2811
    %v2882 = vpop.f32.mrf.mxu0
    %v2883 = vadd.f32 %v2808, %v2882
    %v2884 = vpop.f32.mrf.mxu0
    %2885 = vdwg.mxu0
    %v2886 = vld [vmem:[%s2723] sm:$0xf]
    %v2887 = vld [vmem:[#allocation2] sm:$0xff]
    %2889 = vrot.lane.b32.xlu0 %v2886, 120
    %v2890 = vpop.permute.xlu0 %2889
    %v2892 = vcombine.high %v2887, %v2887
    %2893 = vrot.lane.b32.xlu0 %v2887, 126
    %v2894 = vpop.permute.xlu0 %2893
    %2895 = vrot.lane.b32.xlu0 %v2892, 126
    %v2896 = vpop.permute.xlu0 %2895
    %v2897 = vsel %vm526, %v2894, %v2896
    %v2898 = vsel %vm364, %v2890, 0
    %v2900 = vsel %vm367, %v2897, 0
    %2902 = vmatprep.subr.mxu0 0.0
    %2903 = vmatpush1.msra.mxu0 0.0
    %2904 = vmatprep.subr.mxu0 0.0
    %2905 = vmatpush1.msra.mxu0 0.0
    %2906 = vmatprep.subr.mxu0 0.0
    %2907 = vmatpush1.msra.mxu0 0.0
    %2908 = vmatprep.subr.mxu0 0.0
    %2909 = vmatpush1.msra.mxu0 0.0
    %2910 = vmatprep.subr.mxu0 0.0
    %2911 = vmatpush1.msra.mxu0 0.0
    %2912 = vmatprep.subr.mxu0 0.0
    %2913 = vmatpush1.msra.mxu0 0.0
    %2914 = vmatprep.subr.mxu0 0.0
    %2915 = vmatpush1.msra.mxu0 0.0
    %2916 = vmatprep.subr.mxu0 0.0
    %2917 = vmatpush1.msra.mxu0 0.0
    %2918 = vmatprep.subr.mxu0 0.0
    %2919 = vmatpush1.msra.mxu0 0.0
    %2920 = vmatprep.subr.mxu0 0.0
    %2921 = vmatpush1.msra.mxu0 0.0
    %2922 = vmatprep.subr.mxu0 0.0
    %2923 = vmatpush1.msra.mxu0 0.0
    %2924 = vmatprep.subr.mxu0 0.0
    %2925 = vmatpush1.msra.mxu0 0.0
    %2926 = vmatprep.subr.mxu0 0.0
    %2927 = vmatpush1.msra.mxu0 0.0
    %2928 = vmatprep.subr.mxu0 0.0
    %2929 = vmatpush1.msra.mxu0 0.0
    %2930 = vmatprep.subr.mxu0 0.0
    %2931 = vmatpush1.msra.mxu0 0.0
    %2932 = vmatprep.subr.mxu0 0.0
    %2933 = vmatpush1.msra.mxu0 %v2900
    %2934 = vmatprep.subr.mxu0 0.0
    %2935 = vmatpush2.msra.mxu0 0.0
    %2936 = vmatprep.subr.mxu0 0.0
    %2937 = vmatpush2.msra.mxu0 0.0
    %2938 = vmatprep.subr.mxu0 0.0
    %2939 = vmatpush2.msra.mxu0 0.0
    %2940 = vmatprep.subr.mxu0 0.0
    %2941 = vmatpush2.msra.mxu0 0.0
    %2942 = vmatprep.subr.mxu0 0.0
    %2943 = vmatpush2.msra.mxu0 0.0
    %2944 = vmatprep.subr.mxu0 0.0
    %2945 = vmatpush2.msra.mxu0 0.0
    %2946 = vmatprep.subr.mxu0 0.0
    %2947 = vmatpush2.msra.mxu0 0.0
    %2948 = vmatprep.subr.mxu0 0.0
    %2949 = vmatpush2.msra.mxu0 0.0
    %2950 = vmatprep.subr.mxu0 0.0
    %2951 = vmatpush2.msra.mxu0 0.0
    %2952 = vmatprep.subr.mxu0 0.0
    %2953 = vmatpush2.msra.mxu0 0.0
    %2954 = vmatprep.subr.mxu0 0.0
    %2955 = vmatpush2.msra.mxu0 0.0
    %2956 = vmatprep.subr.mxu0 0.0
    %2957 = vmatpush2.msra.mxu0 0.0
    %2958 = vmatprep.subr.mxu0 0.0
    %2959 = vmatpush2.msra.mxu0 0.0
    %2960 = vmatprep.subr.mxu0 0.0
    %2961 = vmatpush2.msra.mxu0 0.0
    %2962 = vmatprep.subr.mxu0 0.0
    %2963 = vmatpush2.msra.mxu0 0.0
    %2964 = vmatprep.subr.mxu0 0.0
    %2965 = vmatpush2.msra.mxu0 0.0
    %2966 = vmatprep.mubr.f32.mxu0 0.0
    %2967 = vmatmul.mubr.f32.gmra.mxu0 %v2898
    %v2968 = vpop.f32.mrf.mxu0
    %v2969 = vadd.f32 0.0, %v2968
    %v2970 = vpop.f32.mrf.mxu0
    %2971 = vdwg.mxu0
    %v2972 = vadd.f32 %v2883, %v2969
    %v2973 = vld [vmem:[%s2723] sm:$0xf]
    %v2974 = vld [vmem:[#allocation2] sm:$0xff]
    %2976 = vrot.lane.b32.xlu0 %v2973, 116
    %v2977 = vpop.permute.xlu0 %2976
    %v2979 = vcombine.high %v2974, %v2974
    %2980 = vrot.lane.b32.xlu0 %v2974, 112
    %v2981 = vpop.permute.xlu0 %2980
    %2982 = vrot.lane.b32.xlu0 %v2979, 112
    %v2983 = vpop.permute.xlu0 %2982
    %v2984 = vsel %vm614, %v2981, %v2983
    %v2985 = vsel %vm364, %v2977, 0
    %v2987 = vsel %vm367, %v2984, 0
    %2989 = vmatprep.subr.mxu0 0.0
    %2990 = vmatpush1.msra.mxu0 0.0
    %2991 = vmatprep.subr.mxu0 0.0
    %2992 = vmatpush1.msra.mxu0 0.0
    %2993 = vmatprep.subr.mxu0 0.0
    %2994 = vmatpush1.msra.mxu0 0.0
    %2995 = vmatprep.subr.mxu0 0.0
    %2996 = vmatpush1.msra.mxu0 0.0
    %2997 = vmatprep.subr.mxu0 0.0
    %2998 = vmatpush1.msra.mxu0 0.0
    %2999 = vmatprep.subr.mxu0 0.0
    %3000 = vmatpush1.msra.mxu0 0.0
    %3001 = vmatprep.subr.mxu0 0.0
    %3002 = vmatpush1.msra.mxu0 0.0
    %3003 = vmatprep.subr.mxu0 0.0
    %3004 = vmatpush1.msra.mxu0 0.0
    %3005 = vmatprep.subr.mxu0 0.0
    %3006 = vmatpush1.msra.mxu0 0.0
    %3007 = vmatprep.subr.mxu0 0.0
    %3008 = vmatpush1.msra.mxu0 0.0
    %3009 = vmatprep.subr.mxu0 0.0
    %3010 = vmatpush1.msra.mxu0 0.0
    %3011 = vmatprep.subr.mxu0 0.0
    %3012 = vmatpush1.msra.mxu0 0.0
    %3013 = vmatprep.subr.mxu0 0.0
    %3014 = vmatpush1.msra.mxu0 0.0
    %3015 = vmatprep.subr.mxu0 0.0
    %3016 = vmatpush1.msra.mxu0 0.0
    %3017 = vmatprep.subr.mxu0 0.0
    %3018 = vmatpush1.msra.mxu0 0.0
    %3019 = vmatprep.subr.mxu0 0.0
    %3020 = vmatpush1.msra.mxu0 %v2987
    %3021 = vmatprep.subr.mxu0 0.0
    %3022 = vmatpush2.msra.mxu0 0.0
    %3023 = vmatprep.subr.mxu0 0.0
    %3024 = vmatpush2.msra.mxu0 0.0
    %3025 = vmatprep.subr.mxu0 0.0
    %3026 = vmatpush2.msra.mxu0 0.0
    %3027 = vmatprep.subr.mxu0 0.0
    %3028 = vmatpush2.msra.mxu0 0.0
    %3029 = vmatprep.subr.mxu0 0.0
    %3030 = vmatpush2.msra.mxu0 0.0
    %3031 = vmatprep.subr.mxu0 0.0
    %3032 = vmatpush2.msra.mxu0 0.0
    %3033 = vmatprep.subr.mxu0 0.0
    %3034 = vmatpush2.msra.mxu0 0.0
    %3035 = vmatprep.subr.mxu0 0.0
    %3036 = vmatpush2.msra.mxu0 0.0
    %3037 = vmatprep.subr.mxu0 0.0
    %3038 = vmatpush2.msra.mxu0 0.0
    %3039 = vmatprep.subr.mxu0 0.0
    %3040 = vmatpush2.msra.mxu0 0.0
    %3041 = vmatprep.subr.mxu0 0.0
    %3042 = vmatpush2.msra.mxu0 0.0
    %3043 = vmatprep.subr.mxu0 0.0
    %3044 = vmatpush2.msra.mxu0 0.0
    %3045 = vmatprep.subr.mxu0 0.0
    %3046 = vmatpush2.msra.mxu0 0.0
    %3047 = vmatprep.subr.mxu0 0.0
    %3048 = vmatpush2.msra.mxu0 0.0
    %3049 = vmatprep.subr.mxu0 0.0
    %3050 = vmatpush2.msra.mxu0 0.0
    %3051 = vmatprep.subr.mxu0 0.0
    %3052 = vmatpush2.msra.mxu0 0.0
    %3053 = vmatprep.mubr.f32.mxu0 0.0
    %3054 = vmatmul.mubr.f32.gmra.mxu0 %v2985
    %v3055 = vpop.f32.mrf.mxu0
    %v3056 = vadd.f32 0.0, %v3055
    %v3057 = vpop.f32.mrf.mxu0
    %3058 = vdwg.mxu0
    %v3059 = vadd.f32 %v2972, %v3056
    %v3060 = vld [vmem:[%s2723] sm:$0xf]
    %v3061 = vld [vmem:[#allocation2] sm:$0xff]
    %3063 = vrot.lane.b32.xlu0 %v3060, 112
    %v3064 = vpop.permute.xlu0 %3063
    %v3066 = vcombine.high %v3061, %v3061
    %3067 = vrot.lane.b32.xlu0 %v3061, 111
    %v3068 = vpop.permute.xlu0 %3067
    %3069 = vrot.lane.b32.xlu0 %v3066, 111
    %v3070 = vpop.permute.xlu0 %3069
    %v3071 = vsel %vm702, %v3068, %v3070
    %v3072 = vsel %vm364, %v3064, 0
    %v3074 = vsel %vm367, %v3071, 0
    %3076 = vmatprep.subr.mxu0 0.0
    %3077 = vmatpush1.msra.mxu0 0.0
    %3078 = vmatprep.subr.mxu0 0.0
    %3079 = vmatpush1.msra.mxu0 0.0
    %3080 = vmatprep.subr.mxu0 0.0
    %3081 = vmatpush1.msra.mxu0 0.0
    %3082 = vmatprep.subr.mxu0 0.0
    %3083 = vmatpush1.msra.mxu0 0.0
    %3084 = vmatprep.subr.mxu0 0.0
    %3085 = vmatpush1.msra.mxu0 0.0
    %3086 = vmatprep.subr.mxu0 0.0
    %3087 = vmatpush1.msra.mxu0 0.0
    %3088 = vmatprep.subr.mxu0 0.0
    %3089 = vmatpush1.msra.mxu0 0.0
    %3090 = vmatprep.subr.mxu0 0.0
    %3091 = vmatpush1.msra.mxu0 0.0
    %3092 = vmatprep.subr.mxu0 0.0
    %3093 = vmatpush1.msra.mxu0 0.0
    %3094 = vmatprep.subr.mxu0 0.0
    %3095 = vmatpush1.msra.mxu0 0.0
    %3096 = vmatprep.subr.mxu0 0.0
    %3097 = vmatpush1.msra.mxu0 0.0
    %3098 = vmatprep.subr.mxu0 0.0
    %3099 = vmatpush1.msra.mxu0 0.0
    %3100 = vmatprep.subr.mxu0 0.0
    %3101 = vmatpush1.msra.mxu0 0.0
    %3102 = vmatprep.subr.mxu0 0.0
    %3103 = vmatpush1.msra.mxu0 0.0
    %3104 = vmatprep.subr.mxu0 0.0
    %3105 = vmatpush1.msra.mxu0 0.0
    %3106 = vmatprep.subr.mxu0 0.0
    %3107 = vmatpush1.msra.mxu0 %v3074
    %3108 = vmatprep.subr.mxu0 0.0
    %3109 = vmatpush2.msra.mxu0 0.0
    %3110 = vmatprep.subr.mxu0 0.0
    %3111 = vmatpush2.msra.mxu0 0.0
    %3112 = vmatprep.subr.mxu0 0.0
    %3113 = vmatpush2.msra.mxu0 0.0
    %3114 = vmatprep.subr.mxu0 0.0
    %3115 = vmatpush2.msra.mxu0 0.0
    %3116 = vmatprep.subr.mxu0 0.0
    %3117 = vmatpush2.msra.mxu0 0.0
    %3118 = vmatprep.subr.mxu0 0.0
    %3119 = vmatpush2.msra.mxu0 0.0
    %3120 = vmatprep.subr.mxu0 0.0
    %3121 = vmatpush2.msra.mxu0 0.0
    %3122 = vmatprep.subr.mxu0 0.0
    %3123 = vmatpush2.msra.mxu0 0.0
    %3124 = vmatprep.subr.mxu0 0.0
    %3125 = vmatpush2.msra.mxu0 0.0
    %3126 = vmatprep.subr.mxu0 0.0
    %3127 = vmatpush2.msra.mxu0 0.0
    %3128 = vmatprep.subr.mxu0 0.0
    %3129 = vmatpush2.msra.mxu0 0.0
    %3130 = vmatprep.subr.mxu0 0.0
    %3131 = vmatpush2.msra.mxu0 0.0
    %3132 = vmatprep.subr.mxu0 0.0
    %3133 = vmatpush2.msra.mxu0 0.0
    %3134 = vmatprep.subr.mxu0 0.0
    %3135 = vmatpush2.msra.mxu0 0.0
    %3136 = vmatprep.subr.mxu0 0.0
    %3137 = vmatpush2.msra.mxu0 0.0
    %3138 = vmatprep.subr.mxu0 0.0
    %3139 = vmatpush2.msra.mxu0 0.0
    %3140 = vmatprep.mubr.f32.mxu0 0.0
    %3141 = vmatmul.mubr.f32.gmra.mxu0 %v3072
    %v3142 = vpop.f32.mrf.mxu0
    %v3143 = vadd.f32 0.0, %v3142
    %v3144 = vpop.f32.mrf.mxu0
    %3145 = vdwg.mxu0
    %v3146 = vadd.f32 %v3059, %v3143
    %v3147 = vld [vmem:[%s2723] sm:$0xf]
    %v3148 = vld [vmem:[#allocation2] sm:$0xff]
    %3150 = vrot.lane.b32.xlu0 %v3147, 108
    %v3151 = vpop.permute.xlu0 %3150
    %v3153 = vcombine.high %v3148, %v3148
    %3154 = vrot.lane.b32.xlu0 %v3148, 110
    %v3155 = vpop.permute.xlu0 %3154
    %3156 = vrot.lane.b32.xlu0 %v3153, 110
    %v3157 = vpop.permute.xlu0 %3156
    %v3158 = vsel %vm790, %v3155, %v3157
    %v3159 = vsel %vm364, %v3151, 0
    %v3161 = vsel %vm367, %v3158, 0
    %3163 = vmatprep.subr.mxu0 0.0
    %3164 = vmatpush1.msra.mxu0 0.0
    %3165 = vmatprep.subr.mxu0 0.0
    %3166 = vmatpush1.msra.mxu0 0.0
    %3167 = vmatprep.subr.mxu0 0.0
    %3168 = vmatpush1.msra.mxu0 0.0
    %3169 = vmatprep.subr.mxu0 0.0
    %3170 = vmatpush1.msra.mxu0 0.0
    %3171 = vmatprep.subr.mxu0 0.0
    %3172 = vmatpush1.msra.mxu0 0.0
    %3173 = vmatprep.subr.mxu0 0.0
    %3174 = vmatpush1.msra.mxu0 0.0
    %3175 = vmatprep.subr.mxu0 0.0
    %3176 = vmatpush1.msra.mxu0 0.0
    %3177 = vmatprep.subr.mxu0 0.0
    %3178 = vmatpush1.msra.mxu0 0.0
    %3179 = vmatprep.subr.mxu0 0.0
    %3180 = vmatpush1.msra.mxu0 0.0
    %3181 = vmatprep.subr.mxu0 0.0
    %3182 = vmatpush1.msra.mxu0 0.0
    %3183 = vmatprep.subr.mxu0 0.0
    %3184 = vmatpush1.msra.mxu0 0.0
    %3185 = vmatprep.subr.mxu0 0.0
    %3186 = vmatpush1.msra.mxu0 0.0
    %3187 = vmatprep.subr.mxu0 0.0
    %3188 = vmatpush1.msra.mxu0 0.0
    %3189 = vmatprep.subr.mxu0 0.0
    %3190 = vmatpush1.msra.mxu0 0.0
    %3191 = vmatprep.subr.mxu0 0.0
    %3192 = vmatpush1.msra.mxu0 0.0
    %3193 = vmatprep.subr.mxu0 0.0
    %3194 = vmatpush1.msra.mxu0 %v3161
    %3195 = vmatprep.subr.mxu0 0.0
    %3196 = vmatpush2.msra.mxu0 0.0
    %3197 = vmatprep.subr.mxu0 0.0
    %3198 = vmatpush2.msra.mxu0 0.0
    %3199 = vmatprep.subr.mxu0 0.0
    %3200 = vmatpush2.msra.mxu0 0.0
    %3201 = vmatprep.subr.mxu0 0.0
    %3202 = vmatpush2.msra.mxu0 0.0
    %3203 = vmatprep.subr.mxu0 0.0
    %3204 = vmatpush2.msra.mxu0 0.0
    %3205 = vmatprep.subr.mxu0 0.0
    %3206 = vmatpush2.msra.mxu0 0.0
    %3207 = vmatprep.subr.mxu0 0.0
    %3208 = vmatpush2.msra.mxu0 0.0
    %3209 = vmatprep.subr.mxu0 0.0
    %3210 = vmatpush2.msra.mxu0 0.0
    %3211 = vmatprep.subr.mxu0 0.0
    %3212 = vmatpush2.msra.mxu0 0.0
    %3213 = vmatprep.subr.mxu0 0.0
    %3214 = vmatpush2.msra.mxu0 0.0
    %3215 = vmatprep.subr.mxu0 0.0
    %3216 = vmatpush2.msra.mxu0 0.0
    %3217 = vmatprep.subr.mxu0 0.0
    %3218 = vmatpush2.msra.mxu0 0.0
    %3219 = vmatprep.subr.mxu0 0.0
    %3220 = vmatpush2.msra.mxu0 0.0
    %3221 = vmatprep.subr.mxu0 0.0
    %3222 = vmatpush2.msra.mxu0 0.0
    %3223 = vmatprep.subr.mxu0 0.0
    %3224 = vmatpush2.msra.mxu0 0.0
    %3225 = vmatprep.subr.mxu0 0.0
    %3226 = vmatpush2.msra.mxu0 0.0
    %3227 = vmatprep.mubr.f32.mxu0 0.0
    %3228 = vmatmul.mubr.f32.gmra.mxu0 %v3159
    %v3229 = vpop.f32.mrf.mxu0
    %v3230 = vadd.f32 0.0, %v3229
    %v3231 = vpop.f32.mrf.mxu0
    %3232 = vdwg.mxu0
    %v3233 = vadd.f32 %v3146, %v3230
    %v3234 = vld [vmem:[%s2723] sm:$0xf]
    %v3235 = vld [vmem:[#allocation2] sm:$0xff]
    %3237 = vrot.lane.b32.xlu0 %v3234, 104
    %v3238 = vpop.permute.xlu0 %3237
    %v3240 = vcombine.high %v3235, %v3235
    %3241 = vrot.lane.b32.xlu0 %v3235, 96
    %v3242 = vpop.permute.xlu0 %3241
    %3243 = vrot.lane.b32.xlu0 %v3240, 96
    %v3244 = vpop.permute.xlu0 %3243
    %v3245 = vsel %vm878, %v3242, %v3244
    %v3246 = vsel %vm364, %v3238, 0
    %v3248 = vsel %vm367, %v3245, 0
    %3250 = vmatprep.subr.mxu0 0.0
    %3251 = vmatpush1.msra.mxu0 0.0
    %3252 = vmatprep.subr.mxu0 0.0
    %3253 = vmatpush1.msra.mxu0 0.0
    %3254 = vmatprep.subr.mxu0 0.0
    %3255 = vmatpush1.msra.mxu0 0.0
    %3256 = vmatprep.subr.mxu0 0.0
    %3257 = vmatpush1.msra.mxu0 0.0
    %3258 = vmatprep.subr.mxu0 0.0
    %3259 = vmatpush1.msra.mxu0 0.0
    %3260 = vmatprep.subr.mxu0 0.0
    %3261 = vmatpush1.msra.mxu0 0.0
    %3262 = vmatprep.subr.mxu0 0.0
    %3263 = vmatpush1.msra.mxu0 0.0
    %3264 = vmatprep.subr.mxu0 0.0
    %3265 = vmatpush1.msra.mxu0 0.0
    %3266 = vmatprep.subr.mxu0 0.0
    %3267 = vmatpush1.msra.mxu0 0.0
    %3268 = vmatprep.subr.mxu0 0.0
    %3269 = vmatpush1.msra.mxu0 0.0
    %3270 = vmatprep.subr.mxu0 0.0
    %3271 = vmatpush1.msra.mxu0 0.0
    %3272 = vmatprep.subr.mxu0 0.0
    %3273 = vmatpush1.msra.mxu0 0.0
    %3274 = vmatprep.subr.mxu0 0.0
    %3275 = vmatpush1.msra.mxu0 0.0
    %3276 = vmatprep.subr.mxu0 0.0
    %3277 = vmatpush1.msra.mxu0 0.0
    %3278 = vmatprep.subr.mxu0 0.0
    %3279 = vmatpush1.msra.mxu0 0.0
    %3280 = vmatprep.subr.mxu0 0.0
    %3281 = vmatpush1.msra.mxu0 %v3248
    %3282 = vmatprep.subr.mxu0 0.0
    %3283 = vmatpush2.msra.mxu0 0.0
    %3284 = vmatprep.subr.mxu0 0.0
    %3285 = vmatpush2.msra.mxu0 0.0
    %3286 = vmatprep.subr.mxu0 0.0
    %3287 = vmatpush2.msra.mxu0 0.0
    %3288 = vmatprep.subr.mxu0 0.0
    %3289 = vmatpush2.msra.mxu0 0.0
    %3290 = vmatprep.subr.mxu0 0.0
    %3291 = vmatpush2.msra.mxu0 0.0
    %3292 = vmatprep.subr.mxu0 0.0
    %3293 = vmatpush2.msra.mxu0 0.0
    %3294 = vmatprep.subr.mxu0 0.0
    %3295 = vmatpush2.msra.mxu0 0.0
    %3296 = vmatprep.subr.mxu0 0.0
    %3297 = vmatpush2.msra.mxu0 0.0
    %3298 = vmatprep.subr.mxu0 0.0
    %3299 = vmatpush2.msra.mxu0 0.0
    %3300 = vmatprep.subr.mxu0 0.0
    %3301 = vmatpush2.msra.mxu0 0.0
    %3302 = vmatprep.subr.mxu0 0.0
    %3303 = vmatpush2.msra.mxu0 0.0
    %3304 = vmatprep.subr.mxu0 0.0
    %3305 = vmatpush2.msra.mxu0 0.0
    %3306 = vmatprep.subr.mxu0 0.0
    %3307 = vmatpush2.msra.mxu0 0.0
    %3308 = vmatprep.subr.mxu0 0.0
    %3309 = vmatpush2.msra.mxu0 0.0
    %3310 = vmatprep.subr.mxu0 0.0
    %3311 = vmatpush2.msra.mxu0 0.0
    %3312 = vmatprep.subr.mxu0 0.0
    %3313 = vmatpush2.msra.mxu0 0.0
    %3314 = vmatprep.mubr.f32.mxu0 0.0
    %3315 = vmatmul.mubr.f32.gmra.mxu0 %v3246
    %v3316 = vpop.f32.mrf.mxu0
    %v3317 = vadd.f32 0.0, %v3316
    %v3318 = vpop.f32.mrf.mxu0
    %3319 = vdwg.mxu0
    %v3320 = vadd.f32 %v3233, %v3317
    %v3321 = vld [vmem:[%s2723] sm:$0xf]
    %v3322 = vld [vmem:[#allocation2] sm:$0xff]
    %3324 = vrot.lane.b32.xlu0 %v3321, 100
    %v3325 = vpop.permute.xlu0 %3324
    %v3327 = vcombine.high %v3322, %v3322
    %3328 = vrot.lane.b32.xlu0 %v3322, 95
    %v3329 = vpop.permute.xlu0 %3328
    %3330 = vrot.lane.b32.xlu0 %v3327, 95
    %v3331 = vpop.permute.xlu0 %3330
    %v3332 = vsel %vm966, %v3329, %v3331
    %v3333 = vsel %vm364, %v3325, 0
    %v3335 = vsel %vm367, %v3332, 0
    %3337 = vmatprep.subr.mxu0 0.0
    %3338 = vmatpush1.msra.mxu0 0.0
    %3339 = vmatprep.subr.mxu0 0.0
    %3340 = vmatpush1.msra.mxu0 0.0
    %3341 = vmatprep.subr.mxu0 0.0
    %3342 = vmatpush1.msra.mxu0 0.0
    %3343 = vmatprep.subr.mxu0 0.0
    %3344 = vmatpush1.msra.mxu0 0.0
    %3345 = vmatprep.subr.mxu0 0.0
    %3346 = vmatpush1.msra.mxu0 0.0
    %3347 = vmatprep.subr.mxu0 0.0
    %3348 = vmatpush1.msra.mxu0 0.0
    %3349 = vmatprep.subr.mxu0 0.0
    %3350 = vmatpush1.msra.mxu0 0.0
    %3351 = vmatprep.subr.mxu0 0.0
    %3352 = vmatpush1.msra.mxu0 0.0
    %3353 = vmatprep.subr.mxu0 0.0
    %3354 = vmatpush1.msra.mxu0 0.0
    %3355 = vmatprep.subr.mxu0 0.0
    %3356 = vmatpush1.msra.mxu0 0.0
    %3357 = vmatprep.subr.mxu0 0.0
    %3358 = vmatpush1.msra.mxu0 0.0
    %3359 = vmatprep.subr.mxu0 0.0
    %3360 = vmatpush1.msra.mxu0 0.0
    %3361 = vmatprep.subr.mxu0 0.0
    %3362 = vmatpush1.msra.mxu0 0.0
    %3363 = vmatprep.subr.mxu0 0.0
    %3364 = vmatpush1.msra.mxu0 0.0
    %3365 = vmatprep.subr.mxu0 0.0
    %3366 = vmatpush1.msra.mxu0 0.0
    %3367 = vmatprep.subr.mxu0 0.0
    %3368 = vmatpush1.msra.mxu0 %v3335
    %3369 = vmatprep.subr.mxu0 0.0
    %3370 = vmatpush2.msra.mxu0 0.0
    %3371 = vmatprep.subr.mxu0 0.0
    %3372 = vmatpush2.msra.mxu0 0.0
    %3373 = vmatprep.subr.mxu0 0.0
    %3374 = vmatpush2.msra.mxu0 0.0
    %3375 = vmatprep.subr.mxu0 0.0
    %3376 = vmatpush2.msra.mxu0 0.0
    %3377 = vmatprep.subr.mxu0 0.0
    %3378 = vmatpush2.msra.mxu0 0.0
    %3379 = vmatprep.subr.mxu0 0.0
    %3380 = vmatpush2.msra.mxu0 0.0
    %3381 = vmatprep.subr.mxu0 0.0
    %3382 = vmatpush2.msra.mxu0 0.0
    %3383 = vmatprep.subr.mxu0 0.0
    %3384 = vmatpush2.msra.mxu0 0.0
    %3385 = vmatprep.subr.mxu0 0.0
    %3386 = vmatpush2.msra.mxu0 0.0
    %3387 = vmatprep.subr.mxu0 0.0
    %3388 = vmatpush2.msra.mxu0 0.0
    %3389 = vmatprep.subr.mxu0 0.0
    %3390 = vmatpush2.msra.mxu0 0.0
    %3391 = vmatprep.subr.mxu0 0.0
    %3392 = vmatpush2.msra.mxu0 0.0
    %3393 = vmatprep.subr.mxu0 0.0
    %3394 = vmatpush2.msra.mxu0 0.0
    %3395 = vmatprep.subr.mxu0 0.0
    %3396 = vmatpush2.msra.mxu0 0.0
    %3397 = vmatprep.subr.mxu0 0.0
    %3398 = vmatpush2.msra.mxu0 0.0
    %3399 = vmatprep.subr.mxu0 0.0
    %3400 = vmatpush2.msra.mxu0 0.0
    %3401 = vmatprep.mubr.f32.mxu0 0.0
    %3402 = vmatmul.mubr.f32.gmra.mxu0 %v3333
    %v3403 = vpop.f32.mrf.mxu0
    %v3404 = vadd.f32 0.0, %v3403
    %v3405 = vpop.f32.mrf.mxu0
    %3406 = vdwg.mxu0
    %v3407 = vadd.f32 %v3320, %v3404
    %v3408 = vld [vmem:[%s2723] sm:$0xf]
    %v3409 = vld [vmem:[#allocation2] sm:$0xff]
    %3411 = vrot.lane.b32.xlu0 %v3408, 96
    %v3412 = vpop.permute.xlu0 %3411
    %v3414 = vcombine.high %v3409, %v3409
    %3415 = vrot.lane.b32.xlu0 %v3409, 94
    %v3416 = vpop.permute.xlu0 %3415
    %3417 = vrot.lane.b32.xlu0 %v3414, 94
    %v3418 = vpop.permute.xlu0 %3417
    %v3419 = vsel %vm1054, %v3416, %v3418
    %v3420 = vsel %vm364, %v3412, 0
    %v3422 = vsel %vm367, %v3419, 0
    %3424 = vmatprep.subr.mxu0 0.0
    %3425 = vmatpush1.msra.mxu0 0.0
    %3426 = vmatprep.subr.mxu0 0.0
    %3427 = vmatpush1.msra.mxu0 0.0
    %3428 = vmatprep.subr.mxu0 0.0
    %3429 = vmatpush1.msra.mxu0 0.0
    %3430 = vmatprep.subr.mxu0 0.0
    %3431 = vmatpush1.msra.mxu0 0.0
    %3432 = vmatprep.subr.mxu0 0.0
    %3433 = vmatpush1.msra.mxu0 0.0
    %3434 = vmatprep.subr.mxu0 0.0
    %3435 = vmatpush1.msra.mxu0 0.0
    %3436 = vmatprep.subr.mxu0 0.0
    %3437 = vmatpush1.msra.mxu0 0.0
    %3438 = vmatprep.subr.mxu0 0.0
    %3439 = vmatpush1.msra.mxu0 0.0
    %3440 = vmatprep.subr.mxu0 0.0
    %3441 = vmatpush1.msra.mxu0 0.0
    %3442 = vmatprep.subr.mxu0 0.0
    %3443 = vmatpush1.msra.mxu0 0.0
    %3444 = vmatprep.subr.mxu0 0.0
    %3445 = vmatpush1.msra.mxu0 0.0
    %3446 = vmatprep.subr.mxu0 0.0
    %3447 = vmatpush1.msra.mxu0 0.0
    %3448 = vmatprep.subr.mxu0 0.0
    %3449 = vmatpush1.msra.mxu0 0.0
    %3450 = vmatprep.subr.mxu0 0.0
    %3451 = vmatpush1.msra.mxu0 0.0
    %3452 = vmatprep.subr.mxu0 0.0
    %3453 = vmatpush1.msra.mxu0 0.0
    %3454 = vmatprep.subr.mxu0 0.0
    %3455 = vmatpush1.msra.mxu0 %v3422
    %3456 = vmatprep.subr.mxu0 0.0
    %3457 = vmatpush2.msra.mxu0 0.0
    %3458 = vmatprep.subr.mxu0 0.0
    %3459 = vmatpush2.msra.mxu0 0.0
    %3460 = vmatprep.subr.mxu0 0.0
    %3461 = vmatpush2.msra.mxu0 0.0
    %3462 = vmatprep.subr.mxu0 0.0
    %3463 = vmatpush2.msra.mxu0 0.0
    %3464 = vmatprep.subr.mxu0 0.0
    %3465 = vmatpush2.msra.mxu0 0.0
    %3466 = vmatprep.subr.mxu0 0.0
    %3467 = vmatpush2.msra.mxu0 0.0
    %3468 = vmatprep.subr.mxu0 0.0
    %3469 = vmatpush2.msra.mxu0 0.0
    %3470 = vmatprep.subr.mxu0 0.0
    %3471 = vmatpush2.msra.mxu0 0.0
    %3472 = vmatprep.subr.mxu0 0.0
    %3473 = vmatpush2.msra.mxu0 0.0
    %3474 = vmatprep.subr.mxu0 0.0
    %3475 = vmatpush2.msra.mxu0 0.0
    %3476 = vmatprep.subr.mxu0 0.0
    %3477 = vmatpush2.msra.mxu0 0.0
    %3478 = vmatprep.subr.mxu0 0.0
    %3479 = vmatpush2.msra.mxu0 0.0
    %3480 = vmatprep.subr.mxu0 0.0
    %3481 = vmatpush2.msra.mxu0 0.0
    %3482 = vmatprep.subr.mxu0 0.0
    %3483 = vmatpush2.msra.mxu0 0.0
    %3484 = vmatprep.subr.mxu0 0.0
    %3485 = vmatpush2.msra.mxu0 0.0
    %3486 = vmatprep.subr.mxu0 0.0
    %3487 = vmatpush2.msra.mxu0 0.0
    %3488 = vmatprep.mubr.f32.mxu0 0.0
    %3489 = vmatmul.mubr.f32.gmra.mxu0 %v3420
    %v3490 = vpop.f32.mrf.mxu0
    %v3491 = vadd.f32 0.0, %v3490
    %v3492 = vpop.f32.mrf.mxu0
    %3493 = vdwg.mxu0
    %v3494 = vadd.f32 %v3407, %v3491
    %v3495 = vld [vmem:[%s2723] sm:$0xf]
    %3497 = vset.pattern.permute.xlu0 36
    %3498 = vperm.xlu0 %3497, %v3495
    %v3499 = vpop.permute.xlu0 %3498
    %v3501 = vadd.f32 %v3494, %v3499
    %v3502 = vadd.f32 %v1926, %v3501
    %3503 = vst [vmem:[#allocation9] sm:$0xf] %v3502
    %s3504 = scalar_lea.vmem [#allocation3], 8
    %v3505 = vld [vmem:[%s3504] sm:$0xff]
    %v3506 = vld [vmem:[#allocation6] sm:$0xff]
    %v3507 = vld [vmem:[#allocation6 + $0x8] sm:$0xff]
    %v3508 = vld [vmem:[#allocation6 + $0x10] sm:$0xff]
    %v3509 = vld [vmem:[#allocation6 + $0x18] sm:$0xff]
    %v3510 = vld [vmem:[#allocation6 + $0x20] sm:$0xff]
    %v3511 = vld [vmem:[#allocation6 + $0x28] sm:$0xff]
    %v3512 = vld [vmem:[#allocation6 + $0x30] sm:$0xff]
    %v3513 = vld [vmem:[#allocation6 + $0x38] sm:$0xff]
    %v3514 = vld [vmem:[#allocation6 + $0x40] sm:$0xff]
    %v3515 = vld [vmem:[#allocation6 + $0x48] sm:$0xff]
    %v3516 = vld [vmem:[#allocation6 + $0x50] sm:$0xff]
    %v3517 = vld [vmem:[#allocation6 + $0x58] sm:$0xff]
    %v3518 = vld [vmem:[#allocation6 + $0x60] sm:$0xff]
    %v3519 = vld [vmem:[#allocation6 + $0x68] sm:$0xff]
    %v3520 = vld [vmem:[#allocation6 + $0x70] sm:$0xff]
    %v3521 = vld [vmem:[#allocation6 + $0x78] sm:$0xff]
    %v3522 = vld [vmem:[#allocation6 + $0x80] sm:$0xff]
    %v3523 = vld [vmem:[#allocation6 + $0x88] sm:$0xff]
    %v3524 = vld [vmem:[#allocation6 + $0x90] sm:$0xff]
    %v3525 = vld [vmem:[#allocation6 + $0x98] sm:$0xff]
    %v3526 = vld [vmem:[#allocation6 + $0xa0] sm:$0xff]
    %v3527 = vld [vmem:[#allocation6 + $0xa8] sm:$0xff]
    %v3528 = vld [vmem:[#allocation6 + $0xb0] sm:$0xff]
    %v3529 = vld [vmem:[#allocation6 + $0xb8] sm:$0xff]
    %v3530 = vld [vmem:[#allocation6 + $0xc0] sm:$0xff]
    %v3531 = vld [vmem:[#allocation6 + $0xc8] sm:$0xff]
    %v3532 = vld [vmem:[#allocation6 + $0xd0] sm:$0xff]
    %v3533 = vld [vmem:[#allocation6 + $0xd8] sm:$0xff]
    %v3534 = vld [vmem:[#allocation6 + $0xe0] sm:$0xff]
    %v3535 = vld [vmem:[#allocation6 + $0xe8] sm:$0xff]
    %v3536 = vld [vmem:[#allocation6 + $0xf0] sm:$0xff]
    %v3537 = vld [vmem:[#allocation6 + $0xf8] sm:$0xff]
    %v3538 = vld [vmem:[#allocation6 + $0x100] sm:$0xff]
    %v3539 = vld [vmem:[#allocation6 + $0x108] sm:$0xff]
    %v3540 = vld [vmem:[#allocation6 + $0x110] sm:$0xff]
    %v3541 = vld [vmem:[#allocation6 + $0x118] sm:$0xff]
    %v3542 = vld [vmem:[#allocation6 + $0x120] sm:$0xff]
    %v3543 = vld [vmem:[#allocation6 + $0x128] sm:$0xff]
    %v3544 = vld [vmem:[#allocation6 + $0x130] sm:$0xff]
    %v3545 = vld [vmem:[#allocation6 + $0x138] sm:$0xff]
    %v3546 = vld [vmem:[#allocation6 + $0x140] sm:$0xff]
    %v3547 = vld [vmem:[#allocation6 + $0x148] sm:$0xff]
    %v3548 = vld [vmem:[#allocation6 + $0x150] sm:$0xff]
    %v3549 = vld [vmem:[#allocation6 + $0x158] sm:$0xff]
    %v3550 = vld [vmem:[#allocation6 + $0x160] sm:$0xff]
    %v3551 = vld [vmem:[#allocation6 + $0x168] sm:$0xff]
    %v3552 = vld [vmem:[#allocation6 + $0x170] sm:$0xff]
    %v3553 = vld [vmem:[#allocation6 + $0x178] sm:$0xff]
    %v3554 = vld [vmem:[#allocation6 + $0x180] sm:$0xff]
    %v3555 = vld [vmem:[#allocation6 + $0x188] sm:$0xff]
    %v3556 = vld [vmem:[#allocation6 + $0x190] sm:$0xff]
    %v3557 = vld [vmem:[#allocation6 + $0x198] sm:$0xff]
    %v3558 = vld [vmem:[#allocation6 + $0x1a0] sm:$0xff]
    %v3559 = vld [vmem:[#allocation6 + $0x1a8] sm:$0xff]
    %v3560 = vld [vmem:[#allocation6 + $0x1b0] sm:$0xff]
    %v3561 = vld [vmem:[#allocation6 + $0x1b8] sm:$0xff]
    %v3562 = vld [vmem:[#allocation6 + $0x1c0] sm:$0xff]
    %v3563 = vld [vmem:[#allocation6 + $0x1c8] sm:$0xff]
    %v3564 = vld [vmem:[#allocation6 + $0x1d0] sm:$0xff]
    %v3565 = vld [vmem:[#allocation6 + $0x1d8] sm:$0xff]
    %v3566 = vld [vmem:[#allocation6 + $0x1e0] sm:$0xff]
    %v3567 = vld [vmem:[#allocation6 + $0x1e8] sm:$0xff]
    %v3568 = vld [vmem:[#allocation6 + $0x1f0] sm:$0xff]
    %v3569 = vld [vmem:[#allocation6 + $0x1f8] sm:$0xff]
    %v3570 = vld [vmem:[#allocation6 + $0x200] sm:$0xff]
    %v3571 = vld [vmem:[#allocation6 + $0x208] sm:$0xff]
    %v3572 = vld [vmem:[#allocation6 + $0x210] sm:$0xff]
    %v3573 = vld [vmem:[#allocation6 + $0x218] sm:$0xff]
    %v3574 = vld [vmem:[#allocation6 + $0x220] sm:$0xff]
    %v3575 = vld [vmem:[#allocation6 + $0x228] sm:$0xff]
    %v3576 = vld [vmem:[#allocation6 + $0x230] sm:$0xff]
    %v3577 = vld [vmem:[#allocation6 + $0x238] sm:$0xff]
    %v3578 = vld [vmem:[#allocation6 + $0x240] sm:$0xff]
    %v3579 = vld [vmem:[#allocation6 + $0x248] sm:$0xff]
    %v3580 = vld [vmem:[#allocation6 + $0x250] sm:$0xff]
    %v3581 = vld [vmem:[#allocation6 + $0x258] sm:$0xff]
    %v3582 = vld [vmem:[#allocation6 + $0x260] sm:$0xff]
    %v3583 = vld [vmem:[#allocation6 + $0x268] sm:$0xff]
    %v3584 = vld [vmem:[#allocation6 + $0x270] sm:$0xff]
    %v3585 = vld [vmem:[#allocation6 + $0x278] sm:$0xff]
    %v3586 = vld [vmem:[#allocation6 + $0x280] sm:$0xff]
    %v3587 = vld [vmem:[#allocation6 + $0x288] sm:$0xff]
    %v3588 = vld [vmem:[#allocation6 + $0x290] sm:$0xff]
    %v3589 = vld [vmem:[#allocation6 + $0x298] sm:$0xff]
    %v3590 = vld [vmem:[#allocation6 + $0x2a0] sm:$0xff]
    %v3591 = vld [vmem:[#allocation6 + $0x2a8] sm:$0xff]
    %v3592 = vld [vmem:[#allocation6 + $0x2b0] sm:$0xff]
    %v3593 = vld [vmem:[#allocation6 + $0x2b8] sm:$0xff]
    %v3594 = vld [vmem:[#allocation6 + $0x2c0] sm:$0xff]
    %v3595 = vld [vmem:[#allocation6 + $0x2c8] sm:$0xff]
    %v3596 = vld [vmem:[#allocation6 + $0x2d0] sm:$0xff]
    %v3597 = vld [vmem:[#allocation6 + $0x2d8] sm:$0xff]
    %v3598 = vld [vmem:[#allocation6 + $0x2e0] sm:$0xff]
    %v3599 = vld [vmem:[#allocation6 + $0x2e8] sm:$0xff]
    %v3600 = vld [vmem:[#allocation6 + $0x2f0] sm:$0xff]
    %v3601 = vld [vmem:[#allocation6 + $0x2f8] sm:$0xff]
    %v3602 = vld [vmem:[#allocation6 + $0x300] sm:$0xff]
    %v3603 = vld [vmem:[#allocation6 + $0x308] sm:$0xff]
    %v3604 = vld [vmem:[#allocation6 + $0x310] sm:$0xff]
    %v3605 = vld [vmem:[#allocation6 + $0x318] sm:$0xff]
    %v3606 = vld [vmem:[#allocation6 + $0x320] sm:$0xff]
    %v3607 = vld [vmem:[#allocation6 + $0x328] sm:$0xff]
    %v3608 = vld [vmem:[#allocation6 + $0x330] sm:$0xff]
    %v3609 = vld [vmem:[#allocation6 + $0x338] sm:$0xff]
    %v3610 = vld [vmem:[#allocation6 + $0x340] sm:$0xff]
    %v3611 = vld [vmem:[#allocation6 + $0x348] sm:$0xff]
    %v3612 = vld [vmem:[#allocation6 + $0x350] sm:$0xff]
    %v3613 = vld [vmem:[#allocation6 + $0x358] sm:$0xff]
    %v3614 = vld [vmem:[#allocation6 + $0x360] sm:$0xff]
    %v3615 = vld [vmem:[#allocation6 + $0x368] sm:$0xff]
    %v3616 = vld [vmem:[#allocation6 + $0x370] sm:$0xff]
    %v3617 = vld [vmem:[#allocation6 + $0x378] sm:$0xff]
    %v3618 = vld [vmem:[#allocation6 + $0x380] sm:$0xff]
    %v3619 = vld [vmem:[#allocation6 + $0x388] sm:$0xff]
    %v3620 = vld [vmem:[#allocation6 + $0x390] sm:$0xff]
    %v3621 = vld [vmem:[#allocation6 + $0x398] sm:$0xff]
    %v3622 = vld [vmem:[#allocation6 + $0x3a0] sm:$0xff]
    %v3623 = vld [vmem:[#allocation6 + $0x3a8] sm:$0xff]
    %v3624 = vld [vmem:[#allocation6 + $0x3b0] sm:$0xff]
    %v3625 = vld [vmem:[#allocation6 + $0x3b8] sm:$0xff]
    %v3626 = vld [vmem:[#allocation6 + $0x3c0] sm:$0xff]
    %v3627 = vld [vmem:[#allocation6 + $0x3c8] sm:$0xff]
    %v3628 = vld [vmem:[#allocation6 + $0x3d0] sm:$0xff]
    %v3629 = vld [vmem:[#allocation6 + $0x3d8] sm:$0xff]
    %v3630 = vld [vmem:[#allocation6 + $0x3e0] sm:$0xff]
    %v3631 = vld [vmem:[#allocation6 + $0x3e8] sm:$0xff]
    %v3632 = vld [vmem:[#allocation6 + $0x3f0] sm:$0xff]
    %v3633 = vld [vmem:[#allocation6 + $0x3f8] sm:$0xff]
    %v3635 = vcombine.high %v3505, %v3505
    %3637 = vmatprep.subr.mxu0 %v3567
    %3638 = vmatpush1.msra.mxu0 %v3566
    %3639 = vmatprep.subr.mxu0 %v3563
    %3640 = vmatpush1.msra.mxu0 %v3562
    %3641 = vmatprep.subr.mxu0 %v3559
    %3642 = vmatpush1.msra.mxu0 %v3558
    %3643 = vmatprep.subr.mxu0 %v3555
    %3644 = vmatpush1.msra.mxu0 %v3554
    %3645 = vmatprep.subr.mxu0 %v3551
    %3646 = vmatpush1.msra.mxu0 %v3550
    %3647 = vmatprep.subr.mxu0 %v3547
    %3648 = vmatpush1.msra.mxu0 %v3546
    %3649 = vmatprep.subr.mxu0 %v3543
    %3650 = vmatpush1.msra.mxu0 %v3542
    %3651 = vmatprep.subr.mxu0 %v3539
    %3652 = vmatpush1.msra.mxu0 %v3538
    %3653 = vmatprep.subr.mxu0 %v3535
    %3654 = vmatpush1.msra.mxu0 %v3534
    %3655 = vmatprep.subr.mxu0 %v3531
    %3656 = vmatpush1.msra.mxu0 %v3530
    %3657 = vmatprep.subr.mxu0 %v3527
    %3658 = vmatpush1.msra.mxu0 %v3526
    %3659 = vmatprep.subr.mxu0 %v3523
    %3660 = vmatpush1.msra.mxu0 %v3522
    %3661 = vmatprep.subr.mxu0 %v3519
    %3662 = vmatpush1.msra.mxu0 %v3518
    %3663 = vmatprep.subr.mxu0 %v3515
    %3664 = vmatpush1.msra.mxu0 %v3514
    %3665 = vmatprep.subr.mxu0 %v3511
    %3666 = vmatpush1.msra.mxu0 %v3510
    %3667 = vmatprep.subr.mxu0 %v3507
    %3668 = vmatpush1.msra.mxu0 %v3506
    %3669 = vmatprep.subr.mxu0 %v3631
    %3670 = vmatpush2.msra.mxu0 %v3630
    %3671 = vmatprep.subr.mxu0 %v3627
    %3672 = vmatpush2.msra.mxu0 %v3626
    %3673 = vmatprep.subr.mxu0 %v3623
    %3674 = vmatpush2.msra.mxu0 %v3622
    %3675 = vmatprep.subr.mxu0 %v3619
    %3676 = vmatpush2.msra.mxu0 %v3618
    %3677 = vmatprep.subr.mxu0 %v3615
    %3678 = vmatpush2.msra.mxu0 %v3614
    %3679 = vmatprep.subr.mxu0 %v3611
    %3680 = vmatpush2.msra.mxu0 %v3610
    %3681 = vmatprep.subr.mxu0 %v3607
    %3682 = vmatpush2.msra.mxu0 %v3606
    %3683 = vmatprep.subr.mxu0 %v3603
    %3684 = vmatpush2.msra.mxu0 %v3602
    %3685 = vmatprep.subr.mxu0 %v3599
    %3686 = vmatpush2.msra.mxu0 %v3598
    %3687 = vmatprep.subr.mxu0 %v3595
    %3688 = vmatpush2.msra.mxu0 %v3594
    %3689 = vmatprep.subr.mxu0 %v3591
    %3690 = vmatpush2.msra.mxu0 %v3590
    %3691 = vmatprep.subr.mxu0 %v3587
    %3692 = vmatpush2.msra.mxu0 %v3586
    %3693 = vmatprep.subr.mxu0 %v3583
    %3694 = vmatpush2.msra.mxu0 %v3582
    %3695 = vmatprep.subr.mxu0 %v3579
    %3696 = vmatpush2.msra.mxu0 %v3578
    %3697 = vmatprep.subr.mxu0 %v3575
    %3698 = vmatpush2.msra.mxu0 %v3574
    %3699 = vmatprep.subr.mxu0 %v3571
    %3700 = vmatpush2.msra.mxu0 %v3570
    %3701 = vmatprep.mubr.f32.mxu0 %v3635
    %3702 = vmatmul.mubr.f32.gmra.mxu0 %v3505
    %v3703 = vpop.f32.mrf.mxu0
    %v3704 = vadd.f32 0.0, %v3703
    %v3705 = vpop.f32.mrf.mxu0
    %v3706 = vadd.f32 0.0, %v3705
    %3707 = vdwg.mxu0
    %3708 = vmatprep.subr.mxu0 %v3569
    %3709 = vmatpush1.msra.mxu0 %v3568
    %3710 = vmatprep.subr.mxu0 %v3565
    %3711 = vmatpush1.msra.mxu0 %v3564
    %3712 = vmatprep.subr.mxu0 %v3561
    %3713 = vmatpush1.msra.mxu0 %v3560
    %3714 = vmatprep.subr.mxu0 %v3557
    %3715 = vmatpush1.msra.mxu0 %v3556
    %3716 = vmatprep.subr.mxu0 %v3553
    %3717 = vmatpush1.msra.mxu0 %v3552
    %3718 = vmatprep.subr.mxu0 %v3549
    %3719 = vmatpush1.msra.mxu0 %v3548
    %3720 = vmatprep.subr.mxu0 %v3545
    %3721 = vmatpush1.msra.mxu0 %v3544
    %3722 = vmatprep.subr.mxu0 %v3541
    %3723 = vmatpush1.msra.mxu0 %v3540
    %3724 = vmatprep.subr.mxu0 %v3537
    %3725 = vmatpush1.msra.mxu0 %v3536
    %3726 = vmatprep.subr.mxu0 %v3533
    %3727 = vmatpush1.msra.mxu0 %v3532
    %3728 = vmatprep.subr.mxu0 %v3529
    %3729 = vmatpush1.msra.mxu0 %v3528
    %3730 = vmatprep.subr.mxu0 %v3525
    %3731 = vmatpush1.msra.mxu0 %v3524
    %3732 = vmatprep.subr.mxu0 %v3521
    %3733 = vmatpush1.msra.mxu0 %v3520
    %3734 = vmatprep.subr.mxu0 %v3517
    %3735 = vmatpush1.msra.mxu0 %v3516
    %3736 = vmatprep.subr.mxu0 %v3513
    %3737 = vmatpush1.msra.mxu0 %v3512
    %3738 = vmatprep.subr.mxu0 %v3509
    %3739 = vmatpush1.msra.mxu0 %v3508
    %3740 = vmatprep.subr.mxu0 %v3633
    %3741 = vmatpush2.msra.mxu0 %v3632
    %3742 = vmatprep.subr.mxu0 %v3629
    %3743 = vmatpush2.msra.mxu0 %v3628
    %3744 = vmatprep.subr.mxu0 %v3625
    %3745 = vmatpush2.msra.mxu0 %v3624
    %3746 = vmatprep.subr.mxu0 %v3621
    %3747 = vmatpush2.msra.mxu0 %v3620
    %3748 = vmatprep.subr.mxu0 %v3617
    %3749 = vmatpush2.msra.mxu0 %v3616
    %3750 = vmatprep.subr.mxu0 %v3613
    %3751 = vmatpush2.msra.mxu0 %v3612
    %3752 = vmatprep.subr.mxu0 %v3609
    %3753 = vmatpush2.msra.mxu0 %v3608
    %3754 = vmatprep.subr.mxu0 %v3605
    %3755 = vmatpush2.msra.mxu0 %v3604
    %3756 = vmatprep.subr.mxu0 %v3601
    %3757 = vmatpush2.msra.mxu0 %v3600
    %3758 = vmatprep.subr.mxu0 %v3597
    %3759 = vmatpush2.msra.mxu0 %v3596
    %3760 = vmatprep.subr.mxu0 %v3593
    %3761 = vmatpush2.msra.mxu0 %v3592
    %3762 = vmatprep.subr.mxu0 %v3589
    %3763 = vmatpush2.msra.mxu0 %v3588
    %3764 = vmatprep.subr.mxu0 %v3585
    %3765 = vmatpush2.msra.mxu0 %v3584
    %3766 = vmatprep.subr.mxu0 %v3581
    %3767 = vmatpush2.msra.mxu0 %v3580
    %3768 = vmatprep.subr.mxu0 %v3577
    %3769 = vmatpush2.msra.mxu0 %v3576
    %3770 = vmatprep.subr.mxu0 %v3573
    %3771 = vmatpush2.msra.mxu0 %v3572
    %3772 = vmatprep.mubr.f32.mxu0 %v3635
    %3773 = vmatmul.mubr.f32.gmra.mxu0 %v3505
    %v3774 = vpop.f32.mrf.mxu0
    %v3775 = vadd.f32 0.0, %v3774
    %v3776 = vpop.f32.mrf.mxu0
    %v3777 = vadd.f32 0.0, %v3776
    %3778 = vdwg.mxu0
    %v3779 = vmax.f32 %v3704, %v3706
    %v3780 = vmax.f32 %v3775, %v3777
    %v3781 = vmax.f32 %v3779, %v3780
    %v3782 = vsel %vm59, %v3781, 0.0
    %3784 = vrot.lane.b32.xlu0 %v3782, 17
    %v3785 = vpop.permute.xlu0 %3784
    %v3786 = vrot.slane %v3785, 4
    %v3787 = vsel %vm343, %v3786, %v3785
    %3789 = vst.msk [vmem:[#allocation2] sm:$0xff] %vm348, %v3787
    %v3790 = vld [vmem:[#allocation8] sm:$0xf]
    %v3791 = vld [vmem:[#allocation2] sm:$0xf]
    %v3792 = vld [vmem:[#allocation2] sm:$0xff]
    %3794 = vrot.lane.b32.xlu0 %v3790, 124
    %v3795 = vpop.permute.xlu0 %3794
    %v3797 = vcombine.high %v3792, %v3792
    %3798 = vrot.lane.b32.xlu0 %v3792, 127
    %v3799 = vpop.permute.xlu0 %3798
    %3800 = vrot.lane.b32.xlu0 %v3797, 127
    %v3801 = vpop.permute.xlu0 %3800
    %v3802 = vsel %vm362, %v3799, %v3801
    %v3803 = vsel %vm364, %v3795, 0
    %v3805 = vsel %vm367, %v3802, 0
    %3807 = vmatprep.subr.mxu0 0.0
    %3808 = vmatpush1.msra.mxu0 0.0
    %3809 = vmatprep.subr.mxu0 0.0
    %3810 = vmatpush1.msra.mxu0 0.0
    %3811 = vmatprep.subr.mxu0 0.0
    %3812 = vmatpush1.msra.mxu0 0.0
    %3813 = vmatprep.subr.mxu0 0.0
    %3814 = vmatpush1.msra.mxu0 0.0
    %3815 = vmatprep.subr.mxu0 0.0
    %3816 = vmatpush1.msra.mxu0 0.0
    %3817 = vmatprep.subr.mxu0 0.0
    %3818 = vmatpush1.msra.mxu0 0.0
    %3819 = vmatprep.subr.mxu0 0.0
    %3820 = vmatpush1.msra.mxu0 0.0
    %3821 = vmatprep.subr.mxu0 0.0
    %3822 = vmatpush1.msra.mxu0 0.0
    %3823 = vmatprep.subr.mxu0 0.0
    %3824 = vmatpush1.msra.mxu0 0.0
    %3825 = vmatprep.subr.mxu0 0.0
    %3826 = vmatpush1.msra.mxu0 0.0
    %3827 = vmatprep.subr.mxu0 0.0
    %3828 = vmatpush1.msra.mxu0 0.0
    %3829 = vmatprep.subr.mxu0 0.0
    %3830 = vmatpush1.msra.mxu0 0.0
    %3831 = vmatprep.subr.mxu0 0.0
    %3832 = vmatpush1.msra.mxu0 0.0
    %3833 = vmatprep.subr.mxu0 0.0
    %3834 = vmatpush1.msra.mxu0 0.0
    %3835 = vmatprep.subr.mxu0 0.0
    %3836 = vmatpush1.msra.mxu0 0.0
    %3837 = vmatprep.subr.mxu0 0.0
    %3838 = vmatpush1.msra.mxu0 %v3805
    %3839 = vmatprep.subr.mxu0 0.0
    %3840 = vmatpush2.msra.mxu0 0.0
    %3841 = vmatprep.subr.mxu0 0.0
    %3842 = vmatpush2.msra.mxu0 0.0
    %3843 = vmatprep.subr.mxu0 0.0
    %3844 = vmatpush2.msra.mxu0 0.0
    %3845 = vmatprep.subr.mxu0 0.0
    %3846 = vmatpush2.msra.mxu0 0.0
    %3847 = vmatprep.subr.mxu0 0.0
    %3848 = vmatpush2.msra.mxu0 0.0
    %3849 = vmatprep.subr.mxu0 0.0
    %3850 = vmatpush2.msra.mxu0 0.0
    %3851 = vmatprep.subr.mxu0 0.0
    %3852 = vmatpush2.msra.mxu0 0.0
    %3853 = vmatprep.subr.mxu0 0.0
    %3854 = vmatpush2.msra.mxu0 0.0
    %3855 = vmatprep.subr.mxu0 0.0
    %3856 = vmatpush2.msra.mxu0 0.0
    %3857 = vmatprep.subr.mxu0 0.0
    %3858 = vmatpush2.msra.mxu0 0.0
    %3859 = vmatprep.subr.mxu0 0.0
    %3860 = vmatpush2.msra.mxu0 0.0
    %3861 = vmatprep.subr.mxu0 0.0
    %3862 = vmatpush2.msra.mxu0 0.0
    %3863 = vmatprep.subr.mxu0 0.0
    %3864 = vmatpush2.msra.mxu0 0.0
    %3865 = vmatprep.subr.mxu0 0.0
    %3866 = vmatpush2.msra.mxu0 0.0
    %3867 = vmatprep.subr.mxu0 0.0
    %3868 = vmatpush2.msra.mxu0 0.0
    %3869 = vmatprep.subr.mxu0 0.0
    %3870 = vmatpush2.msra.mxu0 0.0
    %3871 = vmatprep.mubr.f32.mxu0 0.0
    %3872 = vmatmul.mubr.f32.gmra.mxu0 %v3803
    %v3873 = vpop.f32.mrf.mxu0
    %v3874 = vadd.f32 0.0, %v3873
    %v3875 = vpop.f32.mrf.mxu0
    %3876 = vdwg.mxu0
    %v3877 = vsel %vm364, %v3790, 0
    %v3880 = vsel %vm367, %v3791, 0
    %3882 = vmatprep.subr.mxu0 0.0
    %3883 = vmatpush1.msra.mxu0 0.0
    %3884 = vmatprep.subr.mxu0 0.0
    %3885 = vmatpush1.msra.mxu0 0.0
    %3886 = vmatprep.subr.mxu0 0.0
    %3887 = vmatpush1.msra.mxu0 0.0
    %3888 = vmatprep.subr.mxu0 0.0
    %3889 = vmatpush1.msra.mxu0 0.0
    %3890 = vmatprep.subr.mxu0 0.0
    %3891 = vmatpush1.msra.mxu0 0.0
    %3892 = vmatprep.subr.mxu0 0.0
    %3893 = vmatpush1.msra.mxu0 0.0
    %3894 = vmatprep.subr.mxu0 0.0
    %3895 = vmatpush1.msra.mxu0 0.0
    %3896 = vmatprep.subr.mxu0 0.0
    %3897 = vmatpush1.msra.mxu0 0.0
    %3898 = vmatprep.subr.mxu0 0.0
    %3899 = vmatpush1.msra.mxu0 0.0
    %3900 = vmatprep.subr.mxu0 0.0
    %3901 = vmatpush1.msra.mxu0 0.0
    %3902 = vmatprep.subr.mxu0 0.0
    %3903 = vmatpush1.msra.mxu0 0.0
    %3904 = vmatprep.subr.mxu0 0.0
    %3905 = vmatpush1.msra.mxu0 0.0
    %3906 = vmatprep.subr.mxu0 0.0
    %3907 = vmatpush1.msra.mxu0 0.0
    %3908 = vmatprep.subr.mxu0 0.0
    %3909 = vmatpush1.msra.mxu0 0.0
    %3910 = vmatprep.subr.mxu0 0.0
    %3911 = vmatpush1.msra.mxu0 0.0
    %3912 = vmatprep.subr.mxu0 0.0
    %3913 = vmatpush1.msra.mxu0 %v3880
    %3914 = vmatprep.subr.mxu0 0.0
    %3915 = vmatpush2.msra.mxu0 0.0
    %3916 = vmatprep.subr.mxu0 0.0
    %3917 = vmatpush2.msra.mxu0 0.0
    %3918 = vmatprep.subr.mxu0 0.0
    %3919 = vmatpush2.msra.mxu0 0.0
    %3920 = vmatprep.subr.mxu0 0.0
    %3921 = vmatpush2.msra.mxu0 0.0
    %3922 = vmatprep.subr.mxu0 0.0
    %3923 = vmatpush2.msra.mxu0 0.0
    %3924 = vmatprep.subr.mxu0 0.0
    %3925 = vmatpush2.msra.mxu0 0.0
    %3926 = vmatprep.subr.mxu0 0.0
    %3927 = vmatpush2.msra.mxu0 0.0
    %3928 = vmatprep.subr.mxu0 0.0
    %3929 = vmatpush2.msra.mxu0 0.0
    %3930 = vmatprep.subr.mxu0 0.0
    %3931 = vmatpush2.msra.mxu0 0.0
    %3932 = vmatprep.subr.mxu0 0.0
    %3933 = vmatpush2.msra.mxu0 0.0
    %3934 = vmatprep.subr.mxu0 0.0
    %3935 = vmatpush2.msra.mxu0 0.0
    %3936 = vmatprep.subr.mxu0 0.0
    %3937 = vmatpush2.msra.mxu0 0.0
    %3938 = vmatprep.subr.mxu0 0.0
    %3939 = vmatpush2.msra.mxu0 0.0
    %3940 = vmatprep.subr.mxu0 0.0
    %3941 = vmatpush2.msra.mxu0 0.0
    %3942 = vmatprep.subr.mxu0 0.0
    %3943 = vmatpush2.msra.mxu0 0.0
    %3944 = vmatprep.subr.mxu0 0.0
    %3945 = vmatpush2.msra.mxu0 0.0
    %3946 = vmatprep.mubr.f32.mxu0 0.0
    %3947 = vmatmul.mubr.f32.gmra.mxu0 %v3877
    %v3948 = vpop.f32.mrf.mxu0
    %v3949 = vadd.f32 %v3874, %v3948
    %v3950 = vpop.f32.mrf.mxu0
    %3951 = vdwg.mxu0
    %v3952 = vld [vmem:[#allocation8] sm:$0xf]
    %v3953 = vld [vmem:[#allocation2] sm:$0xff]
    %3955 = vrot.lane.b32.xlu0 %v3952, 120
    %v3956 = vpop.permute.xlu0 %3955
    %v3958 = vcombine.high %v3953, %v3953
    %3959 = vrot.lane.b32.xlu0 %v3953, 126
    %v3960 = vpop.permute.xlu0 %3959
    %3961 = vrot.lane.b32.xlu0 %v3958, 126
    %v3962 = vpop.permute.xlu0 %3961
    %v3963 = vsel %vm526, %v3960, %v3962
    %v3964 = vsel %vm364, %v3956, 0
    %v3966 = vsel %vm367, %v3963, 0
    %3968 = vmatprep.subr.mxu0 0.0
    %3969 = vmatpush1.msra.mxu0 0.0
    %3970 = vmatprep.subr.mxu0 0.0
    %3971 = vmatpush1.msra.mxu0 0.0
    %3972 = vmatprep.subr.mxu0 0.0
    %3973 = vmatpush1.msra.mxu0 0.0
    %3974 = vmatprep.subr.mxu0 0.0
    %3975 = vmatpush1.msra.mxu0 0.0
    %3976 = vmatprep.subr.mxu0 0.0
    %3977 = vmatpush1.msra.mxu0 0.0
    %3978 = vmatprep.subr.mxu0 0.0
    %3979 = vmatpush1.msra.mxu0 0.0
    %3980 = vmatprep.subr.mxu0 0.0
    %3981 = vmatpush1.msra.mxu0 0.0
    %3982 = vmatprep.subr.mxu0 0.0
    %3983 = vmatpush1.msra.mxu0 0.0
    %3984 = vmatprep.subr.mxu0 0.0
    %3985 = vmatpush1.msra.mxu0 0.0
    %3986 = vmatprep.subr.mxu0 0.0
    %3987 = vmatpush1.msra.mxu0 0.0
    %3988 = vmatprep.subr.mxu0 0.0
    %3989 = vmatpush1.msra.mxu0 0.0
    %3990 = vmatprep.subr.mxu0 0.0
    %3991 = vmatpush1.msra.mxu0 0.0
    %3992 = vmatprep.subr.mxu0 0.0
    %3993 = vmatpush1.msra.mxu0 0.0
    %3994 = vmatprep.subr.mxu0 0.0
    %3995 = vmatpush1.msra.mxu0 0.0
    %3996 = vmatprep.subr.mxu0 0.0
    %3997 = vmatpush1.msra.mxu0 0.0
    %3998 = vmatprep.subr.mxu0 0.0
    %3999 = vmatpush1.msra.mxu0 %v3966
    %4000 = vmatprep.subr.mxu0 0.0
    %4001 = vmatpush2.msra.mxu0 0.0
    %4002 = vmatprep.subr.mxu0 0.0
    %4003 = vmatpush2.msra.mxu0 0.0
    %4004 = vmatprep.subr.mxu0 0.0
    %4005 = vmatpush2.msra.mxu0 0.0
    %4006 = vmatprep.subr.mxu0 0.0
    %4007 = vmatpush2.msra.mxu0 0.0
    %4008 = vmatprep.subr.mxu0 0.0
    %4009 = vmatpush2.msra.mxu0 0.0
    %4010 = vmatprep.subr.mxu0 0.0
    %4011 = vmatpush2.msra.mxu0 0.0
    %4012 = vmatprep.subr.mxu0 0.0
    %4013 = vmatpush2.msra.mxu0 0.0
    %4014 = vmatprep.subr.mxu0 0.0
    %4015 = vmatpush2.msra.mxu0 0.0
    %4016 = vmatprep.subr.mxu0 0.0
    %4017 = vmatpush2.msra.mxu0 0.0
    %4018 = vmatprep.subr.mxu0 0.0
    %4019 = vmatpush2.msra.mxu0 0.0
    %4020 = vmatprep.subr.mxu0 0.0
    %4021 = vmatpush2.msra.mxu0 0.0
    %4022 = vmatprep.subr.mxu0 0.0
    %4023 = vmatpush2.msra.mxu0 0.0
    %4024 = vmatprep.subr.mxu0 0.0
    %4025 = vmatpush2.msra.mxu0 0.0
    %4026 = vmatprep.subr.mxu0 0.0
    %4027 = vmatpush2.msra.mxu0 0.0
    %4028 = vmatprep.subr.mxu0 0.0
    %4029 = vmatpush2.msra.mxu0 0.0
    %4030 = vmatprep.subr.mxu0 0.0
    %4031 = vmatpush2.msra.mxu0 0.0
    %4032 = vmatprep.mubr.f32.mxu0 0.0
    %4033 = vmatmul.mubr.f32.gmra.mxu0 %v3964
    %v4034 = vpop.f32.mrf.mxu0
    %v4035 = vadd.f32 0.0, %v4034
    %v4036 = vpop.f32.mrf.mxu0
    %4037 = vdwg.mxu0
    %v4038 = vadd.f32 %v3949, %v4035
    %v4039 = vld [vmem:[#allocation8] sm:$0xf]
    %v4040 = vld [vmem:[#allocation2] sm:$0xff]
    %4042 = vrot.lane.b32.xlu0 %v4039, 116
    %v4043 = vpop.permute.xlu0 %4042
    %v4045 = vcombine.high %v4040, %v4040
    %4046 = vrot.lane.b32.xlu0 %v4040, 112
    %v4047 = vpop.permute.xlu0 %4046
    %4048 = vrot.lane.b32.xlu0 %v4045, 112
    %v4049 = vpop.permute.xlu0 %4048
    %v4050 = vsel %vm614, %v4047, %v4049
    %v4051 = vsel %vm364, %v4043, 0
    %v4053 = vsel %vm367, %v4050, 0
    %4055 = vmatprep.subr.mxu0 0.0
    %4056 = vmatpush1.msra.mxu0 0.0
    %4057 = vmatprep.subr.mxu0 0.0
    %4058 = vmatpush1.msra.mxu0 0.0
    %4059 = vmatprep.subr.mxu0 0.0
    %4060 = vmatpush1.msra.mxu0 0.0
    %4061 = vmatprep.subr.mxu0 0.0
    %4062 = vmatpush1.msra.mxu0 0.0
    %4063 = vmatprep.subr.mxu0 0.0
    %4064 = vmatpush1.msra.mxu0 0.0
    %4065 = vmatprep.subr.mxu0 0.0
    %4066 = vmatpush1.msra.mxu0 0.0
    %4067 = vmatprep.subr.mxu0 0.0
    %4068 = vmatpush1.msra.mxu0 0.0
    %4069 = vmatprep.subr.mxu0 0.0
    %4070 = vmatpush1.msra.mxu0 0.0
    %4071 = vmatprep.subr.mxu0 0.0
    %4072 = vmatpush1.msra.mxu0 0.0
    %4073 = vmatprep.subr.mxu0 0.0
    %4074 = vmatpush1.msra.mxu0 0.0
    %4075 = vmatprep.subr.mxu0 0.0
    %4076 = vmatpush1.msra.mxu0 0.0
    %4077 = vmatprep.subr.mxu0 0.0
    %4078 = vmatpush1.msra.mxu0 0.0
    %4079 = vmatprep.subr.mxu0 0.0
    %4080 = vmatpush1.msra.mxu0 0.0
    %4081 = vmatprep.subr.mxu0 0.0
    %4082 = vmatpush1.msra.mxu0 0.0
    %4083 = vmatprep.subr.mxu0 0.0
    %4084 = vmatpush1.msra.mxu0 0.0
    %4085 = vmatprep.subr.mxu0 0.0
    %4086 = vmatpush1.msra.mxu0 %v4053
    %4087 = vmatprep.subr.mxu0 0.0
    %4088 = vmatpush2.msra.mxu0 0.0
    %4089 = vmatprep.subr.mxu0 0.0
    %4090 = vmatpush2.msra.mxu0 0.0
    %4091 = vmatprep.subr.mxu0 0.0
    %4092 = vmatpush2.msra.mxu0 0.0
    %4093 = vmatprep.subr.mxu0 0.0
    %4094 = vmatpush2.msra.mxu0 0.0
    %4095 = vmatprep.subr.mxu0 0.0
    %4096 = vmatpush2.msra.mxu0 0.0
    %4097 = vmatprep.subr.mxu0 0.0
    %4098 = vmatpush2.msra.mxu0 0.0
    %4099 = vmatprep.subr.mxu0 0.0
    %4100 = vmatpush2.msra.mxu0 0.0
    %4101 = vmatprep.subr.mxu0 0.0
    %4102 = vmatpush2.msra.mxu0 0.0
    %4103 = vmatprep.subr.mxu0 0.0
    %4104 = vmatpush2.msra.mxu0 0.0
    %4105 = vmatprep.subr.mxu0 0.0
    %4106 = vmatpush2.msra.mxu0 0.0
    %4107 = vmatprep.subr.mxu0 0.0
    %4108 = vmatpush2.msra.mxu0 0.0
    %4109 = vmatprep.subr.mxu0 0.0
    %4110 = vmatpush2.msra.mxu0 0.0
    %4111 = vmatprep.subr.mxu0 0.0
    %4112 = vmatpush2.msra.mxu0 0.0
    %4113 = vmatprep.subr.mxu0 0.0
    %4114 = vmatpush2.msra.mxu0 0.0
    %4115 = vmatprep.subr.mxu0 0.0
    %4116 = vmatpush2.msra.mxu0 0.0
    %4117 = vmatprep.subr.mxu0 0.0
    %4118 = vmatpush2.msra.mxu0 0.0
    %4119 = vmatprep.mubr.f32.mxu0 0.0
    %4120 = vmatmul.mubr.f32.gmra.mxu0 %v4051
    %v4121 = vpop.f32.mrf.mxu0
    %v4122 = vadd.f32 0.0, %v4121
    %v4123 = vpop.f32.mrf.mxu0
    %4124 = vdwg.mxu0
    %v4125 = vadd.f32 %v4038, %v4122
    %v4126 = vld [vmem:[#allocation8] sm:$0xf]
    %v4127 = vld [vmem:[#allocation2] sm:$0xff]
    %4129 = vrot.lane.b32.xlu0 %v4126, 112
    %v4130 = vpop.permute.xlu0 %4129
    %v4132 = vcombine.high %v4127, %v4127
    %4133 = vrot.lane.b32.xlu0 %v4127, 111
    %v4134 = vpop.permute.xlu0 %4133
    %4135 = vrot.lane.b32.xlu0 %v4132, 111
    %v4136 = vpop.permute.xlu0 %4135
    %v4137 = vsel %vm702, %v4134, %v4136
    %v4138 = vsel %vm364, %v4130, 0
    %v4140 = vsel %vm367, %v4137, 0
    %4142 = vmatprep.subr.mxu0 0.0
    %4143 = vmatpush1.msra.mxu0 0.0
    %4144 = vmatprep.subr.mxu0 0.0
    %4145 = vmatpush1.msra.mxu0 0.0
    %4146 = vmatprep.subr.mxu0 0.0
    %4147 = vmatpush1.msra.mxu0 0.0
    %4148 = vmatprep.subr.mxu0 0.0
    %4149 = vmatpush1.msra.mxu0 0.0
    %4150 = vmatprep.subr.mxu0 0.0
    %4151 = vmatpush1.msra.mxu0 0.0
    %4152 = vmatprep.subr.mxu0 0.0
    %4153 = vmatpush1.msra.mxu0 0.0
    %4154 = vmatprep.subr.mxu0 0.0
    %4155 = vmatpush1.msra.mxu0 0.0
    %4156 = vmatprep.subr.mxu0 0.0
    %4157 = vmatpush1.msra.mxu0 0.0
    %4158 = vmatprep.subr.mxu0 0.0
    %4159 = vmatpush1.msra.mxu0 0.0
    %4160 = vmatprep.subr.mxu0 0.0
    %4161 = vmatpush1.msra.mxu0 0.0
    %4162 = vmatprep.subr.mxu0 0.0
    %4163 = vmatpush1.msra.mxu0 0.0
    %4164 = vmatprep.subr.mxu0 0.0
    %4165 = vmatpush1.msra.mxu0 0.0
    %4166 = vmatprep.subr.mxu0 0.0
    %4167 = vmatpush1.msra.mxu0 0.0
    %4168 = vmatprep.subr.mxu0 0.0
    %4169 = vmatpush1.msra.mxu0 0.0
    %4170 = vmatprep.subr.mxu0 0.0
    %4171 = vmatpush1.msra.mxu0 0.0
    %4172 = vmatprep.subr.mxu0 0.0
    %4173 = vmatpush1.msra.mxu0 %v4140
    %4174 = vmatprep.subr.mxu0 0.0
    %4175 = vmatpush2.msra.mxu0 0.0
    %4176 = vmatprep.subr.mxu0 0.0
    %4177 = vmatpush2.msra.mxu0 0.0
    %4178 = vmatprep.subr.mxu0 0.0
    %4179 = vmatpush2.msra.mxu0 0.0
    %4180 = vmatprep.subr.mxu0 0.0
    %4181 = vmatpush2.msra.mxu0 0.0
    %4182 = vmatprep.subr.mxu0 0.0
    %4183 = vmatpush2.msra.mxu0 0.0
    %4184 = vmatprep.subr.mxu0 0.0
    %4185 = vmatpush2.msra.mxu0 0.0
    %4186 = vmatprep.subr.mxu0 0.0
    %4187 = vmatpush2.msra.mxu0 0.0
    %4188 = vmatprep.subr.mxu0 0.0
    %4189 = vmatpush2.msra.mxu0 0.0
    %4190 = vmatprep.subr.mxu0 0.0
    %4191 = vmatpush2.msra.mxu0 0.0
    %4192 = vmatprep.subr.mxu0 0.0
    %4193 = vmatpush2.msra.mxu0 0.0
    %4194 = vmatprep.subr.mxu0 0.0
    %4195 = vmatpush2.msra.mxu0 0.0
    %4196 = vmatprep.subr.mxu0 0.0
    %4197 = vmatpush2.msra.mxu0 0.0
    %4198 = vmatprep.subr.mxu0 0.0
    %4199 = vmatpush2.msra.mxu0 0.0
    %4200 = vmatprep.subr.mxu0 0.0
    %4201 = vmatpush2.msra.mxu0 0.0
    %4202 = vmatprep.subr.mxu0 0.0
    %4203 = vmatpush2.msra.mxu0 0.0
    %4204 = vmatprep.subr.mxu0 0.0
    %4205 = vmatpush2.msra.mxu0 0.0
    %4206 = vmatprep.mubr.f32.mxu0 0.0
    %4207 = vmatmul.mubr.f32.gmra.mxu0 %v4138
    %v4208 = vpop.f32.mrf.mxu0
    %v4209 = vadd.f32 0.0, %v4208
    %v4210 = vpop.f32.mrf.mxu0
    %4211 = vdwg.mxu0
    %v4212 = vadd.f32 %v4125, %v4209
    %v4213 = vld [vmem:[#allocation8] sm:$0xf]
    %v4214 = vld [vmem:[#allocation2] sm:$0xff]
    %4216 = vrot.lane.b32.xlu0 %v4213, 108
    %v4217 = vpop.permute.xlu0 %4216
    %v4219 = vcombine.high %v4214, %v4214
    %4220 = vrot.lane.b32.xlu0 %v4214, 110
    %v4221 = vpop.permute.xlu0 %4220
    %4222 = vrot.lane.b32.xlu0 %v4219, 110
    %v4223 = vpop.permute.xlu0 %4222
    %v4224 = vsel %vm790, %v4221, %v4223
    %v4225 = vsel %vm364, %v4217, 0
    %v4227 = vsel %vm367, %v4224, 0
    %4229 = vmatprep.subr.mxu0 0.0
    %4230 = vmatpush1.msra.mxu0 0.0
    %4231 = vmatprep.subr.mxu0 0.0
    %4232 = vmatpush1.msra.mxu0 0.0
    %4233 = vmatprep.subr.mxu0 0.0
    %4234 = vmatpush1.msra.mxu0 0.0
    %4235 = vmatprep.subr.mxu0 0.0
    %4236 = vmatpush1.msra.mxu0 0.0
    %4237 = vmatprep.subr.mxu0 0.0
    %4238 = vmatpush1.msra.mxu0 0.0
    %4239 = vmatprep.subr.mxu0 0.0
    %4240 = vmatpush1.msra.mxu0 0.0
    %4241 = vmatprep.subr.mxu0 0.0
    %4242 = vmatpush1.msra.mxu0 0.0
    %4243 = vmatprep.subr.mxu0 0.0
    %4244 = vmatpush1.msra.mxu0 0.0
    %4245 = vmatprep.subr.mxu0 0.0
    %4246 = vmatpush1.msra.mxu0 0.0
    %4247 = vmatprep.subr.mxu0 0.0
    %4248 = vmatpush1.msra.mxu0 0.0
    %4249 = vmatprep.subr.mxu0 0.0
    %4250 = vmatpush1.msra.mxu0 0.0
    %4251 = vmatprep.subr.mxu0 0.0
    %4252 = vmatpush1.msra.mxu0 0.0
    %4253 = vmatprep.subr.mxu0 0.0
    %4254 = vmatpush1.msra.mxu0 0.0
    %4255 = vmatprep.subr.mxu0 0.0
    %4256 = vmatpush1.msra.mxu0 0.0
    %4257 = vmatprep.subr.mxu0 0.0
    %4258 = vmatpush1.msra.mxu0 0.0
    %4259 = vmatprep.subr.mxu0 0.0
    %4260 = vmatpush1.msra.mxu0 %v4227
    %4261 = vmatprep.subr.mxu0 0.0
    %4262 = vmatpush2.msra.mxu0 0.0
    %4263 = vmatprep.subr.mxu0 0.0
    %4264 = vmatpush2.msra.mxu0 0.0
    %4265 = vmatprep.subr.mxu0 0.0
    %4266 = vmatpush2.msra.mxu0 0.0
    %4267 = vmatprep.subr.mxu0 0.0
    %4268 = vmatpush2.msra.mxu0 0.0
    %4269 = vmatprep.subr.mxu0 0.0
    %4270 = vmatpush2.msra.mxu0 0.0
    %4271 = vmatprep.subr.mxu0 0.0
    %4272 = vmatpush2.msra.mxu0 0.0
    %4273 = vmatprep.subr.mxu0 0.0
    %4274 = vmatpush2.msra.mxu0 0.0
    %4275 = vmatprep.subr.mxu0 0.0
    %4276 = vmatpush2.msra.mxu0 0.0
    %4277 = vmatprep.subr.mxu0 0.0
    %4278 = vmatpush2.msra.mxu0 0.0
    %4279 = vmatprep.subr.mxu0 0.0
    %4280 = vmatpush2.msra.mxu0 0.0
    %4281 = vmatprep.subr.mxu0 0.0
    %4282 = vmatpush2.msra.mxu0 0.0
    %4283 = vmatprep.subr.mxu0 0.0
    %4284 = vmatpush2.msra.mxu0 0.0
    %4285 = vmatprep.subr.mxu0 0.0
    %4286 = vmatpush2.msra.mxu0 0.0
    %4287 = vmatprep.subr.mxu0 0.0
    %4288 = vmatpush2.msra.mxu0 0.0
    %4289 = vmatprep.subr.mxu0 0.0
    %4290 = vmatpush2.msra.mxu0 0.0
    %4291 = vmatprep.subr.mxu0 0.0
    %4292 = vmatpush2.msra.mxu0 0.0
    %4293 = vmatprep.mubr.f32.mxu0 0.0
    %4294 = vmatmul.mubr.f32.gmra.mxu0 %v4225
    %v4295 = vpop.f32.mrf.mxu0
    %v4296 = vadd.f32 0.0, %v4295
    %v4297 = vpop.f32.mrf.mxu0
    %4298 = vdwg.mxu0
    %v4299 = vadd.f32 %v4212, %v4296
    %v4300 = vld [vmem:[#allocation8] sm:$0xf]
    %v4301 = vld [vmem:[#allocation2] sm:$0xff]
    %4303 = vrot.lane.b32.xlu0 %v4300, 104
    %v4304 = vpop.permute.xlu0 %4303
    %v4306 = vcombine.high %v4301, %v4301
    %4307 = vrot.lane.b32.xlu0 %v4301, 96
    %v4308 = vpop.permute.xlu0 %4307
    %4309 = vrot.lane.b32.xlu0 %v4306, 96
    %v4310 = vpop.permute.xlu0 %4309
    %v4311 = vsel %vm878, %v4308, %v4310
    %v4312 = vsel %vm364, %v4304, 0
    %v4314 = vsel %vm367, %v4311, 0
    %4316 = vmatprep.subr.mxu0 0.0
    %4317 = vmatpush1.msra.mxu0 0.0
    %4318 = vmatprep.subr.mxu0 0.0
    %4319 = vmatpush1.msra.mxu0 0.0
    %4320 = vmatprep.subr.mxu0 0.0
    %4321 = vmatpush1.msra.mxu0 0.0
    %4322 = vmatprep.subr.mxu0 0.0
    %4323 = vmatpush1.msra.mxu0 0.0
    %4324 = vmatprep.subr.mxu0 0.0
    %4325 = vmatpush1.msra.mxu0 0.0
    %4326 = vmatprep.subr.mxu0 0.0
    %4327 = vmatpush1.msra.mxu0 0.0
    %4328 = vmatprep.subr.mxu0 0.0
    %4329 = vmatpush1.msra.mxu0 0.0
    %4330 = vmatprep.subr.mxu0 0.0
    %4331 = vmatpush1.msra.mxu0 0.0
    %4332 = vmatprep.subr.mxu0 0.0
    %4333 = vmatpush1.msra.mxu0 0.0
    %4334 = vmatprep.subr.mxu0 0.0
    %4335 = vmatpush1.msra.mxu0 0.0
    %4336 = vmatprep.subr.mxu0 0.0
    %4337 = vmatpush1.msra.mxu0 0.0
    %4338 = vmatprep.subr.mxu0 0.0
    %4339 = vmatpush1.msra.mxu0 0.0
    %4340 = vmatprep.subr.mxu0 0.0
    %4341 = vmatpush1.msra.mxu0 0.0
    %4342 = vmatprep.subr.mxu0 0.0
    %4343 = vmatpush1.msra.mxu0 0.0
    %4344 = vmatprep.subr.mxu0 0.0
    %4345 = vmatpush1.msra.mxu0 0.0
    %4346 = vmatprep.subr.mxu0 0.0
    %4347 = vmatpush1.msra.mxu0 %v4314
    %4348 = vmatprep.subr.mxu0 0.0
    %4349 = vmatpush2.msra.mxu0 0.0
    %4350 = vmatprep.subr.mxu0 0.0
    %4351 = vmatpush2.msra.mxu0 0.0
    %4352 = vmatprep.subr.mxu0 0.0
    %4353 = vmatpush2.msra.mxu0 0.0
    %4354 = vmatprep.subr.mxu0 0.0
    %4355 = vmatpush2.msra.mxu0 0.0
    %4356 = vmatprep.subr.mxu0 0.0
    %4357 = vmatpush2.msra.mxu0 0.0
    %4358 = vmatprep.subr.mxu0 0.0
    %4359 = vmatpush2.msra.mxu0 0.0
    %4360 = vmatprep.subr.mxu0 0.0
    %4361 = vmatpush2.msra.mxu0 0.0
    %4362 = vmatprep.subr.mxu0 0.0
    %4363 = vmatpush2.msra.mxu0 0.0
    %4364 = vmatprep.subr.mxu0 0.0
    %4365 = vmatpush2.msra.mxu0 0.0
    %4366 = vmatprep.subr.mxu0 0.0
    %4367 = vmatpush2.msra.mxu0 0.0
    %4368 = vmatprep.subr.mxu0 0.0
    %4369 = vmatpush2.msra.mxu0 0.0
    %4370 = vmatprep.subr.mxu0 0.0
    %4371 = vmatpush2.msra.mxu0 0.0
    %4372 = vmatprep.subr.mxu0 0.0
    %4373 = vmatpush2.msra.mxu0 0.0
    %4374 = vmatprep.subr.mxu0 0.0
    %4375 = vmatpush2.msra.mxu0 0.0
    %4376 = vmatprep.subr.mxu0 0.0
    %4377 = vmatpush2.msra.mxu0 0.0
    %4378 = vmatprep.subr.mxu0 0.0
    %4379 = vmatpush2.msra.mxu0 0.0
    %4380 = vmatprep.mubr.f32.mxu0 0.0
    %4381 = vmatmul.mubr.f32.gmra.mxu0 %v4312
    %v4382 = vpop.f32.mrf.mxu0
    %v4383 = vadd.f32 0.0, %v4382
    %v4384 = vpop.f32.mrf.mxu0
    %4385 = vdwg.mxu0
    %v4386 = vadd.f32 %v4299, %v4383
    %v4387 = vld [vmem:[#allocation8] sm:$0xf]
    %v4388 = vld [vmem:[#allocation2] sm:$0xff]
    %4390 = vrot.lane.b32.xlu0 %v4387, 100
    %v4391 = vpop.permute.xlu0 %4390
    %v4393 = vcombine.high %v4388, %v4388
    %4394 = vrot.lane.b32.xlu0 %v4388, 95
    %v4395 = vpop.permute.xlu0 %4394
    %4396 = vrot.lane.b32.xlu0 %v4393, 95
    %v4397 = vpop.permute.xlu0 %4396
    %v4398 = vsel %vm966, %v4395, %v4397
    %v4399 = vsel %vm364, %v4391, 0
    %v4401 = vsel %vm367, %v4398, 0
    %4403 = vmatprep.subr.mxu0 0.0
    %4404 = vmatpush1.msra.mxu0 0.0
    %4405 = vmatprep.subr.mxu0 0.0
    %4406 = vmatpush1.msra.mxu0 0.0
    %4407 = vmatprep.subr.mxu0 0.0
    %4408 = vmatpush1.msra.mxu0 0.0
    %4409 = vmatprep.subr.mxu0 0.0
    %4410 = vmatpush1.msra.mxu0 0.0
    %4411 = vmatprep.subr.mxu0 0.0
    %4412 = vmatpush1.msra.mxu0 0.0
    %4413 = vmatprep.subr.mxu0 0.0
    %4414 = vmatpush1.msra.mxu0 0.0
    %4415 = vmatprep.subr.mxu0 0.0
    %4416 = vmatpush1.msra.mxu0 0.0
    %4417 = vmatprep.subr.mxu0 0.0
    %4418 = vmatpush1.msra.mxu0 0.0
    %4419 = vmatprep.subr.mxu0 0.0
    %4420 = vmatpush1.msra.mxu0 0.0
    %4421 = vmatprep.subr.mxu0 0.0
    %4422 = vmatpush1.msra.mxu0 0.0
    %4423 = vmatprep.subr.mxu0 0.0
    %4424 = vmatpush1.msra.mxu0 0.0
    %4425 = vmatprep.subr.mxu0 0.0
    %4426 = vmatpush1.msra.mxu0 0.0
    %4427 = vmatprep.subr.mxu0 0.0
    %4428 = vmatpush1.msra.mxu0 0.0
    %4429 = vmatprep.subr.mxu0 0.0
    %4430 = vmatpush1.msra.mxu0 0.0
    %4431 = vmatprep.subr.mxu0 0.0
    %4432 = vmatpush1.msra.mxu0 0.0
    %4433 = vmatprep.subr.mxu0 0.0
    %4434 = vmatpush1.msra.mxu0 %v4401
    %4435 = vmatprep.subr.mxu0 0.0
    %4436 = vmatpush2.msra.mxu0 0.0
    %4437 = vmatprep.subr.mxu0 0.0
    %4438 = vmatpush2.msra.mxu0 0.0
    %4439 = vmatprep.subr.mxu0 0.0
    %4440 = vmatpush2.msra.mxu0 0.0
    %4441 = vmatprep.subr.mxu0 0.0
    %4442 = vmatpush2.msra.mxu0 0.0
    %4443 = vmatprep.subr.mxu0 0.0
    %4444 = vmatpush2.msra.mxu0 0.0
    %4445 = vmatprep.subr.mxu0 0.0
    %4446 = vmatpush2.msra.mxu0 0.0
    %4447 = vmatprep.subr.mxu0 0.0
    %4448 = vmatpush2.msra.mxu0 0.0
    %4449 = vmatprep.subr.mxu0 0.0
    %4450 = vmatpush2.msra.mxu0 0.0
    %4451 = vmatprep.subr.mxu0 0.0
    %4452 = vmatpush2.msra.mxu0 0.0
    %4453 = vmatprep.subr.mxu0 0.0
    %4454 = vmatpush2.msra.mxu0 0.0
    %4455 = vmatprep.subr.mxu0 0.0
    %4456 = vmatpush2.msra.mxu0 0.0
    %4457 = vmatprep.subr.mxu0 0.0
    %4458 = vmatpush2.msra.mxu0 0.0
    %4459 = vmatprep.subr.mxu0 0.0
    %4460 = vmatpush2.msra.mxu0 0.0
    %4461 = vmatprep.subr.mxu0 0.0
    %4462 = vmatpush2.msra.mxu0 0.0
    %4463 = vmatprep.subr.mxu0 0.0
    %4464 = vmatpush2.msra.mxu0 0.0
    %4465 = vmatprep.subr.mxu0 0.0
    %4466 = vmatpush2.msra.mxu0 0.0
    %4467 = vmatprep.mubr.f32.mxu0 0.0
    %4468 = vmatmul.mubr.f32.gmra.mxu0 %v4399
    %v4469 = vpop.f32.mrf.mxu0
    %v4470 = vadd.f32 0.0, %v4469
    %v4471 = vpop.f32.mrf.mxu0
    %4472 = vdwg.mxu0
    %v4473 = vadd.f32 %v4386, %v4470
    %v4474 = vld [vmem:[#allocation8] sm:$0xf]
    %v4475 = vld [vmem:[#allocation2] sm:$0xff]
    %4477 = vrot.lane.b32.xlu0 %v4474, 96
    %v4478 = vpop.permute.xlu0 %4477
    %v4480 = vcombine.high %v4475, %v4475
    %4481 = vrot.lane.b32.xlu0 %v4475, 94
    %v4482 = vpop.permute.xlu0 %4481
    %4483 = vrot.lane.b32.xlu0 %v4480, 94
    %v4484 = vpop.permute.xlu0 %4483
    %v4485 = vsel %vm1054, %v4482, %v4484
    %v4486 = vsel %vm364, %v4478, 0
    %v4488 = vsel %vm367, %v4485, 0
    %4490 = vmatprep.subr.mxu0 0.0
    %4491 = vmatpush1.msra.mxu0 0.0
    %4492 = vmatprep.subr.mxu0 0.0
    %4493 = vmatpush1.msra.mxu0 0.0
    %4494 = vmatprep.subr.mxu0 0.0
    %4495 = vmatpush1.msra.mxu0 0.0
    %4496 = vmatprep.subr.mxu0 0.0
    %4497 = vmatpush1.msra.mxu0 0.0
    %4498 = vmatprep.subr.mxu0 0.0
    %4499 = vmatpush1.msra.mxu0 0.0
    %4500 = vmatprep.subr.mxu0 0.0
    %4501 = vmatpush1.msra.mxu0 0.0
    %4502 = vmatprep.subr.mxu0 0.0
    %4503 = vmatpush1.msra.mxu0 0.0
    %4504 = vmatprep.subr.mxu0 0.0
    %4505 = vmatpush1.msra.mxu0 0.0
    %4506 = vmatprep.subr.mxu0 0.0
    %4507 = vmatpush1.msra.mxu0 0.0
    %4508 = vmatprep.subr.mxu0 0.0
    %4509 = vmatpush1.msra.mxu0 0.0
    %4510 = vmatprep.subr.mxu0 0.0
    %4511 = vmatpush1.msra.mxu0 0.0
    %4512 = vmatprep.subr.mxu0 0.0
    %4513 = vmatpush1.msra.mxu0 0.0
    %4514 = vmatprep.subr.mxu0 0.0
    %4515 = vmatpush1.msra.mxu0 0.0
    %4516 = vmatprep.subr.mxu0 0.0
    %4517 = vmatpush1.msra.mxu0 0.0
    %4518 = vmatprep.subr.mxu0 0.0
    %4519 = vmatpush1.msra.mxu0 0.0
    %4520 = vmatprep.subr.mxu0 0.0
    %4521 = vmatpush1.msra.mxu0 %v4488
    %4522 = vmatprep.subr.mxu0 0.0
    %4523 = vmatpush2.msra.mxu0 0.0
    %4524 = vmatprep.subr.mxu0 0.0
    %4525 = vmatpush2.msra.mxu0 0.0
    %4526 = vmatprep.subr.mxu0 0.0
    %4527 = vmatpush2.msra.mxu0 0.0
    %4528 = vmatprep.subr.mxu0 0.0
    %4529 = vmatpush2.msra.mxu0 0.0
    %4530 = vmatprep.subr.mxu0 0.0
    %4531 = vmatpush2.msra.mxu0 0.0
    %4532 = vmatprep.subr.mxu0 0.0
    %4533 = vmatpush2.msra.mxu0 0.0
    %4534 = vmatprep.subr.mxu0 0.0
    %4535 = vmatpush2.msra.mxu0 0.0
    %4536 = vmatprep.subr.mxu0 0.0
    %4537 = vmatpush2.msra.mxu0 0.0
    %4538 = vmatprep.subr.mxu0 0.0
    %4539 = vmatpush2.msra.mxu0 0.0
    %4540 = vmatprep.subr.mxu0 0.0
    %4541 = vmatpush2.msra.mxu0 0.0
    %4542 = vmatprep.subr.mxu0 0.0
    %4543 = vmatpush2.msra.mxu0 0.0
    %4544 = vmatprep.subr.mxu0 0.0
    %4545 = vmatpush2.msra.mxu0 0.0
    %4546 = vmatprep.subr.mxu0 0.0
    %4547 = vmatpush2.msra.mxu0 0.0
    %4548 = vmatprep.subr.mxu0 0.0
    %4549 = vmatpush2.msra.mxu0 0.0
    %4550 = vmatprep.subr.mxu0 0.0
    %4551 = vmatpush2.msra.mxu0 0.0
    %4552 = vmatprep.subr.mxu0 0.0
    %4553 = vmatpush2.msra.mxu0 0.0
    %4554 = vmatprep.mubr.f32.mxu0 0.0
    %4555 = vmatmul.mubr.f32.gmra.mxu0 %v4486
    %v4556 = vpop.f32.mrf.mxu0
    %v4557 = vadd.f32 0.0, %v4556
    %v4558 = vpop.f32.mrf.mxu0
    %4559 = vdwg.mxu0
    %v4560 = vadd.f32 %v4473, %v4557
    %v4561 = vld [vmem:[#allocation8] sm:$0xf]
    %4563 = vset.pattern.permute.xlu0 36
    %4564 = vperm.xlu0 %4563, %v4561
    %v4565 = vpop.permute.xlu0 %4564
    %v4567 = vadd.f32 %v4560, %v4565
    %v4568 = vmax.f32 %v4567, 0.0
    %v4569 = vsel %vm59, %v4568, 0.0
    %4571 = vrot.lane.b32.xlu0 %v4569, 17
    %v4572 = vpop.permute.xlu0 %4571
    %v4573 = vrot.slane %v4572, 4
    %v4574 = vsel %vm343, %v4573, %v4572
    %4576 = vst.msk [vmem:[#allocation2] sm:$0xff] %vm348, %v4574
    %v4577 = vld [vmem:[%s1147] sm:$0xf]
    %v4578 = vld [vmem:[#allocation2] sm:$0xf]
    %v4579 = vld [vmem:[#allocation2] sm:$0xff]
    %4581 = vrot.lane.b32.xlu0 %v4577, 124
    %v4582 = vpop.permute.xlu0 %4581
    %v4584 = vcombine.high %v4579, %v4579
    %4585 = vrot.lane.b32.xlu0 %v4579, 127
    %v4586 = vpop.permute.xlu0 %4585
    %4587 = vrot.lane.b32.xlu0 %v4584, 127
    %v4588 = vpop.permute.xlu0 %4587
    %v4589 = vsel %vm362, %v4586, %v4588
    %v4590 = vsel %vm364, %v4582, 0
    %v4592 = vsel %vm367, %v4589, 0
    %4594 = vmatprep.subr.mxu0 0.0
    %4595 = vmatpush1.msra.mxu0 0.0
    %4596 = vmatprep.subr.mxu0 0.0
    %4597 = vmatpush1.msra.mxu0 0.0
    %4598 = vmatprep.subr.mxu0 0.0
    %4599 = vmatpush1.msra.mxu0 0.0
    %4600 = vmatprep.subr.mxu0 0.0
    %4601 = vmatpush1.msra.mxu0 0.0
    %4602 = vmatprep.subr.mxu0 0.0
    %4603 = vmatpush1.msra.mxu0 0.0
    %4604 = vmatprep.subr.mxu0 0.0
    %4605 = vmatpush1.msra.mxu0 0.0
    %4606 = vmatprep.subr.mxu0 0.0
    %4607 = vmatpush1.msra.mxu0 0.0
    %4608 = vmatprep.subr.mxu0 0.0
    %4609 = vmatpush1.msra.mxu0 0.0
    %4610 = vmatprep.subr.mxu0 0.0
    %4611 = vmatpush1.msra.mxu0 0.0
    %4612 = vmatprep.subr.mxu0 0.0
    %4613 = vmatpush1.msra.mxu0 0.0
    %4614 = vmatprep.subr.mxu0 0.0
    %4615 = vmatpush1.msra.mxu0 0.0
    %4616 = vmatprep.subr.mxu0 0.0
    %4617 = vmatpush1.msra.mxu0 0.0
    %4618 = vmatprep.subr.mxu0 0.0
    %4619 = vmatpush1.msra.mxu0 0.0
    %4620 = vmatprep.subr.mxu0 0.0
    %4621 = vmatpush1.msra.mxu0 0.0
    %4622 = vmatprep.subr.mxu0 0.0
    %4623 = vmatpush1.msra.mxu0 0.0
    %4624 = vmatprep.subr.mxu0 0.0
    %4625 = vmatpush1.msra.mxu0 %v4592
    %4626 = vmatprep.subr.mxu0 0.0
    %4627 = vmatpush2.msra.mxu0 0.0
    %4628 = vmatprep.subr.mxu0 0.0
    %4629 = vmatpush2.msra.mxu0 0.0
    %4630 = vmatprep.subr.mxu0 0.0
    %4631 = vmatpush2.msra.mxu0 0.0
    %4632 = vmatprep.subr.mxu0 0.0
    %4633 = vmatpush2.msra.mxu0 0.0
    %4634 = vmatprep.subr.mxu0 0.0
    %4635 = vmatpush2.msra.mxu0 0.0
    %4636 = vmatprep.subr.mxu0 0.0
    %4637 = vmatpush2.msra.mxu0 0.0
    %4638 = vmatprep.subr.mxu0 0.0
    %4639 = vmatpush2.msra.mxu0 0.0
    %4640 = vmatprep.subr.mxu0 0.0
    %4641 = vmatpush2.msra.mxu0 0.0
    %4642 = vmatprep.subr.mxu0 0.0
    %4643 = vmatpush2.msra.mxu0 0.0
    %4644 = vmatprep.subr.mxu0 0.0
    %4645 = vmatpush2.msra.mxu0 0.0
    %4646 = vmatprep.subr.mxu0 0.0
    %4647 = vmatpush2.msra.mxu0 0.0
    %4648 = vmatprep.subr.mxu0 0.0
    %4649 = vmatpush2.msra.mxu0 0.0
    %4650 = vmatprep.subr.mxu0 0.0
    %4651 = vmatpush2.msra.mxu0 0.0
    %4652 = vmatprep.subr.mxu0 0.0
    %4653 = vmatpush2.msra.mxu0 0.0
    %4654 = vmatprep.subr.mxu0 0.0
    %4655 = vmatpush2.msra.mxu0 0.0
    %4656 = vmatprep.subr.mxu0 0.0
    %4657 = vmatpush2.msra.mxu0 0.0
    %4658 = vmatprep.mubr.f32.mxu0 0.0
    %4659 = vmatmul.mubr.f32.gmra.mxu0 %v4590
    %v4660 = vpop.f32.mrf.mxu0
    %v4661 = vadd.f32 0.0, %v4660
    %v4662 = vpop.f32.mrf.mxu0
    %4663 = vdwg.mxu0
    %v4664 = vsel %vm364, %v4577, 0
    %v4667 = vsel %vm367, %v4578, 0
    %4669 = vmatprep.subr.mxu0 0.0
    %4670 = vmatpush1.msra.mxu0 0.0
    %4671 = vmatprep.subr.mxu0 0.0
    %4672 = vmatpush1.msra.mxu0 0.0
    %4673 = vmatprep.subr.mxu0 0.0
    %4674 = vmatpush1.msra.mxu0 0.0
    %4675 = vmatprep.subr.mxu0 0.0
    %4676 = vmatpush1.msra.mxu0 0.0
    %4677 = vmatprep.subr.mxu0 0.0
    %4678 = vmatpush1.msra.mxu0 0.0
    %4679 = vmatprep.subr.mxu0 0.0
    %4680 = vmatpush1.msra.mxu0 0.0
    %4681 = vmatprep.subr.mxu0 0.0
    %4682 = vmatpush1.msra.mxu0 0.0
    %4683 = vmatprep.subr.mxu0 0.0
    %4684 = vmatpush1.msra.mxu0 0.0
    %4685 = vmatprep.subr.mxu0 0.0
    %4686 = vmatpush1.msra.mxu0 0.0
    %4687 = vmatprep.subr.mxu0 0.0
    %4688 = vmatpush1.msra.mxu0 0.0
    %4689 = vmatprep.subr.mxu0 0.0
    %4690 = vmatpush1.msra.mxu0 0.0
    %4691 = vmatprep.subr.mxu0 0.0
    %4692 = vmatpush1.msra.mxu0 0.0
    %4693 = vmatprep.subr.mxu0 0.0
    %4694 = vmatpush1.msra.mxu0 0.0
    %4695 = vmatprep.subr.mxu0 0.0
    %4696 = vmatpush1.msra.mxu0 0.0
    %4697 = vmatprep.subr.mxu0 0.0
    %4698 = vmatpush1.msra.mxu0 0.0
    %4699 = vmatprep.subr.mxu0 0.0
    %4700 = vmatpush1.msra.mxu0 %v4667
    %4701 = vmatprep.subr.mxu0 0.0
    %4702 = vmatpush2.msra.mxu0 0.0
    %4703 = vmatprep.subr.mxu0 0.0
    %4704 = vmatpush2.msra.mxu0 0.0
    %4705 = vmatprep.subr.mxu0 0.0
    %4706 = vmatpush2.msra.mxu0 0.0
    %4707 = vmatprep.subr.mxu0 0.0
    %4708 = vmatpush2.msra.mxu0 0.0
    %4709 = vmatprep.subr.mxu0 0.0
    %4710 = vmatpush2.msra.mxu0 0.0
    %4711 = vmatprep.subr.mxu0 0.0
    %4712 = vmatpush2.msra.mxu0 0.0
    %4713 = vmatprep.subr.mxu0 0.0
    %4714 = vmatpush2.msra.mxu0 0.0
    %4715 = vmatprep.subr.mxu0 0.0
    %4716 = vmatpush2.msra.mxu0 0.0
    %4717 = vmatprep.subr.mxu0 0.0
    %4718 = vmatpush2.msra.mxu0 0.0
    %4719 = vmatprep.subr.mxu0 0.0
    %4720 = vmatpush2.msra.mxu0 0.0
    %4721 = vmatprep.subr.mxu0 0.0
    %4722 = vmatpush2.msra.mxu0 0.0
    %4723 = vmatprep.subr.mxu0 0.0
    %4724 = vmatpush2.msra.mxu0 0.0
    %4725 = vmatprep.subr.mxu0 0.0
    %4726 = vmatpush2.msra.mxu0 0.0
    %4727 = vmatprep.subr.mxu0 0.0
    %4728 = vmatpush2.msra.mxu0 0.0
    %4729 = vmatprep.subr.mxu0 0.0
    %4730 = vmatpush2.msra.mxu0 0.0
    %4731 = vmatprep.subr.mxu0 0.0
    %4732 = vmatpush2.msra.mxu0 0.0
    %4733 = vmatprep.mubr.f32.mxu0 0.0
    %4734 = vmatmul.mubr.f32.gmra.mxu0 %v4664
    %v4735 = vpop.f32.mrf.mxu0
    %v4736 = vadd.f32 %v4661, %v4735
    %v4737 = vpop.f32.mrf.mxu0
    %4738 = vdwg.mxu0
    %v4739 = vld [vmem:[%s1147] sm:$0xf]
    %v4740 = vld [vmem:[#allocation2] sm:$0xff]
    %4742 = vrot.lane.b32.xlu0 %v4739, 120
    %v4743 = vpop.permute.xlu0 %4742
    %v4745 = vcombine.high %v4740, %v4740
    %4746 = vrot.lane.b32.xlu0 %v4740, 126
    %v4747 = vpop.permute.xlu0 %4746
    %4748 = vrot.lane.b32.xlu0 %v4745, 126
    %v4749 = vpop.permute.xlu0 %4748
    %v4750 = vsel %vm526, %v4747, %v4749
    %v4751 = vsel %vm364, %v4743, 0
    %v4753 = vsel %vm367, %v4750, 0
    %4755 = vmatprep.subr.mxu0 0.0
    %4756 = vmatpush1.msra.mxu0 0.0
    %4757 = vmatprep.subr.mxu0 0.0
    %4758 = vmatpush1.msra.mxu0 0.0
    %4759 = vmatprep.subr.mxu0 0.0
    %4760 = vmatpush1.msra.mxu0 0.0
    %4761 = vmatprep.subr.mxu0 0.0
    %4762 = vmatpush1.msra.mxu0 0.0
    %4763 = vmatprep.subr.mxu0 0.0
    %4764 = vmatpush1.msra.mxu0 0.0
    %4765 = vmatprep.subr.mxu0 0.0
    %4766 = vmatpush1.msra.mxu0 0.0
    %4767 = vmatprep.subr.mxu0 0.0
    %4768 = vmatpush1.msra.mxu0 0.0
    %4769 = vmatprep.subr.mxu0 0.0
    %4770 = vmatpush1.msra.mxu0 0.0
    %4771 = vmatprep.subr.mxu0 0.0
    %4772 = vmatpush1.msra.mxu0 0.0
    %4773 = vmatprep.subr.mxu0 0.0
    %4774 = vmatpush1.msra.mxu0 0.0
    %4775 = vmatprep.subr.mxu0 0.0
    %4776 = vmatpush1.msra.mxu0 0.0
    %4777 = vmatprep.subr.mxu0 0.0
    %4778 = vmatpush1.msra.mxu0 0.0
    %4779 = vmatprep.subr.mxu0 0.0
    %4780 = vmatpush1.msra.mxu0 0.0
    %4781 = vmatprep.subr.mxu0 0.0
    %4782 = vmatpush1.msra.mxu0 0.0
    %4783 = vmatprep.subr.mxu0 0.0
    %4784 = vmatpush1.msra.mxu0 0.0
    %4785 = vmatprep.subr.mxu0 0.0
    %4786 = vmatpush1.msra.mxu0 %v4753
    %4787 = vmatprep.subr.mxu0 0.0
    %4788 = vmatpush2.msra.mxu0 0.0
    %4789 = vmatprep.subr.mxu0 0.0
    %4790 = vmatpush2.msra.mxu0 0.0
    %4791 = vmatprep.subr.mxu0 0.0
    %4792 = vmatpush2.msra.mxu0 0.0
    %4793 = vmatprep.subr.mxu0 0.0
    %4794 = vmatpush2.msra.mxu0 0.0
    %4795 = vmatprep.subr.mxu0 0.0
    %4796 = vmatpush2.msra.mxu0 0.0
    %4797 = vmatprep.subr.mxu0 0.0
    %4798 = vmatpush2.msra.mxu0 0.0
    %4799 = vmatprep.subr.mxu0 0.0
    %4800 = vmatpush2.msra.mxu0 0.0
    %4801 = vmatprep.subr.mxu0 0.0
    %4802 = vmatpush2.msra.mxu0 0.0
    %4803 = vmatprep.subr.mxu0 0.0
    %4804 = vmatpush2.msra.mxu0 0.0
    %4805 = vmatprep.subr.mxu0 0.0
    %4806 = vmatpush2.msra.mxu0 0.0
    %4807 = vmatprep.subr.mxu0 0.0
    %4808 = vmatpush2.msra.mxu0 0.0
    %4809 = vmatprep.subr.mxu0 0.0
    %4810 = vmatpush2.msra.mxu0 0.0
    %4811 = vmatprep.subr.mxu0 0.0
    %4812 = vmatpush2.msra.mxu0 0.0
    %4813 = vmatprep.subr.mxu0 0.0
    %4814 = vmatpush2.msra.mxu0 0.0
    %4815 = vmatprep.subr.mxu0 0.0
    %4816 = vmatpush2.msra.mxu0 0.0
    %4817 = vmatprep.subr.mxu0 0.0
    %4818 = vmatpush2.msra.mxu0 0.0
    %4819 = vmatprep.mubr.f32.mxu0 0.0
    %4820 = vmatmul.mubr.f32.gmra.mxu0 %v4751
    %v4821 = vpop.f32.mrf.mxu0
    %v4822 = vadd.f32 0.0, %v4821
    %v4823 = vpop.f32.mrf.mxu0
    %4824 = vdwg.mxu0
    %v4825 = vadd.f32 %v4736, %v4822
    %v4826 = vld [vmem:[%s1147] sm:$0xf]
    %v4827 = vld [vmem:[#allocation2] sm:$0xff]
    %4829 = vrot.lane.b32.xlu0 %v4826, 116
    %v4830 = vpop.permute.xlu0 %4829
    %v4832 = vcombine.high %v4827, %v4827
    %4833 = vrot.lane.b32.xlu0 %v4827, 112
    %v4834 = vpop.permute.xlu0 %4833
    %4835 = vrot.lane.b32.xlu0 %v4832, 112
    %v4836 = vpop.permute.xlu0 %4835
    %v4837 = vsel %vm614, %v4834, %v4836
    %v4838 = vsel %vm364, %v4830, 0
    %v4840 = vsel %vm367, %v4837, 0
    %4842 = vmatprep.subr.mxu0 0.0
    %4843 = vmatpush1.msra.mxu0 0.0
    %4844 = vmatprep.subr.mxu0 0.0
    %4845 = vmatpush1.msra.mxu0 0.0
    %4846 = vmatprep.subr.mxu0 0.0
    %4847 = vmatpush1.msra.mxu0 0.0
    %4848 = vmatprep.subr.mxu0 0.0
    %4849 = vmatpush1.msra.mxu0 0.0
    %4850 = vmatprep.subr.mxu0 0.0
    %4851 = vmatpush1.msra.mxu0 0.0
    %4852 = vmatprep.subr.mxu0 0.0
    %4853 = vmatpush1.msra.mxu0 0.0
    %4854 = vmatprep.subr.mxu0 0.0
    %4855 = vmatpush1.msra.mxu0 0.0
    %4856 = vmatprep.subr.mxu0 0.0
    %4857 = vmatpush1.msra.mxu0 0.0
    %4858 = vmatprep.subr.mxu0 0.0
    %4859 = vmatpush1.msra.mxu0 0.0
    %4860 = vmatprep.subr.mxu0 0.0
    %4861 = vmatpush1.msra.mxu0 0.0
    %4862 = vmatprep.subr.mxu0 0.0
    %4863 = vmatpush1.msra.mxu0 0.0
    %4864 = vmatprep.subr.mxu0 0.0
    %4865 = vmatpush1.msra.mxu0 0.0
    %4866 = vmatprep.subr.mxu0 0.0
    %4867 = vmatpush1.msra.mxu0 0.0
    %4868 = vmatprep.subr.mxu0 0.0
    %4869 = vmatpush1.msra.mxu0 0.0
    %4870 = vmatprep.subr.mxu0 0.0
    %4871 = vmatpush1.msra.mxu0 0.0
    %4872 = vmatprep.subr.mxu0 0.0
    %4873 = vmatpush1.msra.mxu0 %v4840
    %4874 = vmatprep.subr.mxu0 0.0
    %4875 = vmatpush2.msra.mxu0 0.0
    %4876 = vmatprep.subr.mxu0 0.0
    %4877 = vmatpush2.msra.mxu0 0.0
    %4878 = vmatprep.subr.mxu0 0.0
    %4879 = vmatpush2.msra.mxu0 0.0
    %4880 = vmatprep.subr.mxu0 0.0
    %4881 = vmatpush2.msra.mxu0 0.0
    %4882 = vmatprep.subr.mxu0 0.0
    %4883 = vmatpush2.msra.mxu0 0.0
    %4884 = vmatprep.subr.mxu0 0.0
    %4885 = vmatpush2.msra.mxu0 0.0
    %4886 = vmatprep.subr.mxu0 0.0
    %4887 = vmatpush2.msra.mxu0 0.0
    %4888 = vmatprep.subr.mxu0 0.0
    %4889 = vmatpush2.msra.mxu0 0.0
    %4890 = vmatprep.subr.mxu0 0.0
    %4891 = vmatpush2.msra.mxu0 0.0
    %4892 = vmatprep.subr.mxu0 0.0
    %4893 = vmatpush2.msra.mxu0 0.0
    %4894 = vmatprep.subr.mxu0 0.0
    %4895 = vmatpush2.msra.mxu0 0.0
    %4896 = vmatprep.subr.mxu0 0.0
    %4897 = vmatpush2.msra.mxu0 0.0
    %4898 = vmatprep.subr.mxu0 0.0
    %4899 = vmatpush2.msra.mxu0 0.0
    %4900 = vmatprep.subr.mxu0 0.0
    %4901 = vmatpush2.msra.mxu0 0.0
    %4902 = vmatprep.subr.mxu0 0.0
    %4903 = vmatpush2.msra.mxu0 0.0
    %4904 = vmatprep.subr.mxu0 0.0
    %4905 = vmatpush2.msra.mxu0 0.0
    %4906 = vmatprep.mubr.f32.mxu0 0.0
    %4907 = vmatmul.mubr.f32.gmra.mxu0 %v4838
    %v4908 = vpop.f32.mrf.mxu0
    %v4909 = vadd.f32 0.0, %v4908
    %v4910 = vpop.f32.mrf.mxu0
    %4911 = vdwg.mxu0
    %v4912 = vadd.f32 %v4825, %v4909
    %v4913 = vld [vmem:[%s1147] sm:$0xf]
    %v4914 = vld [vmem:[#allocation2] sm:$0xff]
    %4916 = vrot.lane.b32.xlu0 %v4913, 112
    %v4917 = vpop.permute.xlu0 %4916
    %v4919 = vcombine.high %v4914, %v4914
    %4920 = vrot.lane.b32.xlu0 %v4914, 111
    %v4921 = vpop.permute.xlu0 %4920
    %4922 = vrot.lane.b32.xlu0 %v4919, 111
    %v4923 = vpop.permute.xlu0 %4922
    %v4924 = vsel %vm702, %v4921, %v4923
    %v4925 = vsel %vm364, %v4917, 0
    %v4927 = vsel %vm367, %v4924, 0
    %4929 = vmatprep.subr.mxu0 0.0
    %4930 = vmatpush1.msra.mxu0 0.0
    %4931 = vmatprep.subr.mxu0 0.0
    %4932 = vmatpush1.msra.mxu0 0.0
    %4933 = vmatprep.subr.mxu0 0.0
    %4934 = vmatpush1.msra.mxu0 0.0
    %4935 = vmatprep.subr.mxu0 0.0
    %4936 = vmatpush1.msra.mxu0 0.0
    %4937 = vmatprep.subr.mxu0 0.0
    %4938 = vmatpush1.msra.mxu0 0.0
    %4939 = vmatprep.subr.mxu0 0.0
    %4940 = vmatpush1.msra.mxu0 0.0
    %4941 = vmatprep.subr.mxu0 0.0
    %4942 = vmatpush1.msra.mxu0 0.0
    %4943 = vmatprep.subr.mxu0 0.0
    %4944 = vmatpush1.msra.mxu0 0.0
    %4945 = vmatprep.subr.mxu0 0.0
    %4946 = vmatpush1.msra.mxu0 0.0
    %4947 = vmatprep.subr.mxu0 0.0
    %4948 = vmatpush1.msra.mxu0 0.0
    %4949 = vmatprep.subr.mxu0 0.0
    %4950 = vmatpush1.msra.mxu0 0.0
    %4951 = vmatprep.subr.mxu0 0.0
    %4952 = vmatpush1.msra.mxu0 0.0
    %4953 = vmatprep.subr.mxu0 0.0
    %4954 = vmatpush1.msra.mxu0 0.0
    %4955 = vmatprep.subr.mxu0 0.0
    %4956 = vmatpush1.msra.mxu0 0.0
    %4957 = vmatprep.subr.mxu0 0.0
    %4958 = vmatpush1.msra.mxu0 0.0
    %4959 = vmatprep.subr.mxu0 0.0
    %4960 = vmatpush1.msra.mxu0 %v4927
    %4961 = vmatprep.subr.mxu0 0.0
    %4962 = vmatpush2.msra.mxu0 0.0
    %4963 = vmatprep.subr.mxu0 0.0
    %4964 = vmatpush2.msra.mxu0 0.0
    %4965 = vmatprep.subr.mxu0 0.0
    %4966 = vmatpush2.msra.mxu0 0.0
    %4967 = vmatprep.subr.mxu0 0.0
    %4968 = vmatpush2.msra.mxu0 0.0
    %4969 = vmatprep.subr.mxu0 0.0
    %4970 = vmatpush2.msra.mxu0 0.0
    %4971 = vmatprep.subr.mxu0 0.0
    %4972 = vmatpush2.msra.mxu0 0.0
    %4973 = vmatprep.subr.mxu0 0.0
    %4974 = vmatpush2.msra.mxu0 0.0
    %4975 = vmatprep.subr.mxu0 0.0
    %4976 = vmatpush2.msra.mxu0 0.0
    %4977 = vmatprep.subr.mxu0 0.0
    %4978 = vmatpush2.msra.mxu0 0.0
    %4979 = vmatprep.subr.mxu0 0.0
    %4980 = vmatpush2.msra.mxu0 0.0
    %4981 = vmatprep.subr.mxu0 0.0
    %4982 = vmatpush2.msra.mxu0 0.0
    %4983 = vmatprep.subr.mxu0 0.0
    %4984 = vmatpush2.msra.mxu0 0.0
    %4985 = vmatprep.subr.mxu0 0.0
    %4986 = vmatpush2.msra.mxu0 0.0
    %4987 = vmatprep.subr.mxu0 0.0
    %4988 = vmatpush2.msra.mxu0 0.0
    %4989 = vmatprep.subr.mxu0 0.0
    %4990 = vmatpush2.msra.mxu0 0.0
    %4991 = vmatprep.subr.mxu0 0.0
    %4992 = vmatpush2.msra.mxu0 0.0
    %4993 = vmatprep.mubr.f32.mxu0 0.0
    %4994 = vmatmul.mubr.f32.gmra.mxu0 %v4925
    %v4995 = vpop.f32.mrf.mxu0
    %v4996 = vadd.f32 0.0, %v4995
    %v4997 = vpop.f32.mrf.mxu0
    %4998 = vdwg.mxu0
    %v4999 = vadd.f32 %v4912, %v4996
    %v5000 = vld [vmem:[%s1147] sm:$0xf]
    %v5001 = vld [vmem:[#allocation2] sm:$0xff]
    %5003 = vrot.lane.b32.xlu0 %v5000, 108
    %v5004 = vpop.permute.xlu0 %5003
    %v5006 = vcombine.high %v5001, %v5001
    %5007 = vrot.lane.b32.xlu0 %v5001, 110
    %v5008 = vpop.permute.xlu0 %5007
    %5009 = vrot.lane.b32.xlu0 %v5006, 110
    %v5010 = vpop.permute.xlu0 %5009
    %v5011 = vsel %vm790, %v5008, %v5010
    %v5012 = vsel %vm364, %v5004, 0
    %v5014 = vsel %vm367, %v5011, 0
    %5016 = vmatprep.subr.mxu0 0.0
    %5017 = vmatpush1.msra.mxu0 0.0
    %5018 = vmatprep.subr.mxu0 0.0
    %5019 = vmatpush1.msra.mxu0 0.0
    %5020 = vmatprep.subr.mxu0 0.0
    %5021 = vmatpush1.msra.mxu0 0.0
    %5022 = vmatprep.subr.mxu0 0.0
    %5023 = vmatpush1.msra.mxu0 0.0
    %5024 = vmatprep.subr.mxu0 0.0
    %5025 = vmatpush1.msra.mxu0 0.0
    %5026 = vmatprep.subr.mxu0 0.0
    %5027 = vmatpush1.msra.mxu0 0.0
    %5028 = vmatprep.subr.mxu0 0.0
    %5029 = vmatpush1.msra.mxu0 0.0
    %5030 = vmatprep.subr.mxu0 0.0
    %5031 = vmatpush1.msra.mxu0 0.0
    %5032 = vmatprep.subr.mxu0 0.0
    %5033 = vmatpush1.msra.mxu0 0.0
    %5034 = vmatprep.subr.mxu0 0.0
    %5035 = vmatpush1.msra.mxu0 0.0
    %5036 = vmatprep.subr.mxu0 0.0
    %5037 = vmatpush1.msra.mxu0 0.0
    %5038 = vmatprep.subr.mxu0 0.0
    %5039 = vmatpush1.msra.mxu0 0.0
    %5040 = vmatprep.subr.mxu0 0.0
    %5041 = vmatpush1.msra.mxu0 0.0
    %5042 = vmatprep.subr.mxu0 0.0
    %5043 = vmatpush1.msra.mxu0 0.0
    %5044 = vmatprep.subr.mxu0 0.0
    %5045 = vmatpush1.msra.mxu0 0.0
    %5046 = vmatprep.subr.mxu0 0.0
    %5047 = vmatpush1.msra.mxu0 %v5014
    %5048 = vmatprep.subr.mxu0 0.0
    %5049 = vmatpush2.msra.mxu0 0.0
    %5050 = vmatprep.subr.mxu0 0.0
    %5051 = vmatpush2.msra.mxu0 0.0
    %5052 = vmatprep.subr.mxu0 0.0
    %5053 = vmatpush2.msra.mxu0 0.0
    %5054 = vmatprep.subr.mxu0 0.0
    %5055 = vmatpush2.msra.mxu0 0.0
    %5056 = vmatprep.subr.mxu0 0.0
    %5057 = vmatpush2.msra.mxu0 0.0
    %5058 = vmatprep.subr.mxu0 0.0
    %5059 = vmatpush2.msra.mxu0 0.0
    %5060 = vmatprep.subr.mxu0 0.0
    %5061 = vmatpush2.msra.mxu0 0.0
    %5062 = vmatprep.subr.mxu0 0.0
    %5063 = vmatpush2.msra.mxu0 0.0
    %5064 = vmatprep.subr.mxu0 0.0
    %5065 = vmatpush2.msra.mxu0 0.0
    %5066 = vmatprep.subr.mxu0 0.0
    %5067 = vmatpush2.msra.mxu0 0.0
    %5068 = vmatprep.subr.mxu0 0.0
    %5069 = vmatpush2.msra.mxu0 0.0
    %5070 = vmatprep.subr.mxu0 0.0
    %5071 = vmatpush2.msra.mxu0 0.0
    %5072 = vmatprep.subr.mxu0 0.0
    %5073 = vmatpush2.msra.mxu0 0.0
    %5074 = vmatprep.subr.mxu0 0.0
    %5075 = vmatpush2.msra.mxu0 0.0
    %5076 = vmatprep.subr.mxu0 0.0
    %5077 = vmatpush2.msra.mxu0 0.0
    %5078 = vmatprep.subr.mxu0 0.0
    %5079 = vmatpush2.msra.mxu0 0.0
    %5080 = vmatprep.mubr.f32.mxu0 0.0
    %5081 = vmatmul.mubr.f32.gmra.mxu0 %v5012
    %v5082 = vpop.f32.mrf.mxu0
    %v5083 = vadd.f32 0.0, %v5082
    %v5084 = vpop.f32.mrf.mxu0
    %5085 = vdwg.mxu0
    %v5086 = vadd.f32 %v4999, %v5083
    %v5087 = vld [vmem:[%s1147] sm:$0xf]
    %v5088 = vld [vmem:[#allocation2] sm:$0xff]
    %5090 = vrot.lane.b32.xlu0 %v5087, 104
    %v5091 = vpop.permute.xlu0 %5090
    %v5093 = vcombine.high %v5088, %v5088
    %5094 = vrot.lane.b32.xlu0 %v5088, 96
    %v5095 = vpop.permute.xlu0 %5094
    %5096 = vrot.lane.b32.xlu0 %v5093, 96
    %v5097 = vpop.permute.xlu0 %5096
    %v5098 = vsel %vm878, %v5095, %v5097
    %v5099 = vsel %vm364, %v5091, 0
    %v5101 = vsel %vm367, %v5098, 0
    %5103 = vmatprep.subr.mxu0 0.0
    %5104 = vmatpush1.msra.mxu0 0.0
    %5105 = vmatprep.subr.mxu0 0.0
    %5106 = vmatpush1.msra.mxu0 0.0
    %5107 = vmatprep.subr.mxu0 0.0
    %5108 = vmatpush1.msra.mxu0 0.0
    %5109 = vmatprep.subr.mxu0 0.0
    %5110 = vmatpush1.msra.mxu0 0.0
    %5111 = vmatprep.subr.mxu0 0.0
    %5112 = vmatpush1.msra.mxu0 0.0
    %5113 = vmatprep.subr.mxu0 0.0
    %5114 = vmatpush1.msra.mxu0 0.0
    %5115 = vmatprep.subr.mxu0 0.0
    %5116 = vmatpush1.msra.mxu0 0.0
    %5117 = vmatprep.subr.mxu0 0.0
    %5118 = vmatpush1.msra.mxu0 0.0
    %5119 = vmatprep.subr.mxu0 0.0
    %5120 = vmatpush1.msra.mxu0 0.0
    %5121 = vmatprep.subr.mxu0 0.0
    %5122 = vmatpush1.msra.mxu0 0.0
    %5123 = vmatprep.subr.mxu0 0.0
    %5124 = vmatpush1.msra.mxu0 0.0
    %5125 = vmatprep.subr.mxu0 0.0
    %5126 = vmatpush1.msra.mxu0 0.0
    %5127 = vmatprep.subr.mxu0 0.0
    %5128 = vmatpush1.msra.mxu0 0.0
    %5129 = vmatprep.subr.mxu0 0.0
    %5130 = vmatpush1.msra.mxu0 0.0
    %5131 = vmatprep.subr.mxu0 0.0
    %5132 = vmatpush1.msra.mxu0 0.0
    %5133 = vmatprep.subr.mxu0 0.0
    %5134 = vmatpush1.msra.mxu0 %v5101
    %5135 = vmatprep.subr.mxu0 0.0
    %5136 = vmatpush2.msra.mxu0 0.0
    %5137 = vmatprep.subr.mxu0 0.0
    %5138 = vmatpush2.msra.mxu0 0.0
    %5139 = vmatprep.subr.mxu0 0.0
    %5140 = vmatpush2.msra.mxu0 0.0
    %5141 = vmatprep.subr.mxu0 0.0
    %5142 = vmatpush2.msra.mxu0 0.0
    %5143 = vmatprep.subr.mxu0 0.0
    %5144 = vmatpush2.msra.mxu0 0.0
    %5145 = vmatprep.subr.mxu0 0.0
    %5146 = vmatpush2.msra.mxu0 0.0
    %5147 = vmatprep.subr.mxu0 0.0
    %5148 = vmatpush2.msra.mxu0 0.0
    %5149 = vmatprep.subr.mxu0 0.0
    %5150 = vmatpush2.msra.mxu0 0.0
    %5151 = vmatprep.subr.mxu0 0.0
    %5152 = vmatpush2.msra.mxu0 0.0
    %5153 = vmatprep.subr.mxu0 0.0
    %5154 = vmatpush2.msra.mxu0 0.0
    %5155 = vmatprep.subr.mxu0 0.0
    %5156 = vmatpush2.msra.mxu0 0.0
    %5157 = vmatprep.subr.mxu0 0.0
    %5158 = vmatpush2.msra.mxu0 0.0
    %5159 = vmatprep.subr.mxu0 0.0
    %5160 = vmatpush2.msra.mxu0 0.0
    %5161 = vmatprep.subr.mxu0 0.0
    %5162 = vmatpush2.msra.mxu0 0.0
    %5163 = vmatprep.subr.mxu0 0.0
    %5164 = vmatpush2.msra.mxu0 0.0
    %5165 = vmatprep.subr.mxu0 0.0
    %5166 = vmatpush2.msra.mxu0 0.0
    %5167 = vmatprep.mubr.f32.mxu0 0.0
    %5168 = vmatmul.mubr.f32.gmra.mxu0 %v5099
    %v5169 = vpop.f32.mrf.mxu0
    %v5170 = vadd.f32 0.0, %v5169
    %v5171 = vpop.f32.mrf.mxu0
    %5172 = vdwg.mxu0
    %v5173 = vadd.f32 %v5086, %v5170
    %v5174 = vld [vmem:[%s1147] sm:$0xf]
    %v5175 = vld [vmem:[#allocation2] sm:$0xff]
    %5177 = vrot.lane.b32.xlu0 %v5174, 100
    %v5178 = vpop.permute.xlu0 %5177
    %v5180 = vcombine.high %v5175, %v5175
    %5181 = vrot.lane.b32.xlu0 %v5175, 95
    %v5182 = vpop.permute.xlu0 %5181
    %5183 = vrot.lane.b32.xlu0 %v5180, 95
    %v5184 = vpop.permute.xlu0 %5183
    %v5185 = vsel %vm966, %v5182, %v5184
    %v5186 = vsel %vm364, %v5178, 0
    %v5188 = vsel %vm367, %v5185, 0
    %5190 = vmatprep.subr.mxu0 0.0
    %5191 = vmatpush1.msra.mxu0 0.0
    %5192 = vmatprep.subr.mxu0 0.0
    %5193 = vmatpush1.msra.mxu0 0.0
    %5194 = vmatprep.subr.mxu0 0.0
    %5195 = vmatpush1.msra.mxu0 0.0
    %5196 = vmatprep.subr.mxu0 0.0
    %5197 = vmatpush1.msra.mxu0 0.0
    %5198 = vmatprep.subr.mxu0 0.0
    %5199 = vmatpush1.msra.mxu0 0.0
    %5200 = vmatprep.subr.mxu0 0.0
    %5201 = vmatpush1.msra.mxu0 0.0
    %5202 = vmatprep.subr.mxu0 0.0
    %5203 = vmatpush1.msra.mxu0 0.0
    %5204 = vmatprep.subr.mxu0 0.0
    %5205 = vmatpush1.msra.mxu0 0.0
    %5206 = vmatprep.subr.mxu0 0.0
    %5207 = vmatpush1.msra.mxu0 0.0
    %5208 = vmatprep.subr.mxu0 0.0
    %5209 = vmatpush1.msra.mxu0 0.0
    %5210 = vmatprep.subr.mxu0 0.0
    %5211 = vmatpush1.msra.mxu0 0.0
    %5212 = vmatprep.subr.mxu0 0.0
    %5213 = vmatpush1.msra.mxu0 0.0
    %5214 = vmatprep.subr.mxu0 0.0
    %5215 = vmatpush1.msra.mxu0 0.0
    %5216 = vmatprep.subr.mxu0 0.0
    %5217 = vmatpush1.msra.mxu0 0.0
    %5218 = vmatprep.subr.mxu0 0.0
    %5219 = vmatpush1.msra.mxu0 0.0
    %5220 = vmatprep.subr.mxu0 0.0
    %5221 = vmatpush1.msra.mxu0 %v5188
    %5222 = vmatprep.subr.mxu0 0.0
    %5223 = vmatpush2.msra.mxu0 0.0
    %5224 = vmatprep.subr.mxu0 0.0
    %5225 = vmatpush2.msra.mxu0 0.0
    %5226 = vmatprep.subr.mxu0 0.0
    %5227 = vmatpush2.msra.mxu0 0.0
    %5228 = vmatprep.subr.mxu0 0.0
    %5229 = vmatpush2.msra.mxu0 0.0
    %5230 = vmatprep.subr.mxu0 0.0
    %5231 = vmatpush2.msra.mxu0 0.0
    %5232 = vmatprep.subr.mxu0 0.0
    %5233 = vmatpush2.msra.mxu0 0.0
    %5234 = vmatprep.subr.mxu0 0.0
    %5235 = vmatpush2.msra.mxu0 0.0
    %5236 = vmatprep.subr.mxu0 0.0
    %5237 = vmatpush2.msra.mxu0 0.0
    %5238 = vmatprep.subr.mxu0 0.0
    %5239 = vmatpush2.msra.mxu0 0.0
    %5240 = vmatprep.subr.mxu0 0.0
    %5241 = vmatpush2.msra.mxu0 0.0
    %5242 = vmatprep.subr.mxu0 0.0
    %5243 = vmatpush2.msra.mxu0 0.0
    %5244 = vmatprep.subr.mxu0 0.0
    %5245 = vmatpush2.msra.mxu0 0.0
    %5246 = vmatprep.subr.mxu0 0.0
    %5247 = vmatpush2.msra.mxu0 0.0
    %5248 = vmatprep.subr.mxu0 0.0
    %5249 = vmatpush2.msra.mxu0 0.0
    %5250 = vmatprep.subr.mxu0 0.0
    %5251 = vmatpush2.msra.mxu0 0.0
    %5252 = vmatprep.subr.mxu0 0.0
    %5253 = vmatpush2.msra.mxu0 0.0
    %5254 = vmatprep.mubr.f32.mxu0 0.0
    %5255 = vmatmul.mubr.f32.gmra.mxu0 %v5186
    %v5256 = vpop.f32.mrf.mxu0
    %v5257 = vadd.f32 0.0, %v5256
    %v5258 = vpop.f32.mrf.mxu0
    %5259 = vdwg.mxu0
    %v5260 = vadd.f32 %v5173, %v5257
    %v5261 = vld [vmem:[%s1147] sm:$0xf]
    %v5262 = vld [vmem:[#allocation2] sm:$0xff]
    %5264 = vrot.lane.b32.xlu0 %v5261, 96
    %v5265 = vpop.permute.xlu0 %5264
    %v5267 = vcombine.high %v5262, %v5262
    %5268 = vrot.lane.b32.xlu0 %v5262, 94
    %v5269 = vpop.permute.xlu0 %5268
    %5270 = vrot.lane.b32.xlu0 %v5267, 94
    %v5271 = vpop.permute.xlu0 %5270
    %v5272 = vsel %vm1054, %v5269, %v5271
    %v5273 = vsel %vm364, %v5265, 0
    %v5275 = vsel %vm367, %v5272, 0
    %5277 = vmatprep.subr.mxu0 0.0
    %5278 = vmatpush1.msra.mxu0 0.0
    %5279 = vmatprep.subr.mxu0 0.0
    %5280 = vmatpush1.msra.mxu0 0.0
    %5281 = vmatprep.subr.mxu0 0.0
    %5282 = vmatpush1.msra.mxu0 0.0
    %5283 = vmatprep.subr.mxu0 0.0
    %5284 = vmatpush1.msra.mxu0 0.0
    %5285 = vmatprep.subr.mxu0 0.0
    %5286 = vmatpush1.msra.mxu0 0.0
    %5287 = vmatprep.subr.mxu0 0.0
    %5288 = vmatpush1.msra.mxu0 0.0
    %5289 = vmatprep.subr.mxu0 0.0
    %5290 = vmatpush1.msra.mxu0 0.0
    %5291 = vmatprep.subr.mxu0 0.0
    %5292 = vmatpush1.msra.mxu0 0.0
    %5293 = vmatprep.subr.mxu0 0.0
    %5294 = vmatpush1.msra.mxu0 0.0
    %5295 = vmatprep.subr.mxu0 0.0
    %5296 = vmatpush1.msra.mxu0 0.0
    %5297 = vmatprep.subr.mxu0 0.0
    %5298 = vmatpush1.msra.mxu0 0.0
    %5299 = vmatprep.subr.mxu0 0.0
    %5300 = vmatpush1.msra.mxu0 0.0
    %5301 = vmatprep.subr.mxu0 0.0
    %5302 = vmatpush1.msra.mxu0 0.0
    %5303 = vmatprep.subr.mxu0 0.0
    %5304 = vmatpush1.msra.mxu0 0.0
    %5305 = vmatprep.subr.mxu0 0.0
    %5306 = vmatpush1.msra.mxu0 0.0
    %5307 = vmatprep.subr.mxu0 0.0
    %5308 = vmatpush1.msra.mxu0 %v5275
    %5309 = vmatprep.subr.mxu0 0.0
    %5310 = vmatpush2.msra.mxu0 0.0
    %5311 = vmatprep.subr.mxu0 0.0
    %5312 = vmatpush2.msra.mxu0 0.0
    %5313 = vmatprep.subr.mxu0 0.0
    %5314 = vmatpush2.msra.mxu0 0.0
    %5315 = vmatprep.subr.mxu0 0.0
    %5316 = vmatpush2.msra.mxu0 0.0
    %5317 = vmatprep.subr.mxu0 0.0
    %5318 = vmatpush2.msra.mxu0 0.0
    %5319 = vmatprep.subr.mxu0 0.0
    %5320 = vmatpush2.msra.mxu0 0.0
    %5321 = vmatprep.subr.mxu0 0.0
    %5322 = vmatpush2.msra.mxu0 0.0
    %5323 = vmatprep.subr.mxu0 0.0
    %5324 = vmatpush2.msra.mxu0 0.0
    %5325 = vmatprep.subr.mxu0 0.0
    %5326 = vmatpush2.msra.mxu0 0.0
    %5327 = vmatprep.subr.mxu0 0.0
    %5328 = vmatpush2.msra.mxu0 0.0
    %5329 = vmatprep.subr.mxu0 0.0
    %5330 = vmatpush2.msra.mxu0 0.0
    %5331 = vmatprep.subr.mxu0 0.0
    %5332 = vmatpush2.msra.mxu0 0.0
    %5333 = vmatprep.subr.mxu0 0.0
    %5334 = vmatpush2.msra.mxu0 0.0
    %5335 = vmatprep.subr.mxu0 0.0
    %5336 = vmatpush2.msra.mxu0 0.0
    %5337 = vmatprep.subr.mxu0 0.0
    %5338 = vmatpush2.msra.mxu0 0.0
    %5339 = vmatprep.subr.mxu0 0.0
    %5340 = vmatpush2.msra.mxu0 0.0
    %5341 = vmatprep.mubr.f32.mxu0 0.0
    %5342 = vmatmul.mubr.f32.gmra.mxu0 %v5273
    %v5343 = vpop.f32.mrf.mxu0
    %v5344 = vadd.f32 0.0, %v5343
    %v5345 = vpop.f32.mrf.mxu0
    %5346 = vdwg.mxu0
    %v5347 = vadd.f32 %v5260, %v5344
    %v5348 = vld [vmem:[%s1147] sm:$0xf]
    %5350 = vset.pattern.permute.xlu0 36
    %5351 = vperm.xlu0 %5350, %v5348
    %v5352 = vpop.permute.xlu0 %5351
    %v5354 = vadd.f32 %v5347, %v5352
    %v5355 = vadd.f32 %v3781, %v5354
    %v5356 = vsel %vm59, %v5355, 0.0
    %5358 = vrot.lane.b32.xlu0 %v5356, 17
    %v5359 = vpop.permute.xlu0 %5358
    %v5360 = vrot.slane %v5359, 4
    %v5361 = vsel %vm343, %v5360, %v5359
    %5363 = vst.msk [vmem:[#allocation2] sm:$0xff] %vm348, %v5361
    %v5364 = vld [vmem:[%s1935] sm:$0xf]
    %v5365 = vld [vmem:[#allocation2] sm:$0xf]
    %v5366 = vld [vmem:[#allocation2] sm:$0xff]
    %5368 = vrot.lane.b32.xlu0 %v5364, 124
    %v5369 = vpop.permute.xlu0 %5368
    %v5371 = vcombine.high %v5366, %v5366
    %5372 = vrot.lane.b32.xlu0 %v5366, 127
    %v5373 = vpop.permute.xlu0 %5372
    %5374 = vrot.lane.b32.xlu0 %v5371, 127
    %v5375 = vpop.permute.xlu0 %5374
    %v5376 = vsel %vm362, %v5373, %v5375
    %v5377 = vsel %vm364, %v5369, 0
    %v5379 = vsel %vm367, %v5376, 0
    %5381 = vmatprep.subr.mxu0 0.0
    %5382 = vmatpush1.msra.mxu0 0.0
    %5383 = vmatprep.subr.mxu0 0.0
    %5384 = vmatpush1.msra.mxu0 0.0
    %5385 = vmatprep.subr.mxu0 0.0
    %5386 = vmatpush1.msra.mxu0 0.0
    %5387 = vmatprep.subr.mxu0 0.0
    %5388 = vmatpush1.msra.mxu0 0.0
    %5389 = vmatprep.subr.mxu0 0.0
    %5390 = vmatpush1.msra.mxu0 0.0
    %5391 = vmatprep.subr.mxu0 0.0
    %5392 = vmatpush1.msra.mxu0 0.0
    %5393 = vmatprep.subr.mxu0 0.0
    %5394 = vmatpush1.msra.mxu0 0.0
    %5395 = vmatprep.subr.mxu0 0.0
    %5396 = vmatpush1.msra.mxu0 0.0
    %5397 = vmatprep.subr.mxu0 0.0
    %5398 = vmatpush1.msra.mxu0 0.0
    %5399 = vmatprep.subr.mxu0 0.0
    %5400 = vmatpush1.msra.mxu0 0.0
    %5401 = vmatprep.subr.mxu0 0.0
    %5402 = vmatpush1.msra.mxu0 0.0
    %5403 = vmatprep.subr.mxu0 0.0
    %5404 = vmatpush1.msra.mxu0 0.0
    %5405 = vmatprep.subr.mxu0 0.0
    %5406 = vmatpush1.msra.mxu0 0.0
    %5407 = vmatprep.subr.mxu0 0.0
    %5408 = vmatpush1.msra.mxu0 0.0
    %5409 = vmatprep.subr.mxu0 0.0
    %5410 = vmatpush1.msra.mxu0 0.0
    %5411 = vmatprep.subr.mxu0 0.0
    %5412 = vmatpush1.msra.mxu0 %v5379
    %5413 = vmatprep.subr.mxu0 0.0
    %5414 = vmatpush2.msra.mxu0 0.0
    %5415 = vmatprep.subr.mxu0 0.0
    %5416 = vmatpush2.msra.mxu0 0.0
    %5417 = vmatprep.subr.mxu0 0.0
    %5418 = vmatpush2.msra.mxu0 0.0
    %5419 = vmatprep.subr.mxu0 0.0
    %5420 = vmatpush2.msra.mxu0 0.0
    %5421 = vmatprep.subr.mxu0 0.0
    %5422 = vmatpush2.msra.mxu0 0.0
    %5423 = vmatprep.subr.mxu0 0.0
    %5424 = vmatpush2.msra.mxu0 0.0
    %5425 = vmatprep.subr.mxu0 0.0
    %5426 = vmatpush2.msra.mxu0 0.0
    %5427 = vmatprep.subr.mxu0 0.0
    %5428 = vmatpush2.msra.mxu0 0.0
    %5429 = vmatprep.subr.mxu0 0.0
    %5430 = vmatpush2.msra.mxu0 0.0
    %5431 = vmatprep.subr.mxu0 0.0
    %5432 = vmatpush2.msra.mxu0 0.0
    %5433 = vmatprep.subr.mxu0 0.0
    %5434 = vmatpush2.msra.mxu0 0.0
    %5435 = vmatprep.subr.mxu0 0.0
    %5436 = vmatpush2.msra.mxu0 0.0
    %5437 = vmatprep.subr.mxu0 0.0
    %5438 = vmatpush2.msra.mxu0 0.0
    %5439 = vmatprep.subr.mxu0 0.0
    %5440 = vmatpush2.msra.mxu0 0.0
    %5441 = vmatprep.subr.mxu0 0.0
    %5442 = vmatpush2.msra.mxu0 0.0
    %5443 = vmatprep.subr.mxu0 0.0
    %5444 = vmatpush2.msra.mxu0 0.0
    %5445 = vmatprep.mubr.f32.mxu0 0.0
    %5446 = vmatmul.mubr.f32.gmra.mxu0 %v5377
    %v5447 = vpop.f32.mrf.mxu0
    %v5448 = vadd.f32 0.0, %v5447
    %v5449 = vpop.f32.mrf.mxu0
    %5450 = vdwg.mxu0
    %v5451 = vsel %vm364, %v5364, 0
    %v5454 = vsel %vm367, %v5365, 0
    %5456 = vmatprep.subr.mxu0 0.0
    %5457 = vmatpush1.msra.mxu0 0.0
    %5458 = vmatprep.subr.mxu0 0.0
    %5459 = vmatpush1.msra.mxu0 0.0
    %5460 = vmatprep.subr.mxu0 0.0
    %5461 = vmatpush1.msra.mxu0 0.0
    %5462 = vmatprep.subr.mxu0 0.0
    %5463 = vmatpush1.msra.mxu0 0.0
    %5464 = vmatprep.subr.mxu0 0.0
    %5465 = vmatpush1.msra.mxu0 0.0
    %5466 = vmatprep.subr.mxu0 0.0
    %5467 = vmatpush1.msra.mxu0 0.0
    %5468 = vmatprep.subr.mxu0 0.0
    %5469 = vmatpush1.msra.mxu0 0.0
    %5470 = vmatprep.subr.mxu0 0.0
    %5471 = vmatpush1.msra.mxu0 0.0
    %5472 = vmatprep.subr.mxu0 0.0
    %5473 = vmatpush1.msra.mxu0 0.0
    %5474 = vmatprep.subr.mxu0 0.0
    %5475 = vmatpush1.msra.mxu0 0.0
    %5476 = vmatprep.subr.mxu0 0.0
    %5477 = vmatpush1.msra.mxu0 0.0
    %5478 = vmatprep.subr.mxu0 0.0
    %5479 = vmatpush1.msra.mxu0 0.0
    %5480 = vmatprep.subr.mxu0 0.0
    %5481 = vmatpush1.msra.mxu0 0.0
    %5482 = vmatprep.subr.mxu0 0.0
    %5483 = vmatpush1.msra.mxu0 0.0
    %5484 = vmatprep.subr.mxu0 0.0
    %5485 = vmatpush1.msra.mxu0 0.0
    %5486 = vmatprep.subr.mxu0 0.0
    %5487 = vmatpush1.msra.mxu0 %v5454
    %5488 = vmatprep.subr.mxu0 0.0
    %5489 = vmatpush2.msra.mxu0 0.0
    %5490 = vmatprep.subr.mxu0 0.0
    %5491 = vmatpush2.msra.mxu0 0.0
    %5492 = vmatprep.subr.mxu0 0.0
    %5493 = vmatpush2.msra.mxu0 0.0
    %5494 = vmatprep.subr.mxu0 0.0
    %5495 = vmatpush2.msra.mxu0 0.0
    %5496 = vmatprep.subr.mxu0 0.0
    %5497 = vmatpush2.msra.mxu0 0.0
    %5498 = vmatprep.subr.mxu0 0.0
    %5499 = vmatpush2.msra.mxu0 0.0
    %5500 = vmatprep.subr.mxu0 0.0
    %5501 = vmatpush2.msra.mxu0 0.0
    %5502 = vmatprep.subr.mxu0 0.0
    %5503 = vmatpush2.msra.mxu0 0.0
    %5504 = vmatprep.subr.mxu0 0.0
    %5505 = vmatpush2.msra.mxu0 0.0
    %5506 = vmatprep.subr.mxu0 0.0
    %5507 = vmatpush2.msra.mxu0 0.0
    %5508 = vmatprep.subr.mxu0 0.0
    %5509 = vmatpush2.msra.mxu0 0.0
    %5510 = vmatprep.subr.mxu0 0.0
    %5511 = vmatpush2.msra.mxu0 0.0
    %5512 = vmatprep.subr.mxu0 0.0
    %5513 = vmatpush2.msra.mxu0 0.0
    %5514 = vmatprep.subr.mxu0 0.0
    %5515 = vmatpush2.msra.mxu0 0.0
    %5516 = vmatprep.subr.mxu0 0.0
    %5517 = vmatpush2.msra.mxu0 0.0
    %5518 = vmatprep.subr.mxu0 0.0
    %5519 = vmatpush2.msra.mxu0 0.0
    %5520 = vmatprep.mubr.f32.mxu0 0.0
    %5521 = vmatmul.mubr.f32.gmra.mxu0 %v5451
    %v5522 = vpop.f32.mrf.mxu0
    %v5523 = vadd.f32 %v5448, %v5522
    %v5524 = vpop.f32.mrf.mxu0
    %5525 = vdwg.mxu0
    %v5526 = vld [vmem:[%s1935] sm:$0xf]
    %v5527 = vld [vmem:[#allocation2] sm:$0xff]
    %5529 = vrot.lane.b32.xlu0 %v5526, 120
    %v5530 = vpop.permute.xlu0 %5529
    %v5532 = vcombine.high %v5527, %v5527
    %5533 = vrot.lane.b32.xlu0 %v5527, 126
    %v5534 = vpop.permute.xlu0 %5533
    %5535 = vrot.lane.b32.xlu0 %v5532, 126
    %v5536 = vpop.permute.xlu0 %5535
    %v5537 = vsel %vm526, %v5534, %v5536
    %v5538 = vsel %vm364, %v5530, 0
    %v5540 = vsel %vm367, %v5537, 0
    %5542 = vmatprep.subr.mxu0 0.0
    %5543 = vmatpush1.msra.mxu0 0.0
    %5544 = vmatprep.subr.mxu0 0.0
    %5545 = vmatpush1.msra.mxu0 0.0
    %5546 = vmatprep.subr.mxu0 0.0
    %5547 = vmatpush1.msra.mxu0 0.0
    %5548 = vmatprep.subr.mxu0 0.0
    %5549 = vmatpush1.msra.mxu0 0.0
    %5550 = vmatprep.subr.mxu0 0.0
    %5551 = vmatpush1.msra.mxu0 0.0
    %5552 = vmatprep.subr.mxu0 0.0
    %5553 = vmatpush1.msra.mxu0 0.0
    %5554 = vmatprep.subr.mxu0 0.0
    %5555 = vmatpush1.msra.mxu0 0.0
    %5556 = vmatprep.subr.mxu0 0.0
    %5557 = vmatpush1.msra.mxu0 0.0
    %5558 = vmatprep.subr.mxu0 0.0
    %5559 = vmatpush1.msra.mxu0 0.0
    %5560 = vmatprep.subr.mxu0 0.0
    %5561 = vmatpush1.msra.mxu0 0.0
    %5562 = vmatprep.subr.mxu0 0.0
    %5563 = vmatpush1.msra.mxu0 0.0
    %5564 = vmatprep.subr.mxu0 0.0
    %5565 = vmatpush1.msra.mxu0 0.0
    %5566 = vmatprep.subr.mxu0 0.0
    %5567 = vmatpush1.msra.mxu0 0.0
    %5568 = vmatprep.subr.mxu0 0.0
    %5569 = vmatpush1.msra.mxu0 0.0
    %5570 = vmatprep.subr.mxu0 0.0
    %5571 = vmatpush1.msra.mxu0 0.0
    %5572 = vmatprep.subr.mxu0 0.0
    %5573 = vmatpush1.msra.mxu0 %v5540
    %5574 = vmatprep.subr.mxu0 0.0
    %5575 = vmatpush2.msra.mxu0 0.0
    %5576 = vmatprep.subr.mxu0 0.0
    %5577 = vmatpush2.msra.mxu0 0.0
    %5578 = vmatprep.subr.mxu0 0.0
    %5579 = vmatpush2.msra.mxu0 0.0
    %5580 = vmatprep.subr.mxu0 0.0
    %5581 = vmatpush2.msra.mxu0 0.0
    %5582 = vmatprep.subr.mxu0 0.0
    %5583 = vmatpush2.msra.mxu0 0.0
    %5584 = vmatprep.subr.mxu0 0.0
    %5585 = vmatpush2.msra.mxu0 0.0
    %5586 = vmatprep.subr.mxu0 0.0
    %5587 = vmatpush2.msra.mxu0 0.0
    %5588 = vmatprep.subr.mxu0 0.0
    %5589 = vmatpush2.msra.mxu0 0.0
    %5590 = vmatprep.subr.mxu0 0.0
    %5591 = vmatpush2.msra.mxu0 0.0
    %5592 = vmatprep.subr.mxu0 0.0
    %5593 = vmatpush2.msra.mxu0 0.0
    %5594 = vmatprep.subr.mxu0 0.0
    %5595 = vmatpush2.msra.mxu0 0.0
    %5596 = vmatprep.subr.mxu0 0.0
    %5597 = vmatpush2.msra.mxu0 0.0
    %5598 = vmatprep.subr.mxu0 0.0
    %5599 = vmatpush2.msra.mxu0 0.0
    %5600 = vmatprep.subr.mxu0 0.0
    %5601 = vmatpush2.msra.mxu0 0.0
    %5602 = vmatprep.subr.mxu0 0.0
    %5603 = vmatpush2.msra.mxu0 0.0
    %5604 = vmatprep.subr.mxu0 0.0
    %5605 = vmatpush2.msra.mxu0 0.0
    %5606 = vmatprep.mubr.f32.mxu0 0.0
    %5607 = vmatmul.mubr.f32.gmra.mxu0 %v5538
    %v5608 = vpop.f32.mrf.mxu0
    %v5609 = vadd.f32 0.0, %v5608
    %v5610 = vpop.f32.mrf.mxu0
    %5611 = vdwg.mxu0
    %v5612 = vadd.f32 %v5523, %v5609
    %v5613 = vld [vmem:[%s1935] sm:$0xf]
    %v5614 = vld [vmem:[#allocation2] sm:$0xff]
    %5616 = vrot.lane.b32.xlu0 %v5613, 116
    %v5617 = vpop.permute.xlu0 %5616
    %v5619 = vcombine.high %v5614, %v5614
    %5620 = vrot.lane.b32.xlu0 %v5614, 112
    %v5621 = vpop.permute.xlu0 %5620
    %5622 = vrot.lane.b32.xlu0 %v5619, 112
    %v5623 = vpop.permute.xlu0 %5622
    %v5624 = vsel %vm614, %v5621, %v5623
    %v5625 = vsel %vm364, %v5617, 0
    %v5627 = vsel %vm367, %v5624, 0
    %5629 = vmatprep.subr.mxu0 0.0
    %5630 = vmatpush1.msra.mxu0 0.0
    %5631 = vmatprep.subr.mxu0 0.0
    %5632 = vmatpush1.msra.mxu0 0.0
    %5633 = vmatprep.subr.mxu0 0.0
    %5634 = vmatpush1.msra.mxu0 0.0
    %5635 = vmatprep.subr.mxu0 0.0
    %5636 = vmatpush1.msra.mxu0 0.0
    %5637 = vmatprep.subr.mxu0 0.0
    %5638 = vmatpush1.msra.mxu0 0.0
    %5639 = vmatprep.subr.mxu0 0.0
    %5640 = vmatpush1.msra.mxu0 0.0
    %5641 = vmatprep.subr.mxu0 0.0
    %5642 = vmatpush1.msra.mxu0 0.0
    %5643 = vmatprep.subr.mxu0 0.0
    %5644 = vmatpush1.msra.mxu0 0.0
    %5645 = vmatprep.subr.mxu0 0.0
    %5646 = vmatpush1.msra.mxu0 0.0
    %5647 = vmatprep.subr.mxu0 0.0
    %5648 = vmatpush1.msra.mxu0 0.0
    %5649 = vmatprep.subr.mxu0 0.0
    %5650 = vmatpush1.msra.mxu0 0.0
    %5651 = vmatprep.subr.mxu0 0.0
    %5652 = vmatpush1.msra.mxu0 0.0
    %5653 = vmatprep.subr.mxu0 0.0
    %5654 = vmatpush1.msra.mxu0 0.0
    %5655 = vmatprep.subr.mxu0 0.0
    %5656 = vmatpush1.msra.mxu0 0.0
    %5657 = vmatprep.subr.mxu0 0.0
    %5658 = vmatpush1.msra.mxu0 0.0
    %5659 = vmatprep.subr.mxu0 0.0
    %5660 = vmatpush1.msra.mxu0 %v5627
    %5661 = vmatprep.subr.mxu0 0.0
    %5662 = vmatpush2.msra.mxu0 0.0
    %5663 = vmatprep.subr.mxu0 0.0
    %5664 = vmatpush2.msra.mxu0 0.0
    %5665 = vmatprep.subr.mxu0 0.0
    %5666 = vmatpush2.msra.mxu0 0.0
    %5667 = vmatprep.subr.mxu0 0.0
    %5668 = vmatpush2.msra.mxu0 0.0
    %5669 = vmatprep.subr.mxu0 0.0
    %5670 = vmatpush2.msra.mxu0 0.0
    %5671 = vmatprep.subr.mxu0 0.0
    %5672 = vmatpush2.msra.mxu0 0.0
    %5673 = vmatprep.subr.mxu0 0.0
    %5674 = vmatpush2.msra.mxu0 0.0
    %5675 = vmatprep.subr.mxu0 0.0
    %5676 = vmatpush2.msra.mxu0 0.0
    %5677 = vmatprep.subr.mxu0 0.0
    %5678 = vmatpush2.msra.mxu0 0.0
    %5679 = vmatprep.subr.mxu0 0.0
    %5680 = vmatpush2.msra.mxu0 0.0
    %5681 = vmatprep.subr.mxu0 0.0
    %5682 = vmatpush2.msra.mxu0 0.0
    %5683 = vmatprep.subr.mxu0 0.0
    %5684 = vmatpush2.msra.mxu0 0.0
    %5685 = vmatprep.subr.mxu0 0.0
    %5686 = vmatpush2.msra.mxu0 0.0
    %5687 = vmatprep.subr.mxu0 0.0
    %5688 = vmatpush2.msra.mxu0 0.0
    %5689 = vmatprep.subr.mxu0 0.0
    %5690 = vmatpush2.msra.mxu0 0.0
    %5691 = vmatprep.subr.mxu0 0.0
    %5692 = vmatpush2.msra.mxu0 0.0
    %5693 = vmatprep.mubr.f32.mxu0 0.0
    %5694 = vmatmul.mubr.f32.gmra.mxu0 %v5625
    %v5695 = vpop.f32.mrf.mxu0
    %v5696 = vadd.f32 0.0, %v5695
    %v5697 = vpop.f32.mrf.mxu0
    %5698 = vdwg.mxu0
    %v5699 = vadd.f32 %v5612, %v5696
    %v5700 = vld [vmem:[%s1935] sm:$0xf]
    %v5701 = vld [vmem:[#allocation2] sm:$0xff]
    %5703 = vrot.lane.b32.xlu0 %v5700, 112
    %v5704 = vpop.permute.xlu0 %5703
    %v5706 = vcombine.high %v5701, %v5701
    %5707 = vrot.lane.b32.xlu0 %v5701, 111
    %v5708 = vpop.permute.xlu0 %5707
    %5709 = vrot.lane.b32.xlu0 %v5706, 111
    %v5710 = vpop.permute.xlu0 %5709
    %v5711 = vsel %vm702, %v5708, %v5710
    %v5712 = vsel %vm364, %v5704, 0
    %v5714 = vsel %vm367, %v5711, 0
    %5716 = vmatprep.subr.mxu0 0.0
    %5717 = vmatpush1.msra.mxu0 0.0
    %5718 = vmatprep.subr.mxu0 0.0
    %5719 = vmatpush1.msra.mxu0 0.0
    %5720 = vmatprep.subr.mxu0 0.0
    %5721 = vmatpush1.msra.mxu0 0.0
    %5722 = vmatprep.subr.mxu0 0.0
    %5723 = vmatpush1.msra.mxu0 0.0
    %5724 = vmatprep.subr.mxu0 0.0
    %5725 = vmatpush1.msra.mxu0 0.0
    %5726 = vmatprep.subr.mxu0 0.0
    %5727 = vmatpush1.msra.mxu0 0.0
    %5728 = vmatprep.subr.mxu0 0.0
    %5729 = vmatpush1.msra.mxu0 0.0
    %5730 = vmatprep.subr.mxu0 0.0
    %5731 = vmatpush1.msra.mxu0 0.0
    %5732 = vmatprep.subr.mxu0 0.0
    %5733 = vmatpush1.msra.mxu0 0.0
    %5734 = vmatprep.subr.mxu0 0.0
    %5735 = vmatpush1.msra.mxu0 0.0
    %5736 = vmatprep.subr.mxu0 0.0
    %5737 = vmatpush1.msra.mxu0 0.0
    %5738 = vmatprep.subr.mxu0 0.0
    %5739 = vmatpush1.msra.mxu0 0.0
    %5740 = vmatprep.subr.mxu0 0.0
    %5741 = vmatpush1.msra.mxu0 0.0
    %5742 = vmatprep.subr.mxu0 0.0
    %5743 = vmatpush1.msra.mxu0 0.0
    %5744 = vmatprep.subr.mxu0 0.0
    %5745 = vmatpush1.msra.mxu0 0.0
    %5746 = vmatprep.subr.mxu0 0.0
    %5747 = vmatpush1.msra.mxu0 %v5714
    %5748 = vmatprep.subr.mxu0 0.0
    %5749 = vmatpush2.msra.mxu0 0.0
    %5750 = vmatprep.subr.mxu0 0.0
    %5751 = vmatpush2.msra.mxu0 0.0
    %5752 = vmatprep.subr.mxu0 0.0
    %5753 = vmatpush2.msra.mxu0 0.0
    %5754 = vmatprep.subr.mxu0 0.0
    %5755 = vmatpush2.msra.mxu0 0.0
    %5756 = vmatprep.subr.mxu0 0.0
    %5757 = vmatpush2.msra.mxu0 0.0
    %5758 = vmatprep.subr.mxu0 0.0
    %5759 = vmatpush2.msra.mxu0 0.0
    %5760 = vmatprep.subr.mxu0 0.0
    %5761 = vmatpush2.msra.mxu0 0.0
    %5762 = vmatprep.subr.mxu0 0.0
    %5763 = vmatpush2.msra.mxu0 0.0
    %5764 = vmatprep.subr.mxu0 0.0
    %5765 = vmatpush2.msra.mxu0 0.0
    %5766 = vmatprep.subr.mxu0 0.0
    %5767 = vmatpush2.msra.mxu0 0.0
    %5768 = vmatprep.subr.mxu0 0.0
    %5769 = vmatpush2.msra.mxu0 0.0
    %5770 = vmatprep.subr.mxu0 0.0
    %5771 = vmatpush2.msra.mxu0 0.0
    %5772 = vmatprep.subr.mxu0 0.0
    %5773 = vmatpush2.msra.mxu0 0.0
    %5774 = vmatprep.subr.mxu0 0.0
    %5775 = vmatpush2.msra.mxu0 0.0
    %5776 = vmatprep.subr.mxu0 0.0
    %5777 = vmatpush2.msra.mxu0 0.0
    %5778 = vmatprep.subr.mxu0 0.0
    %5779 = vmatpush2.msra.mxu0 0.0
    %5780 = vmatprep.mubr.f32.mxu0 0.0
    %5781 = vmatmul.mubr.f32.gmra.mxu0 %v5712
    %v5782 = vpop.f32.mrf.mxu0
    %v5783 = vadd.f32 0.0, %v5782
    %v5784 = vpop.f32.mrf.mxu0
    %5785 = vdwg.mxu0
    %v5786 = vadd.f32 %v5699, %v5783
    %v5787 = vld [vmem:[%s1935] sm:$0xf]
    %v5788 = vld [vmem:[#allocation2] sm:$0xff]
    %5790 = vrot.lane.b32.xlu0 %v5787, 108
    %v5791 = vpop.permute.xlu0 %5790
    %v5793 = vcombine.high %v5788, %v5788
    %5794 = vrot.lane.b32.xlu0 %v5788, 110
    %v5795 = vpop.permute.xlu0 %5794
    %5796 = vrot.lane.b32.xlu0 %v5793, 110
    %v5797 = vpop.permute.xlu0 %5796
    %v5798 = vsel %vm790, %v5795, %v5797
    %v5799 = vsel %vm364, %v5791, 0
    %v5801 = vsel %vm367, %v5798, 0
    %5803 = vmatprep.subr.mxu0 0.0
    %5804 = vmatpush1.msra.mxu0 0.0
    %5805 = vmatprep.subr.mxu0 0.0
    %5806 = vmatpush1.msra.mxu0 0.0
    %5807 = vmatprep.subr.mxu0 0.0
    %5808 = vmatpush1.msra.mxu0 0.0
    %5809 = vmatprep.subr.mxu0 0.0
    %5810 = vmatpush1.msra.mxu0 0.0
    %5811 = vmatprep.subr.mxu0 0.0
    %5812 = vmatpush1.msra.mxu0 0.0
    %5813 = vmatprep.subr.mxu0 0.0
    %5814 = vmatpush1.msra.mxu0 0.0
    %5815 = vmatprep.subr.mxu0 0.0
    %5816 = vmatpush1.msra.mxu0 0.0
    %5817 = vmatprep.subr.mxu0 0.0
    %5818 = vmatpush1.msra.mxu0 0.0
    %5819 = vmatprep.subr.mxu0 0.0
    %5820 = vmatpush1.msra.mxu0 0.0
    %5821 = vmatprep.subr.mxu0 0.0
    %5822 = vmatpush1.msra.mxu0 0.0
    %5823 = vmatprep.subr.mxu0 0.0
    %5824 = vmatpush1.msra.mxu0 0.0
    %5825 = vmatprep.subr.mxu0 0.0
    %5826 = vmatpush1.msra.mxu0 0.0
    %5827 = vmatprep.subr.mxu0 0.0
    %5828 = vmatpush1.msra.mxu0 0.0
    %5829 = vmatprep.subr.mxu0 0.0
    %5830 = vmatpush1.msra.mxu0 0.0
    %5831 = vmatprep.subr.mxu0 0.0
    %5832 = vmatpush1.msra.mxu0 0.0
    %5833 = vmatprep.subr.mxu0 0.0
    %5834 = vmatpush1.msra.mxu0 %v5801
    %5835 = vmatprep.subr.mxu0 0.0
    %5836 = vmatpush2.msra.mxu0 0.0
    %5837 = vmatprep.subr.mxu0 0.0
    %5838 = vmatpush2.msra.mxu0 0.0
    %5839 = vmatprep.subr.mxu0 0.0
    %5840 = vmatpush2.msra.mxu0 0.0
    %5841 = vmatprep.subr.mxu0 0.0
    %5842 = vmatpush2.msra.mxu0 0.0
    %5843 = vmatprep.subr.mxu0 0.0
    %5844 = vmatpush2.msra.mxu0 0.0
    %5845 = vmatprep.subr.mxu0 0.0
    %5846 = vmatpush2.msra.mxu0 0.0
    %5847 = vmatprep.subr.mxu0 0.0
    %5848 = vmatpush2.msra.mxu0 0.0
    %5849 = vmatprep.subr.mxu0 0.0
    %5850 = vmatpush2.msra.mxu0 0.0
    %5851 = vmatprep.subr.mxu0 0.0
    %5852 = vmatpush2.msra.mxu0 0.0
    %5853 = vmatprep.subr.mxu0 0.0
    %5854 = vmatpush2.msra.mxu0 0.0
    %5855 = vmatprep.subr.mxu0 0.0
    %5856 = vmatpush2.msra.mxu0 0.0
    %5857 = vmatprep.subr.mxu0 0.0
    %5858 = vmatpush2.msra.mxu0 0.0
    %5859 = vmatprep.subr.mxu0 0.0
    %5860 = vmatpush2.msra.mxu0 0.0
    %5861 = vmatprep.subr.mxu0 0.0
    %5862 = vmatpush2.msra.mxu0 0.0
    %5863 = vmatprep.subr.mxu0 0.0
    %5864 = vmatpush2.msra.mxu0 0.0
    %5865 = vmatprep.subr.mxu0 0.0
    %5866 = vmatpush2.msra.mxu0 0.0
    %5867 = vmatprep.mubr.f32.mxu0 0.0
    %5868 = vmatmul.mubr.f32.gmra.mxu0 %v5799
    %v5869 = vpop.f32.mrf.mxu0
    %v5870 = vadd.f32 0.0, %v5869
    %v5871 = vpop.f32.mrf.mxu0
    %5872 = vdwg.mxu0
    %v5873 = vadd.f32 %v5786, %v5870
    %v5874 = vld [vmem:[%s1935] sm:$0xf]
    %v5875 = vld [vmem:[#allocation2] sm:$0xff]
    %5877 = vrot.lane.b32.xlu0 %v5874, 104
    %v5878 = vpop.permute.xlu0 %5877
    %v5880 = vcombine.high %v5875, %v5875
    %5881 = vrot.lane.b32.xlu0 %v5875, 96
    %v5882 = vpop.permute.xlu0 %5881
    %5883 = vrot.lane.b32.xlu0 %v5880, 96
    %v5884 = vpop.permute.xlu0 %5883
    %v5885 = vsel %vm878, %v5882, %v5884
    %v5886 = vsel %vm364, %v5878, 0
    %v5888 = vsel %vm367, %v5885, 0
    %5890 = vmatprep.subr.mxu0 0.0
    %5891 = vmatpush1.msra.mxu0 0.0
    %5892 = vmatprep.subr.mxu0 0.0
    %5893 = vmatpush1.msra.mxu0 0.0
    %5894 = vmatprep.subr.mxu0 0.0
    %5895 = vmatpush1.msra.mxu0 0.0
    %5896 = vmatprep.subr.mxu0 0.0
    %5897 = vmatpush1.msra.mxu0 0.0
    %5898 = vmatprep.subr.mxu0 0.0
    %5899 = vmatpush1.msra.mxu0 0.0
    %5900 = vmatprep.subr.mxu0 0.0
    %5901 = vmatpush1.msra.mxu0 0.0
    %5902 = vmatprep.subr.mxu0 0.0
    %5903 = vmatpush1.msra.mxu0 0.0
    %5904 = vmatprep.subr.mxu0 0.0
    %5905 = vmatpush1.msra.mxu0 0.0
    %5906 = vmatprep.subr.mxu0 0.0
    %5907 = vmatpush1.msra.mxu0 0.0
    %5908 = vmatprep.subr.mxu0 0.0
    %5909 = vmatpush1.msra.mxu0 0.0
    %5910 = vmatprep.subr.mxu0 0.0
    %5911 = vmatpush1.msra.mxu0 0.0
    %5912 = vmatprep.subr.mxu0 0.0
    %5913 = vmatpush1.msra.mxu0 0.0
    %5914 = vmatprep.subr.mxu0 0.0
    %5915 = vmatpush1.msra.mxu0 0.0
    %5916 = vmatprep.subr.mxu0 0.0
    %5917 = vmatpush1.msra.mxu0 0.0
    %5918 = vmatprep.subr.mxu0 0.0
    %5919 = vmatpush1.msra.mxu0 0.0
    %5920 = vmatprep.subr.mxu0 0.0
    %5921 = vmatpush1.msra.mxu0 %v5888
    %5922 = vmatprep.subr.mxu0 0.0
    %5923 = vmatpush2.msra.mxu0 0.0
    %5924 = vmatprep.subr.mxu0 0.0
    %5925 = vmatpush2.msra.mxu0 0.0
    %5926 = vmatprep.subr.mxu0 0.0
    %5927 = vmatpush2.msra.mxu0 0.0
    %5928 = vmatprep.subr.mxu0 0.0
    %5929 = vmatpush2.msra.mxu0 0.0
    %5930 = vmatprep.subr.mxu0 0.0
    %5931 = vmatpush2.msra.mxu0 0.0
    %5932 = vmatprep.subr.mxu0 0.0
    %5933 = vmatpush2.msra.mxu0 0.0
    %5934 = vmatprep.subr.mxu0 0.0
    %5935 = vmatpush2.msra.mxu0 0.0
    %5936 = vmatprep.subr.mxu0 0.0
    %5937 = vmatpush2.msra.mxu0 0.0
    %5938 = vmatprep.subr.mxu0 0.0
    %5939 = vmatpush2.msra.mxu0 0.0
    %5940 = vmatprep.subr.mxu0 0.0
    %5941 = vmatpush2.msra.mxu0 0.0
    %5942 = vmatprep.subr.mxu0 0.0
    %5943 = vmatpush2.msra.mxu0 0.0
    %5944 = vmatprep.subr.mxu0 0.0
    %5945 = vmatpush2.msra.mxu0 0.0
    %5946 = vmatprep.subr.mxu0 0.0
    %5947 = vmatpush2.msra.mxu0 0.0
    %5948 = vmatprep.subr.mxu0 0.0
    %5949 = vmatpush2.msra.mxu0 0.0
    %5950 = vmatprep.subr.mxu0 0.0
    %5951 = vmatpush2.msra.mxu0 0.0
    %5952 = vmatprep.subr.mxu0 0.0
    %5953 = vmatpush2.msra.mxu0 0.0
    %5954 = vmatprep.mubr.f32.mxu0 0.0
    %5955 = vmatmul.mubr.f32.gmra.mxu0 %v5886
    %v5956 = vpop.f32.mrf.mxu0
    %v5957 = vadd.f32 0.0, %v5956
    %v5958 = vpop.f32.mrf.mxu0
    %5959 = vdwg.mxu0
    %v5960 = vadd.f32 %v5873, %v5957
    %v5961 = vld [vmem:[%s1935] sm:$0xf]
    %v5962 = vld [vmem:[#allocation2] sm:$0xff]
    %5964 = vrot.lane.b32.xlu0 %v5961, 100
    %v5965 = vpop.permute.xlu0 %5964
    %v5967 = vcombine.high %v5962, %v5962
    %5968 = vrot.lane.b32.xlu0 %v5962, 95
    %v5969 = vpop.permute.xlu0 %5968
    %5970 = vrot.lane.b32.xlu0 %v5967, 95
    %v5971 = vpop.permute.xlu0 %5970
    %v5972 = vsel %vm966, %v5969, %v5971
    %v5973 = vsel %vm364, %v5965, 0
    %v5975 = vsel %vm367, %v5972, 0
    %5977 = vmatprep.subr.mxu0 0.0
    %5978 = vmatpush1.msra.mxu0 0.0
    %5979 = vmatprep.subr.mxu0 0.0
    %5980 = vmatpush1.msra.mxu0 0.0
    %5981 = vmatprep.subr.mxu0 0.0
    %5982 = vmatpush1.msra.mxu0 0.0
    %5983 = vmatprep.subr.mxu0 0.0
    %5984 = vmatpush1.msra.mxu0 0.0
    %5985 = vmatprep.subr.mxu0 0.0
    %5986 = vmatpush1.msra.mxu0 0.0
    %5987 = vmatprep.subr.mxu0 0.0
    %5988 = vmatpush1.msra.mxu0 0.0
    %5989 = vmatprep.subr.mxu0 0.0
    %5990 = vmatpush1.msra.mxu0 0.0
    %5991 = vmatprep.subr.mxu0 0.0
    %5992 = vmatpush1.msra.mxu0 0.0
    %5993 = vmatprep.subr.mxu0 0.0
    %5994 = vmatpush1.msra.mxu0 0.0
    %5995 = vmatprep.subr.mxu0 0.0
    %5996 = vmatpush1.msra.mxu0 0.0
    %5997 = vmatprep.subr.mxu0 0.0
    %5998 = vmatpush1.msra.mxu0 0.0
    %5999 = vmatprep.subr.mxu0 0.0
    %6000 = vmatpush1.msra.mxu0 0.0
    %6001 = vmatprep.subr.mxu0 0.0
    %6002 = vmatpush1.msra.mxu0 0.0
    %6003 = vmatprep.subr.mxu0 0.0
    %6004 = vmatpush1.msra.mxu0 0.0
    %6005 = vmatprep.subr.mxu0 0.0
    %6006 = vmatpush1.msra.mxu0 0.0
    %6007 = vmatprep.subr.mxu0 0.0
    %6008 = vmatpush1.msra.mxu0 %v5975
    %6009 = vmatprep.subr.mxu0 0.0
    %6010 = vmatpush2.msra.mxu0 0.0
    %6011 = vmatprep.subr.mxu0 0.0
    %6012 = vmatpush2.msra.mxu0 0.0
    %6013 = vmatprep.subr.mxu0 0.0
    %6014 = vmatpush2.msra.mxu0 0.0
    %6015 = vmatprep.subr.mxu0 0.0
    %6016 = vmatpush2.msra.mxu0 0.0
    %6017 = vmatprep.subr.mxu0 0.0
    %6018 = vmatpush2.msra.mxu0 0.0
    %6019 = vmatprep.subr.mxu0 0.0
    %6020 = vmatpush2.msra.mxu0 0.0
    %6021 = vmatprep.subr.mxu0 0.0
    %6022 = vmatpush2.msra.mxu0 0.0
    %6023 = vmatprep.subr.mxu0 0.0
    %6024 = vmatpush2.msra.mxu0 0.0
    %6025 = vmatprep.subr.mxu0 0.0
    %6026 = vmatpush2.msra.mxu0 0.0
    %6027 = vmatprep.subr.mxu0 0.0
    %6028 = vmatpush2.msra.mxu0 0.0
    %6029 = vmatprep.subr.mxu0 0.0
    %6030 = vmatpush2.msra.mxu0 0.0
    %6031 = vmatprep.subr.mxu0 0.0
    %6032 = vmatpush2.msra.mxu0 0.0
    %6033 = vmatprep.subr.mxu0 0.0
    %6034 = vmatpush2.msra.mxu0 0.0
    %6035 = vmatprep.subr.mxu0 0.0
    %6036 = vmatpush2.msra.mxu0 0.0
    %6037 = vmatprep.subr.mxu0 0.0
    %6038 = vmatpush2.msra.mxu0 0.0
    %6039 = vmatprep.subr.mxu0 0.0
    %6040 = vmatpush2.msra.mxu0 0.0
    %6041 = vmatprep.mubr.f32.mxu0 0.0
    %6042 = vmatmul.mubr.f32.gmra.mxu0 %v5973
    %v6043 = vpop.f32.mrf.mxu0
    %v6044 = vadd.f32 0.0, %v6043
    %v6045 = vpop.f32.mrf.mxu0
    %6046 = vdwg.mxu0
    %v6047 = vadd.f32 %v5960, %v6044
    %v6048 = vld [vmem:[%s1935] sm:$0xf]
    %v6049 = vld [vmem:[#allocation2] sm:$0xff]
    %6051 = vrot.lane.b32.xlu0 %v6048, 96
    %v6052 = vpop.permute.xlu0 %6051
    %v6054 = vcombine.high %v6049, %v6049
    %6055 = vrot.lane.b32.xlu0 %v6049, 94
    %v6056 = vpop.permute.xlu0 %6055
    %6057 = vrot.lane.b32.xlu0 %v6054, 94
    %v6058 = vpop.permute.xlu0 %6057
    %v6059 = vsel %vm1054, %v6056, %v6058
    %v6060 = vsel %vm364, %v6052, 0
    %v6062 = vsel %vm367, %v6059, 0
    %6064 = vmatprep.subr.mxu0 0.0
    %6065 = vmatpush1.msra.mxu0 0.0
    %6066 = vmatprep.subr.mxu0 0.0
    %6067 = vmatpush1.msra.mxu0 0.0
    %6068 = vmatprep.subr.mxu0 0.0
    %6069 = vmatpush1.msra.mxu0 0.0
    %6070 = vmatprep.subr.mxu0 0.0
    %6071 = vmatpush1.msra.mxu0 0.0
    %6072 = vmatprep.subr.mxu0 0.0
    %6073 = vmatpush1.msra.mxu0 0.0
    %6074 = vmatprep.subr.mxu0 0.0
    %6075 = vmatpush1.msra.mxu0 0.0
    %6076 = vmatprep.subr.mxu0 0.0
    %6077 = vmatpush1.msra.mxu0 0.0
    %6078 = vmatprep.subr.mxu0 0.0
    %6079 = vmatpush1.msra.mxu0 0.0
    %6080 = vmatprep.subr.mxu0 0.0
    %6081 = vmatpush1.msra.mxu0 0.0
    %6082 = vmatprep.subr.mxu0 0.0
    %6083 = vmatpush1.msra.mxu0 0.0
    %6084 = vmatprep.subr.mxu0 0.0
    %6085 = vmatpush1.msra.mxu0 0.0
    %6086 = vmatprep.subr.mxu0 0.0
    %6087 = vmatpush1.msra.mxu0 0.0
    %6088 = vmatprep.subr.mxu0 0.0
    %6089 = vmatpush1.msra.mxu0 0.0
    %6090 = vmatprep.subr.mxu0 0.0
    %6091 = vmatpush1.msra.mxu0 0.0
    %6092 = vmatprep.subr.mxu0 0.0
    %6093 = vmatpush1.msra.mxu0 0.0
    %6094 = vmatprep.subr.mxu0 0.0
    %6095 = vmatpush1.msra.mxu0 %v6062
    %6096 = vmatprep.subr.mxu0 0.0
    %6097 = vmatpush2.msra.mxu0 0.0
    %6098 = vmatprep.subr.mxu0 0.0
    %6099 = vmatpush2.msra.mxu0 0.0
    %6100 = vmatprep.subr.mxu0 0.0
    %6101 = vmatpush2.msra.mxu0 0.0
    %6102 = vmatprep.subr.mxu0 0.0
    %6103 = vmatpush2.msra.mxu0 0.0
    %6104 = vmatprep.subr.mxu0 0.0
    %6105 = vmatpush2.msra.mxu0 0.0
    %6106 = vmatprep.subr.mxu0 0.0
    %6107 = vmatpush2.msra.mxu0 0.0
    %6108 = vmatprep.subr.mxu0 0.0
    %6109 = vmatpush2.msra.mxu0 0.0
    %6110 = vmatprep.subr.mxu0 0.0
    %6111 = vmatpush2.msra.mxu0 0.0
    %6112 = vmatprep.subr.mxu0 0.0
    %6113 = vmatpush2.msra.mxu0 0.0
    %6114 = vmatprep.subr.mxu0 0.0
    %6115 = vmatpush2.msra.mxu0 0.0
    %6116 = vmatprep.subr.mxu0 0.0
    %6117 = vmatpush2.msra.mxu0 0.0
    %6118 = vmatprep.subr.mxu0 0.0
    %6119 = vmatpush2.msra.mxu0 0.0
    %6120 = vmatprep.subr.mxu0 0.0
    %6121 = vmatpush2.msra.mxu0 0.0
    %6122 = vmatprep.subr.mxu0 0.0
    %6123 = vmatpush2.msra.mxu0 0.0
    %6124 = vmatprep.subr.mxu0 0.0
    %6125 = vmatpush2.msra.mxu0 0.0
    %6126 = vmatprep.subr.mxu0 0.0
    %6127 = vmatpush2.msra.mxu0 0.0
    %6128 = vmatprep.mubr.f32.mxu0 0.0
    %6129 = vmatmul.mubr.f32.gmra.mxu0 %v6060
    %v6130 = vpop.f32.mrf.mxu0
    %v6131 = vadd.f32 0.0, %v6130
    %v6132 = vpop.f32.mrf.mxu0
    %6133 = vdwg.mxu0
    %v6134 = vadd.f32 %v6047, %v6131
    %v6135 = vld [vmem:[%s1935] sm:$0xf]
    %6137 = vset.pattern.permute.xlu0 36
    %6138 = vperm.xlu0 %6137, %v6135
    %v6139 = vpop.permute.xlu0 %6138
    %v6141 = vadd.f32 %v6134, %v6139
    %v6142 = vmax.f32 %v6141, 0.0
    %v6143 = vsel %vm59, %v6142, 0.0
    %6145 = vrot.lane.b32.xlu0 %v6143, 17
    %v6146 = vpop.permute.xlu0 %6145
    %v6147 = vrot.slane %v6146, 4
    %v6148 = vsel %vm343, %v6147, %v6146
    %6150 = vst.msk [vmem:[#allocation2] sm:$0xff] %vm348, %v6148
    %v6151 = vld [vmem:[%s2723] sm:$0xf]
    %v6152 = vld [vmem:[#allocation2] sm:$0xf]
    %v6153 = vld [vmem:[#allocation2] sm:$0xff]
    %6155 = vrot.lane.b32.xlu0 %v6151, 124
    %v6156 = vpop.permute.xlu0 %6155
    %v6158 = vcombine.high %v6153, %v6153
    %6159 = vrot.lane.b32.xlu0 %v6153, 127
    %v6160 = vpop.permute.xlu0 %6159
    %6161 = vrot.lane.b32.xlu0 %v6158, 127
    %v6162 = vpop.permute.xlu0 %6161
    %v6163 = vsel %vm362, %v6160, %v6162
    %v6164 = vsel %vm364, %v6156, 0
    %v6166 = vsel %vm367, %v6163, 0
    %6168 = vmatprep.subr.mxu0 0.0
    %6169 = vmatpush1.msra.mxu0 0.0
    %6170 = vmatprep.subr.mxu0 0.0
    %6171 = vmatpush1.msra.mxu0 0.0
    %6172 = vmatprep.subr.mxu0 0.0
    %6173 = vmatpush1.msra.mxu0 0.0
    %6174 = vmatprep.subr.mxu0 0.0
    %6175 = vmatpush1.msra.mxu0 0.0
    %6176 = vmatprep.subr.mxu0 0.0
    %6177 = vmatpush1.msra.mxu0 0.0
    %6178 = vmatprep.subr.mxu0 0.0
    %6179 = vmatpush1.msra.mxu0 0.0
    %6180 = vmatprep.subr.mxu0 0.0
    %6181 = vmatpush1.msra.mxu0 0.0
    %6182 = vmatprep.subr.mxu0 0.0
    %6183 = vmatpush1.msra.mxu0 0.0
    %6184 = vmatprep.subr.mxu0 0.0
    %6185 = vmatpush1.msra.mxu0 0.0
    %6186 = vmatprep.subr.mxu0 0.0
    %6187 = vmatpush1.msra.mxu0 0.0
    %6188 = vmatprep.subr.mxu0 0.0
    %6189 = vmatpush1.msra.mxu0 0.0
    %6190 = vmatprep.subr.mxu0 0.0
    %6191 = vmatpush1.msra.mxu0 0.0
    %6192 = vmatprep.subr.mxu0 0.0
    %6193 = vmatpush1.msra.mxu0 0.0
    %6194 = vmatprep.subr.mxu0 0.0
    %6195 = vmatpush1.msra.mxu0 0.0
    %6196 = vmatprep.subr.mxu0 0.0
    %6197 = vmatpush1.msra.mxu0 0.0
    %6198 = vmatprep.subr.mxu0 0.0
    %6199 = vmatpush1.msra.mxu0 %v6166
    %6200 = vmatprep.subr.mxu0 0.0
    %6201 = vmatpush2.msra.mxu0 0.0
    %6202 = vmatprep.subr.mxu0 0.0
    %6203 = vmatpush2.msra.mxu0 0.0
    %6204 = vmatprep.subr.mxu0 0.0
    %6205 = vmatpush2.msra.mxu0 0.0
    %6206 = vmatprep.subr.mxu0 0.0
    %6207 = vmatpush2.msra.mxu0 0.0
    %6208 = vmatprep.subr.mxu0 0.0
    %6209 = vmatpush2.msra.mxu0 0.0
    %6210 = vmatprep.subr.mxu0 0.0
    %6211 = vmatpush2.msra.mxu0 0.0
    %6212 = vmatprep.subr.mxu0 0.0
    %6213 = vmatpush2.msra.mxu0 0.0
    %6214 = vmatprep.subr.mxu0 0.0
    %6215 = vmatpush2.msra.mxu0 0.0
    %6216 = vmatprep.subr.mxu0 0.0
    %6217 = vmatpush2.msra.mxu0 0.0
    %6218 = vmatprep.subr.mxu0 0.0
    %6219 = vmatpush2.msra.mxu0 0.0
    %6220 = vmatprep.subr.mxu0 0.0
    %6221 = vmatpush2.msra.mxu0 0.0
    %6222 = vmatprep.subr.mxu0 0.0
    %6223 = vmatpush2.msra.mxu0 0.0
    %6224 = vmatprep.subr.mxu0 0.0
    %6225 = vmatpush2.msra.mxu0 0.0
    %6226 = vmatprep.subr.mxu0 0.0
    %6227 = vmatpush2.msra.mxu0 0.0
    %6228 = vmatprep.subr.mxu0 0.0
    %6229 = vmatpush2.msra.mxu0 0.0
    %6230 = vmatprep.subr.mxu0 0.0
    %6231 = vmatpush2.msra.mxu0 0.0
    %6232 = vmatprep.mubr.f32.mxu0 0.0
    %6233 = vmatmul.mubr.f32.gmra.mxu0 %v6164
    %v6234 = vpop.f32.mrf.mxu0
    %v6235 = vadd.f32 0.0, %v6234
    %v6236 = vpop.f32.mrf.mxu0
    %6237 = vdwg.mxu0
    %v6238 = vsel %vm364, %v6151, 0
    %v6241 = vsel %vm367, %v6152, 0
    %6243 = vmatprep.subr.mxu0 0.0
    %6244 = vmatpush1.msra.mxu0 0.0
    %6245 = vmatprep.subr.mxu0 0.0
    %6246 = vmatpush1.msra.mxu0 0.0
    %6247 = vmatprep.subr.mxu0 0.0
    %6248 = vmatpush1.msra.mxu0 0.0
    %6249 = vmatprep.subr.mxu0 0.0
    %6250 = vmatpush1.msra.mxu0 0.0
    %6251 = vmatprep.subr.mxu0 0.0
    %6252 = vmatpush1.msra.mxu0 0.0
    %6253 = vmatprep.subr.mxu0 0.0
    %6254 = vmatpush1.msra.mxu0 0.0
    %6255 = vmatprep.subr.mxu0 0.0
    %6256 = vmatpush1.msra.mxu0 0.0
    %6257 = vmatprep.subr.mxu0 0.0
    %6258 = vmatpush1.msra.mxu0 0.0
    %6259 = vmatprep.subr.mxu0 0.0
    %6260 = vmatpush1.msra.mxu0 0.0
    %6261 = vmatprep.subr.mxu0 0.0
    %6262 = vmatpush1.msra.mxu0 0.0
    %6263 = vmatprep.subr.mxu0 0.0
    %6264 = vmatpush1.msra.mxu0 0.0
    %6265 = vmatprep.subr.mxu0 0.0
    %6266 = vmatpush1.msra.mxu0 0.0
    %6267 = vmatprep.subr.mxu0 0.0
    %6268 = vmatpush1.msra.mxu0 0.0
    %6269 = vmatprep.subr.mxu0 0.0
    %6270 = vmatpush1.msra.mxu0 0.0
    %6271 = vmatprep.subr.mxu0 0.0
    %6272 = vmatpush1.msra.mxu0 0.0
    %6273 = vmatprep.subr.mxu0 0.0
    %6274 = vmatpush1.msra.mxu0 %v6241
    %6275 = vmatprep.subr.mxu0 0.0
    %6276 = vmatpush2.msra.mxu0 0.0
    %6277 = vmatprep.subr.mxu0 0.0
    %6278 = vmatpush2.msra.mxu0 0.0
    %6279 = vmatprep.subr.mxu0 0.0
    %6280 = vmatpush2.msra.mxu0 0.0
    %6281 = vmatprep.subr.mxu0 0.0
    %6282 = vmatpush2.msra.mxu0 0.0
    %6283 = vmatprep.subr.mxu0 0.0
    %6284 = vmatpush2.msra.mxu0 0.0
    %6285 = vmatprep.subr.mxu0 0.0
    %6286 = vmatpush2.msra.mxu0 0.0
    %6287 = vmatprep.subr.mxu0 0.0
    %6288 = vmatpush2.msra.mxu0 0.0
    %6289 = vmatprep.subr.mxu0 0.0
    %6290 = vmatpush2.msra.mxu0 0.0
    %6291 = vmatprep.subr.mxu0 0.0
    %6292 = vmatpush2.msra.mxu0 0.0
    %6293 = vmatprep.subr.mxu0 0.0
    %6294 = vmatpush2.msra.mxu0 0.0
    %6295 = vmatprep.subr.mxu0 0.0
    %6296 = vmatpush2.msra.mxu0 0.0
    %6297 = vmatprep.subr.mxu0 0.0
    %6298 = vmatpush2.msra.mxu0 0.0
    %6299 = vmatprep.subr.mxu0 0.0
    %6300 = vmatpush2.msra.mxu0 0.0
    %6301 = vmatprep.subr.mxu0 0.0
    %6302 = vmatpush2.msra.mxu0 0.0
    %6303 = vmatprep.subr.mxu0 0.0
    %6304 = vmatpush2.msra.mxu0 0.0
    %6305 = vmatprep.subr.mxu0 0.0
    %6306 = vmatpush2.msra.mxu0 0.0
    %6307 = vmatprep.mubr.f32.mxu0 0.0
    %6308 = vmatmul.mubr.f32.gmra.mxu0 %v6238
    %v6309 = vpop.f32.mrf.mxu0
    %v6310 = vadd.f32 %v6235, %v6309
    %v6311 = vpop.f32.mrf.mxu0
    %6312 = vdwg.mxu0
    %v6313 = vld [vmem:[%s2723] sm:$0xf]
    %v6314 = vld [vmem:[#allocation2] sm:$0xff]
    %6316 = vrot.lane.b32.xlu0 %v6313, 120
    %v6317 = vpop.permute.xlu0 %6316
    %v6319 = vcombine.high %v6314, %v6314
    %6320 = vrot.lane.b32.xlu0 %v6314, 126
    %v6321 = vpop.permute.xlu0 %6320
    %6322 = vrot.lane.b32.xlu0 %v6319, 126
    %v6323 = vpop.permute.xlu0 %6322
    %v6324 = vsel %vm526, %v6321, %v6323
    %v6325 = vsel %vm364, %v6317, 0
    %v6327 = vsel %vm367, %v6324, 0
    %6329 = vmatprep.subr.mxu0 0.0
    %6330 = vmatpush1.msra.mxu0 0.0
    %6331 = vmatprep.subr.mxu0 0.0
    %6332 = vmatpush1.msra.mxu0 0.0
    %6333 = vmatprep.subr.mxu0 0.0
    %6334 = vmatpush1.msra.mxu0 0.0
    %6335 = vmatprep.subr.mxu0 0.0
    %6336 = vmatpush1.msra.mxu0 0.0
    %6337 = vmatprep.subr.mxu0 0.0
    %6338 = vmatpush1.msra.mxu0 0.0
    %6339 = vmatprep.subr.mxu0 0.0
    %6340 = vmatpush1.msra.mxu0 0.0
    %6341 = vmatprep.subr.mxu0 0.0
    %6342 = vmatpush1.msra.mxu0 0.0
    %6343 = vmatprep.subr.mxu0 0.0
    %6344 = vmatpush1.msra.mxu0 0.0
    %6345 = vmatprep.subr.mxu0 0.0
    %6346 = vmatpush1.msra.mxu0 0.0
    %6347 = vmatprep.subr.mxu0 0.0
    %6348 = vmatpush1.msra.mxu0 0.0
    %6349 = vmatprep.subr.mxu0 0.0
    %6350 = vmatpush1.msra.mxu0 0.0
    %6351 = vmatprep.subr.mxu0 0.0
    %6352 = vmatpush1.msra.mxu0 0.0
    %6353 = vmatprep.subr.mxu0 0.0
    %6354 = vmatpush1.msra.mxu0 0.0
    %6355 = vmatprep.subr.mxu0 0.0
    %6356 = vmatpush1.msra.mxu0 0.0
    %6357 = vmatprep.subr.mxu0 0.0
    %6358 = vmatpush1.msra.mxu0 0.0
    %6359 = vmatprep.subr.mxu0 0.0
    %6360 = vmatpush1.msra.mxu0 %v6327
    %6361 = vmatprep.subr.mxu0 0.0
    %6362 = vmatpush2.msra.mxu0 0.0
    %6363 = vmatprep.subr.mxu0 0.0
    %6364 = vmatpush2.msra.mxu0 0.0
    %6365 = vmatprep.subr.mxu0 0.0
    %6366 = vmatpush2.msra.mxu0 0.0
    %6367 = vmatprep.subr.mxu0 0.0
    %6368 = vmatpush2.msra.mxu0 0.0
    %6369 = vmatprep.subr.mxu0 0.0
    %6370 = vmatpush2.msra.mxu0 0.0
    %6371 = vmatprep.subr.mxu0 0.0
    %6372 = vmatpush2.msra.mxu0 0.0
    %6373 = vmatprep.subr.mxu0 0.0
    %6374 = vmatpush2.msra.mxu0 0.0
    %6375 = vmatprep.subr.mxu0 0.0
    %6376 = vmatpush2.msra.mxu0 0.0
    %6377 = vmatprep.subr.mxu0 0.0
    %6378 = vmatpush2.msra.mxu0 0.0
    %6379 = vmatprep.subr.mxu0 0.0
    %6380 = vmatpush2.msra.mxu0 0.0
    %6381 = vmatprep.subr.mxu0 0.0
    %6382 = vmatpush2.msra.mxu0 0.0
    %6383 = vmatprep.subr.mxu0 0.0
    %6384 = vmatpush2.msra.mxu0 0.0
    %6385 = vmatprep.subr.mxu0 0.0
    %6386 = vmatpush2.msra.mxu0 0.0
    %6387 = vmatprep.subr.mxu0 0.0
    %6388 = vmatpush2.msra.mxu0 0.0
    %6389 = vmatprep.subr.mxu0 0.0
    %6390 = vmatpush2.msra.mxu0 0.0
    %6391 = vmatprep.subr.mxu0 0.0
    %6392 = vmatpush2.msra.mxu0 0.0
    %6393 = vmatprep.mubr.f32.mxu0 0.0
    %6394 = vmatmul.mubr.f32.gmra.mxu0 %v6325
    %v6395 = vpop.f32.mrf.mxu0
    %v6396 = vadd.f32 0.0, %v6395
    %v6397 = vpop.f32.mrf.mxu0
    %6398 = vdwg.mxu0
    %v6399 = vadd.f32 %v6310, %v6396
    %v6400 = vld [vmem:[%s2723] sm:$0xf]
    %v6401 = vld [vmem:[#allocation2] sm:$0xff]
    %6403 = vrot.lane.b32.xlu0 %v6400, 116
    %v6404 = vpop.permute.xlu0 %6403
    %v6406 = vcombine.high %v6401, %v6401
    %6407 = vrot.lane.b32.xlu0 %v6401, 112
    %v6408 = vpop.permute.xlu0 %6407
    %6409 = vrot.lane.b32.xlu0 %v6406, 112
    %v6410 = vpop.permute.xlu0 %6409
    %v6411 = vsel %vm614, %v6408, %v6410
    %v6412 = vsel %vm364, %v6404, 0
    %v6414 = vsel %vm367, %v6411, 0
    %6416 = vmatprep.subr.mxu0 0.0
    %6417 = vmatpush1.msra.mxu0 0.0
    %6418 = vmatprep.subr.mxu0 0.0
    %6419 = vmatpush1.msra.mxu0 0.0
    %6420 = vmatprep.subr.mxu0 0.0
    %6421 = vmatpush1.msra.mxu0 0.0
    %6422 = vmatprep.subr.mxu0 0.0
    %6423 = vmatpush1.msra.mxu0 0.0
    %6424 = vmatprep.subr.mxu0 0.0
    %6425 = vmatpush1.msra.mxu0 0.0
    %6426 = vmatprep.subr.mxu0 0.0
    %6427 = vmatpush1.msra.mxu0 0.0
    %6428 = vmatprep.subr.mxu0 0.0
    %6429 = vmatpush1.msra.mxu0 0.0
    %6430 = vmatprep.subr.mxu0 0.0
    %6431 = vmatpush1.msra.mxu0 0.0
    %6432 = vmatprep.subr.mxu0 0.0
    %6433 = vmatpush1.msra.mxu0 0.0
    %6434 = vmatprep.subr.mxu0 0.0
    %6435 = vmatpush1.msra.mxu0 0.0
    %6436 = vmatprep.subr.mxu0 0.0
    %6437 = vmatpush1.msra.mxu0 0.0
    %6438 = vmatprep.subr.mxu0 0.0
    %6439 = vmatpush1.msra.mxu0 0.0
    %6440 = vmatprep.subr.mxu0 0.0
    %6441 = vmatpush1.msra.mxu0 0.0
    %6442 = vmatprep.subr.mxu0 0.0
    %6443 = vmatpush1.msra.mxu0 0.0
    %6444 = vmatprep.subr.mxu0 0.0
    %6445 = vmatpush1.msra.mxu0 0.0
    %6446 = vmatprep.subr.mxu0 0.0
    %6447 = vmatpush1.msra.mxu0 %v6414
    %6448 = vmatprep.subr.mxu0 0.0
    %6449 = vmatpush2.msra.mxu0 0.0
    %6450 = vmatprep.subr.mxu0 0.0
    %6451 = vmatpush2.msra.mxu0 0.0
    %6452 = vmatprep.subr.mxu0 0.0
    %6453 = vmatpush2.msra.mxu0 0.0
    %6454 = vmatprep.subr.mxu0 0.0
    %6455 = vmatpush2.msra.mxu0 0.0
    %6456 = vmatprep.subr.mxu0 0.0
    %6457 = vmatpush2.msra.mxu0 0.0
    %6458 = vmatprep.subr.mxu0 0.0
    %6459 = vmatpush2.msra.mxu0 0.0
    %6460 = vmatprep.subr.mxu0 0.0
    %6461 = vmatpush2.msra.mxu0 0.0
    %6462 = vmatprep.subr.mxu0 0.0
    %6463 = vmatpush2.msra.mxu0 0.0
    %6464 = vmatprep.subr.mxu0 0.0
    %6465 = vmatpush2.msra.mxu0 0.0
    %6466 = vmatprep.subr.mxu0 0.0
    %6467 = vmatpush2.msra.mxu0 0.0
    %6468 = vmatprep.subr.mxu0 0.0
    %6469 = vmatpush2.msra.mxu0 0.0
    %6470 = vmatprep.subr.mxu0 0.0
    %6471 = vmatpush2.msra.mxu0 0.0
    %6472 = vmatprep.subr.mxu0 0.0
    %6473 = vmatpush2.msra.mxu0 0.0
    %6474 = vmatprep.subr.mxu0 0.0
    %6475 = vmatpush2.msra.mxu0 0.0
    %6476 = vmatprep.subr.mxu0 0.0
    %6477 = vmatpush2.msra.mxu0 0.0
    %6478 = vmatprep.subr.mxu0 0.0
    %6479 = vmatpush2.msra.mxu0 0.0
    %6480 = vmatprep.mubr.f32.mxu0 0.0
    %6481 = vmatmul.mubr.f32.gmra.mxu0 %v6412
    %v6482 = vpop.f32.mrf.mxu0
    %v6483 = vadd.f32 0.0, %v6482
    %v6484 = vpop.f32.mrf.mxu0
    %6485 = vdwg.mxu0
    %v6486 = vadd.f32 %v6399, %v6483
    %v6487 = vld [vmem:[%s2723] sm:$0xf]
    %v6488 = vld [vmem:[#allocation2] sm:$0xff]
    %6490 = vrot.lane.b32.xlu0 %v6487, 112
    %v6491 = vpop.permute.xlu0 %6490
    %v6493 = vcombine.high %v6488, %v6488
    %6494 = vrot.lane.b32.xlu0 %v6488, 111
    %v6495 = vpop.permute.xlu0 %6494
    %6496 = vrot.lane.b32.xlu0 %v6493, 111
    %v6497 = vpop.permute.xlu0 %6496
    %v6498 = vsel %vm702, %v6495, %v6497
    %v6499 = vsel %vm364, %v6491, 0
    %v6501 = vsel %vm367, %v6498, 0
    %6503 = vmatprep.subr.mxu0 0.0
    %6504 = vmatpush1.msra.mxu0 0.0
    %6505 = vmatprep.subr.mxu0 0.0
    %6506 = vmatpush1.msra.mxu0 0.0
    %6507 = vmatprep.subr.mxu0 0.0
    %6508 = vmatpush1.msra.mxu0 0.0
    %6509 = vmatprep.subr.mxu0 0.0
    %6510 = vmatpush1.msra.mxu0 0.0
    %6511 = vmatprep.subr.mxu0 0.0
    %6512 = vmatpush1.msra.mxu0 0.0
    %6513 = vmatprep.subr.mxu0 0.0
    %6514 = vmatpush1.msra.mxu0 0.0
    %6515 = vmatprep.subr.mxu0 0.0
    %6516 = vmatpush1.msra.mxu0 0.0
    %6517 = vmatprep.subr.mxu0 0.0
    %6518 = vmatpush1.msra.mxu0 0.0
    %6519 = vmatprep.subr.mxu0 0.0
    %6520 = vmatpush1.msra.mxu0 0.0
    %6521 = vmatprep.subr.mxu0 0.0
    %6522 = vmatpush1.msra.mxu0 0.0
    %6523 = vmatprep.subr.mxu0 0.0
    %6524 = vmatpush1.msra.mxu0 0.0
    %6525 = vmatprep.subr.mxu0 0.0
    %6526 = vmatpush1.msra.mxu0 0.0
    %6527 = vmatprep.subr.mxu0 0.0
    %6528 = vmatpush1.msra.mxu0 0.0
    %6529 = vmatprep.subr.mxu0 0.0
    %6530 = vmatpush1.msra.mxu0 0.0
    %6531 = vmatprep.subr.mxu0 0.0
    %6532 = vmatpush1.msra.mxu0 0.0
    %6533 = vmatprep.subr.mxu0 0.0
    %6534 = vmatpush1.msra.mxu0 %v6501
    %6535 = vmatprep.subr.mxu0 0.0
    %6536 = vmatpush2.msra.mxu0 0.0
    %6537 = vmatprep.subr.mxu0 0.0
    %6538 = vmatpush2.msra.mxu0 0.0
    %6539 = vmatprep.subr.mxu0 0.0
    %6540 = vmatpush2.msra.mxu0 0.0
    %6541 = vmatprep.subr.mxu0 0.0
    %6542 = vmatpush2.msra.mxu0 0.0
    %6543 = vmatprep.subr.mxu0 0.0
    %6544 = vmatpush2.msra.mxu0 0.0
    %6545 = vmatprep.subr.mxu0 0.0
    %6546 = vmatpush2.msra.mxu0 0.0
    %6547 = vmatprep.subr.mxu0 0.0
    %6548 = vmatpush2.msra.mxu0 0.0
    %6549 = vmatprep.subr.mxu0 0.0
    %6550 = vmatpush2.msra.mxu0 0.0
    %6551 = vmatprep.subr.mxu0 0.0
    %6552 = vmatpush2.msra.mxu0 0.0
    %6553 = vmatprep.subr.mxu0 0.0
    %6554 = vmatpush2.msra.mxu0 0.0
    %6555 = vmatprep.subr.mxu0 0.0
    %6556 = vmatpush2.msra.mxu0 0.0
    %6557 = vmatprep.subr.mxu0 0.0
    %6558 = vmatpush2.msra.mxu0 0.0
    %6559 = vmatprep.subr.mxu0 0.0
    %6560 = vmatpush2.msra.mxu0 0.0
    %6561 = vmatprep.subr.mxu0 0.0
    %6562 = vmatpush2.msra.mxu0 0.0
    %6563 = vmatprep.subr.mxu0 0.0
    %6564 = vmatpush2.msra.mxu0 0.0
    %6565 = vmatprep.subr.mxu0 0.0
    %6566 = vmatpush2.msra.mxu0 0.0
    %6567 = vmatprep.mubr.f32.mxu0 0.0
    %6568 = vmatmul.mubr.f32.gmra.mxu0 %v6499
    %v6569 = vpop.f32.mrf.mxu0
    %v6570 = vadd.f32 0.0, %v6569
    %v6571 = vpop.f32.mrf.mxu0
    %6572 = vdwg.mxu0
    %v6573 = vadd.f32 %v6486, %v6570
    %v6574 = vld [vmem:[%s2723] sm:$0xf]
    %v6575 = vld [vmem:[#allocation2] sm:$0xff]
    %6577 = vrot.lane.b32.xlu0 %v6574, 108
    %v6578 = vpop.permute.xlu0 %6577
    %v6580 = vcombine.high %v6575, %v6575
    %6581 = vrot.lane.b32.xlu0 %v6575, 110
    %v6582 = vpop.permute.xlu0 %6581
    %6583 = vrot.lane.b32.xlu0 %v6580, 110
    %v6584 = vpop.permute.xlu0 %6583
    %v6585 = vsel %vm790, %v6582, %v6584
    %v6586 = vsel %vm364, %v6578, 0
    %v6588 = vsel %vm367, %v6585, 0
    %6590 = vmatprep.subr.mxu0 0.0
    %6591 = vmatpush1.msra.mxu0 0.0
    %6592 = vmatprep.subr.mxu0 0.0
    %6593 = vmatpush1.msra.mxu0 0.0
    %6594 = vmatprep.subr.mxu0 0.0
    %6595 = vmatpush1.msra.mxu0 0.0
    %6596 = vmatprep.subr.mxu0 0.0
    %6597 = vmatpush1.msra.mxu0 0.0
    %6598 = vmatprep.subr.mxu0 0.0
    %6599 = vmatpush1.msra.mxu0 0.0
    %6600 = vmatprep.subr.mxu0 0.0
    %6601 = vmatpush1.msra.mxu0 0.0
    %6602 = vmatprep.subr.mxu0 0.0
    %6603 = vmatpush1.msra.mxu0 0.0
    %6604 = vmatprep.subr.mxu0 0.0
    %6605 = vmatpush1.msra.mxu0 0.0
    %6606 = vmatprep.subr.mxu0 0.0
    %6607 = vmatpush1.msra.mxu0 0.0
    %6608 = vmatprep.subr.mxu0 0.0
    %6609 = vmatpush1.msra.mxu0 0.0
    %6610 = vmatprep.subr.mxu0 0.0
    %6611 = vmatpush1.msra.mxu0 0.0
    %6612 = vmatprep.subr.mxu0 0.0
    %6613 = vmatpush1.msra.mxu0 0.0
    %6614 = vmatprep.subr.mxu0 0.0
    %6615 = vmatpush1.msra.mxu0 0.0
    %6616 = vmatprep.subr.mxu0 0.0
    %6617 = vmatpush1.msra.mxu0 0.0
    %6618 = vmatprep.subr.mxu0 0.0
    %6619 = vmatpush1.msra.mxu0 0.0
    %6620 = vmatprep.subr.mxu0 0.0
    %6621 = vmatpush1.msra.mxu0 %v6588
    %6622 = vmatprep.subr.mxu0 0.0
    %6623 = vmatpush2.msra.mxu0 0.0
    %6624 = vmatprep.subr.mxu0 0.0
    %6625 = vmatpush2.msra.mxu0 0.0
    %6626 = vmatprep.subr.mxu0 0.0
    %6627 = vmatpush2.msra.mxu0 0.0
    %6628 = vmatprep.subr.mxu0 0.0
    %6629 = vmatpush2.msra.mxu0 0.0
    %6630 = vmatprep.subr.mxu0 0.0
    %6631 = vmatpush2.msra.mxu0 0.0
    %6632 = vmatprep.subr.mxu0 0.0
    %6633 = vmatpush2.msra.mxu0 0.0
    %6634 = vmatprep.subr.mxu0 0.0
    %6635 = vmatpush2.msra.mxu0 0.0
    %6636 = vmatprep.subr.mxu0 0.0
    %6637 = vmatpush2.msra.mxu0 0.0
    %6638 = vmatprep.subr.mxu0 0.0
    %6639 = vmatpush2.msra.mxu0 0.0
    %6640 = vmatprep.subr.mxu0 0.0
    %6641 = vmatpush2.msra.mxu0 0.0
    %6642 = vmatprep.subr.mxu0 0.0
    %6643 = vmatpush2.msra.mxu0 0.0
    %6644 = vmatprep.subr.mxu0 0.0
    %6645 = vmatpush2.msra.mxu0 0.0
    %6646 = vmatprep.subr.mxu0 0.0
    %6647 = vmatpush2.msra.mxu0 0.0
    %6648 = vmatprep.subr.mxu0 0.0
    %6649 = vmatpush2.msra.mxu0 0.0
    %6650 = vmatprep.subr.mxu0 0.0
    %6651 = vmatpush2.msra.mxu0 0.0
    %6652 = vmatprep.subr.mxu0 0.0
    %6653 = vmatpush2.msra.mxu0 0.0
    %6654 = vmatprep.mubr.f32.mxu0 0.0
    %6655 = vmatmul.mubr.f32.gmra.mxu0 %v6586
    %v6656 = vpop.f32.mrf.mxu0
    %v6657 = vadd.f32 0.0, %v6656
    %v6658 = vpop.f32.mrf.mxu0
    %6659 = vdwg.mxu0
    %v6660 = vadd.f32 %v6573, %v6657
    %v6661 = vld [vmem:[%s2723] sm:$0xf]
    %v6662 = vld [vmem:[#allocation2] sm:$0xff]
    %6664 = vrot.lane.b32.xlu0 %v6661, 104
    %v6665 = vpop.permute.xlu0 %6664
    %v6667 = vcombine.high %v6662, %v6662
    %6668 = vrot.lane.b32.xlu0 %v6662, 96
    %v6669 = vpop.permute.xlu0 %6668
    %6670 = vrot.lane.b32.xlu0 %v6667, 96
    %v6671 = vpop.permute.xlu0 %6670
    %v6672 = vsel %vm878, %v6669, %v6671
    %v6673 = vsel %vm364, %v6665, 0
    %v6675 = vsel %vm367, %v6672, 0
    %6677 = vmatprep.subr.mxu0 0.0
    %6678 = vmatpush1.msra.mxu0 0.0
    %6679 = vmatprep.subr.mxu0 0.0
    %6680 = vmatpush1.msra.mxu0 0.0
    %6681 = vmatprep.subr.mxu0 0.0
    %6682 = vmatpush1.msra.mxu0 0.0
    %6683 = vmatprep.subr.mxu0 0.0
    %6684 = vmatpush1.msra.mxu0 0.0
    %6685 = vmatprep.subr.mxu0 0.0
    %6686 = vmatpush1.msra.mxu0 0.0
    %6687 = vmatprep.subr.mxu0 0.0
    %6688 = vmatpush1.msra.mxu0 0.0
    %6689 = vmatprep.subr.mxu0 0.0
    %6690 = vmatpush1.msra.mxu0 0.0
    %6691 = vmatprep.subr.mxu0 0.0
    %6692 = vmatpush1.msra.mxu0 0.0
    %6693 = vmatprep.subr.mxu0 0.0
    %6694 = vmatpush1.msra.mxu0 0.0
    %6695 = vmatprep.subr.mxu0 0.0
    %6696 = vmatpush1.msra.mxu0 0.0
    %6697 = vmatprep.subr.mxu0 0.0
    %6698 = vmatpush1.msra.mxu0 0.0
    %6699 = vmatprep.subr.mxu0 0.0
    %6700 = vmatpush1.msra.mxu0 0.0
    %6701 = vmatprep.subr.mxu0 0.0
    %6702 = vmatpush1.msra.mxu0 0.0
    %6703 = vmatprep.subr.mxu0 0.0
    %6704 = vmatpush1.msra.mxu0 0.0
    %6705 = vmatprep.subr.mxu0 0.0
    %6706 = vmatpush1.msra.mxu0 0.0
    %6707 = vmatprep.subr.mxu0 0.0
    %6708 = vmatpush1.msra.mxu0 %v6675
    %6709 = vmatprep.subr.mxu0 0.0
    %6710 = vmatpush2.msra.mxu0 0.0
    %6711 = vmatprep.subr.mxu0 0.0
    %6712 = vmatpush2.msra.mxu0 0.0
    %6713 = vmatprep.subr.mxu0 0.0
    %6714 = vmatpush2.msra.mxu0 0.0
    %6715 = vmatprep.subr.mxu0 0.0
    %6716 = vmatpush2.msra.mxu0 0.0
    %6717 = vmatprep.subr.mxu0 0.0
    %6718 = vmatpush2.msra.mxu0 0.0
    %6719 = vmatprep.subr.mxu0 0.0
    %6720 = vmatpush2.msra.mxu0 0.0
    %6721 = vmatprep.subr.mxu0 0.0
    %6722 = vmatpush2.msra.mxu0 0.0
    %6723 = vmatprep.subr.mxu0 0.0
    %6724 = vmatpush2.msra.mxu0 0.0
    %6725 = vmatprep.subr.mxu0 0.0
    %6726 = vmatpush2.msra.mxu0 0.0
    %6727 = vmatprep.subr.mxu0 0.0
    %6728 = vmatpush2.msra.mxu0 0.0
    %6729 = vmatprep.subr.mxu0 0.0
    %6730 = vmatpush2.msra.mxu0 0.0
    %6731 = vmatprep.subr.mxu0 0.0
    %6732 = vmatpush2.msra.mxu0 0.0
    %6733 = vmatprep.subr.mxu0 0.0
    %6734 = vmatpush2.msra.mxu0 0.0
    %6735 = vmatprep.subr.mxu0 0.0
    %6736 = vmatpush2.msra.mxu0 0.0
    %6737 = vmatprep.subr.mxu0 0.0
    %6738 = vmatpush2.msra.mxu0 0.0
    %6739 = vmatprep.subr.mxu0 0.0
    %6740 = vmatpush2.msra.mxu0 0.0
    %6741 = vmatprep.mubr.f32.mxu0 0.0
    %6742 = vmatmul.mubr.f32.gmra.mxu0 %v6673
    %v6743 = vpop.f32.mrf.mxu0
    %v6744 = vadd.f32 0.0, %v6743
    %v6745 = vpop.f32.mrf.mxu0
    %6746 = vdwg.mxu0
    %v6747 = vadd.f32 %v6660, %v6744
    %v6748 = vld [vmem:[%s2723] sm:$0xf]
    %v6749 = vld [vmem:[#allocation2] sm:$0xff]
    %6751 = vrot.lane.b32.xlu0 %v6748, 100
    %v6752 = vpop.permute.xlu0 %6751
    %v6754 = vcombine.high %v6749, %v6749
    %6755 = vrot.lane.b32.xlu0 %v6749, 95
    %v6756 = vpop.permute.xlu0 %6755
    %6757 = vrot.lane.b32.xlu0 %v6754, 95
    %v6758 = vpop.permute.xlu0 %6757
    %v6759 = vsel %vm966, %v6756, %v6758
    %v6760 = vsel %vm364, %v6752, 0
    %v6762 = vsel %vm367, %v6759, 0
    %6764 = vmatprep.subr.mxu0 0.0
    %6765 = vmatpush1.msra.mxu0 0.0
    %6766 = vmatprep.subr.mxu0 0.0
    %6767 = vmatpush1.msra.mxu0 0.0
    %6768 = vmatprep.subr.mxu0 0.0
    %6769 = vmatpush1.msra.mxu0 0.0
    %6770 = vmatprep.subr.mxu0 0.0
    %6771 = vmatpush1.msra.mxu0 0.0
    %6772 = vmatprep.subr.mxu0 0.0
    %6773 = vmatpush1.msra.mxu0 0.0
    %6774 = vmatprep.subr.mxu0 0.0
    %6775 = vmatpush1.msra.mxu0 0.0
    %6776 = vmatprep.subr.mxu0 0.0
    %6777 = vmatpush1.msra.mxu0 0.0
    %6778 = vmatprep.subr.mxu0 0.0
    %6779 = vmatpush1.msra.mxu0 0.0
    %6780 = vmatprep.subr.mxu0 0.0
    %6781 = vmatpush1.msra.mxu0 0.0
    %6782 = vmatprep.subr.mxu0 0.0
    %6783 = vmatpush1.msra.mxu0 0.0
    %6784 = vmatprep.subr.mxu0 0.0
    %6785 = vmatpush1.msra.mxu0 0.0
    %6786 = vmatprep.subr.mxu0 0.0
    %6787 = vmatpush1.msra.mxu0 0.0
    %6788 = vmatprep.subr.mxu0 0.0
    %6789 = vmatpush1.msra.mxu0 0.0
    %6790 = vmatprep.subr.mxu0 0.0
    %6791 = vmatpush1.msra.mxu0 0.0
    %6792 = vmatprep.subr.mxu0 0.0
    %6793 = vmatpush1.msra.mxu0 0.0
    %6794 = vmatprep.subr.mxu0 0.0
    %6795 = vmatpush1.msra.mxu0 %v6762
    %6796 = vmatprep.subr.mxu0 0.0
    %6797 = vmatpush2.msra.mxu0 0.0
    %6798 = vmatprep.subr.mxu0 0.0
    %6799 = vmatpush2.msra.mxu0 0.0
    %6800 = vmatprep.subr.mxu0 0.0
    %6801 = vmatpush2.msra.mxu0 0.0
    %6802 = vmatprep.subr.mxu0 0.0
    %6803 = vmatpush2.msra.mxu0 0.0
    %6804 = vmatprep.subr.mxu0 0.0
    %6805 = vmatpush2.msra.mxu0 0.0
    %6806 = vmatprep.subr.mxu0 0.0
    %6807 = vmatpush2.msra.mxu0 0.0
    %6808 = vmatprep.subr.mxu0 0.0
    %6809 = vmatpush2.msra.mxu0 0.0
    %6810 = vmatprep.subr.mxu0 0.0
    %6811 = vmatpush2.msra.mxu0 0.0
    %6812 = vmatprep.subr.mxu0 0.0
    %6813 = vmatpush2.msra.mxu0 0.0
    %6814 = vmatprep.subr.mxu0 0.0
    %6815 = vmatpush2.msra.mxu0 0.0
    %6816 = vmatprep.subr.mxu0 0.0
    %6817 = vmatpush2.msra.mxu0 0.0
    %6818 = vmatprep.subr.mxu0 0.0
    %6819 = vmatpush2.msra.mxu0 0.0
    %6820 = vmatprep.subr.mxu0 0.0
    %6821 = vmatpush2.msra.mxu0 0.0
    %6822 = vmatprep.subr.mxu0 0.0
    %6823 = vmatpush2.msra.mxu0 0.0
    %6824 = vmatprep.subr.mxu0 0.0
    %6825 = vmatpush2.msra.mxu0 0.0
    %6826 = vmatprep.subr.mxu0 0.0
    %6827 = vmatpush2.msra.mxu0 0.0
    %6828 = vmatprep.mubr.f32.mxu0 0.0
    %6829 = vmatmul.mubr.f32.gmra.mxu0 %v6760
    %v6830 = vpop.f32.mrf.mxu0
    %v6831 = vadd.f32 0.0, %v6830
    %v6832 = vpop.f32.mrf.mxu0
    %6833 = vdwg.mxu0
    %v6834 = vadd.f32 %v6747, %v6831
    %v6835 = vld [vmem:[%s2723] sm:$0xf]
    %v6836 = vld [vmem:[#allocation2] sm:$0xff]
    %6838 = vrot.lane.b32.xlu0 %v6835, 96
    %v6839 = vpop.permute.xlu0 %6838
    %v6841 = vcombine.high %v6836, %v6836
    %6842 = vrot.lane.b32.xlu0 %v6836, 94
    %v6843 = vpop.permute.xlu0 %6842
    %6844 = vrot.lane.b32.xlu0 %v6841, 94
    %v6845 = vpop.permute.xlu0 %6844
    %v6846 = vsel %vm1054, %v6843, %v6845
    %v6847 = vsel %vm364, %v6839, 0
    %v6849 = vsel %vm367, %v6846, 0
    %6851 = vmatprep.subr.mxu0 0.0
    %6852 = vmatpush1.msra.mxu0 0.0
    %6853 = vmatprep.subr.mxu0 0.0
    %6854 = vmatpush1.msra.mxu0 0.0
    %6855 = vmatprep.subr.mxu0 0.0
    %6856 = vmatpush1.msra.mxu0 0.0
    %6857 = vmatprep.subr.mxu0 0.0
    %6858 = vmatpush1.msra.mxu0 0.0
    %6859 = vmatprep.subr.mxu0 0.0
    %6860 = vmatpush1.msra.mxu0 0.0
    %6861 = vmatprep.subr.mxu0 0.0
    %6862 = vmatpush1.msra.mxu0 0.0
    %6863 = vmatprep.subr.mxu0 0.0
    %6864 = vmatpush1.msra.mxu0 0.0
    %6865 = vmatprep.subr.mxu0 0.0
    %6866 = vmatpush1.msra.mxu0 0.0
    %6867 = vmatprep.subr.mxu0 0.0
    %6868 = vmatpush1.msra.mxu0 0.0
    %6869 = vmatprep.subr.mxu0 0.0
    %6870 = vmatpush1.msra.mxu0 0.0
    %6871 = vmatprep.subr.mxu0 0.0
    %6872 = vmatpush1.msra.mxu0 0.0
    %6873 = vmatprep.subr.mxu0 0.0
    %6874 = vmatpush1.msra.mxu0 0.0
    %6875 = vmatprep.subr.mxu0 0.0
    %6876 = vmatpush1.msra.mxu0 0.0
    %6877 = vmatprep.subr.mxu0 0.0
    %6878 = vmatpush1.msra.mxu0 0.0
    %6879 = vmatprep.subr.mxu0 0.0
    %6880 = vmatpush1.msra.mxu0 0.0
    %6881 = vmatprep.subr.mxu0 0.0
    %6882 = vmatpush1.msra.mxu0 %v6849
    %6883 = vmatprep.subr.mxu0 0.0
    %6884 = vmatpush2.msra.mxu0 0.0
    %6885 = vmatprep.subr.mxu0 0.0
    %6886 = vmatpush2.msra.mxu0 0.0
    %6887 = vmatprep.subr.mxu0 0.0
    %6888 = vmatpush2.msra.mxu0 0.0
    %6889 = vmatprep.subr.mxu0 0.0
    %6890 = vmatpush2.msra.mxu0 0.0
    %6891 = vmatprep.subr.mxu0 0.0
    %6892 = vmatpush2.msra.mxu0 0.0
    %6893 = vmatprep.subr.mxu0 0.0
    %6894 = vmatpush2.msra.mxu0 0.0
    %6895 = vmatprep.subr.mxu0 0.0
    %6896 = vmatpush2.msra.mxu0 0.0
    %6897 = vmatprep.subr.mxu0 0.0
    %6898 = vmatpush2.msra.mxu0 0.0
    %6899 = vmatprep.subr.mxu0 0.0
    %6900 = vmatpush2.msra.mxu0 0.0
    %6901 = vmatprep.subr.mxu0 0.0
    %6902 = vmatpush2.msra.mxu0 0.0
    %6903 = vmatprep.subr.mxu0 0.0
    %6904 = vmatpush2.msra.mxu0 0.0
    %6905 = vmatprep.subr.mxu0 0.0
    %6906 = vmatpush2.msra.mxu0 0.0
    %6907 = vmatprep.subr.mxu0 0.0
    %6908 = vmatpush2.msra.mxu0 0.0
    %6909 = vmatprep.subr.mxu0 0.0
    %6910 = vmatpush2.msra.mxu0 0.0
    %6911 = vmatprep.subr.mxu0 0.0
    %6912 = vmatpush2.msra.mxu0 0.0
    %6913 = vmatprep.subr.mxu0 0.0
    %6914 = vmatpush2.msra.mxu0 0.0
    %6915 = vmatprep.mubr.f32.mxu0 0.0
    %6916 = vmatmul.mubr.f32.gmra.mxu0 %v6847
    %v6917 = vpop.f32.mrf.mxu0
    %v6918 = vadd.f32 0.0, %v6917
    %v6919 = vpop.f32.mrf.mxu0
    %6920 = vdwg.mxu0
    %v6921 = vadd.f32 %v6834, %v6918
    %v6922 = vld [vmem:[%s2723] sm:$0xf]
    %6924 = vset.pattern.permute.xlu0 36
    %6925 = vperm.xlu0 %6924, %v6922
    %v6926 = vpop.permute.xlu0 %6925
    %v6928 = vadd.f32 %v6921, %v6926
    %v6929 = vadd.f32 %v5355, %v6928
    %s6930 = scalar_lea.vmem [#allocation9], 4
    %6931 = vst [vmem:[%s6930] sm:$0xf] %v6929
    // Predicated region
    $region26: #{tpu_custom_call.1} parent=1 // pred_check
      _
    $region27: #{tpu_custom_call.1} parent=1 // pred_check_branch
      %6933 = sbr.rel (0) target = $region29
    $region28: #{tpu_custom_call.1} parent=1 // pred_region
      %s6935 = ssub.s32 128, 128
      %6936 = vsyncadd [#allocation5], %s6935
      %s6937 = sshll.u32 [#allocation9], 4
      %s6938 = int_to_ptr.vmem [resolvable:$true] %s6937
      %6943 = dma.vmem_to_hbm [thread:$0]  %s6938, 128, %s3, [#allocation5], 64, 64, 4
    $region29: #{tpu_custom_call.1} parent=1 // pred_fallthru
      _
    // Predicated region
    $region30: #{tpu_custom_call.1} parent=1 // pred_check
      _
    $region31: #{tpu_custom_call.1} parent=1 // pred_check_branch
      %6945 = sbr.rel (0) target = $region33
    $region32: #{tpu_custom_call.1} parent=1 // pred_region
      %6946 = dma.done [#allocation5], 128
    $region33: #{tpu_custom_call.1} parent=1 // pred_fallthru
      _
    %6947 = vsyncpa [#allocation4], 1
    %6948 = vsyncpa [#allocation7], 1
    %6949 = vsyncpa [#allocation5], 1

</llo_original>
